<compile_context>
chip_gen: v5e
topology: v5e:2x2
jax: 0.10.0
libtpu: 0.0.40
codegen_flags: <defaults>
</compile_context>

<pallas_src>
import functools

import jax
import jax.numpy as jnp
from jax.experimental import pallas as pl
from jax.experimental.pallas import tpu as pltpu

EPS = 1e-5
LANE = 128                        # TPU lane width: keep channel axes lane-dense
VMEM_LIMIT = 48 * 1024 * 1024     # scoped-VMEM request, <= 64 MiB (v7x physical)


# --------------------------- small helpers -----------------------------------

def _round_up(n, m=LANE):
    return ((n + m - 1) // m) * m


def _pick_row_tile(m, target=2048):
    """Largest multiple-of-8 divisor of m that is <= target (fallback: m)."""
    t = min(target, m)
    t -= t % 8
    while t >= 8:
        if m % t == 0:
            return t
        t -= 8
    return m


# --------------------------- Pallas kernels ----------------------------------

def bn_stats_kernel(x_ref, sum_ref, sq_ref):
    """Chunked per-channel sum and sum-of-squares over row tiles.

    Grid = (splits:'parallel', steps:'arbitrary').  x: (TM, C).  Accumulates
    into a resident (1, 1, C) block per split (init on step 0 of each split)."""
    @pl.when(pl.program_id(1) == 0)
    def _():
        sum_ref[...] = jnp.zeros_like(sum_ref)
        sq_ref[...] = jnp.zeros_like(sq_ref)

    x = x_ref[...].astype(jnp.float32)
    sum_ref[...] += jnp.sum(x, axis=0, keepdims=True).reshape(1, 1, -1)
    sq_ref[...] += jnp.sum(x * x, axis=0, keepdims=True).reshape(1, 1, -1)


def _im2col_into(im_ref, ap, oh, ow, stride):
    """Write the 9 shifted taps of the spatially padded activation `ap`
    (1, H+2, W+2, Cin) into contiguous lane-aligned column blocks of im_ref
    (oh*ow, 9*Cin).  Each tap value dies right after its store."""
    cin = ap.shape[-1]
    for kh in range(3):
        for kw in range(3):
            if stride == 1:
                tap = ap[0, kh:kh + oh, kw:kw + ow, :]
            else:  # traced only when stride > 1 is actually used
                tap = ap[0, kh:kh + (oh - 1) * stride + 1:stride,
                            kw:kw + (ow - 1) * stride + 1:stride, :]
            t = kh * 3 + kw
            im_ref[:, t * cin:(t + 1) * cin] = tap.reshape(oh * ow, cin)


def bn_relu_conv_kernel(x_ref, scale_ref, shift_ref, w_ref, b_ref,
                        y_ref, sum_ref, sq_ref, apad_ref, im_ref,
                        *, stride, oh, ow):
    """Fused BN1(scale/shift)+ReLU -> 3x3 conv for one image, plus per-image
    BN2 partial statistics (taken from the f32 accumulator before the store).

    x_ref : (1, H, W, Cin)        raw input (unpadded)
    w_ref : (9*Cin, Cout)         tap-packed weights (MXU dtype)
    y_ref : (1, OH, OW, Cout)     conv1 output, unpadded & lane-aligned
    sum_ref/sq_ref : (1, 1, Cout) per-image BN2 partial sums (f32)
    apad_ref : VMEM (1, H+2, W+2, Cin) scratch (spatial zero ring)
    im_ref   : VMEM (OH*OW, 9*Cin)     im2col scratch"""
    _, h, w, cin = x_ref.shape
    a = (x_ref[...].astype(jnp.float32) * scale_ref[...].reshape(1, 1, 1, cin)
         + shift_ref[...].reshape(1, 1, 1, cin))
    a = jnp.maximum(a, 0.0).astype(apad_ref.dtype)   # bf16 for MXU on v6e/v7x

    # padding happens AFTER ReLU -> the ring is genuinely zero, no mask needed.
    # Fully rewritten every step (megacore-safe under a 'parallel' grid).
    apad_ref[...] = jnp.zeros_like(apad_ref)
    apad_ref[:, 1:1 + h, 1:1 + w, :] = a

    _im2col_into(im_ref, apad_ref[...], oh, ow, stride)

    # single MXU contraction, K = 9*Cin, f32 accumulation
    res = jnp.dot(im_ref[...], w_ref[...],
                  preferred_element_type=jnp.float32) + b_ref[...]

    # BN2 per-image partial statistics -- essentially free, res is already live.
    sum_ref[...] = jnp.sum(res, axis=0, keepdims=True).reshape(1, 1, -1)
    sq_ref[...] = jnp.sum(res * res, axis=0, keepdims=True).reshape(1, 1, -1)

    y_ref[...] = res.reshape(1, oh, ow, -1).astype(y_ref.dtype)


def bn_relu_conv_residual_kernel(*refs, has_proj, oh, ow):
    """Fused BN2+ReLU -> 3x3 conv (stride 1) -> + identity(raw x).

    has_proj=True : identity = 1x1 conv of raw x, folded into the f32
                    accumulator as one extra MXU matmul.
    has_proj=False: identity = exact f32 VPU add of the raw-x tile
                    (no identity-matrix matmul, no bf16 rounding of x)."""
    if has_proj:
        (y_ref, scale_ref, shift_ref, w_ref, b_ref, xid_ref, wid_ref, bid_ref,
         o_ref, apad_ref, im_ref) = refs
    else:
        (y_ref, scale_ref, shift_ref, w_ref, b_ref, xid_ref,
         o_ref, apad_ref, im_ref) = refs

    cmid = y_ref.shape[-1]
    a = (y_ref[...].astype(jnp.float32) * scale_ref[...].reshape(1, 1, 1, cmid)
         + shift_ref[...].reshape(1, 1, 1, cmid))
    a = jnp.maximum(a, 0.0).astype(apad_ref.dtype)

    apad_ref[...] = jnp.zeros_like(apad_ref)
    apad_ref[:, 1:1 + oh, 1:1 + ow, :] = a

    _im2col_into(im_ref, apad_ref[...], oh, ow, 1)

    acc = jnp.dot(im_ref[...], w_ref[...],
                  preferred_element_type=jnp.float32) + b_ref[...]

    cin = xid_ref.shape[-1]
    xid = xid_ref[...].reshape(oh * ow, cin)          # pre-subsampled raw x (f32)
    if has_proj:
        acc = acc + jnp.dot(xid.astype(wid_ref.dtype), wid_ref[...],
                            preferred_element_type=jnp.float32) + bid_ref[...]
    else:
        acc = acc + xid                               # exact f32 residual add

    o_ref[...] = acc.reshape(1, oh, ow, -1).astype(o_ref.dtype)


# --------------------------- pallas_call wrappers -----------------------------

def _bn_stats(x2d, count):
    """Per-channel mean / biased variance of x2d (M, C), reduced over rows.
    Leading 'parallel' split axis lets both v7x TensorCores stream HBM."""
    m, c = x2d.shape
    splits = 2 if (m % 16 == 0 and m >= 16) else 1
    ms = m // splits
    tm = _pick_row_tile(ms)
    steps = ms // tm
    sums, sqs = pl.pallas_call(
        bn_stats_kernel,
        out_shape=(jax.ShapeDtypeStruct((splits, 1, c), jnp.float32),
                   jax.ShapeDtypeStruct((splits, 1, c), jnp.float32)),
        grid_spec=pltpu.PrefetchScalarGridSpec(
            num_scalar_prefetch=0,
            grid=(splits, steps),
            in_specs=[pl.BlockSpec((tm, c), lambda j, i: (j * steps + i, 0))],
            out_specs=[pl.BlockSpec((1, 1, c), lambda j, i: (j, 0, 0)),
                       pl.BlockSpec((1, 1, c), lambda j, i: (j, 0, 0))]),
        compiler_params=pltpu.CompilerParams(
            dimension_semantics=("parallel", "arbitrary"),
            vmem_limit_bytes=VMEM_LIMIT),
    )(x2d)
    s = jnp.sum(sums, axis=0)
    ss = jnp.sum(sqs, axis=0)
    mean = s / count
    # TODO(synk): E[x^2]-mean^2 can cancel for large-magnitude activations;
    #             a shifted / Welford-style accumulation would be safer.
    var = jnp.maximum(ss / count - mean * mean, 0.0)
    return mean, var


def _fused_bn_relu_conv(x, scale, shift, w, b, *, stride, oh, ow):
    n, h, wd, cin = x.shape
    cout = w.shape[-1]
    mm_dtype = w.dtype
    kern = functools.partial(bn_relu_conv_kernel, stride=stride, oh=oh, ow=ow)
    flops = 2 * n * oh * ow * 9 * cin * cout
    bytes_accessed = int(x.size * 4 + w.size * w.dtype.itemsize
                         + n * oh * ow * cout * jnp.dtype(mm_dtype).itemsize)
    return pl.pallas_call(
        kern,
        out_shape=(jax.ShapeDtypeStruct((n, oh, ow, cout), mm_dtype),
                   jax.ShapeDtypeStruct((n, 1, cout), jnp.float32),
                   jax.ShapeDtypeStruct((n, 1, cout), jnp.float32)),
        grid_spec=pltpu.PrefetchScalarGridSpec(
            num_scalar_prefetch=0,
            grid=(n,),
            in_specs=[
                pl.BlockSpec((1, h, wd, cin), lambda i: (i, 0, 0, 0)),
                pl.BlockSpec((1, cin), lambda i: (0, 0)),
                pl.BlockSpec((1, cin), lambda i: (0, 0)),
                pl.BlockSpec((9 * cin, cout), lambda i: (0, 0)),
                pl.BlockSpec((1, cout), lambda i: (0, 0)),
            ],
            out_specs=[
                pl.BlockSpec((1, oh, ow, cout), lambda i: (i, 0, 0, 0)),
                pl.BlockSpec((1, 1, cout), lambda i: (i, 0, 0)),
                pl.BlockSpec((1, 1, cout), lambda i: (i, 0, 0)),
            ],
            scratch_shapes=[pltpu.VMEM((1, h + 2, wd + 2, cin), mm_dtype),
                            pltpu.VMEM((oh * ow, 9 * cin), mm_dtype)]),
        compiler_params=pltpu.CompilerParams(
            dimension_semantics=("parallel",),
            vmem_limit_bytes=VMEM_LIMIT),
        cost_estimate=pl.CostEstimate(flops=flops, transcendentals=0,
                                      bytes_accessed=bytes_accessed),
    )(x, scale, shift, w, b)


def _fused_bn_relu_conv_residual(y1, scale, shift, w, b, xid, wid, bid, *,
                                 has_proj, oh, ow):
    n = y1.shape[0]
    cmid = y1.shape[-1]
    cin = xid.shape[-1]
    cout = w.shape[-1]
    mm_dtype = w.dtype
    kern = functools.partial(bn_relu_conv_residual_kernel,
                             has_proj=has_proj, oh=oh, ow=ow)
    in_specs = [
        pl.BlockSpec((1, oh, ow, cmid), lambda i: (i, 0, 0, 0)),
        pl.BlockSpec((1, cmid), lambda i: (0, 0)),
        pl.BlockSpec((1, cmid), lambda i: (0, 0)),
        pl.BlockSpec((9 * cmid, cout), lambda i: (0, 0)),
        pl.BlockSpec((1, cout), lambda i: (0, 0)),
        pl.BlockSpec((1, oh, ow, cin), lambda i: (i, 0, 0, 0)),
    ]
    args = [y1, scale, shift, w, b, xid]
    if has_proj:
        in_specs += [pl.BlockSpec((cin, cout), lambda i: (0, 0)),
                     pl.BlockSpec((1, cout), lambda i: (0, 0))]
        args += [wid, bid]
    flops = 2 * n * oh * ow * (9 * cmid + (cin if has_proj else 0)) * cout
    bytes_accessed = int(y1.size * y1.dtype.itemsize + xid.size * 4
                         + w.size * w.dtype.itemsize + n * oh * ow * cout * 4)
    return pl.pallas_call(
        kern,
        out_shape=jax.ShapeDtypeStruct((n, oh, ow, cout), jnp.float32),
        grid_spec=pltpu.PrefetchScalarGridSpec(
            num_scalar_prefetch=0,
            grid=(n,),
            in_specs=in_specs,
            out_specs=pl.BlockSpec((1, oh, ow, cout), lambda i: (i, 0, 0, 0)),
            scratch_shapes=[pltpu.VMEM((1, oh + 2, ow + 2, cmid), mm_dtype),
                            pltpu.VMEM((oh * ow, 9 * cmid), mm_dtype)]),
        compiler_params=pltpu.CompilerParams(
            dimension_semantics=("parallel",),
            vmem_limit_bytes=VMEM_LIMIT),
        cost_estimate=pl.CostEstimate(flops=flops, transcendentals=0,
                                      bytes_accessed=bytes_accessed),
    )(*args)


# --------------------------- block forward ------------------------------------

def preact_block_nhwc(x_nhwc, params, *, stride=1, out_channels):
    """PreActBlock forward, NHWC in / NHWC out."""
    n, h, w, c_in = x_nhwc.shape
    cp_in = params["bn1_gamma"].shape[-1]
    has_proj = "wid" in params

    x = x_nhwc.astype(jnp.float32)
    if c_in < cp_in:                                  # lane-dense channel pad
        x = jnp.pad(x, ((0, 0), (0, 0), (0, 0), (0, cp_in - c_in)))

    # --- BN1 batch statistics (Pallas reduction kernel) -----------------------
    mean1, var1 = _bn_stats(x.reshape(-1, cp_in), n * h * w)
    scale1 = params["bn1_gamma"] * jax.lax.rsqrt(var1 + EPS)
    shift1 = params["bn1_beta"] - mean1 * scale1

    oh = (h - 1) // stride + 1
    ow = (w - 1) // stride + 1

    # --- fused BN1+ReLU -> conv1, BN2 partial stats come back for free --------
    y1, s2, sq2 = _fused_bn_relu_conv(x, scale1, shift1,
                                      params["w1"], params["b1"],
                                      stride=stride, oh=oh, ow=ow)

    count2 = n * oh * ow
    mean2 = jnp.sum(s2, axis=0) / count2
    var2 = jnp.maximum(jnp.sum(sq2, axis=0) / count2 - mean2 * mean2, 0.0)
    scale2 = params["bn2_gamma"] * jax.lax.rsqrt(var2 + EPS)
    shift2 = params["bn2_beta"] - mean2 * scale2

    # identity input: raw x, pre-subsampled in the wrapper for stride > 1
    xid = x if stride == 1 else x[:, ::stride, ::stride, :]

    # --- fused BN2+ReLU -> conv2 + identity(raw x) -----------------------------
    out = _fused_bn_relu_conv_residual(
        y1, scale2, shift2, params["w2"], params["b2"], xid,
        params.get("wid"), params.get("bid"),
        has_proj=has_proj, oh=oh, ow=ow)

    return out[..., :out_channels]                    # drop channel padding


def preact_block(x_nchw, params, *, stride=1, out_channels):
    """PyTorch-convention NCHW wrapper."""
    x = jnp.transpose(x_nchw, (0, 2, 3, 1))
    y = preact_block_nhwc(x, params, stride=stride, out_channels=out_channels)
    return jnp.transpose(y, (0, 3, 1, 2))


# --------------------------- parameter preparation ---------------------------

def prepare_params(raw, in_dim, dim, stride, mm_dtype=jnp.float32):
    """Convert PyTorch-layout parameters to lane-dense, tap-packed TPU layout.

    3x3 conv weights -> (9*Cin_pad, Cout_pad) matrices (row = tap*Cin_pad + c)
    in the MXU dtype; biases / BN params -> (1, C_pad) f32.  Channel axes are
    zero-padded to multiples of 128.  The 1x1 projection is only emitted when
    the block actually has one."""
    cp_in = _round_up(in_dim)
    cp_out = _round_up(dim)

    def pad_vec(v, c):
        return jnp.pad(v, (0, c - v.shape[0])).astype(jnp.float32)

    def pack_conv3x3(w_oihw, ci, co, cpi, cpo):
        wt = jnp.transpose(w_oihw, (2, 3, 1, 0))                   # (3,3,ci,co)
        wt = jnp.pad(wt, ((0, 0), (0, 0), (0, cpi - ci), (0, cpo - co)))
        return wt.reshape(9 * cpi, cpo).astype(mm_dtype)

    params = {
        "w1": pack_conv3x3(raw["w1_oihw"], in_dim, dim, cp_in, cp_out),
        "b1": pad_vec(raw["b1"], cp_out).reshape(1, cp_out),
        "w2": pack_conv3x3(raw["w2_oihw"], dim, dim, cp_out, cp_out),
        "b2": pad_vec(raw["b2"], cp_out).reshape(1, cp_out),
        "bn1_gamma": pad_vec(raw["bn1_gamma"], cp_in).reshape(1, cp_in),
        "bn1_beta": pad_vec(raw["bn1_beta"], cp_in).reshape(1, cp_in),
        "bn2_gamma": pad_vec(raw["bn2_gamma"], cp_out).reshape(1, cp_out),
        "bn2_beta": pad_vec(raw["bn2_beta"], cp_out).reshape(1, cp_out),
    }
    if (stride != 1) or (in_dim != dim):
        wid = jnp.pad(raw["wid_oihw"][:, :, 0, 0].T,
                      ((0, cp_in - in_dim), (0, cp_out - dim)))
        params["wid"] = wid.astype(mm_dtype)
        params["bid"] = pad_vec(raw["bid"], cp_out).reshape(1, cp_out)
    return params


# --------------------------- pure-JAX reference -------------------------------

def _ref_forward(x, pr, stride, proj):
    def bn_relu(z, g, b):
        m = jnp.mean(z, axis=(0, 2, 3), keepdims=True)
        v = jnp.mean((z - m) ** 2, axis=(0, 2, 3), keepdims=True)
        zn = (z - m) * jax.lax.rsqrt(v + EPS)
        return jnp.maximum(zn * g[None, :, None, None] + b[None, :, None, None], 0.0)

    def conv(z, w, b, s, p):
        y = jax.lax.conv_general_dilated(
            z, w, (s, s), ((p, p), (p, p)),
            dimension_numbers=("NCHW", "OIHW", "NCHW"))
        return y + b[None, :, None, None]

    r = conv(bn_relu(x, pr["bn1_gamma"], pr["bn1_beta"]),
             pr["w1_oihw"], pr["b1"], stride, 1)
    r = conv(bn_relu(r, pr["bn2_gamma"], pr["bn2_beta"]),
             pr["w2_oihw"], pr["b2"], 1, 1)
    ident = conv(x, pr["wid_oihw"], pr["bid"], stride, 0) if proj else x
    return r + ident


# --------------------------- main ---------------------------------------------

if __name__ == "__main__":
    N, H, W = 2, 16, 16
    fwd = jax.jit(preact_block, static_argnames=("stride", "out_channels"))

    def make_raw(key, in_dim, dim):
        ks = jax.random.split(key, 10)
        return {
            "w1_oihw": jax.random.normal(ks[0], (dim, in_dim, 3, 3), jnp.float32) * 0.1,
            "b1": jax.random.normal(ks[1], (dim,), jnp.float32) * 0.1,
            "w2_oihw": jax.random.normal(ks[2], (dim, dim, 3, 3), jnp.float32) * 0.1,
            "b2": jax.random.normal(ks[3], (dim,), jnp.float32) * 0.1,
            "wid_oihw": jax.random.normal(ks[4], (dim, in_dim, 1, 1), jnp.float32) * 0.1,
            "bid": jax.random.normal(ks[5], (dim,), jnp.float32) * 0.1,
            "bn1_gamma": 1.0 + 0.1 * jax.random.normal(ks[6], (in_dim,), jnp.float32),
            "bn1_beta": 0.1 * jax.random.normal(ks[7], (in_dim,), jnp.float32),
            "bn2_gamma": 1.0 + 0.1 * jax.random.normal(ks[8], (dim,), jnp.float32),
            "bn2_beta": 0.1 * jax.random.normal(ks[9], (dim,), jnp.float32),
        }

    def run_case(key, in_dim, dim, stride, mm_dtype, rtol, atol):
        k_raw, k_x = jax.random.split(key)
        raw = make_raw(k_raw, in_dim, dim)
        x = jax.random.normal(k_x, (N, in_dim, H, W), jnp.float32)
        proj = (stride != 1) or (in_dim != dim)
        ref = jax.block_until_ready(_ref_forward(x, raw, stride, proj))
        params = prepare_params(raw, in_dim, dim, stride, mm_dtype=mm_dtype)
        out = jax.block_until_ready(
            fwd(x, params, stride=stride, out_channels=dim))
        assert out.shape == ref.shape, (out.shape, ref.shape)
        err = float(jnp.max(jnp.abs(out - ref)))
        assert jnp.allclose(out, ref, rtol=rtol, atol=atol), err

    root = jax.random.PRNGKey(0)
    k_proj, k_plain = jax.random.split(root)

    # projection identity path (in_dim != dim): f32 and bf16 MXU dtypes
    run_case(k_proj, 4, 8, 1, jnp.float32, 1e-3, 1e-4)
    run_case(k_proj, 4, 8, 1, jnp.bfloat16, 5e-2, 5e-2)
    # plain residual path (no projection): raw x added in f32, no eye matmul
    run_case(k_plain, 8, 8, 1, jnp.float32, 1e-3, 1e-4)

    print("KERNEL_OK")
</pallas_src>

<mosaic_0001>
module attributes {stable_mosaic.version = 11 : i64} {
  func.func @bn_stats_kernel(%arg0: i32, %arg1: i32, %arg2: memref<256x128xf32, #tpu.memory_space<vmem>>, %arg3: memref<1x1x128xf32, #tpu.memory_space<vmem>>, %arg4: memref<1x1x128xf32, #tpu.memory_space<vmem>>) attributes {dimension_semantics = [#tpu.dimension_semantics<parallel>, #tpu.dimension_semantics<arbitrary>], iteration_bounds = array<i64: 2, 1>, scalar_prefetch = 0 : i64, scratch_operands = 0 : i64, tpu.core_type = #tpu.core_type<tc>, window_params = [{transform_indices = @transform_0, window_bounds = array<i64: 256, 128>}, {transform_indices = @transform_1, window_bounds = array<i64: 1, 1, 128>}, {transform_indices = @transform_2, window_bounds = array<i64: 1, 1, 128>}]} {
    %c0_i32 = arith.constant 0 : i32
    %0 = arith.cmpi eq, %arg1, %c0_i32 : i32
    %1 = arith.extui %0 : i1 to i32
    %c0_i32_0 = arith.constant 0 : i32
    %2 = arith.cmpi ne, %1, %c0_i32_0 : i32
    scf.if %2 {
      %cst_15 = arith.constant 0.000000e+00 : f32
      %17 = vector.broadcast %cst_15 : f32 to vector<1x1x128xf32>
      %c0_16 = arith.constant 0 : index
      %c0_17 = arith.constant 0 : index
      %c0_18 = arith.constant 0 : index
      %18 = vector.load %arg3[%c0_16, %c0_17, %c0_18] : memref<1x1x128xf32, #tpu.memory_space<vmem>>, vector<1x1x128xf32>
      tpu.vector_store %arg3[%c0_16, %c0_17, %c0_18], %17 {strides = array<i32>} : memref<1x1x128xf32, #tpu.memory_space<vmem>>, vector<1x1x128xf32>,
      %cst_19 = arith.constant 0.000000e+00 : f32
      %19 = vector.broadcast %cst_19 : f32 to vector<1x1x128xf32>
      %c0_20 = arith.constant 0 : index
      %c0_21 = arith.constant 0 : index
      %c0_22 = arith.constant 0 : index
      %20 = vector.load %arg4[%c0_20, %c0_21, %c0_22] : memref<1x1x128xf32, #tpu.memory_space<vmem>>, vector<1x1x128xf32>
      tpu.vector_store %arg4[%c0_20, %c0_21, %c0_22], %19 {strides = array<i32>} : memref<1x1x128xf32, #tpu.memory_space<vmem>>, vector<1x1x128xf32>,
    } else {
    }
    %c0 = arith.constant 0 : index
    %c0_1 = arith.constant 0 : index
    %3 = vector.load %arg2[%c0, %c0_1] : memref<256x128xf32, #tpu.memory_space<vmem>>, vector<256x128xf32>
    %c0_2 = arith.constant 0 : index
    %c0_3 = arith.constant 0 : index
    %c0_4 = arith.constant 0 : index
    %4 = vector.load %arg3[%c0_2, %c0_3, %c0_4] : memref<1x1x128xf32, #tpu.memory_space<vmem>>, vector<1x1x128xf32>
    %cst = arith.constant dense<0.000000e+00> : vector<128xf32>
    %5 = vector.multi_reduction <add>, %3, %cst [0] : vector<256x128xf32> to vector<128xf32>
    %6 = vector.shape_cast %5 : vector<128xf32> to vector<1x128xf32>
    %7 = vector.shape_cast %6 : vector<1x128xf32> to vector<1x1x128xf32>
    %8 = arith.addf %4, %7 : vector<1x1x128xf32>
    %c0_5 = arith.constant 0 : index
    %c0_6 = arith.constant 0 : index
    %c0_7 = arith.constant 0 : index
    %9 = vector.load %arg3[%c0_5, %c0_6, %c0_7] : memref<1x1x128xf32, #tpu.memory_space<vmem>>, vector<1x1x128xf32>
    tpu.vector_store %arg3[%c0_5, %c0_6, %c0_7], %8 {strides = array<i32>} : memref<1x1x128xf32, #tpu.memory_space<vmem>>, vector<1x1x128xf32>,
    %c0_8 = arith.constant 0 : index
    %c0_9 = arith.constant 0 : index
    %c0_10 = arith.constant 0 : index
    %10 = vector.load %arg4[%c0_8, %c0_9, %c0_10] : memref<1x1x128xf32, #tpu.memory_space<vmem>>, vector<1x1x128xf32>
    %11 = arith.mulf %3, %3 : vector<256x128xf32>
    %cst_11 = arith.constant dense<0.000000e+00> : vector<128xf32>
    %12 = vector.multi_reduction <add>, %11, %cst_11 [0] : vector<256x128xf32> to vector<128xf32>
    %13 = vector.shape_cast %12 : vector<128xf32> to vector<1x128xf32>
    %14 = vector.shape_cast %13 : vector<1x128xf32> to vector<1x1x128xf32>
    %15 = arith.addf %10, %14 : vector<1x1x128xf32>
    %c0_12 = arith.constant 0 : index
    %c0_13 = arith.constant 0 : index
    %c0_14 = arith.constant 0 : index
    %16 = vector.load %arg4[%c0_12, %c0_13, %c0_14] : memref<1x1x128xf32, #tpu.memory_space<vmem>>, vector<1x1x128xf32>
    tpu.vector_store %arg4[%c0_12, %c0_13, %c0_14], %15 {strides = array<i32>} : memref<1x1x128xf32, #tpu.memory_space<vmem>>, vector<1x1x128xf32>,
    return
  }
  func.func @transform_0(%arg0: i32, %arg1: i32) -> (i32, i32) {
    %c1_i32 = arith.constant 1 : i32
    %0 = arith.muli %arg0, %c1_i32 : i32
    %1 = arith.addi %0, %arg1 : i32
    %c0_i32 = arith.constant 0 : i32
    %c0_i32_0 = arith.constant 0 : i32
    return %1, %c0_i32 : i32, i32
  }
  func.func @transform_1(%arg0: i32, %arg1: i32) -> (i32, i32, i32) {
    %c0_i32 = arith.constant 0 : i32
    %c0_i32_0 = arith.constant 0 : i32
    %c0_i32_1 = arith.constant 0 : i32
    return %arg0, %c0_i32, %c0_i32_0 : i32, i32, i32
  }
  func.func @transform_2(%arg0: i32, %arg1: i32) -> (i32, i32, i32) {
    %c0_i32 = arith.constant 0 : i32
    %c0_i32_0 = arith.constant 0 : i32
    %c0_i32_1 = arith.constant 0 : i32
    return %arg0, %c0_i32, %c0_i32_0 : i32, i32, i32
  }
}

module attributes {stable_mosaic.version = 11 : i64} {
  func.func @bn_relu_conv_kernel(%arg0: i32, %arg1: memref<1x16x16x128xf32, #tpu.memory_space<vmem>>, %arg2: memref<1x128xf32, #tpu.memory_space<vmem>>, %arg3: memref<1x128xf32, #tpu.memory_space<vmem>>, %arg4: memref<1152x128xf32, #tpu.memory_space<vmem>>, %arg5: memref<1x128xf32, #tpu.memory_space<vmem>>, %arg6: memref<1x16x16x128xf32, #tpu.memory_space<vmem>>, %arg7: memref<1x1x128xf32, #tpu.memory_space<vmem>>, %arg8: memref<1x1x128xf32, #tpu.memory_space<vmem>>, %arg9: memref<1x18x18x128xf32, #tpu.memory_space<vmem>>, %arg10: memref<256x1152xf32, #tpu.memory_space<vmem>>) attributes {dimension_semantics = [#tpu.dimension_semantics<parallel>], iteration_bounds = array<i64: 2>, scalar_prefetch = 0 : i64, scratch_operands = 2 : i64, tpu.core_type = #tpu.core_type<tc>, window_params = [{transform_indices = @transform_0, window_bounds = array<i64: 1, 16, 16, 128>}, {pipeline_mode = #tpu.pipeline_mode<synchronous>, transform_indices = @transform_1, window_bounds = array<i64: 1, 128>}, {pipeline_mode = #tpu.pipeline_mode<synchronous>, transform_indices = @transform_2, window_bounds = array<i64: 1, 128>}, {pipeline_mode = #tpu.pipeline_mode<synchronous>, transform_indices = @transform_3, window_bounds = array<i64: 1152, 128>}, {pipeline_mode = #tpu.pipeline_mode<synchronous>, transform_indices = @transform_4, window_bounds = array<i64: 1, 128>}, {transform_indices = @transform_5, window_bounds = array<i64: 1, 16, 16, 128>}, {transform_indices = @transform_6, window_bounds = array<i64: 1, 1, 128>}, {transform_indices = @transform_7, window_bounds = array<i64: 1, 1, 128>}]} {
    %c0 = arith.constant 0 : index
    %c0_0 = arith.constant 0 : index
    %c0_1 = arith.constant 0 : index
    %c0_2 = arith.constant 0 : index
    %0 = vector.load %arg1[%c0, %c0_0, %c0_1, %c0_2] : memref<1x16x16x128xf32, #tpu.memory_space<vmem>>, vector<1x16x16x128xf32>
    %c0_3 = arith.constant 0 : index
    %c0_4 = arith.constant 0 : index
    %1 = vector.load %arg2[%c0_3, %c0_4] : memref<1x128xf32, #tpu.memory_space<vmem>>, vector<1x128xf32>
    %2 = vector.shape_cast %1 : vector<1x128xf32> to vector<1x1x1x128xf32>
    %3 = vector.broadcast %2 : vector<1x1x1x128xf32> to vector<1x16x16x128xf32>
    %4 = arith.mulf %0, %3 : vector<1x16x16x128xf32>
    %c0_5 = arith.constant 0 : index
    %c0_6 = arith.constant 0 : index
    %5 = vector.load %arg3[%c0_5, %c0_6] : memref<1x128xf32, #tpu.memory_space<vmem>>, vector<1x128xf32>
    %6 = vector.shape_cast %5 : vector<1x128xf32> to vector<1x1x1x128xf32>
    %7 = vector.broadcast %6 : vector<1x1x1x128xf32> to vector<1x16x16x128xf32>
    %8 = arith.addf %4, %7 : vector<1x16x16x128xf32>
    %cst = arith.constant 0.000000e+00 : f32
    %9 = vector.broadcast %cst : f32 to vector<1x16x16x128xf32>
    %10 = arith.maximumf %8, %9 : vector<1x16x16x128xf32>
    %cst_7 = arith.constant 0.000000e+00 : f32
    %11 = vector.broadcast %cst_7 : f32 to vector<1x18x18x128xf32>
    %c0_8 = arith.constant 0 : index
    %c0_9 = arith.constant 0 : index
    %c0_10 = arith.constant 0 : index
    %c0_11 = arith.constant 0 : index
    %12 = vector.load %arg9[%c0_8, %c0_9, %c0_10, %c0_11] : memref<1x18x18x128xf32, #tpu.memory_space<vmem>>, vector<1x18x18x128xf32>
    tpu.vector_store %arg9[%c0_8, %c0_9, %c0_10, %c0_11], %11 {strides = array<i32>} : memref<1x18x18x128xf32, #tpu.memory_space<vmem>>, vector<1x18x18x128xf32>,
    %c0_12 = arith.constant 0 : index
    %c1 = arith.constant 1 : index
    %c1_13 = arith.constant 1 : index
    %c0_14 = arith.constant 0 : index
    %13 = vector.load %arg9[%c0_12, %c1, %c1_13, %c0_14] : memref<1x18x18x128xf32, #tpu.memory_space<vmem>>, vector<1x16x16x128xf32>
    tpu.vector_store %arg9[%c0_12, %c1, %c1_13, %c0_14], %10 {strides = array<i32>} : memref<1x18x18x128xf32, #tpu.memory_space<vmem>>, vector<1x16x16x128xf32>,
    %c0_15 = arith.constant 0 : index
    %c0_16 = arith.constant 0 : index
    %c0_17 = arith.constant 0 : index
    %c0_18 = arith.constant 0 : index
    %14 = vector.load %arg9[%c0_15, %c0_16, %c0_17, %c0_18] : memref<1x18x18x128xf32, #tpu.memory_space<vmem>>, vector<1x18x18x128xf32>
    %15 = vector.extract_strided_slice %14 {offsets = [0, 0, 0, 0], sizes = [1, 16, 16, 128], strides = [1, 1, 1, 1]} : vector<1x18x18x128xf32> to vector<1x16x16x128xf32>
    %16 = vector.shape_cast %15 : vector<1x16x16x128xf32> to vector<16x16x128xf32>
    %17 = vector.shape_cast %16 : vector<16x16x128xf32> to vector<256x128xf32>
    %c0_19 = arith.constant 0 : index
    %c0_20 = arith.constant 0 : index
    %18 = vector.load %arg10[%c0_19, %c0_20] : memref<256x1152xf32, #tpu.memory_space<vmem>>, vector<256x128xf32>
    tpu.vector_store %arg10[%c0_19, %c0_20], %17 {strides = array<i32>} : memref<256x1152xf32, #tpu.memory_space<vmem>>, vector<256x128xf32>,
    %19 = vector.extract_strided_slice %14 {offsets = [0, 0, 1, 0], sizes = [1, 16, 16, 128], strides = [1, 1, 1, 1]} : vector<1x18x18x128xf32> to vector<1x16x16x128xf32>
    %20 = vector.shape_cast %19 : vector<1x16x16x128xf32> to vector<16x16x128xf32>
    %21 = vector.shape_cast %20 : vector<16x16x128xf32> to vector<256x128xf32>
    %c0_21 = arith.constant 0 : index
    %c128 = arith.constant 128 : index
    %22 = vector.load %arg10[%c0_21, %c128] : memref<256x1152xf32, #tpu.memory_space<vmem>>, vector<256x128xf32>
    tpu.vector_store %arg10[%c0_21, %c128], %21 {strides = array<i32>} : memref<256x1152xf32, #tpu.memory_space<vmem>>, vector<256x128xf32>,
    %23 = vector.extract_strided_slice %14 {offsets = [0, 0, 2, 0], sizes = [1, 16, 16, 128], strides = [1, 1, 1, 1]} : vector<1x18x18x128xf32> to vector<1x16x16x128xf32>
    %24 = vector.shape_cast %23 : vector<1x16x16x128xf32> to vector<16x16x128xf32>
    %25 = vector.shape_cast %24 : vector<16x16x128xf32> to vector<256x128xf32>
    %c0_22 = arith.constant 0 : index
    %c256 = arith.constant 256 : index
    %26 = vector.load %arg10[%c0_22, %c256] : memref<256x1152xf32, #tpu.memory_space<vmem>>, vector<256x128xf32>
    tpu.vector_store %arg10[%c0_22, %c256], %25 {strides = array<i32>} : memref<256x1152xf32, #tpu.memory_space<vmem>>, vector<256x128xf32>,
    %27 = vector.extract_strided_slice %14 {offsets = [0, 1, 0, 0], sizes = [1, 16, 16, 128], strides = [1, 1, 1, 1]} : vector<1x18x18x128xf32> to vector<1x16x16x128xf32>
    %28 = vector.shape_cast %27 : vector<1x16x16x128xf32> to vector<16x16x128xf32>
    %29 = vector.shape_cast %28 : vector<16x16x128xf32> to vector<256x128xf32>
    %c0_23 = arith.constant 0 : index
    %c384 = arith.constant 384 : index
    %30 = vector.load %arg10[%c0_23, %c384] : memref<256x1152xf32, #tpu.memory_space<vmem>>, vector<256x128xf32>
    tpu.vector_store %arg10[%c0_23, %c384], %29 {strides = array<i32>} : memref<256x1152xf32, #tpu.memory_space<vmem>>, vector<256x128xf32>,
    %31 = vector.extract_strided_slice %14 {offsets = [0, 1, 1, 0], sizes = [1, 16, 16, 128], strides = [1, 1, 1, 1]} : vector<1x18x18x128xf32> to vector<1x16x16x128xf32>
    %32 = vector.shape_cast %31 : vector<1x16x16x128xf32> to vector<16x16x128xf32>
    %33 = vector.shape_cast %32 : vector<16x16x128xf32> to vector<256x128xf32>
    %c0_24 = arith.constant 0 : index
    %c512 = arith.constant 512 : index
    %34 = vector.load %arg10[%c0_24, %c512] : memref<256x1152xf32, #tpu.memory_space<vmem>>, vector<256x128xf32>
    tpu.vector_store %arg10[%c0_24, %c512], %33 {strides = array<i32>} : memref<256x1152xf32, #tpu.memory_space<vmem>>, vector<256x128xf32>,
    %35 = vector.extract_strided_slice %14 {offsets = [0, 1, 2, 0], sizes = [1, 16, 16, 128], strides = [1, 1, 1, 1]} : vector<1x18x18x128xf32> to vector<1x16x16x128xf32>
    %36 = vector.shape_cast %35 : vector<1x16x16x128xf32> to vector<16x16x128xf32>
    %37 = vector.shape_cast %36 : vector<16x16x128xf32> to vector<256x128xf32>
    %c0_25 = arith.constant 0 : index
    %c640 = arith.constant 640 : index
    %38 = vector.load %arg10[%c0_25, %c640] : memref<256x1152xf32, #tpu.memory_space<vmem>>, vector<256x128xf32>
    tpu.vector_store %arg10[%c0_25, %c640], %37 {strides = array<i32>} : memref<256x1152xf32, #tpu.memory_space<vmem>>, vector<256x128xf32>,
    %39 = vector.extract_strided_slice %14 {offsets = [0, 2, 0, 0], sizes = [1, 16, 16, 128], strides = [1, 1, 1, 1]} : vector<1x18x18x128xf32> to vector<1x16x16x128xf32>
    %40 = vector.shape_cast %39 : vector<1x16x16x128xf32> to vector<16x16x128xf32>
    %41 = vector.shape_cast %40 : vector<16x16x128xf32> to vector<256x128xf32>
    %c0_26 = arith.constant 0 : index
    %c768 = arith.constant 768 : index
    %42 = vector.load %arg10[%c0_26, %c768] : memref<256x1152xf32, #tpu.memory_space<vmem>>, vector<256x128xf32>
    tpu.vector_store %arg10[%c0_26, %c768], %41 {strides = array<i32>} : memref<256x1152xf32, #tpu.memory_space<vmem>>, vector<256x128xf32>,
    %43 = vector.extract_strided_slice %14 {offsets = [0, 2, 1, 0], sizes = [1, 16, 16, 128], strides = [1, 1, 1, 1]} : vector<1x18x18x128xf32> to vector<1x16x16x128xf32>
    %44 = vector.shape_cast %43 : vector<1x16x16x128xf32> to vector<16x16x128xf32>
    %45 = vector.shape_cast %44 : vector<16x16x128xf32> to vector<256x128xf32>
    %c0_27 = arith.constant 0 : index
    %c896 = arith.constant 896 : index
    %46 = vector.load %arg10[%c0_27, %c896] : memref<256x1152xf32, #tpu.memory_space<vmem>>, vector<256x128xf32>
    tpu.vector_store %arg10[%c0_27, %c896], %45 {strides = array<i32>} : memref<256x1152xf32, #tpu.memory_space<vmem>>, vector<256x128xf32>,
    %47 = vector.extract_strided_slice %14 {offsets = [0, 2, 2, 0], sizes = [1, 16, 16, 128], strides = [1, 1, 1, 1]} : vector<1x18x18x128xf32> to vector<1x16x16x128xf32>
    %48 = vector.shape_cast %47 : vector<1x16x16x128xf32> to vector<16x16x128xf32>
    %49 = vector.shape_cast %48 : vector<16x16x128xf32> to vector<256x128xf32>
    %c0_28 = arith.constant 0 : index
    %c1024 = arith.constant 1024 : index
    %50 = vector.load %arg10[%c0_28, %c1024] : memref<256x1152xf32, #tpu.memory_space<vmem>>, vector<256x128xf32>
    tpu.vector_store %arg10[%c0_28, %c1024], %49 {strides = array<i32>} : memref<256x1152xf32, #tpu.memory_space<vmem>>, vector<256x128xf32>,
    %c0_29 = arith.constant 0 : index
    %c0_30 = arith.constant 0 : index
    %51 = vector.load %arg10[%c0_29, %c0_30] : memref<256x1152xf32, #tpu.memory_space<vmem>>, vector<256x1152xf32>
    %c0_31 = arith.constant 0 : index
    %c0_32 = arith.constant 0 : index
    %52 = vector.load %arg4[%c0_31, %c0_32] : memref<1152x128xf32, #tpu.memory_space<vmem>>, vector<1152x128xf32>
    %cst_33 = arith.constant dense<0.000000e+00> : vector<256x128xf32>
    %53 = tpu.matmul %51, %52, %cst_33 {dimension_numbers = #tpu.dot_dimension_numbers<[1], [0], [0], [1], [0, 0, 1, 1], [], []>} : vector<256x1152xf32>, vector<1152x128xf32>, vector<256x128xf32> -> vector<256x128xf32>
    %c0_34 = arith.constant 0 : index
    %c0_35 = arith.constant 0 : index
    %54 = vector.load %arg5[%c0_34, %c0_35] : memref<1x128xf32, #tpu.memory_space<vmem>>, vector<1x128xf32>
    %55 = vector.broadcast %54 : vector<1x128xf32> to vector<256x128xf32>
    %56 = arith.addf %53, %55 : vector<256x128xf32>
    %cst_36 = arith.constant dense<0.000000e+00> : vector<128xf32>
    %57 = vector.multi_reduction <add>, %56, %cst_36 [0] : vector<256x128xf32> to vector<128xf32>
    %58 = vector.shape_cast %57 : vector<128xf32> to vector<1x128xf32>
    %59 = vector.shape_cast %58 : vector<1x128xf32> to vector<1x1x128xf32>
    %c0_37 = arith.constant 0 : index
    %c0_38 = arith.constant 0 : index
    %c0_39 = arith.constant 0 : index
    %60 = vector.load %arg7[%c0_37, %c0_38, %c0_39] : memref<1x1x128xf32, #tpu.memory_space<vmem>>, vector<1x1x128xf32>
    tpu.vector_store %arg7[%c0_37, %c0_38, %c0_39], %59 {strides = array<i32>} : memref<1x1x128xf32, #tpu.memory_space<vmem>>, vector<1x1x128xf32>,
    %61 = arith.mulf %56, %56 : vector<256x128xf32>
    %cst_40 = arith.constant dense<0.000000e+00> : vector<128xf32>
    %62 = vector.multi_reduction <add>, %61, %cst_40 [0] : vector<256x128xf32> to vector<128xf32>
    %63 = vector.shape_cast %62 : vector<128xf32> to vector<1x128xf32>
    %64 = vector.shape_cast %63 : vector<1x128xf32> to vector<1x1x128xf32>
    %c0_41 = arith.constant 0 : index
    %c0_42 = arith.constant 0 : index
    %c0_43 = arith.constant 0 : index
    %65 = vector.load %arg8[%c0_41, %c0_42, %c0_43] : memref<1x1x128xf32, #tpu.memory_space<vmem>>, vector<1x1x128xf32>
    tpu.vector_store %arg8[%c0_41, %c0_42, %c0_43], %64 {strides = array<i32>} : memref<1x1x128xf32, #tpu.memory_space<vmem>>, vector<1x1x128xf32>,
    %66 = vector.shape_cast %56 : vector<256x128xf32> to vector<1x16x16x128xf32>
    %c0_44 = arith.constant 0 : index
    %c0_45 = arith.constant 0 : index
    %c0_46 = arith.constant 0 : index
    %c0_47 = arith.constant 0 : index
    %67 = vector.load %arg6[%c0_44, %c0_45, %c0_46, %c0_47] : memref<1x16x16x128xf32, #tpu.memory_space<vmem>>, vector<1x16x16x128xf32>
    tpu.vector_store %arg6[%c0_44, %c0_45, %c0_46, %c0_47], %66 {strides = array<i32>} : memref<1x16x16x128xf32, #tpu.memory_space<vmem>>, vector<1x16x16x128xf32>,
    return
  }
  func.func @transform_0(%arg0: i32) -> (i32, i32, i32, i32) {
    %c0_i32 = arith.constant 0 : i32
    %c0_i32_0 = arith.constant 0 : i32
    %c0_i32_1 = arith.constant 0 : i32
    %c0_i32_2 = arith.constant 0 : i32
    return %arg0, %c0_i32, %c0_i32_0, %c0_i32_1 : i32, i32, i32, i32
  }
  func.func @transform_1(%arg0: i32) -> (i32, i32) {
    %c0_i32 = arith.constant 0 : i32
    %c0_i32_0 = arith.constant 0 : i32
    %c0_i32_1 = arith.constant 0 : i32
    return %c0_i32, %c0_i32_0 : i32, i32
  }
  func.func @transform_2(%arg0: i32) -> (i32, i32) {
    %c0_i32 = arith.constant 0 : i32
    %c0_i32_0 = arith.constant 0 : i32
    %c0_i32_1 = arith.constant 0 : i32
    return %c0_i32, %c0_i32_0 : i32, i32
  }
  func.func @transform_3(%arg0: i32) -> (i32, i32) {
    %c0_i32 = arith.constant 0 : i32
    %c0_i32_0 = arith.constant 0 : i32
    %c0_i32_1 = arith.constant 0 : i32
    return %c0_i32, %c0_i32_0 : i32, i32
  }
  func.func @transform_4(%arg0: i32) -> (i32, i32) {
    %c0_i32 = arith.constant 0 : i32
    %c0_i32_0 = arith.constant 0 : i32
    %c0_i32_1 = arith.constant 0 : i32
    return %c0_i32, %c0_i32_0 : i32, i32
  }
  func.func @transform_5(%arg0: i32) -> (i32, i32, i32, i32) {
    %c0_i32 = arith.constant 0 : i32
    %c0_i32_0 = arith.constant 0 : i32
    %c0_i32_1 = arith.constant 0 : i32
    %c0_i32_2 = arith.constant 0 : i32
    return %arg0, %c0_i32, %c0_i32_0, %c0_i32_1 : i32, i32, i32, i32
  }
  func.func @transform_6(%arg0: i32) -> (i32, i32, i32) {
    %c0_i32 = arith.constant 0 : i32
    %c0_i32_0 = arith.constant 0 : i32
    %c0_i32_1 = arith.constant 0 : i32
    return %arg0, %c0_i32, %c0_i32_0 : i32, i32, i32
  }
  func.func @transform_7(%arg0: i32) -> (i32, i32, i32) {
    %c0_i32 = arith.constant 0 : i32
    %c0_i32_0 = arith.constant 0 : i32
    %c0_i32_1 = arith.constant 0 : i32
    return %arg0, %c0_i32, %c0_i32_0 : i32, i32, i32
  }
}

module attributes {stable_mosaic.version = 11 : i64} {
  func.func @bn_relu_conv_residual_kernel(%arg0: i32, %arg1: memref<1x16x16x128xf32, #tpu.memory_space<vmem>>, %arg2: memref<1x128xf32, #tpu.memory_space<vmem>>, %arg3: memref<1x128xf32, #tpu.memory_space<vmem>>, %arg4: memref<1152x128xf32, #tpu.memory_space<vmem>>, %arg5: memref<1x128xf32, #tpu.memory_space<vmem>>, %arg6: memref<1x16x16x128xf32, #tpu.memory_space<vmem>>, %arg7: memref<128x128xf32, #tpu.memory_space<vmem>>, %arg8: memref<1x128xf32, #tpu.memory_space<vmem>>, %arg9: memref<1x16x16x128xf32, #tpu.memory_space<vmem>>, %arg10: memref<1x18x18x128xf32, #tpu.memory_space<vmem>>, %arg11: memref<256x1152xf32, #tpu.memory_space<vmem>>) attributes {dimension_semantics = [#tpu.dimension_semantics<parallel>], iteration_bounds = array<i64: 2>, scalar_prefetch = 0 : i64, scratch_operands = 2 : i64, tpu.core_type = #tpu.core_type<tc>, window_params = [{transform_indices = @transform_0, window_bounds = array<i64: 1, 16, 16, 128>}, {pipeline_mode = #tpu.pipeline_mode<synchronous>, transform_indices = @transform_1, window_bounds = array<i64: 1, 128>}, {pipeline_mode = #tpu.pipeline_mode<synchronous>, transform_indices = @transform_2, window_bounds = array<i64: 1, 128>}, {pipeline_mode = #tpu.pipeline_mode<synchronous>, transform_indices = @transform_3, window_bounds = array<i64: 1152, 128>}, {pipeline_mode = #tpu.pipeline_mode<synchronous>, transform_indices = @transform_4, window_bounds = array<i64: 1, 128>}, {transform_indices = @transform_5, window_bounds = array<i64: 1, 16, 16, 128>}, {pipeline_mode = #tpu.pipeline_mode<synchronous>, transform_indices = @transform_6, window_bounds = array<i64: 128, 128>}, {pipeline_mode = #tpu.pipeline_mode<synchronous>, transform_indices = @transform_7, window_bounds = array<i64: 1, 128>}, {transform_indices = @transform_8, window_bounds = array<i64: 1, 16, 16, 128>}]} {
    %c0 = arith.constant 0 : index
    %c0_0 = arith.constant 0 : index
    %c0_1 = arith.constant 0 : index
    %c0_2 = arith.constant 0 : index
    %0 = vector.load %arg1[%c0, %c0_0, %c0_1, %c0_2] : memref<1x16x16x128xf32, #tpu.memory_space<vmem>>, vector<1x16x16x128xf32>
    %c0_3 = arith.constant 0 : index
    %c0_4 = arith.constant 0 : index
    %1 = vector.load %arg2[%c0_3, %c0_4] : memref<1x128xf32, #tpu.memory_space<vmem>>, vector<1x128xf32>
    %2 = vector.shape_cast %1 : vector<1x128xf32> to vector<1x1x1x128xf32>
    %3 = vector.broadcast %2 : vector<1x1x1x128xf32> to vector<1x16x16x128xf32>
    %4 = arith.mulf %0, %3 : vector<1x16x16x128xf32>
    %c0_5 = arith.constant 0 : index
    %c0_6 = arith.constant 0 : index
    %5 = vector.load %arg3[%c0_5, %c0_6] : memref<1x128xf32, #tpu.memory_space<vmem>>, vector<1x128xf32>
    %6 = vector.shape_cast %5 : vector<1x128xf32> to vector<1x1x1x128xf32>
    %7 = vector.broadcast %6 : vector<1x1x1x128xf32> to vector<1x16x16x128xf32>
    %8 = arith.addf %4, %7 : vector<1x16x16x128xf32>
    %cst = arith.constant 0.000000e+00 : f32
    %9 = vector.broadcast %cst : f32 to vector<1x16x16x128xf32>
    %10 = arith.maximumf %8, %9 : vector<1x16x16x128xf32>
    %cst_7 = arith.constant 0.000000e+00 : f32
    %11 = vector.broadcast %cst_7 : f32 to vector<1x18x18x128xf32>
    %c0_8 = arith.constant 0 : index
    %c0_9 = arith.constant 0 : index
    %c0_10 = arith.constant 0 : index
    %c0_11 = arith.constant 0 : index
    %12 = vector.load %arg10[%c0_8, %c0_9, %c0_10, %c0_11] : memref<1x18x18x128xf32, #tpu.memory_space<vmem>>, vector<1x18x18x128xf32>
    tpu.vector_store %arg10[%c0_8, %c0_9, %c0_10, %c0_11], %11 {strides = array<i32>} : memref<1x18x18x128xf32, #tpu.memory_space<vmem>>, vector<1x18x18x128xf32>,
    %c0_12 = arith.constant 0 : index
    %c1 = arith.constant 1 : index
    %c1_13 = arith.constant 1 : index
    %c0_14 = arith.constant 0 : index
    %13 = vector.load %arg10[%c0_12, %c1, %c1_13, %c0_14] : memref<1x18x18x128xf32, #tpu.memory_space<vmem>>, vector<1x16x16x128xf32>
    tpu.vector_store %arg10[%c0_12, %c1, %c1_13, %c0_14], %10 {strides = array<i32>} : memref<1x18x18x128xf32, #tpu.memory_space<vmem>>, vector<1x16x16x128xf32>,
    %c0_15 = arith.constant 0 : index
    %c0_16 = arith.constant 0 : index
    %c0_17 = arith.constant 0 : index
    %c0_18 = arith.constant 0 : index
    %14 = vector.load %arg10[%c0_15, %c0_16, %c0_17, %c0_18] : memref<1x18x18x128xf32, #tpu.memory_space<vmem>>, vector<1x18x18x128xf32>
    %15 = vector.extract_strided_slice %14 {offsets = [0, 0, 0, 0], sizes = [1, 16, 16, 128], strides = [1, 1, 1, 1]} : vector<1x18x18x128xf32> to vector<1x16x16x128xf32>
    %16 = vector.shape_cast %15 : vector<1x16x16x128xf32> to vector<16x16x128xf32>
    %17 = vector.shape_cast %16 : vector<16x16x128xf32> to vector<256x128xf32>
    %c0_19 = arith.constant 0 : index
    %c0_20 = arith.constant 0 : index
    %18 = vector.load %arg11[%c0_19, %c0_20] : memref<256x1152xf32, #tpu.memory_space<vmem>>, vector<256x128xf32>
    tpu.vector_store %arg11[%c0_19, %c0_20], %17 {strides = array<i32>} : memref<256x1152xf32, #tpu.memory_space<vmem>>, vector<256x128xf32>,
    %19 = vector.extract_strided_slice %14 {offsets = [0, 0, 1, 0], sizes = [1, 16, 16, 128], strides = [1, 1, 1, 1]} : vector<1x18x18x128xf32> to vector<1x16x16x128xf32>
    %20 = vector.shape_cast %19 : vector<1x16x16x128xf32> to vector<16x16x128xf32>
    %21 = vector.shape_cast %20 : vector<16x16x128xf32> to vector<256x128xf32>
    %c0_21 = arith.constant 0 : index
    %c128 = arith.constant 128 : index
    %22 = vector.load %arg11[%c0_21, %c128] : memref<256x1152xf32, #tpu.memory_space<vmem>>, vector<256x128xf32>
    tpu.vector_store %arg11[%c0_21, %c128], %21 {strides = array<i32>} : memref<256x1152xf32, #tpu.memory_space<vmem>>, vector<256x128xf32>,
    %23 = vector.extract_strided_slice %14 {offsets = [0, 0, 2, 0], sizes = [1, 16, 16, 128], strides = [1, 1, 1, 1]} : vector<1x18x18x128xf32> to vector<1x16x16x128xf32>
    %24 = vector.shape_cast %23 : vector<1x16x16x128xf32> to vector<16x16x128xf32>
    %25 = vector.shape_cast %24 : vector<16x16x128xf32> to vector<256x128xf32>
    %c0_22 = arith.constant 0 : index
    %c256 = arith.constant 256 : index
    %26 = vector.load %arg11[%c0_22, %c256] : memref<256x1152xf32, #tpu.memory_space<vmem>>, vector<256x128xf32>
    tpu.vector_store %arg11[%c0_22, %c256], %25 {strides = array<i32>} : memref<256x1152xf32, #tpu.memory_space<vmem>>, vector<256x128xf32>,
    %27 = vector.extract_strided_slice %14 {offsets = [0, 1, 0, 0], sizes = [1, 16, 16, 128], strides = [1, 1, 1, 1]} : vector<1x18x18x128xf32> to vector<1x16x16x128xf32>
    %28 = vector.shape_cast %27 : vector<1x16x16x128xf32> to vector<16x16x128xf32>
    %29 = vector.shape_cast %28 : vector<16x16x128xf32> to vector<256x128xf32>
    %c0_23 = arith.constant 0 : index
    %c384 = arith.constant 384 : index
    %30 = vector.load %arg11[%c0_23, %c384] : memref<256x1152xf32, #tpu.memory_space<vmem>>, vector<256x128xf32>
    tpu.vector_store %arg11[%c0_23, %c384], %29 {strides = array<i32>} : memref<256x1152xf32, #tpu.memory_space<vmem>>, vector<256x128xf32>,
    %31 = vector.extract_strided_slice %14 {offsets = [0, 1, 1, 0], sizes = [1, 16, 16, 128], strides = [1, 1, 1, 1]} : vector<1x18x18x128xf32> to vector<1x16x16x128xf32>
    %32 = vector.shape_cast %31 : vector<1x16x16x128xf32> to vector<16x16x128xf32>
    %33 = vector.shape_cast %32 : vector<16x16x128xf32> to vector<256x128xf32>
    %c0_24 = arith.constant 0 : index
    %c512 = arith.constant 512 : index
    %34 = vector.load %arg11[%c0_24, %c512] : memref<256x1152xf32, #tpu.memory_space<vmem>>, vector<256x128xf32>
    tpu.vector_store %arg11[%c0_24, %c512], %33 {strides = array<i32>} : memref<256x1152xf32, #tpu.memory_space<vmem>>, vector<256x128xf32>,
    %35 = vector.extract_strided_slice %14 {offsets = [0, 1, 2, 0], sizes = [1, 16, 16, 128], strides = [1, 1, 1, 1]} : vector<1x18x18x128xf32> to vector<1x16x16x128xf32>
    %36 = vector.shape_cast %35 : vector<1x16x16x128xf32> to vector<16x16x128xf32>
    %37 = vector.shape_cast %36 : vector<16x16x128xf32> to vector<256x128xf32>
    %c0_25 = arith.constant 0 : index
    %c640 = arith.constant 640 : index
    %38 = vector.load %arg11[%c0_25, %c640] : memref<256x1152xf32, #tpu.memory_space<vmem>>, vector<256x128xf32>
    tpu.vector_store %arg11[%c0_25, %c640], %37 {strides = array<i32>} : memref<256x1152xf32, #tpu.memory_space<vmem>>, vector<256x128xf32>,
    %39 = vector.extract_strided_slice %14 {offsets = [0, 2, 0, 0], sizes = [1, 16, 16, 128], strides = [1, 1, 1, 1]} : vector<1x18x18x128xf32> to vector<1x16x16x128xf32>
    %40 = vector.shape_cast %39 : vector<1x16x16x128xf32> to vector<16x16x128xf32>
    %41 = vector.shape_cast %40 : vector<16x16x128xf32> to vector<256x128xf32>
    %c0_26 = arith.constant 0 : index
    %c768 = arith.constant 768 : index
    %42 = vector.load %arg11[%c0_26, %c768] : memref<256x1152xf32, #tpu.memory_space<vmem>>, vector<256x128xf32>
    tpu.vector_store %arg11[%c0_26, %c768], %41 {strides = array<i32>} : memref<256x1152xf32, #tpu.memory_space<vmem>>, vector<256x128xf32>,
    %43 = vector.extract_strided_slice %14 {offsets = [0, 2, 1, 0], sizes = [1, 16, 16, 128], strides = [1, 1, 1, 1]} : vector<1x18x18x128xf32> to vector<1x16x16x128xf32>
    %44 = vector.shape_cast %43 : vector<1x16x16x128xf32> to vector<16x16x128xf32>
    %45 = vector.shape_cast %44 : vector<16x16x128xf32> to vector<256x128xf32>
    %c0_27 = arith.constant 0 : index
    %c896 = arith.constant 896 : index
    %46 = vector.load %arg11[%c0_27, %c896] : memref<256x1152xf32, #tpu.memory_space<vmem>>, vector<256x128xf32>
    tpu.vector_store %arg11[%c0_27, %c896], %45 {strides = array<i32>} : memref<256x1152xf32, #tpu.memory_space<vmem>>, vector<256x128xf32>,
    %47 = vector.extract_strided_slice %14 {offsets = [0, 2, 2, 0], sizes = [1, 16, 16, 128], strides = [1, 1, 1, 1]} : vector<1x18x18x128xf32> to vector<1x16x16x128xf32>
    %48 = vector.shape_cast %47 : vector<1x16x16x128xf32> to vector<16x16x128xf32>
    %49 = vector.shape_cast %48 : vector<16x16x128xf32> to vector<256x128xf32>
    %c0_28 = arith.constant 0 : index
    %c1024 = arith.constant 1024 : index
    %50 = vector.load %arg11[%c0_28, %c1024] : memref<256x1152xf32, #tpu.memory_space<vmem>>, vector<256x128xf32>
    tpu.vector_store %arg11[%c0_28, %c1024], %49 {strides = array<i32>} : memref<256x1152xf32, #tpu.memory_space<vmem>>, vector<256x128xf32>,
    %c0_29 = arith.constant 0 : index
    %c0_30 = arith.constant 0 : index
    %51 = vector.load %arg11[%c0_29, %c0_30] : memref<256x1152xf32, #tpu.memory_space<vmem>>, vector<256x1152xf32>
    %c0_31 = arith.constant 0 : index
    %c0_32 = arith.constant 0 : index
    %52 = vector.load %arg4[%c0_31, %c0_32] : memref<1152x128xf32, #tpu.memory_space<vmem>>, vector<1152x128xf32>
    %cst_33 = arith.constant dense<0.000000e+00> : vector<256x128xf32>
    %53 = tpu.matmul %51, %52, %cst_33 {dimension_numbers = #tpu.dot_dimension_numbers<[1], [0], [0], [1], [0, 0, 1, 1], [], []>} : vector<256x1152xf32>, vector<1152x128xf32>, vector<256x128xf32> -> vector<256x128xf32>
    %c0_34 = arith.constant 0 : index
    %c0_35 = arith.constant 0 : index
    %54 = vector.load %arg5[%c0_34, %c0_35] : memref<1x128xf32, #tpu.memory_space<vmem>>, vector<1x128xf32>
    %55 = vector.broadcast %54 : vector<1x128xf32> to vector<256x128xf32>
    %56 = arith.addf %53, %55 : vector<256x128xf32>
    %c0_36 = arith.constant 0 : index
    %c0_37 = arith.constant 0 : index
    %c0_38 = arith.constant 0 : index
    %c0_39 = arith.constant 0 : index
    %57 = vector.load %arg6[%c0_36, %c0_37, %c0_38, %c0_39] : memref<1x16x16x128xf32, #tpu.memory_space<vmem>>, vector<1x16x16x128xf32>
    %58 = vector.shape_cast %57 : vector<1x16x16x128xf32> to vector<256x128xf32>
    %c0_40 = arith.constant 0 : index
    %c0_41 = arith.constant 0 : index
    %59 = vector.load %arg7[%c0_40, %c0_41] : memref<128x128xf32, #tpu.memory_space<vmem>>, vector<128x128xf32>
    %cst_42 = arith.constant dense<0.000000e+00> : vector<256x128xf32>
    %60 = tpu.matmul %58, %59, %cst_42 {dimension_numbers = #tpu.dot_dimension_numbers<[1], [0], [0], [1], [0, 0, 1, 1], [], []>} : vector<256x128xf32>, vector<128x128xf32>, vector<256x128xf32> -> vector<256x128xf32>
    %61 = arith.addf %56, %60 : vector<256x128xf32>
    %c0_43 = arith.constant 0 : index
    %c0_44 = arith.constant 0 : index
    %62 = vector.load %arg8[%c0_43, %c0_44] : memref<1x128xf32, #tpu.memory_space<vmem>>, vector<1x128xf32>
    %63 = vector.broadcast %62 : vector<1x128xf32> to vector<256x128xf32>
    %64 = arith.addf %61, %63 : vector<256x128xf32>
    %65 = vector.shape_cast %64 : vector<256x128xf32> to vector<1x16x16x128xf32>
    %c0_45 = arith.constant 0 : index
    %c0_46 = arith.constant 0 : index
    %c0_47 = arith.constant 0 : index
    %c0_48 = arith.constant 0 : index
    %66 = vector.load %arg9[%c0_45, %c0_46, %c0_47, %c0_48] : memref<1x16x16x128xf32, #tpu.memory_space<vmem>>, vector<1x16x16x128xf32>
    tpu.vector_store %arg9[%c0_45, %c0_46, %c0_47, %c0_48], %65 {strides = array<i32>} : memref<1x16x16x128xf32, #tpu.memory_space<vmem>>, vector<1x16x16x128xf32>,
    return
  }
  func.func @transform_0(%arg0: i32) -> (i32, i32, i32, i32) {
    %c0_i32 = arith.constant 0 : i32
    %c0_i32_0 = arith.constant 0 : i32
    %c0_i32_1 = arith.constant 0 : i32
    %c0_i32_2 = arith.constant 0 : i32
    return %arg0, %c0_i32, %c0_i32_0, %c0_i32_1 : i32, i32, i32, i32
  }
  func.func @transform_1(%arg0: i32) -> (i32, i32) {
    %c0_i32 = arith.constant 0 : i32
    %c0_i32_0 = arith.constant 0 : i32
    %c0_i32_1 = arith.constant 0 : i32
    return %c0_i32, %c0_i32_0 : i32, i32
  }
  func.func @transform_2(%arg0: i32) -> (i32, i32) {
    %c0_i32 = arith.constant 0 : i32
    %c0_i32_0 = arith.constant 0 : i32
    %c0_i32_1 = arith.constant 0 : i32
    return %c0_i32, %c0_i32_0 : i32, i32
  }
  func.func @transform_3(%arg0: i32) -> (i32, i32) {
    %c0_i32 = arith.constant 0 : i32
    %c0_i32_0 = arith.constant 0 : i32
    %c0_i32_1 = arith.constant 0 : i32
    return %c0_i32, %c0_i32_0 : i32, i32
  }
  func.func @transform_4(%arg0: i32) -> (i32, i32) {
    %c0_i32 = arith.constant 0 : i32
    %c0_i32_0 = arith.constant 0 : i32
    %c0_i32_1 = arith.constant 0 : i32
    return %c0_i32, %c0_i32_0 : i32, i32
  }
  func.func @transform_5(%arg0: i32) -> (i32, i32, i32, i32) {
    %c0_i32 = arith.constant 0 : i32
    %c0_i32_0 = arith.constant 0 : i32
    %c0_i32_1 = arith.constant 0 : i32
    %c0_i32_2 = arith.constant 0 : i32
    return %arg0, %c0_i32, %c0_i32_0, %c0_i32_1 : i32, i32, i32, i32
  }
  func.func @transform_6(%arg0: i32) -> (i32, i32) {
    %c0_i32 = arith.constant 0 : i32
    %c0_i32_0 = arith.constant 0 : i32
    %c0_i32_1 = arith.constant 0 : i32
    return %c0_i32, %c0_i32_0 : i32, i32
  }
  func.func @transform_7(%arg0: i32) -> (i32, i32) {
    %c0_i32 = arith.constant 0 : i32
    %c0_i32_0 = arith.constant 0 : i32
    %c0_i32_1 = arith.constant 0 : i32
    return %c0_i32, %c0_i32_0 : i32, i32
  }
  func.func @transform_8(%arg0: i32) -> (i32, i32, i32, i32) {
    %c0_i32 = arith.constant 0 : i32
    %c0_i32_0 = arith.constant 0 : i32
    %c0_i32_1 = arith.constant 0 : i32
    %c0_i32_2 = arith.constant 0 : i32
    return %arg0, %c0_i32, %c0_i32_0, %c0_i32_1 : i32, i32, i32, i32
  }
}

</mosaic_0001>

<llo_original>
// kernel: preact_block.3
$region0: #{preact_block.3}
  #allocation0 [shape = 'u32[]', space=smem, size = 0x4, offset = 0x4, fixed_abs, tag = 'smem constant byte address 0x4 - core index']
  #allocation1 [shape = 'u32[72,128]{1,0:T(1,128)}', space=vmem, size = 0x9000, scoped, tag = 'internal scratch']
  %s0 = inlined_call_operand.vmem [shape: f32[512,128], index: 0, kind: input, shape index: {}]
  %s1 = inlined_call_operand.vmem [shape: f32[2,1,128], index: 1, kind: output, shape index: {0}]
  %s2 = inlined_call_operand.vmem [shape: f32[2,1,128], index: 2, kind: output, shape index: {1}]
  %3 = xla_tuple %s1, %s2
  %s4 = sld [smem:[#allocation0]]
  $region49: #{preact_block.3} parent=0
    _
  %s6 = ssub.s32 1, %s4
  %s7 = scalar_select 0, %s6, %s4
  loop: start=0, step=1, limit=4
  $region2: #{preact_block.3} parent=0 // loop_pre_header
    _
  $region3: #{preact_block.3} parent=0 // loop_header
    %s9 = sphi 0, %s13
    %p10 = scmp.ge.s32.totalorder %s9, 4
    %s16 = sphi 0, %s28
    %s17 = sphi 0, %s24
    %s18 = sphi 0, %s16
    %s19 = sphi 0, %s17
    %s20 = sphi 0, %s18
    %s21 = sphi 0, %s19
    %s33 = sphi 0, %s35
    %s36 = sphi 0, %s33
    %s37 = sphi 0, %s36
    %s53 = sphi 0, %s37
    %s59 = sphi 0, %s61
    %s62 = sphi 0, %s59
    %s63 = sphi 0, %s62
    %s79 = sphi 0, %s63
    %s85 = sphi 0, %s87
    %s88 = sphi 0, %s85
    %s89 = sphi 0, %s88
    %s105 = sphi 0, %s89
  $region4: #{preact_block.3} parent=0 // loop_header_branch
    %12 = sbr.rel (%p10) target = $region8
  $region5: #{preact_block.3} parent=0 // loop_body
    %s14 = ssub.s32 %s9, 1
    %s15 = ssub.s32 %s9, 2
    %s22 = sadd.s32 1, %s17
    %p23 = scmp.ge.s32.totalorder %s22, 1
    %s24 = scalar_select %p23, 0, %s22
    %s25 = sadd.s32 1, %s16
    %s26 = scalar_select %p23, %s25, %s16
    %p27 = scmp.ge.s32.totalorder %s26, 2
    %s28 = scalar_select %p27, 0, %s26
    %s29 = sadd.s32 %s16, %s17
    %s30 = sadd.s32 %s28, %s24
    %s31 = ssub.s32 %s29, %s30
    %p32 = scmp.eq.s32.totalorder %s31, 0
    %s34 = sadd.s32 %s33, 1
    %s35 = scalar_select %p32, %s33, %s34
    %p38 = pneg %p32
    %p39 = scmp.eq.s32.totalorder %s9, 1
    %p40 = por %p38, %p39
    %p41 = scmp.ne.s32.totalorder %s33, %s36
    %p42 = scmp.eq.s32.totalorder %s9, 0
    %p43 = por %p41, %p42
    %p44 = scmp.ne.s32.totalorder %s33, %s36
    %p45 = scmp.eq.s32.totalorder %s14, 1
    %p46 = por %p44, %p45
    %p47 = scmp.ne.s32.totalorder %s36, %s37
    %p48 = scmp.eq.s32.totalorder %s14, 0
    %p49 = por %p47, %p48
    %p50 = scmp.ne.s32.totalorder %s36, %s37
    %p51 = scmp.eq.s32.totalorder %s15, 1
    %p52 = por %p50, %p51
    %p54 = scmp.ne.s32.totalorder %s37, %s53
    %p55 = scmp.eq.s32.totalorder %s15, 0
    %p56 = por %p54, %p55
    %s57 = ssub.s32 %s16, %s28
    %p58 = scmp.eq.s32.totalorder %s57, 0
    %s60 = sadd.s32 %s59, 1
    %s61 = scalar_select %p58, %s59, %s60
    %p64 = pneg %p58
    %p65 = scmp.eq.s32.totalorder %s9, 1
    %p66 = por %p64, %p65
    %p67 = scmp.ne.s32.totalorder %s59, %s62
    %p68 = scmp.eq.s32.totalorder %s9, 0
    %p69 = por %p67, %p68
    %p70 = scmp.ne.s32.totalorder %s59, %s62
    %p71 = scmp.eq.s32.totalorder %s14, 1
    %p72 = por %p70, %p71
    %p73 = scmp.ne.s32.totalorder %s62, %s63
    %p74 = scmp.eq.s32.totalorder %s14, 0
    %p75 = por %p73, %p74
    %p76 = scmp.ne.s32.totalorder %s62, %s63
    %p77 = scmp.eq.s32.totalorder %s15, 1
    %p78 = por %p76, %p77
    %p80 = scmp.ne.s32.totalorder %s63, %s79
    %p81 = scmp.eq.s32.totalorder %s15, 0
    %p82 = por %p80, %p81
    %s83 = ssub.s32 %s16, %s28
    %p84 = scmp.eq.s32.totalorder %s83, 0
    %s86 = sadd.s32 %s85, 1
    %s87 = scalar_select %p84, %s85, %s86
    %p90 = pneg %p84
    %p91 = scmp.eq.s32.totalorder %s9, 1
    %p92 = por %p90, %p91
    %p93 = scmp.ne.s32.totalorder %s85, %s88
    %p94 = scmp.eq.s32.totalorder %s9, 0
    %p95 = por %p93, %p94
    %p96 = scmp.ne.s32.totalorder %s85, %s88
    %p97 = scmp.eq.s32.totalorder %s14, 1
    %p98 = por %p96, %p97
    %p99 = scmp.ne.s32.totalorder %s88, %s89
    %p100 = scmp.eq.s32.totalorder %s14, 0
    %p101 = por %p99, %p100
    %p102 = scmp.ne.s32.totalorder %s88, %s89
    %p103 = scmp.eq.s32.totalorder %s15, 1
    %p104 = por %p102, %p103
    %p106 = scmp.ne.s32.totalorder %s89, %s105
    %p107 = scmp.eq.s32.totalorder %s15, 0
    %p108 = por %p106, %p107
    %p109 = scmp.le.s32.totalorder 1, %s9
    %p110 = scmp.lt.s32.totalorder %s9, 3
    %p111 = pnand %p109, %p110
    %p112 = pneg %p111
    // Predicated region
    $region9: #{preact_block.3} parent=5 // pred_check
      _
    $region10: #{preact_block.3} parent=5 // pred_check_branch
      %114 = sbr.rel (%p111) target = $region12
    $region11: #{preact_block.3} parent=5 // pred_region
      %s115 = ssub.s32 %s9, 1
    $region12: #{preact_block.3} parent=5 // pred_fallthru
      _
    %p116 = scmp.lt.s32.totalorder %s9, 2
    // Predicated region
    $region13: #{preact_block.3} parent=5 // pred_check
      %p117 = pneg %p116
    $region14: #{preact_block.3} parent=5 // pred_check_branch
      %119 = sbr.rel (%p117) target = $region16
    $region15: #{preact_block.3} parent=5 // pred_region
      // Predicated region
      $region17: #{preact_block.3} parent=15 // pred_check
        %p120 = pneg %p43
      $region18: #{preact_block.3} parent=15 // pred_check_branch
        %122 = sbr.rel (%p120) target = $region20
      $region19: #{preact_block.3} parent=15 // pred_region
        %s123 = sadd.s32 %s16, %s17
        %s124 = smul.u32 32, %s123
        %p125 = scmp.lt.s32.totalorder %s124, 63
        %s126 = scalar_select %p125, %s124, 63
        %s127 = smul.addr %s126, 8
        %s128 = scalar_lea.vmem %s0, %s127
        %s129 = sadd.s32 %s16, %s17
        %s130 = smul.u32 32, %s129
      $region20: #{preact_block.3} parent=15 // pred_fallthru
        _
    $region16: #{preact_block.3} parent=5 // pred_fallthru
      _
    %p131 = scmp.le.s32.totalorder 1, %s9
    %p132 = scmp.lt.s32.totalorder %s9, 3
    %p133 = pnand %p131, %p132
    %p134 = pneg %p133
    // Predicated region
    $region21: #{preact_block.3} parent=5 // pred_check
      _
    $region22: #{preact_block.3} parent=5 // pred_check_branch
      %136 = sbr.rel (%p133) target = $region24
    $region23: #{preact_block.3} parent=5 // pred_region
      %s137 = ssub.s32 %s9, 1
      %s138 = sadd.s32 %s18, %s19
      %s139 = smul.u32 32, %s138
      %p140 = scmp.lt.s32.totalorder %s139, 63
      %s141 = scalar_select %p140, %s139, 63
      %s142 = smul.addr %s141, 8
      %s143 = scalar_lea.vmem %s0, %s142
      %p144 = pneg %p49
      %p145 = pneg %p46
      %p146 = pneg %p75
      %p147 = pneg %p72
      %p148 = scmp.lt.s32.totalorder %s18, 1
      %s149 = scalar_select %p148, %s18, 1
      %s150 = scalar_lea.vmem %s1, %s149
      %p151 = pneg %p101
      %p152 = pneg %p98
      %p153 = scmp.lt.s32.totalorder %s18, 1
      %s154 = scalar_select %p153, %s18, 1
      %s155 = scalar_lea.vmem %s2, %s154
      %s156 = sadd.s32 %s18, %s19
      %s157 = smul.u32 32, %s156
      %p158 = scmp.lt.s32.totalorder %s157, 63
      %s159 = scalar_select %p158, %s157, 63
      %s160 = smul.addr %s159, 8
      %s161 = scalar_lea.vmem %s0, %s160
      %s162 = sadd.s32 %s18, %s19
      %s163 = smul.u32 32, %s162
      %p164 = scmp.lt.s32.totalorder %s18, 1
      %s165 = scalar_select %p164, %s18, 1
      %s166 = scalar_lea.vmem %s1, %s165
      %p167 = scmp.lt.s32.totalorder %s18, 1
      %s168 = scalar_select %p167, %s18, 1
      %s169 = scalar_lea.vmem %s2, %s168
      %p170 = scmp.eq.s32.totalorder %s19, 0
      // Predicated region
      $region25: #{preact_block.3} parent=23 // pred_check
        %p171 = pneg %p170
      $region26: #{preact_block.3} parent=23 // pred_check_branch
        %173 = sbr.rel (%p171) target = $region28
      $region27: #{preact_block.3} parent=23 // pred_region
        %174 = vst [vmem:[%s166] sm:$0x1] 0.0
        %175 = vst [vmem:[%s169] sm:$0x1] 0.0
      $region28: #{preact_block.3} parent=23 // pred_fallthru
        _
      %v176 = vld [vmem:[%s161] sm:$0xff]
      %v177 = vld [vmem:[%s161 + $0x8] sm:$0xff]
      %v178 = vld [vmem:[%s161 + $0x10] sm:$0xff]
      %v179 = vld [vmem:[%s161 + $0x18] sm:$0xff]
      %v180 = vld [vmem:[%s161 + $0x20] sm:$0xff]
      %v181 = vld [vmem:[%s161 + $0x28] sm:$0xff]
      %v182 = vld [vmem:[%s161 + $0x30] sm:$0xff]
      %v183 = vld [vmem:[%s161 + $0x38] sm:$0xff]
      %v184 = vld [vmem:[%s161 + $0x40] sm:$0xff]
      %v185 = vld [vmem:[%s161 + $0x48] sm:$0xff]
      %v186 = vld [vmem:[%s161 + $0x50] sm:$0xff]
      %v187 = vld [vmem:[%s161 + $0x58] sm:$0xff]
      %v188 = vld [vmem:[%s161 + $0x60] sm:$0xff]
      %v189 = vld [vmem:[%s161 + $0x68] sm:$0xff]
      %v190 = vld [vmem:[%s161 + $0x70] sm:$0xff]
      %v191 = vld [vmem:[%s161 + $0x78] sm:$0xff]
      %v192 = vld [vmem:[%s161 + $0x80] sm:$0xff]
      %v193 = vld [vmem:[%s161 + $0x88] sm:$0xff]
      %v194 = vld [vmem:[%s161 + $0x90] sm:$0xff]
      %v195 = vld [vmem:[%s161 + $0x98] sm:$0xff]
      %v196 = vld [vmem:[%s161 + $0xa0] sm:$0xff]
      %v197 = vld [vmem:[%s161 + $0xa8] sm:$0xff]
      %v198 = vld [vmem:[%s161 + $0xb0] sm:$0xff]
      %v199 = vld [vmem:[%s161 + $0xb8] sm:$0xff]
      %v200 = vld [vmem:[%s161 + $0xc0] sm:$0xff]
      %v201 = vld [vmem:[%s161 + $0xc8] sm:$0xff]
      %v202 = vld [vmem:[%s161 + $0xd0] sm:$0xff]
      %v203 = vld [vmem:[%s161 + $0xd8] sm:$0xff]
      %v204 = vld [vmem:[%s161 + $0xe0] sm:$0xff]
      %v205 = vld [vmem:[%s161 + $0xe8] sm:$0xff]
      %v206 = vld [vmem:[%s161 + $0xf0] sm:$0xff]
      %v207 = vld [vmem:[%s161 + $0xf8] sm:$0xff]
      %v208 = vld [vmem:[%s166] sm:$0x1]
      %v209 = vadd.f32 %v176, %v177
      %v210 = vadd.f32 %v209, %v178
      %v211 = vadd.f32 %v210, %v179
      %v212 = vadd.f32 %v211, %v180
      %v213 = vadd.f32 %v212, %v181
      %v214 = vadd.f32 %v213, %v182
      %v215 = vadd.f32 %v214, %v183
      %v216 = vadd.f32 %v215, %v184
      %v217 = vadd.f32 %v216, %v185
      %v218 = vadd.f32 %v217, %v186
      %v219 = vadd.f32 %v218, %v187
      %v220 = vadd.f32 %v219, %v188
      %v221 = vadd.f32 %v220, %v189
      %v222 = vadd.f32 %v221, %v190
      %v223 = vadd.f32 %v222, %v191
      %v224 = vadd.f32 %v223, %v192
      %v225 = vadd.f32 %v224, %v193
      %v226 = vadd.f32 %v225, %v194
      %v227 = vadd.f32 %v226, %v195
      %v228 = vadd.f32 %v227, %v196
      %v229 = vadd.f32 %v228, %v197
      %v230 = vadd.f32 %v229, %v198
      %v231 = vadd.f32 %v230, %v199
      %v232 = vadd.f32 %v231, %v200
      %v233 = vadd.f32 %v232, %v201
      %v234 = vadd.f32 %v233, %v202
      %v235 = vadd.f32 %v234, %v203
      %v236 = vadd.f32 %v235, %v204
      %v237 = vadd.f32 %v236, %v205
      %v238 = vadd.f32 %v237, %v206
      %v239 = vadd.f32 %v238, %v207
      %v240 = vrot.slane %v239, 4
      %v241 = vadd.f32 %v239, %v240
      %v242 = vrot.slane %v241, 2
      %v243 = vadd.f32 %v241, %v242
      %v244 = vrot.slane %v243, 1
      %v245 = vadd.f32 %v243, %v244
      %v246 = vadd.f32 %v208, %v245
      %247 = vst [vmem:[%s166] sm:$0x1] %v246
      %v248 = vld [vmem:[%s169] sm:$0x1]
      %v249 = vmul.f32 %v176, %v176
      %v250 = vmul.f32 %v177, %v177
      %v251 = vmul.f32 %v178, %v178
      %v252 = vmul.f32 %v179, %v179
      %v253 = vmul.f32 %v180, %v180
      %v254 = vmul.f32 %v181, %v181
      %v255 = vmul.f32 %v182, %v182
      %v256 = vmul.f32 %v183, %v183
      %v257 = vmul.f32 %v184, %v184
      %v258 = vmul.f32 %v185, %v185
      %v259 = vmul.f32 %v186, %v186
      %v260 = vmul.f32 %v187, %v187
      %v261 = vmul.f32 %v188, %v188
      %v262 = vmul.f32 %v189, %v189
      %v263 = vmul.f32 %v190, %v190
      %v264 = vmul.f32 %v191, %v191
      %v265 = vmul.f32 %v192, %v192
      %v266 = vmul.f32 %v193, %v193
      %v267 = vmul.f32 %v194, %v194
      %v268 = vmul.f32 %v195, %v195
      %v269 = vmul.f32 %v196, %v196
      %v270 = vmul.f32 %v197, %v197
      %v271 = vmul.f32 %v198, %v198
      %v272 = vmul.f32 %v199, %v199
      %v273 = vmul.f32 %v200, %v200
      %v274 = vmul.f32 %v201, %v201
      %v275 = vmul.f32 %v202, %v202
      %v276 = vmul.f32 %v203, %v203
      %v277 = vmul.f32 %v204, %v204
      %v278 = vmul.f32 %v205, %v205
      %v279 = vmul.f32 %v206, %v206
      %v280 = vmul.f32 %v207, %v207
      %v281 = vadd.f32 %v249, %v250
      %v282 = vadd.f32 %v281, %v251
      %v283 = vadd.f32 %v282, %v252
      %v284 = vadd.f32 %v283, %v253
      %v285 = vadd.f32 %v284, %v254
      %v286 = vadd.f32 %v285, %v255
      %v287 = vadd.f32 %v286, %v256
      %v288 = vadd.f32 %v287, %v257
      %v289 = vadd.f32 %v288, %v258
      %v290 = vadd.f32 %v289, %v259
      %v291 = vadd.f32 %v290, %v260
      %v292 = vadd.f32 %v291, %v261
      %v293 = vadd.f32 %v292, %v262
      %v294 = vadd.f32 %v293, %v263
      %v295 = vadd.f32 %v294, %v264
      %v296 = vadd.f32 %v295, %v265
      %v297 = vadd.f32 %v296, %v266
      %v298 = vadd.f32 %v297, %v267
      %v299 = vadd.f32 %v298, %v268
      %v300 = vadd.f32 %v299, %v269
      %v301 = vadd.f32 %v300, %v270
      %v302 = vadd.f32 %v301, %v271
      %v303 = vadd.f32 %v302, %v272
      %v304 = vadd.f32 %v303, %v273
      %v305 = vadd.f32 %v304, %v274
      %v306 = vadd.f32 %v305, %v275
      %v307 = vadd.f32 %v306, %v276
      %v308 = vadd.f32 %v307, %v277
      %v309 = vadd.f32 %v308, %v278
      %v310 = vadd.f32 %v309, %v279
      %v311 = vadd.f32 %v310, %v280
      %v312 = vrot.slane %v311, 4
      %v313 = vadd.f32 %v311, %v312
      %v314 = vrot.slane %v313, 2
      %v315 = vadd.f32 %v313, %v314
      %v316 = vrot.slane %v315, 1
      %v317 = vadd.f32 %v315, %v316
      %v318 = vadd.f32 %v248, %v317
      %319 = vst [vmem:[%s169] sm:$0x1] %v318
      %p320 = scmp.lt.s32.totalorder %s18, 1
      %s321 = scalar_select %p320, %s18, 1
      %s322 = scalar_lea.vmem %s1, %s321
      %p323 = scmp.lt.s32.totalorder %s18, 1
      %s324 = scalar_select %p323, %s18, 1
      %s325 = scalar_lea.vmem %s2, %s324
      // Predicated region
      $region29: #{preact_block.3} parent=23 // pred_check
        %p326 = pneg %p72
      $region30: #{preact_block.3} parent=23 // pred_check_branch
        %328 = sbr.rel (%p326) target = $region32
      $region31: #{preact_block.3} parent=23 // pred_region
        _
      $region32: #{preact_block.3} parent=23 // pred_fallthru
        _
      // Predicated region
      $region33: #{preact_block.3} parent=23 // pred_check
        %p329 = pneg %p98
      $region34: #{preact_block.3} parent=23 // pred_check_branch
        %331 = sbr.rel (%p329) target = $region36
      $region35: #{preact_block.3} parent=23 // pred_region
        _
      $region36: #{preact_block.3} parent=23 // pred_fallthru
        _
    $region24: #{preact_block.3} parent=5 // pred_fallthru
      _
    %p332 = scmp.le.s32.totalorder 2, %s9
    // Predicated region
    $region37: #{preact_block.3} parent=5 // pred_check
      %p333 = pneg %p332
    $region38: #{preact_block.3} parent=5 // pred_check_branch
      %335 = sbr.rel (%p333) target = $region40
    $region39: #{preact_block.3} parent=5 // pred_region
      %s336 = ssub.s32 %s9, 2
      // Predicated region
      $region41: #{preact_block.3} parent=39 // pred_check
        %p337 = pneg %p78
      $region42: #{preact_block.3} parent=39 // pred_check_branch
        %339 = sbr.rel (%p337) target = $region44
      $region43: #{preact_block.3} parent=39 // pred_region
        %p340 = scmp.lt.s32.totalorder %s20, 1
        %s341 = scalar_select %p340, %s20, 1
        %s342 = scalar_lea.vmem %s1, %s341
      $region44: #{preact_block.3} parent=39 // pred_fallthru
        _
      // Predicated region
      $region45: #{preact_block.3} parent=39 // pred_check
        %p343 = pneg %p104
      $region46: #{preact_block.3} parent=39 // pred_check_branch
        %345 = sbr.rel (%p343) target = $region48
      $region47: #{preact_block.3} parent=39 // pred_region
        %p346 = scmp.lt.s32.totalorder %s20, 1
        %s347 = scalar_select %p346, %s20, 1
        %s348 = scalar_lea.vmem %s2, %s347
      $region48: #{preact_block.3} parent=39 // pred_fallthru
        _
    $region40: #{preact_block.3} parent=5 // pred_fallthru
      _
  $region6: #{preact_block.3} parent=0 // loop_footer
    %s13 = sadd.s32 1, %s9
  $region7: #{preact_block.3} parent=0 // loop_footer_branch
    %8 = sbr.rel target = $region3
  $region8: #{preact_block.3} parent=0 // loop_exit
    _

// kernel: preact_block.4
$region0: #{preact_block.4}
  #allocation0 [shape = 'u32[]', space=smem, size = 0x4, offset = 0x4, fixed_abs, tag = 'smem constant byte address 0x4 - core index']
  #allocation1 [shape = 'u32[72,128]{1,0:T(1,128)}', space=vmem, size = 0x9000, scoped, tag = 'internal scratch']
  #allocation2 [shape = 'f32[1,18,18,128]{3,2,1,0:T(8,128)}', space=vmem, size = 0x36000, scoped, tag = 'scratch operand']
  #allocation3 [shape = 'f32[256,1152]{1,0:T(8,128)}', space=vmem, size = 0x120000, scoped, tag = 'scratch operand']
  %s0 = inlined_call_operand.vmem [shape: f32[2,16,16,128], index: 0, kind: input, shape index: {}]
  %s1 = inlined_call_operand.vmem [shape: f32[1,128], index: 1, kind: input, shape index: {}]
  %s2 = inlined_call_operand.vmem [shape: f32[1,128], index: 2, kind: input, shape index: {}]
  %s3 = inlined_call_operand.vmem [shape: f32[1152,128], index: 3, kind: input, shape index: {}]
  %s4 = inlined_call_operand.vmem [shape: f32[1,128], index: 4, kind: input, shape index: {}]
  %s5 = inlined_call_operand.vmem [shape: f32[2,16,16,128], index: 5, kind: output, shape index: {0}]
  %s6 = inlined_call_operand.vmem [shape: f32[2,1,128], index: 6, kind: output, shape index: {1}]
  %s7 = inlined_call_operand.vmem [shape: f32[2,1,128], index: 7, kind: output, shape index: {2}]
  %8 = xla_tuple %s5, %s6, %s7
  %s9 = sld [smem:[#allocation0]]
  $region69: #{preact_block.4} parent=0
    _
  %s11 = ssub.s32 1, %s9
  %s12 = scalar_select 0, %s11, %s9
  loop: start=0, step=1, limit=4
  $region2: #{preact_block.4} parent=0 // loop_pre_header
    _
  $region3: #{preact_block.4} parent=0 // loop_header
    %s14 = sphi 0, %s18
    %p15 = scmp.ge.s32.totalorder %s14, 4
    %s24 = sphi 0, %s26
    %s27 = sphi 0, %s24
    %s28 = sphi 0, %s27
    %s44 = sphi 0, %s28
    %s48 = sphi 0, %s48
    %s50 = sphi 0, %s48
    %s51 = sphi 0, %s50
    %s65 = sphi 0, %s51
    %s69 = sphi 0, %s69
    %s71 = sphi 0, %s69
    %s72 = sphi 0, %s71
    %s86 = sphi 0, %s72
    %s90 = sphi 0, %s90
    %s92 = sphi 0, %s90
    %s93 = sphi 0, %s92
    %s107 = sphi 0, %s93
    %s111 = sphi 0, %s111
    %s113 = sphi 0, %s111
    %s114 = sphi 0, %s113
    %s128 = sphi 0, %s114
    %s134 = sphi 0, %s136
    %s137 = sphi 0, %s134
    %s138 = sphi 0, %s137
    %s154 = sphi 0, %s138
    %s160 = sphi 0, %s162
    %s163 = sphi 0, %s160
    %s164 = sphi 0, %s163
    %s180 = sphi 0, %s164
    %s186 = sphi 0, %s188
    %s189 = sphi 0, %s186
    %s190 = sphi 0, %s189
    %s206 = sphi 0, %s190
  $region4: #{preact_block.4} parent=0 // loop_header_branch
    %17 = sbr.rel (%p15) target = $region8
  $region5: #{preact_block.4} parent=0 // loop_body
    %s19 = ssub.s32 %s14, 1
    %s20 = ssub.s32 %s14, 2
    %s21 = sadd.s32 %s14, 1
    %s22 = ssub.s32 %s14, %s21
    %p23 = scmp.eq.s32.totalorder %s22, 0
    %s25 = sadd.s32 %s24, 1
    %s26 = scalar_select %p23, %s24, %s25
    %p29 = pneg %p23
    %p30 = scmp.eq.s32.totalorder %s14, 1
    %p31 = por %p29, %p30
    %p32 = scmp.ne.s32.totalorder %s24, %s27
    %p33 = scmp.eq.s32.totalorder %s14, 0
    %p34 = por %p32, %p33
    %p35 = scmp.ne.s32.totalorder %s24, %s27
    %p36 = scmp.eq.s32.totalorder %s19, 1
    %p37 = por %p35, %p36
    %p38 = scmp.ne.s32.totalorder %s27, %s28
    %p39 = scmp.eq.s32.totalorder %s19, 0
    %p40 = por %p38, %p39
    %p41 = scmp.ne.s32.totalorder %s27, %s28
    %p42 = scmp.eq.s32.totalorder %s20, 1
    %p43 = por %p41, %p42
    %p45 = scmp.ne.s32.totalorder %s28, %s44
    %p46 = scmp.eq.s32.totalorder %s20, 0
    %p47 = por %p45, %p46
    %s49 = sadd.s32 %s48, 1
    %p52 = scmp.eq.s32.totalorder %s14, 1
    %p53 = scmp.ne.s32.totalorder %s48, %s50
    %p54 = scmp.eq.s32.totalorder %s14, 0
    %p55 = por %p53, %p54
    %p56 = scmp.ne.s32.totalorder %s48, %s50
    %p57 = scmp.eq.s32.totalorder %s19, 1
    %p58 = por %p56, %p57
    %p59 = scmp.ne.s32.totalorder %s50, %s51
    %p60 = scmp.eq.s32.totalorder %s19, 0
    %p61 = por %p59, %p60
    %p62 = scmp.ne.s32.totalorder %s50, %s51
    %p63 = scmp.eq.s32.totalorder %s20, 1
    %p64 = por %p62, %p63
    %p66 = scmp.ne.s32.totalorder %s51, %s65
    %p67 = scmp.eq.s32.totalorder %s20, 0
    %p68 = por %p66, %p67
    %s70 = sadd.s32 %s69, 1
    %p73 = scmp.eq.s32.totalorder %s14, 1
    %p74 = scmp.ne.s32.totalorder %s69, %s71
    %p75 = scmp.eq.s32.totalorder %s14, 0
    %p76 = por %p74, %p75
    %p77 = scmp.ne.s32.totalorder %s69, %s71
    %p78 = scmp.eq.s32.totalorder %s19, 1
    %p79 = por %p77, %p78
    %p80 = scmp.ne.s32.totalorder %s71, %s72
    %p81 = scmp.eq.s32.totalorder %s19, 0
    %p82 = por %p80, %p81
    %p83 = scmp.ne.s32.totalorder %s71, %s72
    %p84 = scmp.eq.s32.totalorder %s20, 1
    %p85 = por %p83, %p84
    %p87 = scmp.ne.s32.totalorder %s72, %s86
    %p88 = scmp.eq.s32.totalorder %s20, 0
    %p89 = por %p87, %p88
    %s91 = sadd.s32 %s90, 1
    %p94 = scmp.eq.s32.totalorder %s14, 1
    %p95 = scmp.ne.s32.totalorder %s90, %s92
    %p96 = scmp.eq.s32.totalorder %s14, 0
    %p97 = por %p95, %p96
    %p98 = scmp.ne.s32.totalorder %s90, %s92
    %p99 = scmp.eq.s32.totalorder %s19, 1
    %p100 = por %p98, %p99
    %p101 = scmp.ne.s32.totalorder %s92, %s93
    %p102 = scmp.eq.s32.totalorder %s19, 0
    %p103 = por %p101, %p102
    %p104 = scmp.ne.s32.totalorder %s92, %s93
    %p105 = scmp.eq.s32.totalorder %s20, 1
    %p106 = por %p104, %p105
    %p108 = scmp.ne.s32.totalorder %s93, %s107
    %p109 = scmp.eq.s32.totalorder %s20, 0
    %p110 = por %p108, %p109
    %s112 = sadd.s32 %s111, 1
    %p115 = scmp.eq.s32.totalorder %s14, 1
    %p116 = scmp.ne.s32.totalorder %s111, %s113
    %p117 = scmp.eq.s32.totalorder %s14, 0
    %p118 = por %p116, %p117
    %p119 = scmp.ne.s32.totalorder %s111, %s113
    %p120 = scmp.eq.s32.totalorder %s19, 1
    %p121 = por %p119, %p120
    %p122 = scmp.ne.s32.totalorder %s113, %s114
    %p123 = scmp.eq.s32.totalorder %s19, 0
    %p124 = por %p122, %p123
    %p125 = scmp.ne.s32.totalorder %s113, %s114
    %p126 = scmp.eq.s32.totalorder %s20, 1
    %p127 = por %p125, %p126
    %p129 = scmp.ne.s32.totalorder %s114, %s128
    %p130 = scmp.eq.s32.totalorder %s20, 0
    %p131 = por %p129, %p130
    %s132 = ssub.s32 %s14, %s21
    %p133 = scmp.eq.s32.totalorder %s132, 0
    %s135 = sadd.s32 %s134, 1
    %s136 = scalar_select %p133, %s134, %s135
    %p139 = pneg %p133
    %p140 = scmp.eq.s32.totalorder %s14, 1
    %p141 = por %p139, %p140
    %p142 = scmp.ne.s32.totalorder %s134, %s137
    %p143 = scmp.eq.s32.totalorder %s14, 0
    %p144 = por %p142, %p143
    %p145 = scmp.ne.s32.totalorder %s134, %s137
    %p146 = scmp.eq.s32.totalorder %s19, 1
    %p147 = por %p145, %p146
    %p148 = scmp.ne.s32.totalorder %s137, %s138
    %p149 = scmp.eq.s32.totalorder %s19, 0
    %p150 = por %p148, %p149
    %p151 = scmp.ne.s32.totalorder %s137, %s138
    %p152 = scmp.eq.s32.totalorder %s20, 1
    %p153 = por %p151, %p152
    %p155 = scmp.ne.s32.totalorder %s138, %s154
    %p156 = scmp.eq.s32.totalorder %s20, 0
    %p157 = por %p155, %p156
    %s158 = ssub.s32 %s14, %s21
    %p159 = scmp.eq.s32.totalorder %s158, 0
    %s161 = sadd.s32 %s160, 1
    %s162 = scalar_select %p159, %s160, %s161
    %p165 = pneg %p159
    %p166 = scmp.eq.s32.totalorder %s14, 1
    %p167 = por %p165, %p166
    %p168 = scmp.ne.s32.totalorder %s160, %s163
    %p169 = scmp.eq.s32.totalorder %s14, 0
    %p170 = por %p168, %p169
    %p171 = scmp.ne.s32.totalorder %s160, %s163
    %p172 = scmp.eq.s32.totalorder %s19, 1
    %p173 = por %p171, %p172
    %p174 = scmp.ne.s32.totalorder %s163, %s164
    %p175 = scmp.eq.s32.totalorder %s19, 0
    %p176 = por %p174, %p175
    %p177 = scmp.ne.s32.totalorder %s163, %s164
    %p178 = scmp.eq.s32.totalorder %s20, 1
    %p179 = por %p177, %p178
    %p181 = scmp.ne.s32.totalorder %s164, %s180
    %p182 = scmp.eq.s32.totalorder %s20, 0
    %p183 = por %p181, %p182
    %s184 = ssub.s32 %s14, %s21
    %p185 = scmp.eq.s32.totalorder %s184, 0
    %s187 = sadd.s32 %s186, 1
    %s188 = scalar_select %p185, %s186, %s187
    %p191 = pneg %p185
    %p192 = scmp.eq.s32.totalorder %s14, 1
    %p193 = por %p191, %p192
    %p194 = scmp.ne.s32.totalorder %s186, %s189
    %p195 = scmp.eq.s32.totalorder %s14, 0
    %p196 = por %p194, %p195
    %p197 = scmp.ne.s32.totalorder %s186, %s189
    %p198 = scmp.eq.s32.totalorder %s19, 1
    %p199 = por %p197, %p198
    %p200 = scmp.ne.s32.totalorder %s189, %s190
    %p201 = scmp.eq.s32.totalorder %s19, 0
    %p202 = por %p200, %p201
    %p203 = scmp.ne.s32.totalorder %s189, %s190
    %p204 = scmp.eq.s32.totalorder %s20, 1
    %p205 = por %p203, %p204
    %p207 = scmp.ne.s32.totalorder %s190, %s206
    %p208 = scmp.eq.s32.totalorder %s20, 0
    %p209 = por %p207, %p208
    %p210 = scmp.le.s32.totalorder 1, %s14
    %p211 = scmp.lt.s32.totalorder %s14, 3
    %p212 = pnand %p210, %p211
    %p213 = pneg %p212
    // Predicated region
    $region9: #{preact_block.4} parent=5 // pred_check
      _
    $region10: #{preact_block.4} parent=5 // pred_check_branch
      %215 = sbr.rel (%p212) target = $region12
    $region11: #{preact_block.4} parent=5 // pred_region
      %s216 = ssub.s32 %s14, 1
      // Predicated region
      $region13: #{preact_block.4} parent=11 // pred_check
        %p217 = pneg %p61
      $region14: #{preact_block.4} parent=11 // pred_check_branch
        %219 = sbr.rel (%p217) target = $region16
      $region15: #{preact_block.4} parent=11 // pred_region
        _
      $region16: #{preact_block.4} parent=11 // pred_fallthru
        _
      // Predicated region
      $region17: #{preact_block.4} parent=11 // pred_check
        %p220 = pneg %p82
      $region18: #{preact_block.4} parent=11 // pred_check_branch
        %222 = sbr.rel (%p220) target = $region20
      $region19: #{preact_block.4} parent=11 // pred_region
        _
      $region20: #{preact_block.4} parent=11 // pred_fallthru
        _
      // Predicated region
      $region21: #{preact_block.4} parent=11 // pred_check
        %p223 = pneg %p103
      $region22: #{preact_block.4} parent=11 // pred_check_branch
        %225 = sbr.rel (%p223) target = $region24
      $region23: #{preact_block.4} parent=11 // pred_region
        _
      $region24: #{preact_block.4} parent=11 // pred_fallthru
        _
      // Predicated region
      $region25: #{preact_block.4} parent=11 // pred_check
        %p226 = pneg %p124
      $region26: #{preact_block.4} parent=11 // pred_check_branch
        %228 = sbr.rel (%p226) target = $region28
      $region27: #{preact_block.4} parent=11 // pred_region
        _
      $region28: #{preact_block.4} parent=11 // pred_fallthru
        _
    $region12: #{preact_block.4} parent=5 // pred_fallthru
      _
    %p229 = scmp.lt.s32.totalorder %s14, 2
    // Predicated region
    $region29: #{preact_block.4} parent=5 // pred_check
      %p230 = pneg %p229
    $region30: #{preact_block.4} parent=5 // pred_check_branch
      %232 = sbr.rel (%p230) target = $region32
    $region31: #{preact_block.4} parent=5 // pred_region
      // Predicated region
      $region33: #{preact_block.4} parent=31 // pred_check
        %p233 = pneg %p34
      $region34: #{preact_block.4} parent=31 // pred_check_branch
        %235 = sbr.rel (%p233) target = $region36
      $region35: #{preact_block.4} parent=31 // pred_region
        %p236 = scmp.lt.s32.totalorder %s14, 1
        %s237 = scalar_select %p236, %s14, 1
        %s238 = smul.addr %s237, 32
        %s239 = smul.addr %s238, 8
        %s240 = scalar_lea.vmem %s0, %s239
      $region36: #{preact_block.4} parent=31 // pred_fallthru
        _
    $region32: #{preact_block.4} parent=5 // pred_fallthru
      _
    %p241 = scmp.le.s32.totalorder 1, %s14
    %p242 = scmp.lt.s32.totalorder %s14, 3
    %p243 = pnand %p241, %p242
    %p244 = pneg %p243
    // Predicated region
    $region37: #{preact_block.4} parent=5 // pred_check
      _
    $region38: #{preact_block.4} parent=5 // pred_check_branch
      %246 = sbr.rel (%p243) target = $region40
    $region39: #{preact_block.4} parent=5 // pred_region
      %s247 = ssub.s32 %s14, 1
      %p248 = scmp.lt.s32.totalorder %s19, 1
      %s249 = scalar_select %p248, %s19, 1
      %s250 = smul.addr %s249, 32
      %s251 = smul.addr %s250, 8
      %s252 = scalar_lea.vmem %s0, %s251
      %p253 = pneg %p40
      %p254 = pneg %p37
      %p255 = pneg %p61
      %p256 = pneg %p58
      %p257 = pneg %p82
      %p258 = pneg %p79
      %p259 = pneg %p103
      %p260 = pneg %p100
      %p261 = pneg %p124
      %p262 = pneg %p121
      %p263 = pneg %p150
      %p264 = pneg %p147
      %p265 = scmp.lt.s32.totalorder %s19, 1
      %s266 = scalar_select %p265, %s19, 1
      %s267 = smul.addr %s266, 32
      %s268 = smul.addr %s267, 8
      %s269 = scalar_lea.vmem %s5, %s268
      %p270 = pneg %p176
      %p271 = pneg %p173
      %p272 = scmp.lt.s32.totalorder %s19, 1
      %s273 = scalar_select %p272, %s19, 1
      %s274 = scalar_lea.vmem %s6, %s273
      %p275 = pneg %p202
      %p276 = pneg %p199
      %p277 = scmp.lt.s32.totalorder %s19, 1
      %s278 = scalar_select %p277, %s19, 1
      %s279 = scalar_lea.vmem %s7, %s278
      %p280 = scmp.lt.s32.totalorder %s19, 1
      %s281 = scalar_select %p280, %s19, 1
      %s282 = smul.addr %s281, 32
      %s283 = smul.addr %s282, 8
      %s284 = scalar_lea.vmem %s0, %s283
      %p285 = scmp.lt.s32.totalorder %s19, 1
      %s286 = scalar_select %p285, %s19, 1
      %s287 = smul.addr %s286, 32
      %s288 = smul.addr %s287, 8
      %s289 = scalar_lea.vmem %s5, %s288
      %p290 = scmp.lt.s32.totalorder %s19, 1
      %s291 = scalar_select %p290, %s19, 1
      %s292 = scalar_lea.vmem %s6, %s291
      %p293 = scmp.lt.s32.totalorder %s19, 1
      %s294 = scalar_select %p293, %s19, 1
      %s295 = scalar_lea.vmem %s7, %s294
      %v296 = vld [vmem:[%s284] sm:$0xff]
      %v297 = vld [vmem:[%s284 + $0x8] sm:$0xff]
      %v298 = vld [vmem:[%s284 + $0x10] sm:$0xff]
      %v299 = vld [vmem:[%s284 + $0x18] sm:$0xff]
      %v300 = vld [vmem:[%s284 + $0x20] sm:$0xff]
      %v301 = vld [vmem:[%s284 + $0x28] sm:$0xff]
      %v302 = vld [vmem:[%s284 + $0x30] sm:$0xff]
      %v303 = vld [vmem:[%s284 + $0x38] sm:$0xff]
      %v304 = vld [vmem:[%s284 + $0x40] sm:$0xff]
      %v305 = vld [vmem:[%s284 + $0x48] sm:$0xff]
      %v306 = vld [vmem:[%s284 + $0x50] sm:$0xff]
      %v307 = vld [vmem:[%s284 + $0x58] sm:$0xff]
      %v308 = vld [vmem:[%s284 + $0x60] sm:$0xff]
      %v309 = vld [vmem:[%s284 + $0x68] sm:$0xff]
      %v310 = vld [vmem:[%s284 + $0x70] sm:$0xff]
      %v311 = vld [vmem:[%s284 + $0x78] sm:$0xff]
      %v312 = vld [vmem:[%s284 + $0x80] sm:$0xff]
      %v313 = vld [vmem:[%s284 + $0x88] sm:$0xff]
      %v314 = vld [vmem:[%s284 + $0x90] sm:$0xff]
      %v315 = vld [vmem:[%s284 + $0x98] sm:$0xff]
      %v316 = vld [vmem:[%s284 + $0xa0] sm:$0xff]
      %v317 = vld [vmem:[%s284 + $0xa8] sm:$0xff]
      %v318 = vld [vmem:[%s284 + $0xb0] sm:$0xff]
      %v319 = vld [vmem:[%s284 + $0xb8] sm:$0xff]
      %v320 = vld [vmem:[%s284 + $0xc0] sm:$0xff]
      %v321 = vld [vmem:[%s284 + $0xc8] sm:$0xff]
      %v322 = vld [vmem:[%s284 + $0xd0] sm:$0xff]
      %v323 = vld [vmem:[%s284 + $0xd8] sm:$0xff]
      %v324 = vld [vmem:[%s284 + $0xe0] sm:$0xff]
      %v325 = vld [vmem:[%s284 + $0xe8] sm:$0xff]
      %v326 = vld [vmem:[%s284 + $0xf0] sm:$0xff]
      %v327 = vld [vmem:[%s284 + $0xf8] sm:$0xff]
      %v328 = vld [vmem:[%s1] sm:$0x1]
      %v330 = vperm.slane %v328, 0
      %v332 = vmul.f32 %v296, %v330
      %v333 = vmul.f32 %v297, %v330
      %v334 = vmul.f32 %v298, %v330
      %v335 = vmul.f32 %v299, %v330
      %v336 = vmul.f32 %v300, %v330
      %v337 = vmul.f32 %v301, %v330
      %v338 = vmul.f32 %v302, %v330
      %v339 = vmul.f32 %v303, %v330
      %v340 = vmul.f32 %v304, %v330
      %v341 = vmul.f32 %v305, %v330
      %v342 = vmul.f32 %v306, %v330
      %v343 = vmul.f32 %v307, %v330
      %v344 = vmul.f32 %v308, %v330
      %v345 = vmul.f32 %v309, %v330
      %v346 = vmul.f32 %v310, %v330
      %v347 = vmul.f32 %v311, %v330
      %v348 = vmul.f32 %v312, %v330
      %v349 = vmul.f32 %v313, %v330
      %v350 = vmul.f32 %v314, %v330
      %v351 = vmul.f32 %v315, %v330
      %v352 = vmul.f32 %v316, %v330
      %v353 = vmul.f32 %v317, %v330
      %v354 = vmul.f32 %v318, %v330
      %v355 = vmul.f32 %v319, %v330
      %v356 = vmul.f32 %v320, %v330
      %v357 = vmul.f32 %v321, %v330
      %v358 = vmul.f32 %v322, %v330
      %v359 = vmul.f32 %v323, %v330
      %v360 = vmul.f32 %v324, %v330
      %v361 = vmul.f32 %v325, %v330
      %v362 = vmul.f32 %v326, %v330
      %v363 = vmul.f32 %v327, %v330
      %v364 = vld [vmem:[%s2] sm:$0x1]
      %v366 = vperm.slane %v364, 0
      %v368 = vadd.f32 %v332, %v366
      %v369 = vadd.f32 %v333, %v366
      %v370 = vadd.f32 %v334, %v366
      %v371 = vadd.f32 %v335, %v366
      %v372 = vadd.f32 %v336, %v366
      %v373 = vadd.f32 %v337, %v366
      %v374 = vadd.f32 %v338, %v366
      %v375 = vadd.f32 %v339, %v366
      %v376 = vadd.f32 %v340, %v366
      %v377 = vadd.f32 %v341, %v366
      %v378 = vadd.f32 %v342, %v366
      %v379 = vadd.f32 %v343, %v366
      %v380 = vadd.f32 %v344, %v366
      %v381 = vadd.f32 %v345, %v366
      %v382 = vadd.f32 %v346, %v366
      %v383 = vadd.f32 %v347, %v366
      %v384 = vadd.f32 %v348, %v366
      %v385 = vadd.f32 %v349, %v366
      %v386 = vadd.f32 %v350, %v366
      %v387 = vadd.f32 %v351, %v366
      %v388 = vadd.f32 %v352, %v366
      %v389 = vadd.f32 %v353, %v366
      %v390 = vadd.f32 %v354, %v366
      %v391 = vadd.f32 %v355, %v366
      %v392 = vadd.f32 %v356, %v366
      %v393 = vadd.f32 %v357, %v366
      %v394 = vadd.f32 %v358, %v366
      %v395 = vadd.f32 %v359, %v366
      %v396 = vadd.f32 %v360, %v366
      %v397 = vadd.f32 %v361, %v366
      %v398 = vadd.f32 %v362, %v366
      %v399 = vadd.f32 %v363, %v366
      %v400 = vmax.f32 %v368, 0.0
      %v401 = vmax.f32 %v369, 0.0
      %v402 = vmax.f32 %v370, 0.0
      %v403 = vmax.f32 %v371, 0.0
      %v404 = vmax.f32 %v372, 0.0
      %v405 = vmax.f32 %v373, 0.0
      %v406 = vmax.f32 %v374, 0.0
      %v407 = vmax.f32 %v375, 0.0
      %v408 = vmax.f32 %v376, 0.0
      %v409 = vmax.f32 %v377, 0.0
      %v410 = vmax.f32 %v378, 0.0
      %v411 = vmax.f32 %v379, 0.0
      %v412 = vmax.f32 %v380, 0.0
      %v413 = vmax.f32 %v381, 0.0
      %v414 = vmax.f32 %v382, 0.0
      %v415 = vmax.f32 %v383, 0.0
      %v416 = vmax.f32 %v384, 0.0
      %v417 = vmax.f32 %v385, 0.0
      %v418 = vmax.f32 %v386, 0.0
      %v419 = vmax.f32 %v387, 0.0
      %v420 = vmax.f32 %v388, 0.0
      %v421 = vmax.f32 %v389, 0.0
      %v422 = vmax.f32 %v390, 0.0
      %v423 = vmax.f32 %v391, 0.0
      %v424 = vmax.f32 %v392, 0.0
      %v425 = vmax.f32 %v393, 0.0
      %v426 = vmax.f32 %v394, 0.0
      %v427 = vmax.f32 %v395, 0.0
      %v428 = vmax.f32 %v396, 0.0
      %v429 = vmax.f32 %v397, 0.0
      %v430 = vmax.f32 %v398, 0.0
      %v431 = vmax.f32 %v399, 0.0
      %432 = vst [vmem:[#allocation2] sm:$0xff] 0.0
      %433 = vst [vmem:[#allocation2 + $0x8] sm:$0xff] 0.0
      %434 = vst [vmem:[#allocation2 + $0x10] sm:$0x3] 0.0
      %435 = vst [vmem:[#allocation2 + $0x18] sm:$0xff] 0.0
      %436 = vst [vmem:[#allocation2 + $0x20] sm:$0xff] 0.0
      %437 = vst [vmem:[#allocation2 + $0x28] sm:$0x3] 0.0
      %438 = vst [vmem:[#allocation2 + $0x30] sm:$0xff] 0.0
      %439 = vst [vmem:[#allocation2 + $0x38] sm:$0xff] 0.0
      %440 = vst [vmem:[#allocation2 + $0x40] sm:$0x3] 0.0
      %441 = vst [vmem:[#allocation2 + $0x48] sm:$0xff] 0.0
      %442 = vst [vmem:[#allocation2 + $0x50] sm:$0xff] 0.0
      %443 = vst [vmem:[#allocation2 + $0x58] sm:$0x3] 0.0
      %444 = vst [vmem:[#allocation2 + $0x60] sm:$0xff] 0.0
      %445 = vst [vmem:[#allocation2 + $0x68] sm:$0xff] 0.0
      %446 = vst [vmem:[#allocation2 + $0x70] sm:$0x3] 0.0
      %447 = vst [vmem:[#allocation2 + $0x78] sm:$0xff] 0.0
      %448 = vst [vmem:[#allocation2 + $0x80] sm:$0xff] 0.0
      %449 = vst [vmem:[#allocation2 + $0x88] sm:$0x3] 0.0
      %450 = vst [vmem:[#allocation2 + $0x90] sm:$0xff] 0.0
      %451 = vst [vmem:[#allocation2 + $0x98] sm:$0xff] 0.0
      %452 = vst [vmem:[#allocation2 + $0xa0] sm:$0x3] 0.0
      %453 = vst [vmem:[#allocation2 + $0xa8] sm:$0xff] 0.0
      %454 = vst [vmem:[#allocation2 + $0xb0] sm:$0xff] 0.0
      %455 = vst [vmem:[#allocation2 + $0xb8] sm:$0x3] 0.0
      %456 = vst [vmem:[#allocation2 + $0xc0] sm:$0xff] 0.0
      %457 = vst [vmem:[#allocation2 + $0xc8] sm:$0xff] 0.0
      %458 = vst [vmem:[#allocation2 + $0xd0] sm:$0x3] 0.0
      %459 = vst [vmem:[#allocation2 + $0xd8] sm:$0xff] 0.0
      %460 = vst [vmem:[#allocation2 + $0xe0] sm:$0xff] 0.0
      %461 = vst [vmem:[#allocation2 + $0xe8] sm:$0x3] 0.0
      %462 = vst [vmem:[#allocation2 + $0xf0] sm:$0xff] 0.0
      %463 = vst [vmem:[#allocation2 + $0xf8] sm:$0xff] 0.0
      %464 = vst [vmem:[#allocation2 + $0x100] sm:$0x3] 0.0
      %465 = vst [vmem:[#allocation2 + $0x108] sm:$0xff] 0.0
      %466 = vst [vmem:[#allocation2 + $0x110] sm:$0xff] 0.0
      %467 = vst [vmem:[#allocation2 + $0x118] sm:$0x3] 0.0
      %468 = vst [vmem:[#allocation2 + $0x120] sm:$0xff] 0.0
      %469 = vst [vmem:[#allocation2 + $0x128] sm:$0xff] 0.0
      %470 = vst [vmem:[#allocation2 + $0x130] sm:$0x3] 0.0
      %471 = vst [vmem:[#allocation2 + $0x138] sm:$0xff] 0.0
      %472 = vst [vmem:[#allocation2 + $0x140] sm:$0xff] 0.0
      %473 = vst [vmem:[#allocation2 + $0x148] sm:$0x3] 0.0
      %474 = vst [vmem:[#allocation2 + $0x150] sm:$0xff] 0.0
      %475 = vst [vmem:[#allocation2 + $0x158] sm:$0xff] 0.0
      %476 = vst [vmem:[#allocation2 + $0x160] sm:$0x3] 0.0
      %477 = vst [vmem:[#allocation2 + $0x168] sm:$0xff] 0.0
      %478 = vst [vmem:[#allocation2 + $0x170] sm:$0xff] 0.0
      %479 = vst [vmem:[#allocation2 + $0x178] sm:$0x3] 0.0
      %480 = vst [vmem:[#allocation2 + $0x180] sm:$0xff] 0.0
      %481 = vst [vmem:[#allocation2 + $0x188] sm:$0xff] 0.0
      %482 = vst [vmem:[#allocation2 + $0x190] sm:$0x3] 0.0
      %483 = vst [vmem:[#allocation2 + $0x198] sm:$0xff] 0.0
      %484 = vst [vmem:[#allocation2 + $0x1a0] sm:$0xff] 0.0
      %485 = vst [vmem:[#allocation2 + $0x1a8] sm:$0x3] 0.0
      %s486 = scalar_lea.vmem [#allocation2], 24
      %487 = vst [vmem:[%s486 + $0x1] sm:$0xff] %v400
      %488 = vst [vmem:[%s486 + $0x9] sm:$0xff] %v401
      %489 = vst [vmem:[%s486 + $0x19] sm:$0xff] %v402
      %490 = vst [vmem:[%s486 + $0x21] sm:$0xff] %v403
      %491 = vst [vmem:[%s486 + $0x31] sm:$0xff] %v404
      %492 = vst [vmem:[%s486 + $0x39] sm:$0xff] %v405
      %493 = vst [vmem:[%s486 + $0x49] sm:$0xff] %v406
      %494 = vst [vmem:[%s486 + $0x51] sm:$0xff] %v407
      %495 = vst [vmem:[%s486 + $0x61] sm:$0xff] %v408
      %496 = vst [vmem:[%s486 + $0x69] sm:$0xff] %v409
      %497 = vst [vmem:[%s486 + $0x79] sm:$0xff] %v410
      %498 = vst [vmem:[%s486 + $0x81] sm:$0xff] %v411
      %499 = vst [vmem:[%s486 + $0x91] sm:$0xff] %v412
      %500 = vst [vmem:[%s486 + $0x99] sm:$0xff] %v413
      %501 = vst [vmem:[%s486 + $0xa9] sm:$0xff] %v414
      %502 = vst [vmem:[%s486 + $0xb1] sm:$0xff] %v415
      %503 = vst [vmem:[%s486 + $0xc1] sm:$0xff] %v416
      %504 = vst [vmem:[%s486 + $0xc9] sm:$0xff] %v417
      %505 = vst [vmem:[%s486 + $0xd9] sm:$0xff] %v418
      %506 = vst [vmem:[%s486 + $0xe1] sm:$0xff] %v419
      %507 = vst [vmem:[%s486 + $0xf1] sm:$0xff] %v420
      %508 = vst [vmem:[%s486 + $0xf9] sm:$0xff] %v421
      %509 = vst [vmem:[%s486 + $0x109] sm:$0xff] %v422
      %510 = vst [vmem:[%s486 + $0x111] sm:$0xff] %v423
      %511 = vst [vmem:[%s486 + $0x121] sm:$0xff] %v424
      %512 = vst [vmem:[%s486 + $0x129] sm:$0xff] %v425
      %513 = vst [vmem:[%s486 + $0x139] sm:$0xff] %v426
      %514 = vst [vmem:[%s486 + $0x141] sm:$0xff] %v427
      %515 = vst [vmem:[%s486 + $0x151] sm:$0xff] %v428
      %516 = vst [vmem:[%s486 + $0x159] sm:$0xff] %v429
      %517 = vst [vmem:[%s486 + $0x169] sm:$0xff] %v430
      %518 = vst [vmem:[%s486 + $0x171] sm:$0xff] %v431
      %v519 = vld [vmem:[#allocation2] sm:$0xff]
      %v520 = vld [vmem:[#allocation2 + $0x8] sm:$0xff]
      %v521 = vld [vmem:[#allocation2 + $0x10] sm:$0x3]
      %v522 = vld [vmem:[#allocation2 + $0x18] sm:$0xff]
      %v523 = vld [vmem:[#allocation2 + $0x20] sm:$0xff]
      %v524 = vld [vmem:[#allocation2 + $0x28] sm:$0x3]
      %v525 = vld [vmem:[#allocation2 + $0x30] sm:$0xff]
      %v526 = vld [vmem:[#allocation2 + $0x38] sm:$0xff]
      %v527 = vld [vmem:[#allocation2 + $0x40] sm:$0x3]
      %v528 = vld [vmem:[#allocation2 + $0x48] sm:$0xff]
      %v529 = vld [vmem:[#allocation2 + $0x50] sm:$0xff]
      %v530 = vld [vmem:[#allocation2 + $0x58] sm:$0x3]
      %v531 = vld [vmem:[#allocation2 + $0x60] sm:$0xff]
      %v532 = vld [vmem:[#allocation2 + $0x68] sm:$0xff]
      %v533 = vld [vmem:[#allocation2 + $0x70] sm:$0x3]
      %v534 = vld [vmem:[#allocation2 + $0x78] sm:$0xff]
      %v535 = vld [vmem:[#allocation2 + $0x80] sm:$0xff]
      %v536 = vld [vmem:[#allocation2 + $0x88] sm:$0x3]
      %v537 = vld [vmem:[#allocation2 + $0x90] sm:$0xff]
      %v538 = vld [vmem:[#allocation2 + $0x98] sm:$0xff]
      %v539 = vld [vmem:[#allocation2 + $0xa0] sm:$0x3]
      %v540 = vld [vmem:[#allocation2 + $0xa8] sm:$0xff]
      %v541 = vld [vmem:[#allocation2 + $0xb0] sm:$0xff]
      %v542 = vld [vmem:[#allocation2 + $0xb8] sm:$0x3]
      %v543 = vld [vmem:[#allocation2 + $0xc0] sm:$0xff]
      %v544 = vld [vmem:[#allocation2 + $0xc8] sm:$0xff]
      %v545 = vld [vmem:[#allocation2 + $0xd0] sm:$0x3]
      %v546 = vld [vmem:[#allocation2 + $0xd8] sm:$0xff]
      %v547 = vld [vmem:[#allocation2 + $0xe0] sm:$0xff]
      %v548 = vld [vmem:[#allocation2 + $0xe8] sm:$0x3]
      %v549 = vld [vmem:[#allocation2 + $0xf0] sm:$0xff]
      %v550 = vld [vmem:[#allocation2 + $0xf8] sm:$0xff]
      %v551 = vld [vmem:[#allocation2 + $0x100] sm:$0x3]
      %v552 = vld [vmem:[#allocation2 + $0x108] sm:$0xff]
      %v553 = vld [vmem:[#allocation2 + $0x110] sm:$0xff]
      %v554 = vld [vmem:[#allocation2 + $0x118] sm:$0x3]
      %v555 = vld [vmem:[#allocation2 + $0x120] sm:$0xff]
      %v556 = vld [vmem:[#allocation2 + $0x128] sm:$0xff]
      %v557 = vld [vmem:[#allocation2 + $0x130] sm:$0x3]
      %v558 = vld [vmem:[#allocation2 + $0x138] sm:$0xff]
      %v559 = vld [vmem:[#allocation2 + $0x140] sm:$0xff]
      %v560 = vld [vmem:[#allocation2 + $0x148] sm:$0x3]
      %v561 = vld [vmem:[#allocation2 + $0x150] sm:$0xff]
      %v562 = vld [vmem:[#allocation2 + $0x158] sm:$0xff]
      %v563 = vld [vmem:[#allocation2 + $0x160] sm:$0x3]
      %v564 = vld [vmem:[#allocation2 + $0x168] sm:$0xff]
      %v565 = vld [vmem:[#allocation2 + $0x170] sm:$0xff]
      %v566 = vld [vmem:[#allocation2 + $0x178] sm:$0x3]
      %v567 = vld [vmem:[#allocation2 + $0x180] sm:$0xff]
      %v568 = vld [vmem:[#allocation2 + $0x188] sm:$0xff]
      %v569 = vld [vmem:[#allocation2 + $0x190] sm:$0x3]
      %v570 = vld [vmem:[#allocation2 + $0x198] sm:$0xff]
      %v571 = vld [vmem:[#allocation2 + $0x1a0] sm:$0xff]
      %v572 = vld [vmem:[#allocation2 + $0x1a8] sm:$0x3]
      %573 = vst [vmem:[#allocation3] sm:$0xff] %v519
      %574 = vst [vmem:[#allocation3 + $0x48] sm:$0xff] %v520
      %575 = vst [vmem:[#allocation3 + $0x90] sm:$0xff] %v522
      %576 = vst [vmem:[#allocation3 + $0xd8] sm:$0xff] %v523
      %577 = vst [vmem:[#allocation3 + $0x120] sm:$0xff] %v525
      %578 = vst [vmem:[#allocation3 + $0x168] sm:$0xff] %v526
      %579 = vst [vmem:[#allocation3 + $0x1b0] sm:$0xff] %v528
      %580 = vst [vmem:[#allocation3 + $0x1f8] sm:$0xff] %v529
      %581 = vst [vmem:[#allocation3 + $0x240] sm:$0xff] %v531
      %582 = vst [vmem:[#allocation3 + $0x288] sm:$0xff] %v532
      %583 = vst [vmem:[#allocation3 + $0x2d0] sm:$0xff] %v534
      %584 = vst [vmem:[#allocation3 + $0x318] sm:$0xff] %v535
      %585 = vst [vmem:[#allocation3 + $0x360] sm:$0xff] %v537
      %586 = vst [vmem:[#allocation3 + $0x3a8] sm:$0xff] %v538
      %587 = vst [vmem:[#allocation3 + $0x3f0] sm:$0xff] %v540
      %588 = vst [vmem:[#allocation3 + $0x438] sm:$0xff] %v541
      %589 = vst [vmem:[#allocation3 + $0x480] sm:$0xff] %v543
      %590 = vst [vmem:[#allocation3 + $0x4c8] sm:$0xff] %v544
      %591 = vst [vmem:[#allocation3 + $0x510] sm:$0xff] %v546
      %592 = vst [vmem:[#allocation3 + $0x558] sm:$0xff] %v547
      %593 = vst [vmem:[#allocation3 + $0x5a0] sm:$0xff] %v549
      %594 = vst [vmem:[#allocation3 + $0x5e8] sm:$0xff] %v550
      %595 = vst [vmem:[#allocation3 + $0x630] sm:$0xff] %v552
      %596 = vst [vmem:[#allocation3 + $0x678] sm:$0xff] %v553
      %597 = vst [vmem:[#allocation3 + $0x6c0] sm:$0xff] %v555
      %598 = vst [vmem:[#allocation3 + $0x708] sm:$0xff] %v556
      %599 = vst [vmem:[#allocation3 + $0x750] sm:$0xff] %v558
      %600 = vst [vmem:[#allocation3 + $0x798] sm:$0xff] %v559
      %601 = vst [vmem:[#allocation3 + $0x7e0] sm:$0xff] %v561
      %602 = vst [vmem:[#allocation3 + $0x828] sm:$0xff] %v562
      %603 = vst [vmem:[#allocation3 + $0x870] sm:$0xff] %v564
      %604 = vst [vmem:[#allocation3 + $0x8b8] sm:$0xff] %v565
      %vm653 = vcmask 1046528
      %v654 = vrot.slane %v519, 1
      %v655 = vrot.slane %v520, 1
      %v656 = vsel %vm653, %v654, %v655
      %v657 = vrot.slane %v521, 1
      %v658 = vsel %vm653, %v655, %v657
      %v659 = vrot.slane %v522, 1
      %v660 = vrot.slane %v523, 1
      %v661 = vsel %vm653, %v659, %v660
      %v662 = vrot.slane %v524, 1
      %v663 = vsel %vm653, %v660, %v662
      %v664 = vrot.slane %v525, 1
      %v665 = vrot.slane %v526, 1
      %v666 = vsel %vm653, %v664, %v665
      %v667 = vrot.slane %v527, 1
      %v668 = vsel %vm653, %v665, %v667
      %v669 = vrot.slane %v528, 1
      %v670 = vrot.slane %v529, 1
      %v671 = vsel %vm653, %v669, %v670
      %v672 = vrot.slane %v530, 1
      %v673 = vsel %vm653, %v670, %v672
      %v674 = vrot.slane %v531, 1
      %v675 = vrot.slane %v532, 1
      %v676 = vsel %vm653, %v674, %v675
      %v677 = vrot.slane %v533, 1
      %v678 = vsel %vm653, %v675, %v677
      %v679 = vrot.slane %v534, 1
      %v680 = vrot.slane %v535, 1
      %v681 = vsel %vm653, %v679, %v680
      %v682 = vrot.slane %v536, 1
      %v683 = vsel %vm653, %v680, %v682
      %v684 = vrot.slane %v537, 1
      %v685 = vrot.slane %v538, 1
      %v686 = vsel %vm653, %v684, %v685
      %v687 = vrot.slane %v539, 1
      %v688 = vsel %vm653, %v685, %v687
      %v689 = vrot.slane %v540, 1
      %v690 = vrot.slane %v541, 1
      %v691 = vsel %vm653, %v689, %v690
      %v692 = vrot.slane %v542, 1
      %v693 = vsel %vm653, %v690, %v692
      %v694 = vrot.slane %v543, 1
      %v695 = vrot.slane %v544, 1
      %v696 = vsel %vm653, %v694, %v695
      %v697 = vrot.slane %v545, 1
      %v698 = vsel %vm653, %v695, %v697
      %v699 = vrot.slane %v546, 1
      %v700 = vrot.slane %v547, 1
      %v701 = vsel %vm653, %v699, %v700
      %v702 = vrot.slane %v548, 1
      %v703 = vsel %vm653, %v700, %v702
      %v704 = vrot.slane %v549, 1
      %v705 = vrot.slane %v550, 1
      %v706 = vsel %vm653, %v704, %v705
      %v707 = vrot.slane %v551, 1
      %v708 = vsel %vm653, %v705, %v707
      %v709 = vrot.slane %v552, 1
      %v710 = vrot.slane %v553, 1
      %v711 = vsel %vm653, %v709, %v710
      %v712 = vrot.slane %v554, 1
      %v713 = vsel %vm653, %v710, %v712
      %v714 = vrot.slane %v555, 1
      %v715 = vrot.slane %v556, 1
      %v716 = vsel %vm653, %v714, %v715
      %v717 = vrot.slane %v557, 1
      %v718 = vsel %vm653, %v715, %v717
      %v719 = vrot.slane %v558, 1
      %v720 = vrot.slane %v559, 1
      %v721 = vsel %vm653, %v719, %v720
      %v722 = vrot.slane %v560, 1
      %v723 = vsel %vm653, %v720, %v722
      %v724 = vrot.slane %v561, 1
      %v725 = vrot.slane %v562, 1
      %v726 = vsel %vm653, %v724, %v725
      %v727 = vrot.slane %v563, 1
      %v728 = vsel %vm653, %v725, %v727
      %v729 = vrot.slane %v564, 1
      %v730 = vrot.slane %v565, 1
      %v731 = vsel %vm653, %v729, %v730
      %v732 = vrot.slane %v566, 1
      %v733 = vsel %vm653, %v730, %v732
      %766 = vst [vmem:[#allocation3 + $0x8] sm:$0xff] %v656
      %767 = vst [vmem:[#allocation3 + $0x50] sm:$0xff] %v658
      %768 = vst [vmem:[#allocation3 + $0x98] sm:$0xff] %v661
      %769 = vst [vmem:[#allocation3 + $0xe0] sm:$0xff] %v663
      %770 = vst [vmem:[#allocation3 + $0x128] sm:$0xff] %v666
      %771 = vst [vmem:[#allocation3 + $0x170] sm:$0xff] %v668
      %772 = vst [vmem:[#allocation3 + $0x1b8] sm:$0xff] %v671
      %773 = vst [vmem:[#allocation3 + $0x200] sm:$0xff] %v673
      %774 = vst [vmem:[#allocation3 + $0x248] sm:$0xff] %v676
      %775 = vst [vmem:[#allocation3 + $0x290] sm:$0xff] %v678
      %776 = vst [vmem:[#allocation3 + $0x2d8] sm:$0xff] %v681
      %777 = vst [vmem:[#allocation3 + $0x320] sm:$0xff] %v683
      %778 = vst [vmem:[#allocation3 + $0x368] sm:$0xff] %v686
      %779 = vst [vmem:[#allocation3 + $0x3b0] sm:$0xff] %v688
      %780 = vst [vmem:[#allocation3 + $0x3f8] sm:$0xff] %v691
      %781 = vst [vmem:[#allocation3 + $0x440] sm:$0xff] %v693
      %782 = vst [vmem:[#allocation3 + $0x488] sm:$0xff] %v696
      %783 = vst [vmem:[#allocation3 + $0x4d0] sm:$0xff] %v698
      %784 = vst [vmem:[#allocation3 + $0x518] sm:$0xff] %v701
      %785 = vst [vmem:[#allocation3 + $0x560] sm:$0xff] %v703
      %786 = vst [vmem:[#allocation3 + $0x5a8] sm:$0xff] %v706
      %787 = vst [vmem:[#allocation3 + $0x5f0] sm:$0xff] %v708
      %788 = vst [vmem:[#allocation3 + $0x638] sm:$0xff] %v711
      %789 = vst [vmem:[#allocation3 + $0x680] sm:$0xff] %v713
      %790 = vst [vmem:[#allocation3 + $0x6c8] sm:$0xff] %v716
      %791 = vst [vmem:[#allocation3 + $0x710] sm:$0xff] %v718
      %792 = vst [vmem:[#allocation3 + $0x758] sm:$0xff] %v721
      %793 = vst [vmem:[#allocation3 + $0x7a0] sm:$0xff] %v723
      %794 = vst [vmem:[#allocation3 + $0x7e8] sm:$0xff] %v726
      %795 = vst [vmem:[#allocation3 + $0x830] sm:$0xff] %v728
      %796 = vst [vmem:[#allocation3 + $0x878] sm:$0xff] %v731
      %797 = vst [vmem:[#allocation3 + $0x8c0] sm:$0xff] %v733
      %vm798 = vcmask 1045504
      %v799 = vrot.slane %v519, 2
      %v800 = vrot.slane %v520, 2
      %v801 = vsel %vm798, %v799, %v800
      %v802 = vrot.slane %v521, 2
      %v803 = vsel %vm798, %v800, %v802
      %v804 = vrot.slane %v522, 2
      %v805 = vrot.slane %v523, 2
      %v806 = vsel %vm798, %v804, %v805
      %v807 = vrot.slane %v524, 2
      %v808 = vsel %vm798, %v805, %v807
      %v809 = vrot.slane %v525, 2
      %v810 = vrot.slane %v526, 2
      %v811 = vsel %vm798, %v809, %v810
      %v812 = vrot.slane %v527, 2
      %v813 = vsel %vm798, %v810, %v812
      %v814 = vrot.slane %v528, 2
      %v815 = vrot.slane %v529, 2
      %v816 = vsel %vm798, %v814, %v815
      %v817 = vrot.slane %v530, 2
      %v818 = vsel %vm798, %v815, %v817
      %v819 = vrot.slane %v531, 2
      %v820 = vrot.slane %v532, 2
      %v821 = vsel %vm798, %v819, %v820
      %v822 = vrot.slane %v533, 2
      %v823 = vsel %vm798, %v820, %v822
      %v824 = vrot.slane %v534, 2
      %v825 = vrot.slane %v535, 2
      %v826 = vsel %vm798, %v824, %v825
      %v827 = vrot.slane %v536, 2
      %v828 = vsel %vm798, %v825, %v827
      %v829 = vrot.slane %v537, 2
      %v830 = vrot.slane %v538, 2
      %v831 = vsel %vm798, %v829, %v830
      %v832 = vrot.slane %v539, 2
      %v833 = vsel %vm798, %v830, %v832
      %v834 = vrot.slane %v540, 2
      %v835 = vrot.slane %v541, 2
      %v836 = vsel %vm798, %v834, %v835
      %v837 = vrot.slane %v542, 2
      %v838 = vsel %vm798, %v835, %v837
      %v839 = vrot.slane %v543, 2
      %v840 = vrot.slane %v544, 2
      %v841 = vsel %vm798, %v839, %v840
      %v842 = vrot.slane %v545, 2
      %v843 = vsel %vm798, %v840, %v842
      %v844 = vrot.slane %v546, 2
      %v845 = vrot.slane %v547, 2
      %v846 = vsel %vm798, %v844, %v845
      %v847 = vrot.slane %v548, 2
      %v848 = vsel %vm798, %v845, %v847
      %v849 = vrot.slane %v549, 2
      %v850 = vrot.slane %v550, 2
      %v851 = vsel %vm798, %v849, %v850
      %v852 = vrot.slane %v551, 2
      %v853 = vsel %vm798, %v850, %v852
      %v854 = vrot.slane %v552, 2
      %v855 = vrot.slane %v553, 2
      %v856 = vsel %vm798, %v854, %v855
      %v857 = vrot.slane %v554, 2
      %v858 = vsel %vm798, %v855, %v857
      %v859 = vrot.slane %v555, 2
      %v860 = vrot.slane %v556, 2
      %v861 = vsel %vm798, %v859, %v860
      %v862 = vrot.slane %v557, 2
      %v863 = vsel %vm798, %v860, %v862
      %v864 = vrot.slane %v558, 2
      %v865 = vrot.slane %v559, 2
      %v866 = vsel %vm798, %v864, %v865
      %v867 = vrot.slane %v560, 2
      %v868 = vsel %vm798, %v865, %v867
      %v869 = vrot.slane %v561, 2
      %v870 = vrot.slane %v562, 2
      %v871 = vsel %vm798, %v869, %v870
      %v872 = vrot.slane %v563, 2
      %v873 = vsel %vm798, %v870, %v872
      %v874 = vrot.slane %v564, 2
      %v875 = vrot.slane %v565, 2
      %v876 = vsel %vm798, %v874, %v875
      %v877 = vrot.slane %v566, 2
      %v878 = vsel %vm798, %v875, %v877
      %911 = vst [vmem:[#allocation3 + $0x10] sm:$0xff] %v801
      %912 = vst [vmem:[#allocation3 + $0x58] sm:$0xff] %v803
      %913 = vst [vmem:[#allocation3 + $0xa0] sm:$0xff] %v806
      %914 = vst [vmem:[#allocation3 + $0xe8] sm:$0xff] %v808
      %915 = vst [vmem:[#allocation3 + $0x130] sm:$0xff] %v811
      %916 = vst [vmem:[#allocation3 + $0x178] sm:$0xff] %v813
      %917 = vst [vmem:[#allocation3 + $0x1c0] sm:$0xff] %v816
      %918 = vst [vmem:[#allocation3 + $0x208] sm:$0xff] %v818
      %919 = vst [vmem:[#allocation3 + $0x250] sm:$0xff] %v821
      %920 = vst [vmem:[#allocation3 + $0x298] sm:$0xff] %v823
      %921 = vst [vmem:[#allocation3 + $0x2e0] sm:$0xff] %v826
      %922 = vst [vmem:[#allocation3 + $0x328] sm:$0xff] %v828
      %923 = vst [vmem:[#allocation3 + $0x370] sm:$0xff] %v831
      %924 = vst [vmem:[#allocation3 + $0x3b8] sm:$0xff] %v833
      %925 = vst [vmem:[#allocation3 + $0x400] sm:$0xff] %v836
      %926 = vst [vmem:[#allocation3 + $0x448] sm:$0xff] %v838
      %927 = vst [vmem:[#allocation3 + $0x490] sm:$0xff] %v841
      %928 = vst [vmem:[#allocation3 + $0x4d8] sm:$0xff] %v843
      %929 = vst [vmem:[#allocation3 + $0x520] sm:$0xff] %v846
      %930 = vst [vmem:[#allocation3 + $0x568] sm:$0xff] %v848
      %931 = vst [vmem:[#allocation3 + $0x5b0] sm:$0xff] %v851
      %932 = vst [vmem:[#allocation3 + $0x5f8] sm:$0xff] %v853
      %933 = vst [vmem:[#allocation3 + $0x640] sm:$0xff] %v856
      %934 = vst [vmem:[#allocation3 + $0x688] sm:$0xff] %v858
      %935 = vst [vmem:[#allocation3 + $0x6d0] sm:$0xff] %v861
      %936 = vst [vmem:[#allocation3 + $0x718] sm:$0xff] %v863
      %937 = vst [vmem:[#allocation3 + $0x760] sm:$0xff] %v866
      %938 = vst [vmem:[#allocation3 + $0x7a8] sm:$0xff] %v868
      %939 = vst [vmem:[#allocation3 + $0x7f0] sm:$0xff] %v871
      %940 = vst [vmem:[#allocation3 + $0x838] sm:$0xff] %v873
      %941 = vst [vmem:[#allocation3 + $0x880] sm:$0xff] %v876
      %942 = vst [vmem:[#allocation3 + $0x8c8] sm:$0xff] %v878
      %943 = vst [vmem:[#allocation3 + $0x18] sm:$0xff] %v522
      %944 = vst [vmem:[#allocation3 + $0x60] sm:$0xff] %v523
      %945 = vst [vmem:[#allocation3 + $0xa8] sm:$0xff] %v525
      %946 = vst [vmem:[#allocation3 + $0xf0] sm:$0xff] %v526
      %947 = vst [vmem:[#allocation3 + $0x138] sm:$0xff] %v528
      %948 = vst [vmem:[#allocation3 + $0x180] sm:$0xff] %v529
      %949 = vst [vmem:[#allocation3 + $0x1c8] sm:$0xff] %v531
      %950 = vst [vmem:[#allocation3 + $0x210] sm:$0xff] %v532
      %951 = vst [vmem:[#allocation3 + $0x258] sm:$0xff] %v534
      %952 = vst [vmem:[#allocation3 + $0x2a0] sm:$0xff] %v535
      %953 = vst [vmem:[#allocation3 + $0x2e8] sm:$0xff] %v537
      %954 = vst [vmem:[#allocation3 + $0x330] sm:$0xff] %v538
      %955 = vst [vmem:[#allocation3 + $0x378] sm:$0xff] %v540
      %956 = vst [vmem:[#allocation3 + $0x3c0] sm:$0xff] %v541
      %957 = vst [vmem:[#allocation3 + $0x408] sm:$0xff] %v543
      %958 = vst [vmem:[#allocation3 + $0x450] sm:$0xff] %v544
      %959 = vst [vmem:[#allocation3 + $0x498] sm:$0xff] %v546
      %960 = vst [vmem:[#allocation3 + $0x4e0] sm:$0xff] %v547
      %961 = vst [vmem:[#allocation3 + $0x528] sm:$0xff] %v549
      %962 = vst [vmem:[#allocation3 + $0x570] sm:$0xff] %v550
      %963 = vst [vmem:[#allocation3 + $0x5b8] sm:$0xff] %v552
      %964 = vst [vmem:[#allocation3 + $0x600] sm:$0xff] %v553
      %965 = vst [vmem:[#allocation3 + $0x648] sm:$0xff] %v555
      %966 = vst [vmem:[#allocation3 + $0x690] sm:$0xff] %v556
      %967 = vst [vmem:[#allocation3 + $0x6d8] sm:$0xff] %v558
      %968 = vst [vmem:[#allocation3 + $0x720] sm:$0xff] %v559
      %969 = vst [vmem:[#allocation3 + $0x768] sm:$0xff] %v561
      %970 = vst [vmem:[#allocation3 + $0x7b0] sm:$0xff] %v562
      %971 = vst [vmem:[#allocation3 + $0x7f8] sm:$0xff] %v564
      %972 = vst [vmem:[#allocation3 + $0x840] sm:$0xff] %v565
      %973 = vst [vmem:[#allocation3 + $0x888] sm:$0xff] %v567
      %974 = vst [vmem:[#allocation3 + $0x8d0] sm:$0xff] %v568
      %v978 = vrot.slane %v567, 1
      %v979 = vrot.slane %v568, 1
      %v980 = vsel %vm653, %v978, %v979
      %v981 = vrot.slane %v569, 1
      %v982 = vsel %vm653, %v979, %v981
      %985 = vst [vmem:[#allocation3 + $0x20] sm:$0xff] %v661
      %986 = vst [vmem:[#allocation3 + $0x68] sm:$0xff] %v663
      %987 = vst [vmem:[#allocation3 + $0xb0] sm:$0xff] %v666
      %988 = vst [vmem:[#allocation3 + $0xf8] sm:$0xff] %v668
      %989 = vst [vmem:[#allocation3 + $0x140] sm:$0xff] %v671
      %990 = vst [vmem:[#allocation3 + $0x188] sm:$0xff] %v673
      %991 = vst [vmem:[#allocation3 + $0x1d0] sm:$0xff] %v676
      %992 = vst [vmem:[#allocation3 + $0x218] sm:$0xff] %v678
      %993 = vst [vmem:[#allocation3 + $0x260] sm:$0xff] %v681
      %994 = vst [vmem:[#allocation3 + $0x2a8] sm:$0xff] %v683
      %995 = vst [vmem:[#allocation3 + $0x2f0] sm:$0xff] %v686
      %996 = vst [vmem:[#allocation3 + $0x338] sm:$0xff] %v688
      %997 = vst [vmem:[#allocation3 + $0x380] sm:$0xff] %v691
      %998 = vst [vmem:[#allocation3 + $0x3c8] sm:$0xff] %v693
      %999 = vst [vmem:[#allocation3 + $0x410] sm:$0xff] %v696
      %1000 = vst [vmem:[#allocation3 + $0x458] sm:$0xff] %v698
      %1001 = vst [vmem:[#allocation3 + $0x4a0] sm:$0xff] %v701
      %1002 = vst [vmem:[#allocation3 + $0x4e8] sm:$0xff] %v703
      %1003 = vst [vmem:[#allocation3 + $0x530] sm:$0xff] %v706
      %1004 = vst [vmem:[#allocation3 + $0x578] sm:$0xff] %v708
      %1005 = vst [vmem:[#allocation3 + $0x5c0] sm:$0xff] %v711
      %1006 = vst [vmem:[#allocation3 + $0x608] sm:$0xff] %v713
      %1007 = vst [vmem:[#allocation3 + $0x650] sm:$0xff] %v716
      %1008 = vst [vmem:[#allocation3 + $0x698] sm:$0xff] %v718
      %1009 = vst [vmem:[#allocation3 + $0x6e0] sm:$0xff] %v721
      %1010 = vst [vmem:[#allocation3 + $0x728] sm:$0xff] %v723
      %1011 = vst [vmem:[#allocation3 + $0x770] sm:$0xff] %v726
      %1012 = vst [vmem:[#allocation3 + $0x7b8] sm:$0xff] %v728
      %1013 = vst [vmem:[#allocation3 + $0x800] sm:$0xff] %v731
      %1014 = vst [vmem:[#allocation3 + $0x848] sm:$0xff] %v733
      %1015 = vst [vmem:[#allocation3 + $0x890] sm:$0xff] %v980
      %1016 = vst [vmem:[#allocation3 + $0x8d8] sm:$0xff] %v982
      %v1017 = vrot.slane %v567, 2
      %v1018 = vrot.slane %v568, 2
      %v1019 = vsel %vm798, %v1017, %v1018
      %v1020 = vrot.slane %v569, 2
      %v1021 = vsel %vm798, %v1018, %v1020
      %1024 = vst [vmem:[#allocation3 + $0x28] sm:$0xff] %v806
      %1025 = vst [vmem:[#allocation3 + $0x70] sm:$0xff] %v808
      %1026 = vst [vmem:[#allocation3 + $0xb8] sm:$0xff] %v811
      %1027 = vst [vmem:[#allocation3 + $0x100] sm:$0xff] %v813
      %1028 = vst [vmem:[#allocation3 + $0x148] sm:$0xff] %v816
      %1029 = vst [vmem:[#allocation3 + $0x190] sm:$0xff] %v818
      %1030 = vst [vmem:[#allocation3 + $0x1d8] sm:$0xff] %v821
      %1031 = vst [vmem:[#allocation3 + $0x220] sm:$0xff] %v823
      %1032 = vst [vmem:[#allocation3 + $0x268] sm:$0xff] %v826
      %1033 = vst [vmem:[#allocation3 + $0x2b0] sm:$0xff] %v828
      %1034 = vst [vmem:[#allocation3 + $0x2f8] sm:$0xff] %v831
      %1035 = vst [vmem:[#allocation3 + $0x340] sm:$0xff] %v833
      %1036 = vst [vmem:[#allocation3 + $0x388] sm:$0xff] %v836
      %1037 = vst [vmem:[#allocation3 + $0x3d0] sm:$0xff] %v838
      %1038 = vst [vmem:[#allocation3 + $0x418] sm:$0xff] %v841
      %1039 = vst [vmem:[#allocation3 + $0x460] sm:$0xff] %v843
      %1040 = vst [vmem:[#allocation3 + $0x4a8] sm:$0xff] %v846
      %1041 = vst [vmem:[#allocation3 + $0x4f0] sm:$0xff] %v848
      %1042 = vst [vmem:[#allocation3 + $0x538] sm:$0xff] %v851
      %1043 = vst [vmem:[#allocation3 + $0x580] sm:$0xff] %v853
      %1044 = vst [vmem:[#allocation3 + $0x5c8] sm:$0xff] %v856
      %1045 = vst [vmem:[#allocation3 + $0x610] sm:$0xff] %v858
      %1046 = vst [vmem:[#allocation3 + $0x658] sm:$0xff] %v861
      %1047 = vst [vmem:[#allocation3 + $0x6a0] sm:$0xff] %v863
      %1048 = vst [vmem:[#allocation3 + $0x6e8] sm:$0xff] %v866
      %1049 = vst [vmem:[#allocation3 + $0x730] sm:$0xff] %v868
      %1050 = vst [vmem:[#allocation3 + $0x778] sm:$0xff] %v871
      %1051 = vst [vmem:[#allocation3 + $0x7c0] sm:$0xff] %v873
      %1052 = vst [vmem:[#allocation3 + $0x808] sm:$0xff] %v876
      %1053 = vst [vmem:[#allocation3 + $0x850] sm:$0xff] %v878
      %1054 = vst [vmem:[#allocation3 + $0x898] sm:$0xff] %v1019
      %1055 = vst [vmem:[#allocation3 + $0x8e0] sm:$0xff] %v1021
      %1056 = vst [vmem:[#allocation3 + $0x30] sm:$0xff] %v525
      %1057 = vst [vmem:[#allocation3 + $0x78] sm:$0xff] %v526
      %1058 = vst [vmem:[#allocation3 + $0xc0] sm:$0xff] %v528
      %1059 = vst [vmem:[#allocation3 + $0x108] sm:$0xff] %v529
      %1060 = vst [vmem:[#allocation3 + $0x150] sm:$0xff] %v531
      %1061 = vst [vmem:[#allocation3 + $0x198] sm:$0xff] %v532
      %1062 = vst [vmem:[#allocation3 + $0x1e0] sm:$0xff] %v534
      %1063 = vst [vmem:[#allocation3 + $0x228] sm:$0xff] %v535
      %1064 = vst [vmem:[#allocation3 + $0x270] sm:$0xff] %v537
      %1065 = vst [vmem:[#allocation3 + $0x2b8] sm:$0xff] %v538
      %1066 = vst [vmem:[#allocation3 + $0x300] sm:$0xff] %v540
      %1067 = vst [vmem:[#allocation3 + $0x348] sm:$0xff] %v541
      %1068 = vst [vmem:[#allocation3 + $0x390] sm:$0xff] %v543
      %1069 = vst [vmem:[#allocation3 + $0x3d8] sm:$0xff] %v544
      %1070 = vst [vmem:[#allocation3 + $0x420] sm:$0xff] %v546
      %1071 = vst [vmem:[#allocation3 + $0x468] sm:$0xff] %v547
      %1072 = vst [vmem:[#allocation3 + $0x4b0] sm:$0xff] %v549
      %1073 = vst [vmem:[#allocation3 + $0x4f8] sm:$0xff] %v550
      %1074 = vst [vmem:[#allocation3 + $0x540] sm:$0xff] %v552
      %1075 = vst [vmem:[#allocation3 + $0x588] sm:$0xff] %v553
      %1076 = vst [vmem:[#allocation3 + $0x5d0] sm:$0xff] %v555
      %1077 = vst [vmem:[#allocation3 + $0x618] sm:$0xff] %v556
      %1078 = vst [vmem:[#allocation3 + $0x660] sm:$0xff] %v558
      %1079 = vst [vmem:[#allocation3 + $0x6a8] sm:$0xff] %v559
      %1080 = vst [vmem:[#allocation3 + $0x6f0] sm:$0xff] %v561
      %1081 = vst [vmem:[#allocation3 + $0x738] sm:$0xff] %v562
      %1082 = vst [vmem:[#allocation3 + $0x780] sm:$0xff] %v564
      %1083 = vst [vmem:[#allocation3 + $0x7c8] sm:$0xff] %v565
      %1084 = vst [vmem:[#allocation3 + $0x810] sm:$0xff] %v567
      %1085 = vst [vmem:[#allocation3 + $0x858] sm:$0xff] %v568
      %1086 = vst [vmem:[#allocation3 + $0x8a0] sm:$0xff] %v570
      %1087 = vst [vmem:[#allocation3 + $0x8e8] sm:$0xff] %v571
      %v1091 = vrot.slane %v570, 1
      %v1092 = vrot.slane %v571, 1
      %v1093 = vsel %vm653, %v1091, %v1092
      %v1094 = vrot.slane %v572, 1
      %v1095 = vsel %vm653, %v1092, %v1094
      %1098 = vst [vmem:[#allocation3 + $0x38] sm:$0xff] %v666
      %1099 = vst [vmem:[#allocation3 + $0x80] sm:$0xff] %v668
      %1100 = vst [vmem:[#allocation3 + $0xc8] sm:$0xff] %v671
      %1101 = vst [vmem:[#allocation3 + $0x110] sm:$0xff] %v673
      %1102 = vst [vmem:[#allocation3 + $0x158] sm:$0xff] %v676
      %1103 = vst [vmem:[#allocation3 + $0x1a0] sm:$0xff] %v678
      %1104 = vst [vmem:[#allocation3 + $0x1e8] sm:$0xff] %v681
      %1105 = vst [vmem:[#allocation3 + $0x230] sm:$0xff] %v683
      %1106 = vst [vmem:[#allocation3 + $0x278] sm:$0xff] %v686
      %1107 = vst [vmem:[#allocation3 + $0x2c0] sm:$0xff] %v688
      %1108 = vst [vmem:[#allocation3 + $0x308] sm:$0xff] %v691
      %1109 = vst [vmem:[#allocation3 + $0x350] sm:$0xff] %v693
      %1110 = vst [vmem:[#allocation3 + $0x398] sm:$0xff] %v696
      %1111 = vst [vmem:[#allocation3 + $0x3e0] sm:$0xff] %v698
      %1112 = vst [vmem:[#allocation3 + $0x428] sm:$0xff] %v701
      %1113 = vst [vmem:[#allocation3 + $0x470] sm:$0xff] %v703
      %1114 = vst [vmem:[#allocation3 + $0x4b8] sm:$0xff] %v706
      %1115 = vst [vmem:[#allocation3 + $0x500] sm:$0xff] %v708
      %1116 = vst [vmem:[#allocation3 + $0x548] sm:$0xff] %v711
      %1117 = vst [vmem:[#allocation3 + $0x590] sm:$0xff] %v713
      %1118 = vst [vmem:[#allocation3 + $0x5d8] sm:$0xff] %v716
      %1119 = vst [vmem:[#allocation3 + $0x620] sm:$0xff] %v718
      %1120 = vst [vmem:[#allocation3 + $0x668] sm:$0xff] %v721
      %1121 = vst [vmem:[#allocation3 + $0x6b0] sm:$0xff] %v723
      %1122 = vst [vmem:[#allocation3 + $0x6f8] sm:$0xff] %v726
      %1123 = vst [vmem:[#allocation3 + $0x740] sm:$0xff] %v728
      %1124 = vst [vmem:[#allocation3 + $0x788] sm:$0xff] %v731
      %1125 = vst [vmem:[#allocation3 + $0x7d0] sm:$0xff] %v733
      %1126 = vst [vmem:[#allocation3 + $0x818] sm:$0xff] %v980
      %1127 = vst [vmem:[#allocation3 + $0x860] sm:$0xff] %v982
      %1128 = vst [vmem:[#allocation3 + $0x8a8] sm:$0xff] %v1093
      %1129 = vst [vmem:[#allocation3 + $0x8f0] sm:$0xff] %v1095
      %v1130 = vrot.slane %v570, 2
      %v1131 = vrot.slane %v571, 2
      %v1132 = vsel %vm798, %v1130, %v1131
      %v1133 = vrot.slane %v572, 2
      %v1134 = vsel %vm798, %v1131, %v1133
      %1137 = vst [vmem:[#allocation3 + $0x40] sm:$0xff] %v811
      %1138 = vst [vmem:[#allocation3 + $0x88] sm:$0xff] %v813
      %1139 = vst [vmem:[#allocation3 + $0xd0] sm:$0xff] %v816
      %1140 = vst [vmem:[#allocation3 + $0x118] sm:$0xff] %v818
      %1141 = vst [vmem:[#allocation3 + $0x160] sm:$0xff] %v821
      %1142 = vst [vmem:[#allocation3 + $0x1a8] sm:$0xff] %v823
      %1143 = vst [vmem:[#allocation3 + $0x1f0] sm:$0xff] %v826
      %1144 = vst [vmem:[#allocation3 + $0x238] sm:$0xff] %v828
      %1145 = vst [vmem:[#allocation3 + $0x280] sm:$0xff] %v831
      %1146 = vst [vmem:[#allocation3 + $0x2c8] sm:$0xff] %v833
      %1147 = vst [vmem:[#allocation3 + $0x310] sm:$0xff] %v836
      %1148 = vst [vmem:[#allocation3 + $0x358] sm:$0xff] %v838
      %1149 = vst [vmem:[#allocation3 + $0x3a0] sm:$0xff] %v841
      %1150 = vst [vmem:[#allocation3 + $0x3e8] sm:$0xff] %v843
      %1151 = vst [vmem:[#allocation3 + $0x430] sm:$0xff] %v846
      %1152 = vst [vmem:[#allocation3 + $0x478] sm:$0xff] %v848
      %1153 = vst [vmem:[#allocation3 + $0x4c0] sm:$0xff] %v851
      %1154 = vst [vmem:[#allocation3 + $0x508] sm:$0xff] %v853
      %1155 = vst [vmem:[#allocation3 + $0x550] sm:$0xff] %v856
      %1156 = vst [vmem:[#allocation3 + $0x598] sm:$0xff] %v858
      %1157 = vst [vmem:[#allocation3 + $0x5e0] sm:$0xff] %v861
      %1158 = vst [vmem:[#allocation3 + $0x628] sm:$0xff] %v863
      %1159 = vst [vmem:[#allocation3 + $0x670] sm:$0xff] %v866
      %1160 = vst [vmem:[#allocation3 + $0x6b8] sm:$0xff] %v868
      %1161 = vst [vmem:[#allocation3 + $0x700] sm:$0xff] %v871
      %1162 = vst [vmem:[#allocation3 + $0x748] sm:$0xff] %v873
      %1163 = vst [vmem:[#allocation3 + $0x790] sm:$0xff] %v876
      %1164 = vst [vmem:[#allocation3 + $0x7d8] sm:$0xff] %v878
      %1165 = vst [vmem:[#allocation3 + $0x820] sm:$0xff] %v1019
      %1166 = vst [vmem:[#allocation3 + $0x868] sm:$0xff] %v1021
      %1167 = vst [vmem:[#allocation3 + $0x8b0] sm:$0xff] %v1132
      %1168 = vst [vmem:[#allocation3 + $0x8f8] sm:$0xff] %v1134
      %v1169 = vld [vmem:[#allocation3] sm:$0xff]
      %v1170 = vld [vmem:[#allocation3 + $0x8] sm:$0xff]
      %v1171 = vld [vmem:[#allocation3 + $0x10] sm:$0xff]
      %v1172 = vld [vmem:[#allocation3 + $0x18] sm:$0xff]
      %v1173 = vld [vmem:[#allocation3 + $0x20] sm:$0xff]
      %v1174 = vld [vmem:[#allocation3 + $0x28] sm:$0xff]
      %v1175 = vld [vmem:[#allocation3 + $0x30] sm:$0xff]
      %v1176 = vld [vmem:[#allocation3 + $0x38] sm:$0xff]
      %v1177 = vld [vmem:[#allocation3 + $0x40] sm:$0xff]
      %v1178 = vld [vmem:[#allocation3 + $0x48] sm:$0xff]
      %v1179 = vld [vmem:[#allocation3 + $0x50] sm:$0xff]
      %v1180 = vld [vmem:[#allocation3 + $0x58] sm:$0xff]
      %v1181 = vld [vmem:[#allocation3 + $0x60] sm:$0xff]
      %v1182 = vld [vmem:[#allocation3 + $0x68] sm:$0xff]
      %v1183 = vld [vmem:[#allocation3 + $0x70] sm:$0xff]
      %v1184 = vld [vmem:[#allocation3 + $0x78] sm:$0xff]
      %v1185 = vld [vmem:[#allocation3 + $0x80] sm:$0xff]
      %v1186 = vld [vmem:[#allocation3 + $0x88] sm:$0xff]
      %v1187 = vld [vmem:[#allocation3 + $0x90] sm:$0xff]
      %v1188 = vld [vmem:[#allocation3 + $0x98] sm:$0xff]
      %v1189 = vld [vmem:[#allocation3 + $0xa0] sm:$0xff]
      %v1190 = vld [vmem:[#allocation3 + $0xa8] sm:$0xff]
      %v1191 = vld [vmem:[#allocation3 + $0xb0] sm:$0xff]
      %v1192 = vld [vmem:[#allocation3 + $0xb8] sm:$0xff]
      %v1193 = vld [vmem:[#allocation3 + $0xc0] sm:$0xff]
      %v1194 = vld [vmem:[#allocation3 + $0xc8] sm:$0xff]
      %v1195 = vld [vmem:[#allocation3 + $0xd0] sm:$0xff]
      %v1196 = vld [vmem:[#allocation3 + $0xd8] sm:$0xff]
      %v1197 = vld [vmem:[#allocation3 + $0xe0] sm:$0xff]
      %v1198 = vld [vmem:[#allocation3 + $0xe8] sm:$0xff]
      %v1199 = vld [vmem:[#allocation3 + $0xf0] sm:$0xff]
      %v1200 = vld [vmem:[#allocation3 + $0xf8] sm:$0xff]
      %v1201 = vld [vmem:[#allocation3 + $0x100] sm:$0xff]
      %v1202 = vld [vmem:[#allocation3 + $0x108] sm:$0xff]
      %v1203 = vld [vmem:[#allocation3 + $0x110] sm:$0xff]
      %v1204 = vld [vmem:[#allocation3 + $0x118] sm:$0xff]
      %v1205 = vld [vmem:[#allocation3 + $0x120] sm:$0xff]
      %v1206 = vld [vmem:[#allocation3 + $0x128] sm:$0xff]
      %v1207 = vld [vmem:[#allocation3 + $0x130] sm:$0xff]
      %v1208 = vld [vmem:[#allocation3 + $0x138] sm:$0xff]
      %v1209 = vld [vmem:[#allocation3 + $0x140] sm:$0xff]
      %v1210 = vld [vmem:[#allocation3 + $0x148] sm:$0xff]
      %v1211 = vld [vmem:[#allocation3 + $0x150] sm:$0xff]
      %v1212 = vld [vmem:[#allocation3 + $0x158] sm:$0xff]
      %v1213 = vld [vmem:[#allocation3 + $0x160] sm:$0xff]
      %v1214 = vld [vmem:[#allocation3 + $0x168] sm:$0xff]
      %v1215 = vld [vmem:[#allocation3 + $0x170] sm:$0xff]
      %v1216 = vld [vmem:[#allocation3 + $0x178] sm:$0xff]
      %v1217 = vld [vmem:[#allocation3 + $0x180] sm:$0xff]
      %v1218 = vld [vmem:[#allocation3 + $0x188] sm:$0xff]
      %v1219 = vld [vmem:[#allocation3 + $0x190] sm:$0xff]
      %v1220 = vld [vmem:[#allocation3 + $0x198] sm:$0xff]
      %v1221 = vld [vmem:[#allocation3 + $0x1a0] sm:$0xff]
      %v1222 = vld [vmem:[#allocation3 + $0x1a8] sm:$0xff]
      %v1223 = vld [vmem:[#allocation3 + $0x1b0] sm:$0xff]
      %v1224 = vld [vmem:[#allocation3 + $0x1b8] sm:$0xff]
      %v1225 = vld [vmem:[#allocation3 + $0x1c0] sm:$0xff]
      %v1226 = vld [vmem:[#allocation3 + $0x1c8] sm:$0xff]
      %v1227 = vld [vmem:[#allocation3 + $0x1d0] sm:$0xff]
      %v1228 = vld [vmem:[#allocation3 + $0x1d8] sm:$0xff]
      %v1229 = vld [vmem:[#allocation3 + $0x1e0] sm:$0xff]
      %v1230 = vld [vmem:[#allocation3 + $0x1e8] sm:$0xff]
      %v1231 = vld [vmem:[#allocation3 + $0x1f0] sm:$0xff]
      %v1232 = vld [vmem:[#allocation3 + $0x1f8] sm:$0xff]
      %v1233 = vld [vmem:[#allocation3 + $0x200] sm:$0xff]
      %v1234 = vld [vmem:[#allocation3 + $0x208] sm:$0xff]
      %v1235 = vld [vmem:[#allocation3 + $0x210] sm:$0xff]
      %v1236 = vld [vmem:[#allocation3 + $0x218] sm:$0xff]
      %v1237 = vld [vmem:[#allocation3 + $0x220] sm:$0xff]
      %v1238 = vld [vmem:[#allocation3 + $0x228] sm:$0xff]
      %v1239 = vld [vmem:[#allocation3 + $0x230] sm:$0xff]
      %v1240 = vld [vmem:[#allocation3 + $0x238] sm:$0xff]
      %v1241 = vld [vmem:[#allocation3 + $0x240] sm:$0xff]
      %v1242 = vld [vmem:[#allocation3 + $0x248] sm:$0xff]
      %v1243 = vld [vmem:[#allocation3 + $0x250] sm:$0xff]
      %v1244 = vld [vmem:[#allocation3 + $0x258] sm:$0xff]
      %v1245 = vld [vmem:[#allocation3 + $0x260] sm:$0xff]
      %v1246 = vld [vmem:[#allocation3 + $0x268] sm:$0xff]
      %v1247 = vld [vmem:[#allocation3 + $0x270] sm:$0xff]
      %v1248 = vld [vmem:[#allocation3 + $0x278] sm:$0xff]
      %v1249 = vld [vmem:[#allocation3 + $0x280] sm:$0xff]
      %v1250 = vld [vmem:[#allocation3 + $0x288] sm:$0xff]
      %v1251 = vld [vmem:[#allocation3 + $0x290] sm:$0xff]
      %v1252 = vld [vmem:[#allocation3 + $0x298] sm:$0xff]
      %v1253 = vld [vmem:[#allocation3 + $0x2a0] sm:$0xff]
      %v1254 = vld [vmem:[#allocation3 + $0x2a8] sm:$0xff]
      %v1255 = vld [vmem:[#allocation3 + $0x2b0] sm:$0xff]
      %v1256 = vld [vmem:[#allocation3 + $0x2b8] sm:$0xff]
      %v1257 = vld [vmem:[#allocation3 + $0x2c0] sm:$0xff]
      %v1258 = vld [vmem:[#allocation3 + $0x2c8] sm:$0xff]
      %v1259 = vld [vmem:[#allocation3 + $0x2d0] sm:$0xff]
      %v1260 = vld [vmem:[#allocation3 + $0x2d8] sm:$0xff]
      %v1261 = vld [vmem:[#allocation3 + $0x2e0] sm:$0xff]
      %v1262 = vld [vmem:[#allocation3 + $0x2e8] sm:$0xff]
      %v1263 = vld [vmem:[#allocation3 + $0x2f0] sm:$0xff]
      %v1264 = vld [vmem:[#allocation3 + $0x2f8] sm:$0xff]
      %v1265 = vld [vmem:[#allocation3 + $0x300] sm:$0xff]
      %v1266 = vld [vmem:[#allocation3 + $0x308] sm:$0xff]
      %v1267 = vld [vmem:[#allocation3 + $0x310] sm:$0xff]
      %v1268 = vld [vmem:[#allocation3 + $0x318] sm:$0xff]
      %v1269 = vld [vmem:[#allocation3 + $0x320] sm:$0xff]
      %v1270 = vld [vmem:[#allocation3 + $0x328] sm:$0xff]
      %v1271 = vld [vmem:[#allocation3 + $0x330] sm:$0xff]
      %v1272 = vld [vmem:[#allocation3 + $0x338] sm:$0xff]
      %v1273 = vld [vmem:[#allocation3 + $0x340] sm:$0xff]
      %v1274 = vld [vmem:[#allocation3 + $0x348] sm:$0xff]
      %v1275 = vld [vmem:[#allocation3 + $0x350] sm:$0xff]
      %v1276 = vld [vmem:[#allocation3 + $0x358] sm:$0xff]
      %v1277 = vld [vmem:[#allocation3 + $0x360] sm:$0xff]
      %v1278 = vld [vmem:[#allocation3 + $0x368] sm:$0xff]
      %v1279 = vld [vmem:[#allocation3 + $0x370] sm:$0xff]
      %v1280 = vld [vmem:[#allocation3 + $0x378] sm:$0xff]
      %v1281 = vld [vmem:[#allocation3 + $0x380] sm:$0xff]
      %v1282 = vld [vmem:[#allocation3 + $0x388] sm:$0xff]
      %v1283 = vld [vmem:[#allocation3 + $0x390] sm:$0xff]
      %v1284 = vld [vmem:[#allocation3 + $0x398] sm:$0xff]
      %v1285 = vld [vmem:[#allocation3 + $0x3a0] sm:$0xff]
      %v1286 = vld [vmem:[#allocation3 + $0x3a8] sm:$0xff]
      %v1287 = vld [vmem:[#allocation3 + $0x3b0] sm:$0xff]
      %v1288 = vld [vmem:[#allocation3 + $0x3b8] sm:$0xff]
      %v1289 = vld [vmem:[#allocation3 + $0x3c0] sm:$0xff]
      %v1290 = vld [vmem:[#allocation3 + $0x3c8] sm:$0xff]
      %v1291 = vld [vmem:[#allocation3 + $0x3d0] sm:$0xff]
      %v1292 = vld [vmem:[#allocation3 + $0x3d8] sm:$0xff]
      %v1293 = vld [vmem:[#allocation3 + $0x3e0] sm:$0xff]
      %v1294 = vld [vmem:[#allocation3 + $0x3e8] sm:$0xff]
      %v1295 = vld [vmem:[#allocation3 + $0x3f0] sm:$0xff]
      %v1296 = vld [vmem:[#allocation3 + $0x3f8] sm:$0xff]
      %v1297 = vld [vmem:[#allocation3 + $0x400] sm:$0xff]
      %v1298 = vld [vmem:[#allocation3 + $0x408] sm:$0xff]
      %v1299 = vld [vmem:[#allocation3 + $0x410] sm:$0xff]
      %v1300 = vld [vmem:[#allocation3 + $0x418] sm:$0xff]
      %v1301 = vld [vmem:[#allocation3 + $0x420] sm:$0xff]
      %v1302 = vld [vmem:[#allocation3 + $0x428] sm:$0xff]
      %v1303 = vld [vmem:[#allocation3 + $0x430] sm:$0xff]
      %v1304 = vld [vmem:[#allocation3 + $0x438] sm:$0xff]
      %v1305 = vld [vmem:[#allocation3 + $0x440] sm:$0xff]
      %v1306 = vld [vmem:[#allocation3 + $0x448] sm:$0xff]
      %v1307 = vld [vmem:[#allocation3 + $0x450] sm:$0xff]
      %v1308 = vld [vmem:[#allocation3 + $0x458] sm:$0xff]
      %v1309 = vld [vmem:[#allocation3 + $0x460] sm:$0xff]
      %v1310 = vld [vmem:[#allocation3 + $0x468] sm:$0xff]
      %v1311 = vld [vmem:[#allocation3 + $0x470] sm:$0xff]
      %v1312 = vld [vmem:[#allocation3 + $0x478] sm:$0xff]
      %v1313 = vld [vmem:[#allocation3 + $0x480] sm:$0xff]
      %v1314 = vld [vmem:[#allocation3 + $0x488] sm:$0xff]
      %v1315 = vld [vmem:[#allocation3 + $0x490] sm:$0xff]
      %v1316 = vld [vmem:[#allocation3 + $0x498] sm:$0xff]
      %v1317 = vld [vmem:[#allocation3 + $0x4a0] sm:$0xff]
      %v1318 = vld [vmem:[#allocation3 + $0x4a8] sm:$0xff]
      %v1319 = vld [vmem:[#allocation3 + $0x4b0] sm:$0xff]
      %v1320 = vld [vmem:[#allocation3 + $0x4b8] sm:$0xff]
      %v1321 = vld [vmem:[#allocation3 + $0x4c0] sm:$0xff]
      %v1322 = vld [vmem:[#allocation3 + $0x4c8] sm:$0xff]
      %v1323 = vld [vmem:[#allocation3 + $0x4d0] sm:$0xff]
      %v1324 = vld [vmem:[#allocation3 + $0x4d8] sm:$0xff]
      %v1325 = vld [vmem:[#allocation3 + $0x4e0] sm:$0xff]
      %v1326 = vld [vmem:[#allocation3 + $0x4e8] sm:$0xff]
      %v1327 = vld [vmem:[#allocation3 + $0x4f0] sm:$0xff]
      %v1328 = vld [vmem:[#allocation3 + $0x4f8] sm:$0xff]
      %v1329 = vld [vmem:[#allocation3 + $0x500] sm:$0xff]
      %v1330 = vld [vmem:[#allocation3 + $0x508] sm:$0xff]
      %v1331 = vld [vmem:[#allocation3 + $0x510] sm:$0xff]
      %v1332 = vld [vmem:[#allocation3 + $0x518] sm:$0xff]
      %v1333 = vld [vmem:[#allocation3 + $0x520] sm:$0xff]
      %v1334 = vld [vmem:[#allocation3 + $0x528] sm:$0xff]
      %v1335 = vld [vmem:[#allocation3 + $0x530] sm:$0xff]
      %v1336 = vld [vmem:[#allocation3 + $0x538] sm:$0xff]
      %v1337 = vld [vmem:[#allocation3 + $0x540] sm:$0xff]
      %v1338 = vld [vmem:[#allocation3 + $0x548] sm:$0xff]
      %v1339 = vld [vmem:[#allocation3 + $0x550] sm:$0xff]
      %v1340 = vld [vmem:[#allocation3 + $0x558] sm:$0xff]
      %v1341 = vld [vmem:[#allocation3 + $0x560] sm:$0xff]
      %v1342 = vld [vmem:[#allocation3 + $0x568] sm:$0xff]
      %v1343 = vld [vmem:[#allocation3 + $0x570] sm:$0xff]
      %v1344 = vld [vmem:[#allocation3 + $0x578] sm:$0xff]
      %v1345 = vld [vmem:[#allocation3 + $0x580] sm:$0xff]
      %v1346 = vld [vmem:[#allocation3 + $0x588] sm:$0xff]
      %v1347 = vld [vmem:[#allocation3 + $0x590] sm:$0xff]
      %v1348 = vld [vmem:[#allocation3 + $0x598] sm:$0xff]
      %v1349 = vld [vmem:[#allocation3 + $0x5a0] sm:$0xff]
      %v1350 = vld [vmem:[#allocation3 + $0x5a8] sm:$0xff]
      %v1351 = vld [vmem:[#allocation3 + $0x5b0] sm:$0xff]
      %v1352 = vld [vmem:[#allocation3 + $0x5b8] sm:$0xff]
      %v1353 = vld [vmem:[#allocation3 + $0x5c0] sm:$0xff]
      %v1354 = vld [vmem:[#allocation3 + $0x5c8] sm:$0xff]
      %v1355 = vld [vmem:[#allocation3 + $0x5d0] sm:$0xff]
      %v1356 = vld [vmem:[#allocation3 + $0x5d8] sm:$0xff]
      %v1357 = vld [vmem:[#allocation3 + $0x5e0] sm:$0xff]
      %v1358 = vld [vmem:[#allocation3 + $0x5e8] sm:$0xff]
      %v1359 = vld [vmem:[#allocation3 + $0x5f0] sm:$0xff]
      %v1360 = vld [vmem:[#allocation3 + $0x5f8] sm:$0xff]
      %v1361 = vld [vmem:[#allocation3 + $0x600] sm:$0xff]
      %v1362 = vld [vmem:[#allocation3 + $0x608] sm:$0xff]
      %v1363 = vld [vmem:[#allocation3 + $0x610] sm:$0xff]
      %v1364 = vld [vmem:[#allocation3 + $0x618] sm:$0xff]
      %v1365 = vld [vmem:[#allocation3 + $0x620] sm:$0xff]
      %v1366 = vld [vmem:[#allocation3 + $0x628] sm:$0xff]
      %v1367 = vld [vmem:[#allocation3 + $0x630] sm:$0xff]
      %v1368 = vld [vmem:[#allocation3 + $0x638] sm:$0xff]
      %v1369 = vld [vmem:[#allocation3 + $0x640] sm:$0xff]
      %v1370 = vld [vmem:[#allocation3 + $0x648] sm:$0xff]
      %v1371 = vld [vmem:[#allocation3 + $0x650] sm:$0xff]
      %v1372 = vld [vmem:[#allocation3 + $0x658] sm:$0xff]
      %v1373 = vld [vmem:[#allocation3 + $0x660] sm:$0xff]
      %v1374 = vld [vmem:[#allocation3 + $0x668] sm:$0xff]
      %v1375 = vld [vmem:[#allocation3 + $0x670] sm:$0xff]
      %v1376 = vld [vmem:[#allocation3 + $0x678] sm:$0xff]
      %v1377 = vld [vmem:[#allocation3 + $0x680] sm:$0xff]
      %v1378 = vld [vmem:[#allocation3 + $0x688] sm:$0xff]
      %v1379 = vld [vmem:[#allocation3 + $0x690] sm:$0xff]
      %v1380 = vld [vmem:[#allocation3 + $0x698] sm:$0xff]
      %v1381 = vld [vmem:[#allocation3 + $0x6a0] sm:$0xff]
      %v1382 = vld [vmem:[#allocation3 + $0x6a8] sm:$0xff]
      %v1383 = vld [vmem:[#allocation3 + $0x6b0] sm:$0xff]
      %v1384 = vld [vmem:[#allocation3 + $0x6b8] sm:$0xff]
      %v1385 = vld [vmem:[#allocation3 + $0x6c0] sm:$0xff]
      %v1386 = vld [vmem:[#allocation3 + $0x6c8] sm:$0xff]
      %v1387 = vld [vmem:[#allocation3 + $0x6d0] sm:$0xff]
      %v1388 = vld [vmem:[#allocation3 + $0x6d8] sm:$0xff]
      %v1389 = vld [vmem:[#allocation3 + $0x6e0] sm:$0xff]
      %v1390 = vld [vmem:[#allocation3 + $0x6e8] sm:$0xff]
      %v1391 = vld [vmem:[#allocation3 + $0x6f0] sm:$0xff]
      %v1392 = vld [vmem:[#allocation3 + $0x6f8] sm:$0xff]
      %v1393 = vld [vmem:[#allocation3 + $0x700] sm:$0xff]
      %v1394 = vld [vmem:[#allocation3 + $0x708] sm:$0xff]
      %v1395 = vld [vmem:[#allocation3 + $0x710] sm:$0xff]
      %v1396 = vld [vmem:[#allocation3 + $0x718] sm:$0xff]
      %v1397 = vld [vmem:[#allocation3 + $0x720] sm:$0xff]
      %v1398 = vld [vmem:[#allocation3 + $0x728] sm:$0xff]
      %v1399 = vld [vmem:[#allocation3 + $0x730] sm:$0xff]
      %v1400 = vld [vmem:[#allocation3 + $0x738] sm:$0xff]
      %v1401 = vld [vmem:[#allocation3 + $0x740] sm:$0xff]
      %v1402 = vld [vmem:[#allocation3 + $0x748] sm:$0xff]
      %v1403 = vld [vmem:[#allocation3 + $0x750] sm:$0xff]
      %v1404 = vld [vmem:[#allocation3 + $0x758] sm:$0xff]
      %v1405 = vld [vmem:[#allocation3 + $0x760] sm:$0xff]
      %v1406 = vld [vmem:[#allocation3 + $0x768] sm:$0xff]
      %v1407 = vld [vmem:[#allocation3 + $0x770] sm:$0xff]
      %v1408 = vld [vmem:[#allocation3 + $0x778] sm:$0xff]
      %v1409 = vld [vmem:[#allocation3 + $0x780] sm:$0xff]
      %v1410 = vld [vmem:[#allocation3 + $0x788] sm:$0xff]
      %v1411 = vld [vmem:[#allocation3 + $0x790] sm:$0xff]
      %v1412 = vld [vmem:[#allocation3 + $0x798] sm:$0xff]
      %v1413 = vld [vmem:[#allocation3 + $0x7a0] sm:$0xff]
      %v1414 = vld [vmem:[#allocation3 + $0x7a8] sm:$0xff]
      %v1415 = vld [vmem:[#allocation3 + $0x7b0] sm:$0xff]
      %v1416 = vld [vmem:[#allocation3 + $0x7b8] sm:$0xff]
      %v1417 = vld [vmem:[#allocation3 + $0x7c0] sm:$0xff]
      %v1418 = vld [vmem:[#allocation3 + $0x7c8] sm:$0xff]
      %v1419 = vld [vmem:[#allocation3 + $0x7d0] sm:$0xff]
      %v1420 = vld [vmem:[#allocation3 + $0x7d8] sm:$0xff]
      %v1421 = vld [vmem:[#allocation3 + $0x7e0] sm:$0xff]
      %v1422 = vld [vmem:[#allocation3 + $0x7e8] sm:$0xff]
      %v1423 = vld [vmem:[#allocation3 + $0x7f0] sm:$0xff]
      %v1424 = vld [vmem:[#allocation3 + $0x7f8] sm:$0xff]
      %v1425 = vld [vmem:[#allocation3 + $0x800] sm:$0xff]
      %v1426 = vld [vmem:[#allocation3 + $0x808] sm:$0xff]
      %v1427 = vld [vmem:[#allocation3 + $0x810] sm:$0xff]
      %v1428 = vld [vmem:[#allocation3 + $0x818] sm:$0xff]
      %v1429 = vld [vmem:[#allocation3 + $0x820] sm:$0xff]
      %v1430 = vld [vmem:[#allocation3 + $0x828] sm:$0xff]
      %v1431 = vld [vmem:[#allocation3 + $0x830] sm:$0xff]
      %v1432 = vld [vmem:[#allocation3 + $0x838] sm:$0xff]
      %v1433 = vld [vmem:[#allocation3 + $0x840] sm:$0xff]
      %v1434 = vld [vmem:[#allocation3 + $0x848] sm:$0xff]
      %v1435 = vld [vmem:[#allocation3 + $0x850] sm:$0xff]
      %v1436 = vld [vmem:[#allocation3 + $0x858] sm:$0xff]
      %v1437 = vld [vmem:[#allocation3 + $0x860] sm:$0xff]
      %v1438 = vld [vmem:[#allocation3 + $0x868] sm:$0xff]
      %v1439 = vld [vmem:[#allocation3 + $0x870] sm:$0xff]
      %v1440 = vld [vmem:[#allocation3 + $0x878] sm:$0xff]
      %v1441 = vld [vmem:[#allocation3 + $0x880] sm:$0xff]
      %v1442 = vld [vmem:[#allocation3 + $0x888] sm:$0xff]
      %v1443 = vld [vmem:[#allocation3 + $0x890] sm:$0xff]
      %v1444 = vld [vmem:[#allocation3 + $0x898] sm:$0xff]
      %v1445 = vld [vmem:[#allocation3 + $0x8a0] sm:$0xff]
      %v1446 = vld [vmem:[#allocation3 + $0x8a8] sm:$0xff]
      %v1447 = vld [vmem:[#allocation3 + $0x8b0] sm:$0xff]
      %v1448 = vld [vmem:[#allocation3 + $0x8b8] sm:$0xff]
      %v1449 = vld [vmem:[#allocation3 + $0x8c0] sm:$0xff]
      %v1450 = vld [vmem:[#allocation3 + $0x8c8] sm:$0xff]
      %v1451 = vld [vmem:[#allocation3 + $0x8d0] sm:$0xff]
      %v1452 = vld [vmem:[#allocation3 + $0x8d8] sm:$0xff]
      %v1453 = vld [vmem:[#allocation3 + $0x8e0] sm:$0xff]
      %v1454 = vld [vmem:[#allocation3 + $0x8e8] sm:$0xff]
      %v1455 = vld [vmem:[#allocation3 + $0x8f0] sm:$0xff]
      %v1456 = vld [vmem:[#allocation3 + $0x8f8] sm:$0xff]
      %v1457 = vld [vmem:[%s3] sm:$0xff]
      %v1458 = vld [vmem:[%s3 + $0x8] sm:$0xff]
      %v1459 = vld [vmem:[%s3 + $0x10] sm:$0xff]
      %v1460 = vld [vmem:[%s3 + $0x18] sm:$0xff]
      %v1461 = vld [vmem:[%s3 + $0x20] sm:$0xff]
      %v1462 = vld [vmem:[%s3 + $0x28] sm:$0xff]
      %v1463 = vld [vmem:[%s3 + $0x30] sm:$0xff]
      %v1464 = vld [vmem:[%s3 + $0x38] sm:$0xff]
      %v1465 = vld [vmem:[%s3 + $0x40] sm:$0xff]
      %v1466 = vld [vmem:[%s3 + $0x48] sm:$0xff]
      %v1467 = vld [vmem:[%s3 + $0x50] sm:$0xff]
      %v1468 = vld [vmem:[%s3 + $0x58] sm:$0xff]
      %v1469 = vld [vmem:[%s3 + $0x60] sm:$0xff]
      %v1470 = vld [vmem:[%s3 + $0x68] sm:$0xff]
      %v1471 = vld [vmem:[%s3 + $0x70] sm:$0xff]
      %v1472 = vld [vmem:[%s3 + $0x78] sm:$0xff]
      %v1473 = vld [vmem:[%s3 + $0x80] sm:$0xff]
      %v1474 = vld [vmem:[%s3 + $0x88] sm:$0xff]
      %v1475 = vld [vmem:[%s3 + $0x90] sm:$0xff]
      %v1476 = vld [vmem:[%s3 + $0x98] sm:$0xff]
      %v1477 = vld [vmem:[%s3 + $0xa0] sm:$0xff]
      %v1478 = vld [vmem:[%s3 + $0xa8] sm:$0xff]
      %v1479 = vld [vmem:[%s3 + $0xb0] sm:$0xff]
      %v1480 = vld [vmem:[%s3 + $0xb8] sm:$0xff]
      %v1481 = vld [vmem:[%s3 + $0xc0] sm:$0xff]
      %v1482 = vld [vmem:[%s3 + $0xc8] sm:$0xff]
      %v1483 = vld [vmem:[%s3 + $0xd0] sm:$0xff]
      %v1484 = vld [vmem:[%s3 + $0xd8] sm:$0xff]
      %v1485 = vld [vmem:[%s3 + $0xe0] sm:$0xff]
      %v1486 = vld [vmem:[%s3 + $0xe8] sm:$0xff]
      %v1487 = vld [vmem:[%s3 + $0xf0] sm:$0xff]
      %v1488 = vld [vmem:[%s3 + $0xf8] sm:$0xff]
      %v1489 = vld [vmem:[%s3 + $0x100] sm:$0xff]
      %v1490 = vld [vmem:[%s3 + $0x108] sm:$0xff]
      %v1491 = vld [vmem:[%s3 + $0x110] sm:$0xff]
      %v1492 = vld [vmem:[%s3 + $0x118] sm:$0xff]
      %v1493 = vld [vmem:[%s3 + $0x120] sm:$0xff]
      %v1494 = vld [vmem:[%s3 + $0x128] sm:$0xff]
      %v1495 = vld [vmem:[%s3 + $0x130] sm:$0xff]
      %v1496 = vld [vmem:[%s3 + $0x138] sm:$0xff]
      %v1497 = vld [vmem:[%s3 + $0x140] sm:$0xff]
      %v1498 = vld [vmem:[%s3 + $0x148] sm:$0xff]
      %v1499 = vld [vmem:[%s3 + $0x150] sm:$0xff]
      %v1500 = vld [vmem:[%s3 + $0x158] sm:$0xff]
      %v1501 = vld [vmem:[%s3 + $0x160] sm:$0xff]
      %v1502 = vld [vmem:[%s3 + $0x168] sm:$0xff]
      %v1503 = vld [vmem:[%s3 + $0x170] sm:$0xff]
      %v1504 = vld [vmem:[%s3 + $0x178] sm:$0xff]
      %v1505 = vld [vmem:[%s3 + $0x180] sm:$0xff]
      %v1506 = vld [vmem:[%s3 + $0x188] sm:$0xff]
      %v1507 = vld [vmem:[%s3 + $0x190] sm:$0xff]
      %v1508 = vld [vmem:[%s3 + $0x198] sm:$0xff]
      %v1509 = vld [vmem:[%s3 + $0x1a0] sm:$0xff]
      %v1510 = vld [vmem:[%s3 + $0x1a8] sm:$0xff]
      %v1511 = vld [vmem:[%s3 + $0x1b0] sm:$0xff]
      %v1512 = vld [vmem:[%s3 + $0x1b8] sm:$0xff]
      %v1513 = vld [vmem:[%s3 + $0x1c0] sm:$0xff]
      %v1514 = vld [vmem:[%s3 + $0x1c8] sm:$0xff]
      %v1515 = vld [vmem:[%s3 + $0x1d0] sm:$0xff]
      %v1516 = vld [vmem:[%s3 + $0x1d8] sm:$0xff]
      %v1517 = vld [vmem:[%s3 + $0x1e0] sm:$0xff]
      %v1518 = vld [vmem:[%s3 + $0x1e8] sm:$0xff]
      %v1519 = vld [vmem:[%s3 + $0x1f0] sm:$0xff]
      %v1520 = vld [vmem:[%s3 + $0x1f8] sm:$0xff]
      %v1521 = vld [vmem:[%s3 + $0x200] sm:$0xff]
      %v1522 = vld [vmem:[%s3 + $0x208] sm:$0xff]
      %v1523 = vld [vmem:[%s3 + $0x210] sm:$0xff]
      %v1524 = vld [vmem:[%s3 + $0x218] sm:$0xff]
      %v1525 = vld [vmem:[%s3 + $0x220] sm:$0xff]
      %v1526 = vld [vmem:[%s3 + $0x228] sm:$0xff]
      %v1527 = vld [vmem:[%s3 + $0x230] sm:$0xff]
      %v1528 = vld [vmem:[%s3 + $0x238] sm:$0xff]
      %v1529 = vld [vmem:[%s3 + $0x240] sm:$0xff]
      %v1530 = vld [vmem:[%s3 + $0x248] sm:$0xff]
      %v1531 = vld [vmem:[%s3 + $0x250] sm:$0xff]
      %v1532 = vld [vmem:[%s3 + $0x258] sm:$0xff]
      %v1533 = vld [vmem:[%s3 + $0x260] sm:$0xff]
      %v1534 = vld [vmem:[%s3 + $0x268] sm:$0xff]
      %v1535 = vld [vmem:[%s3 + $0x270] sm:$0xff]
      %v1536 = vld [vmem:[%s3 + $0x278] sm:$0xff]
      %v1537 = vld [vmem:[%s3 + $0x280] sm:$0xff]
      %v1538 = vld [vmem:[%s3 + $0x288] sm:$0xff]
      %v1539 = vld [vmem:[%s3 + $0x290] sm:$0xff]
      %v1540 = vld [vmem:[%s3 + $0x298] sm:$0xff]
      %v1541 = vld [vmem:[%s3 + $0x2a0] sm:$0xff]
      %v1542 = vld [vmem:[%s3 + $0x2a8] sm:$0xff]
      %v1543 = vld [vmem:[%s3 + $0x2b0] sm:$0xff]
      %v1544 = vld [vmem:[%s3 + $0x2b8] sm:$0xff]
      %v1545 = vld [vmem:[%s3 + $0x2c0] sm:$0xff]
      %v1546 = vld [vmem:[%s3 + $0x2c8] sm:$0xff]
      %v1547 = vld [vmem:[%s3 + $0x2d0] sm:$0xff]
      %v1548 = vld [vmem:[%s3 + $0x2d8] sm:$0xff]
      %v1549 = vld [vmem:[%s3 + $0x2e0] sm:$0xff]
      %v1550 = vld [vmem:[%s3 + $0x2e8] sm:$0xff]
      %v1551 = vld [vmem:[%s3 + $0x2f0] sm:$0xff]
      %v1552 = vld [vmem:[%s3 + $0x2f8] sm:$0xff]
      %v1553 = vld [vmem:[%s3 + $0x300] sm:$0xff]
      %v1554 = vld [vmem:[%s3 + $0x308] sm:$0xff]
      %v1555 = vld [vmem:[%s3 + $0x310] sm:$0xff]
      %v1556 = vld [vmem:[%s3 + $0x318] sm:$0xff]
      %v1557 = vld [vmem:[%s3 + $0x320] sm:$0xff]
      %v1558 = vld [vmem:[%s3 + $0x328] sm:$0xff]
      %v1559 = vld [vmem:[%s3 + $0x330] sm:$0xff]
      %v1560 = vld [vmem:[%s3 + $0x338] sm:$0xff]
      %v1561 = vld [vmem:[%s3 + $0x340] sm:$0xff]
      %v1562 = vld [vmem:[%s3 + $0x348] sm:$0xff]
      %v1563 = vld [vmem:[%s3 + $0x350] sm:$0xff]
      %v1564 = vld [vmem:[%s3 + $0x358] sm:$0xff]
      %v1565 = vld [vmem:[%s3 + $0x360] sm:$0xff]
      %v1566 = vld [vmem:[%s3 + $0x368] sm:$0xff]
      %v1567 = vld [vmem:[%s3 + $0x370] sm:$0xff]
      %v1568 = vld [vmem:[%s3 + $0x378] sm:$0xff]
      %v1569 = vld [vmem:[%s3 + $0x380] sm:$0xff]
      %v1570 = vld [vmem:[%s3 + $0x388] sm:$0xff]
      %v1571 = vld [vmem:[%s3 + $0x390] sm:$0xff]
      %v1572 = vld [vmem:[%s3 + $0x398] sm:$0xff]
      %v1573 = vld [vmem:[%s3 + $0x3a0] sm:$0xff]
      %v1574 = vld [vmem:[%s3 + $0x3a8] sm:$0xff]
      %v1575 = vld [vmem:[%s3 + $0x3b0] sm:$0xff]
      %v1576 = vld [vmem:[%s3 + $0x3b8] sm:$0xff]
      %v1577 = vld [vmem:[%s3 + $0x3c0] sm:$0xff]
      %v1578 = vld [vmem:[%s3 + $0x3c8] sm:$0xff]
      %v1579 = vld [vmem:[%s3 + $0x3d0] sm:$0xff]
      %v1580 = vld [vmem:[%s3 + $0x3d8] sm:$0xff]
      %v1581 = vld [vmem:[%s3 + $0x3e0] sm:$0xff]
      %v1582 = vld [vmem:[%s3 + $0x3e8] sm:$0xff]
      %v1583 = vld [vmem:[%s3 + $0x3f0] sm:$0xff]
      %v1584 = vld [vmem:[%s3 + $0x3f8] sm:$0xff]
      %v1585 = vld [vmem:[%s3 + $0x400] sm:$0xff]
      %v1586 = vld [vmem:[%s3 + $0x408] sm:$0xff]
      %v1587 = vld [vmem:[%s3 + $0x410] sm:$0xff]
      %v1588 = vld [vmem:[%s3 + $0x418] sm:$0xff]
      %v1589 = vld [vmem:[%s3 + $0x420] sm:$0xff]
      %v1590 = vld [vmem:[%s3 + $0x428] sm:$0xff]
      %v1591 = vld [vmem:[%s3 + $0x430] sm:$0xff]
      %v1592 = vld [vmem:[%s3 + $0x438] sm:$0xff]
      %v1593 = vld [vmem:[%s3 + $0x440] sm:$0xff]
      %v1594 = vld [vmem:[%s3 + $0x448] sm:$0xff]
      %v1595 = vld [vmem:[%s3 + $0x450] sm:$0xff]
      %v1596 = vld [vmem:[%s3 + $0x458] sm:$0xff]
      %v1597 = vld [vmem:[%s3 + $0x460] sm:$0xff]
      %v1598 = vld [vmem:[%s3 + $0x468] sm:$0xff]
      %v1599 = vld [vmem:[%s3 + $0x470] sm:$0xff]
      %v1600 = vld [vmem:[%s3 + $0x478] sm:$0xff]
      %v1601 = vld [vmem:[%s4] sm:$0x1]
      %v1603 = vperm.slane %v1601, 0
      %1605 = vmatpush.msra.mxu0 %v1472
      %1606 = vmatpush.msra.mxu0 %v1471
      %1607 = vmatpush.msra.mxu0 %v1470
      %1608 = vmatpush.msra.mxu0 %v1469
      %1609 = vmatpush.msra.mxu0 %v1468
      %1610 = vmatpush.msra.mxu0 %v1467
      %1611 = vmatpush.msra.mxu0 %v1466
      %1612 = vmatpush.msra.mxu0 %v1465
      %1613 = vmatpush.msra.mxu0 %v1464
      %1614 = vmatpush.msra.mxu0 %v1463
      %1615 = vmatpush.msra.mxu0 %v1462
      %1616 = vmatpush.msra.mxu0 %v1461
      %1617 = vmatpush.msra.mxu0 %v1460
      %1618 = vmatpush.msra.mxu0 %v1459
      %1619 = vmatpush.msra.mxu0 %v1458
      %1620 = vmatpush.msra.mxu0 %v1457
      %1621 = vmatmul.f32.gmra.mxu0 %v1169
      %v1622 = vpop.f32.mrf.mxu0
      %v1623 = vadd.f32 %v1603, %v1622
      %1624 = vmatmul.f32.gmra.mxu0 %v1178
      %v1625 = vpop.f32.mrf.mxu0
      %v1626 = vadd.f32 %v1603, %v1625
      %1627 = vmatmul.f32.gmra.mxu0 %v1187
      %v1628 = vpop.f32.mrf.mxu0
      %v1629 = vadd.f32 %v1603, %v1628
      %1630 = vmatmul.f32.gmra.mxu0 %v1196
      %v1631 = vpop.f32.mrf.mxu0
      %v1632 = vadd.f32 %v1603, %v1631
      %1633 = vmatmul.f32.gmra.mxu0 %v1205
      %v1634 = vpop.f32.mrf.mxu0
      %v1635 = vadd.f32 %v1603, %v1634
      %1636 = vmatmul.f32.gmra.mxu0 %v1214
      %v1637 = vpop.f32.mrf.mxu0
      %v1638 = vadd.f32 %v1603, %v1637
      %1639 = vmatmul.f32.gmra.mxu0 %v1223
      %v1640 = vpop.f32.mrf.mxu0
      %v1641 = vadd.f32 %v1603, %v1640
      %1642 = vmatmul.f32.gmra.mxu0 %v1232
      %v1643 = vpop.f32.mrf.mxu0
      %v1644 = vadd.f32 %v1603, %v1643
      %1645 = vmatmul.f32.gmra.mxu0 %v1241
      %v1646 = vpop.f32.mrf.mxu0
      %v1647 = vadd.f32 %v1603, %v1646
      %1648 = vmatmul.f32.gmra.mxu0 %v1250
      %v1649 = vpop.f32.mrf.mxu0
      %v1650 = vadd.f32 %v1603, %v1649
      %1651 = vmatmul.f32.gmra.mxu0 %v1259
      %v1652 = vpop.f32.mrf.mxu0
      %v1653 = vadd.f32 %v1603, %v1652
      %1654 = vmatmul.f32.gmra.mxu0 %v1268
      %v1655 = vpop.f32.mrf.mxu0
      %v1656 = vadd.f32 %v1603, %v1655
      %1657 = vmatmul.f32.gmra.mxu0 %v1277
      %v1658 = vpop.f32.mrf.mxu0
      %v1659 = vadd.f32 %v1603, %v1658
      %1660 = vmatmul.f32.gmra.mxu0 %v1286
      %v1661 = vpop.f32.mrf.mxu0
      %v1662 = vadd.f32 %v1603, %v1661
      %1663 = vmatmul.f32.gmra.mxu0 %v1295
      %v1664 = vpop.f32.mrf.mxu0
      %v1665 = vadd.f32 %v1603, %v1664
      %1666 = vmatmul.f32.gmra.mxu0 %v1304
      %v1667 = vpop.f32.mrf.mxu0
      %v1668 = vadd.f32 %v1603, %v1667
      %1669 = vmatmul.f32.gmra.mxu0 %v1313
      %v1670 = vpop.f32.mrf.mxu0
      %v1671 = vadd.f32 %v1603, %v1670
      %1672 = vmatmul.f32.gmra.mxu0 %v1322
      %v1673 = vpop.f32.mrf.mxu0
      %v1674 = vadd.f32 %v1603, %v1673
      %1675 = vmatmul.f32.gmra.mxu0 %v1331
      %v1676 = vpop.f32.mrf.mxu0
      %v1677 = vadd.f32 %v1603, %v1676
      %1678 = vmatmul.f32.gmra.mxu0 %v1340
      %v1679 = vpop.f32.mrf.mxu0
      %v1680 = vadd.f32 %v1603, %v1679
      %1681 = vmatmul.f32.gmra.mxu0 %v1349
      %v1682 = vpop.f32.mrf.mxu0
      %v1683 = vadd.f32 %v1603, %v1682
      %1684 = vmatmul.f32.gmra.mxu0 %v1358
      %v1685 = vpop.f32.mrf.mxu0
      %v1686 = vadd.f32 %v1603, %v1685
      %1687 = vmatmul.f32.gmra.mxu0 %v1367
      %v1688 = vpop.f32.mrf.mxu0
      %v1689 = vadd.f32 %v1603, %v1688
      %1690 = vmatmul.f32.gmra.mxu0 %v1376
      %v1691 = vpop.f32.mrf.mxu0
      %v1692 = vadd.f32 %v1603, %v1691
      %1693 = vmatmul.f32.gmra.mxu0 %v1385
      %v1694 = vpop.f32.mrf.mxu0
      %v1695 = vadd.f32 %v1603, %v1694
      %1696 = vmatmul.f32.gmra.mxu0 %v1394
      %v1697 = vpop.f32.mrf.mxu0
      %v1698 = vadd.f32 %v1603, %v1697
      %1699 = vmatmul.f32.gmra.mxu0 %v1403
      %v1700 = vpop.f32.mrf.mxu0
      %v1701 = vadd.f32 %v1603, %v1700
      %1702 = vmatmul.f32.gmra.mxu0 %v1412
      %v1703 = vpop.f32.mrf.mxu0
      %v1704 = vadd.f32 %v1603, %v1703
      %1705 = vmatmul.f32.gmra.mxu0 %v1421
      %v1706 = vpop.f32.mrf.mxu0
      %v1707 = vadd.f32 %v1603, %v1706
      %1708 = vmatmul.f32.gmra.mxu0 %v1430
      %v1709 = vpop.f32.mrf.mxu0
      %v1710 = vadd.f32 %v1603, %v1709
      %1711 = vmatmul.f32.gmra.mxu0 %v1439
      %v1712 = vpop.f32.mrf.mxu0
      %v1713 = vadd.f32 %v1603, %v1712
      %1714 = vmatmul.f32.gmra.mxu0 %v1448
      %v1715 = vpop.f32.mrf.mxu0
      %v1716 = vadd.f32 %v1603, %v1715
      %1717 = vdwg.mxu0
      %1718 = vmatpush.msra.mxu0 %v1488
      %1719 = vmatpush.msra.mxu0 %v1487
      %1720 = vmatpush.msra.mxu0 %v1486
      %1721 = vmatpush.msra.mxu0 %v1485
      %1722 = vmatpush.msra.mxu0 %v1484
      %1723 = vmatpush.msra.mxu0 %v1483
      %1724 = vmatpush.msra.mxu0 %v1482
      %1725 = vmatpush.msra.mxu0 %v1481
      %1726 = vmatpush.msra.mxu0 %v1480
      %1727 = vmatpush.msra.mxu0 %v1479
      %1728 = vmatpush.msra.mxu0 %v1478
      %1729 = vmatpush.msra.mxu0 %v1477
      %1730 = vmatpush.msra.mxu0 %v1476
      %1731 = vmatpush.msra.mxu0 %v1475
      %1732 = vmatpush.msra.mxu0 %v1474
      %1733 = vmatpush.msra.mxu0 %v1473
      %1734 = vmatmul.f32.gmra.mxu0 %v1170
      %v1735 = vpop.f32.mrf.mxu0
      %v1736 = vadd.f32 %v1623, %v1735
      %1737 = vmatmul.f32.gmra.mxu0 %v1179
      %v1738 = vpop.f32.mrf.mxu0
      %v1739 = vadd.f32 %v1626, %v1738
      %1740 = vmatmul.f32.gmra.mxu0 %v1188
      %v1741 = vpop.f32.mrf.mxu0
      %v1742 = vadd.f32 %v1629, %v1741
      %1743 = vmatmul.f32.gmra.mxu0 %v1197
      %v1744 = vpop.f32.mrf.mxu0
      %v1745 = vadd.f32 %v1632, %v1744
      %1746 = vmatmul.f32.gmra.mxu0 %v1206
      %v1747 = vpop.f32.mrf.mxu0
      %v1748 = vadd.f32 %v1635, %v1747
      %1749 = vmatmul.f32.gmra.mxu0 %v1215
      %v1750 = vpop.f32.mrf.mxu0
      %v1751 = vadd.f32 %v1638, %v1750
      %1752 = vmatmul.f32.gmra.mxu0 %v1224
      %v1753 = vpop.f32.mrf.mxu0
      %v1754 = vadd.f32 %v1641, %v1753
      %1755 = vmatmul.f32.gmra.mxu0 %v1233
      %v1756 = vpop.f32.mrf.mxu0
      %v1757 = vadd.f32 %v1644, %v1756
      %1758 = vmatmul.f32.gmra.mxu0 %v1242
      %v1759 = vpop.f32.mrf.mxu0
      %v1760 = vadd.f32 %v1647, %v1759
      %1761 = vmatmul.f32.gmra.mxu0 %v1251
      %v1762 = vpop.f32.mrf.mxu0
      %v1763 = vadd.f32 %v1650, %v1762
      %1764 = vmatmul.f32.gmra.mxu0 %v1260
      %v1765 = vpop.f32.mrf.mxu0
      %v1766 = vadd.f32 %v1653, %v1765
      %1767 = vmatmul.f32.gmra.mxu0 %v1269
      %v1768 = vpop.f32.mrf.mxu0
      %v1769 = vadd.f32 %v1656, %v1768
      %1770 = vmatmul.f32.gmra.mxu0 %v1278
      %v1771 = vpop.f32.mrf.mxu0
      %v1772 = vadd.f32 %v1659, %v1771
      %1773 = vmatmul.f32.gmra.mxu0 %v1287
      %v1774 = vpop.f32.mrf.mxu0
      %v1775 = vadd.f32 %v1662, %v1774
      %1776 = vmatmul.f32.gmra.mxu0 %v1296
      %v1777 = vpop.f32.mrf.mxu0
      %v1778 = vadd.f32 %v1665, %v1777
      %1779 = vmatmul.f32.gmra.mxu0 %v1305
      %v1780 = vpop.f32.mrf.mxu0
      %v1781 = vadd.f32 %v1668, %v1780
      %1782 = vmatmul.f32.gmra.mxu0 %v1314
      %v1783 = vpop.f32.mrf.mxu0
      %v1784 = vadd.f32 %v1671, %v1783
      %1785 = vmatmul.f32.gmra.mxu0 %v1323
      %v1786 = vpop.f32.mrf.mxu0
      %v1787 = vadd.f32 %v1674, %v1786
      %1788 = vmatmul.f32.gmra.mxu0 %v1332
      %v1789 = vpop.f32.mrf.mxu0
      %v1790 = vadd.f32 %v1677, %v1789
      %1791 = vmatmul.f32.gmra.mxu0 %v1341
      %v1792 = vpop.f32.mrf.mxu0
      %v1793 = vadd.f32 %v1680, %v1792
      %1794 = vmatmul.f32.gmra.mxu0 %v1350
      %v1795 = vpop.f32.mrf.mxu0
      %v1796 = vadd.f32 %v1683, %v1795
      %1797 = vmatmul.f32.gmra.mxu0 %v1359
      %v1798 = vpop.f32.mrf.mxu0
      %v1799 = vadd.f32 %v1686, %v1798
      %1800 = vmatmul.f32.gmra.mxu0 %v1368
      %v1801 = vpop.f32.mrf.mxu0
      %v1802 = vadd.f32 %v1689, %v1801
      %1803 = vmatmul.f32.gmra.mxu0 %v1377
      %v1804 = vpop.f32.mrf.mxu0
      %v1805 = vadd.f32 %v1692, %v1804
      %1806 = vmatmul.f32.gmra.mxu0 %v1386
      %v1807 = vpop.f32.mrf.mxu0
      %v1808 = vadd.f32 %v1695, %v1807
      %1809 = vmatmul.f32.gmra.mxu0 %v1395
      %v1810 = vpop.f32.mrf.mxu0
      %v1811 = vadd.f32 %v1698, %v1810
      %1812 = vmatmul.f32.gmra.mxu0 %v1404
      %v1813 = vpop.f32.mrf.mxu0
      %v1814 = vadd.f32 %v1701, %v1813
      %1815 = vmatmul.f32.gmra.mxu0 %v1413
      %v1816 = vpop.f32.mrf.mxu0
      %v1817 = vadd.f32 %v1704, %v1816
      %1818 = vmatmul.f32.gmra.mxu0 %v1422
      %v1819 = vpop.f32.mrf.mxu0
      %v1820 = vadd.f32 %v1707, %v1819
      %1821 = vmatmul.f32.gmra.mxu0 %v1431
      %v1822 = vpop.f32.mrf.mxu0
      %v1823 = vadd.f32 %v1710, %v1822
      %1824 = vmatmul.f32.gmra.mxu0 %v1440
      %v1825 = vpop.f32.mrf.mxu0
      %v1826 = vadd.f32 %v1713, %v1825
      %1827 = vmatmul.f32.gmra.mxu0 %v1449
      %v1828 = vpop.f32.mrf.mxu0
      %v1829 = vadd.f32 %v1716, %v1828
      %1830 = vdwg.mxu0
      %1831 = vmatpush.msra.mxu0 %v1504
      %1832 = vmatpush.msra.mxu0 %v1503
      %1833 = vmatpush.msra.mxu0 %v1502
      %1834 = vmatpush.msra.mxu0 %v1501
      %1835 = vmatpush.msra.mxu0 %v1500
      %1836 = vmatpush.msra.mxu0 %v1499
      %1837 = vmatpush.msra.mxu0 %v1498
      %1838 = vmatpush.msra.mxu0 %v1497
      %1839 = vmatpush.msra.mxu0 %v1496
      %1840 = vmatpush.msra.mxu0 %v1495
      %1841 = vmatpush.msra.mxu0 %v1494
      %1842 = vmatpush.msra.mxu0 %v1493
      %1843 = vmatpush.msra.mxu0 %v1492
      %1844 = vmatpush.msra.mxu0 %v1491
      %1845 = vmatpush.msra.mxu0 %v1490
      %1846 = vmatpush.msra.mxu0 %v1489
      %1847 = vmatmul.f32.gmra.mxu0 %v1171
      %v1848 = vpop.f32.mrf.mxu0
      %v1849 = vadd.f32 %v1736, %v1848
      %1850 = vmatmul.f32.gmra.mxu0 %v1180
      %v1851 = vpop.f32.mrf.mxu0
      %v1852 = vadd.f32 %v1739, %v1851
      %1853 = vmatmul.f32.gmra.mxu0 %v1189
      %v1854 = vpop.f32.mrf.mxu0
      %v1855 = vadd.f32 %v1742, %v1854
      %1856 = vmatmul.f32.gmra.mxu0 %v1198
      %v1857 = vpop.f32.mrf.mxu0
      %v1858 = vadd.f32 %v1745, %v1857
      %1859 = vmatmul.f32.gmra.mxu0 %v1207
      %v1860 = vpop.f32.mrf.mxu0
      %v1861 = vadd.f32 %v1748, %v1860
      %1862 = vmatmul.f32.gmra.mxu0 %v1216
      %v1863 = vpop.f32.mrf.mxu0
      %v1864 = vadd.f32 %v1751, %v1863
      %1865 = vmatmul.f32.gmra.mxu0 %v1225
      %v1866 = vpop.f32.mrf.mxu0
      %v1867 = vadd.f32 %v1754, %v1866
      %1868 = vmatmul.f32.gmra.mxu0 %v1234
      %v1869 = vpop.f32.mrf.mxu0
      %v1870 = vadd.f32 %v1757, %v1869
      %1871 = vmatmul.f32.gmra.mxu0 %v1243
      %v1872 = vpop.f32.mrf.mxu0
      %v1873 = vadd.f32 %v1760, %v1872
      %1874 = vmatmul.f32.gmra.mxu0 %v1252
      %v1875 = vpop.f32.mrf.mxu0
      %v1876 = vadd.f32 %v1763, %v1875
      %1877 = vmatmul.f32.gmra.mxu0 %v1261
      %v1878 = vpop.f32.mrf.mxu0
      %v1879 = vadd.f32 %v1766, %v1878
      %1880 = vmatmul.f32.gmra.mxu0 %v1270
      %v1881 = vpop.f32.mrf.mxu0
      %v1882 = vadd.f32 %v1769, %v1881
      %1883 = vmatmul.f32.gmra.mxu0 %v1279
      %v1884 = vpop.f32.mrf.mxu0
      %v1885 = vadd.f32 %v1772, %v1884
      %1886 = vmatmul.f32.gmra.mxu0 %v1288
      %v1887 = vpop.f32.mrf.mxu0
      %v1888 = vadd.f32 %v1775, %v1887
      %1889 = vmatmul.f32.gmra.mxu0 %v1297
      %v1890 = vpop.f32.mrf.mxu0
      %v1891 = vadd.f32 %v1778, %v1890
      %1892 = vmatmul.f32.gmra.mxu0 %v1306
      %v1893 = vpop.f32.mrf.mxu0
      %v1894 = vadd.f32 %v1781, %v1893
      %1895 = vmatmul.f32.gmra.mxu0 %v1315
      %v1896 = vpop.f32.mrf.mxu0
      %v1897 = vadd.f32 %v1784, %v1896
      %1898 = vmatmul.f32.gmra.mxu0 %v1324
      %v1899 = vpop.f32.mrf.mxu0
      %v1900 = vadd.f32 %v1787, %v1899
      %1901 = vmatmul.f32.gmra.mxu0 %v1333
      %v1902 = vpop.f32.mrf.mxu0
      %v1903 = vadd.f32 %v1790, %v1902
      %1904 = vmatmul.f32.gmra.mxu0 %v1342
      %v1905 = vpop.f32.mrf.mxu0
      %v1906 = vadd.f32 %v1793, %v1905
      %1907 = vmatmul.f32.gmra.mxu0 %v1351
      %v1908 = vpop.f32.mrf.mxu0
      %v1909 = vadd.f32 %v1796, %v1908
      %1910 = vmatmul.f32.gmra.mxu0 %v1360
      %v1911 = vpop.f32.mrf.mxu0
      %v1912 = vadd.f32 %v1799, %v1911
      %1913 = vmatmul.f32.gmra.mxu0 %v1369
      %v1914 = vpop.f32.mrf.mxu0
      %v1915 = vadd.f32 %v1802, %v1914
      %1916 = vmatmul.f32.gmra.mxu0 %v1378
      %v1917 = vpop.f32.mrf.mxu0
      %v1918 = vadd.f32 %v1805, %v1917
      %1919 = vmatmul.f32.gmra.mxu0 %v1387
      %v1920 = vpop.f32.mrf.mxu0
      %v1921 = vadd.f32 %v1808, %v1920
      %1922 = vmatmul.f32.gmra.mxu0 %v1396
      %v1923 = vpop.f32.mrf.mxu0
      %v1924 = vadd.f32 %v1811, %v1923
      %1925 = vmatmul.f32.gmra.mxu0 %v1405
      %v1926 = vpop.f32.mrf.mxu0
      %v1927 = vadd.f32 %v1814, %v1926
      %1928 = vmatmul.f32.gmra.mxu0 %v1414
      %v1929 = vpop.f32.mrf.mxu0
      %v1930 = vadd.f32 %v1817, %v1929
      %1931 = vmatmul.f32.gmra.mxu0 %v1423
      %v1932 = vpop.f32.mrf.mxu0
      %v1933 = vadd.f32 %v1820, %v1932
      %1934 = vmatmul.f32.gmra.mxu0 %v1432
      %v1935 = vpop.f32.mrf.mxu0
      %v1936 = vadd.f32 %v1823, %v1935
      %1937 = vmatmul.f32.gmra.mxu0 %v1441
      %v1938 = vpop.f32.mrf.mxu0
      %v1939 = vadd.f32 %v1826, %v1938
      %1940 = vmatmul.f32.gmra.mxu0 %v1450
      %v1941 = vpop.f32.mrf.mxu0
      %v1942 = vadd.f32 %v1829, %v1941
      %1943 = vdwg.mxu0
      %1944 = vmatpush.msra.mxu0 %v1520
      %1945 = vmatpush.msra.mxu0 %v1519
      %1946 = vmatpush.msra.mxu0 %v1518
      %1947 = vmatpush.msra.mxu0 %v1517
      %1948 = vmatpush.msra.mxu0 %v1516
      %1949 = vmatpush.msra.mxu0 %v1515
      %1950 = vmatpush.msra.mxu0 %v1514
      %1951 = vmatpush.msra.mxu0 %v1513
      %1952 = vmatpush.msra.mxu0 %v1512
      %1953 = vmatpush.msra.mxu0 %v1511
      %1954 = vmatpush.msra.mxu0 %v1510
      %1955 = vmatpush.msra.mxu0 %v1509
      %1956 = vmatpush.msra.mxu0 %v1508
      %1957 = vmatpush.msra.mxu0 %v1507
      %1958 = vmatpush.msra.mxu0 %v1506
      %1959 = vmatpush.msra.mxu0 %v1505
      %1960 = vmatmul.f32.gmra.mxu0 %v1172
      %v1961 = vpop.f32.mrf.mxu0
      %v1962 = vadd.f32 %v1849, %v1961
      %1963 = vmatmul.f32.gmra.mxu0 %v1181
      %v1964 = vpop.f32.mrf.mxu0
      %v1965 = vadd.f32 %v1852, %v1964
      %1966 = vmatmul.f32.gmra.mxu0 %v1190
      %v1967 = vpop.f32.mrf.mxu0
      %v1968 = vadd.f32 %v1855, %v1967
      %1969 = vmatmul.f32.gmra.mxu0 %v1199
      %v1970 = vpop.f32.mrf.mxu0
      %v1971 = vadd.f32 %v1858, %v1970
      %1972 = vmatmul.f32.gmra.mxu0 %v1208
      %v1973 = vpop.f32.mrf.mxu0
      %v1974 = vadd.f32 %v1861, %v1973
      %1975 = vmatmul.f32.gmra.mxu0 %v1217
      %v1976 = vpop.f32.mrf.mxu0
      %v1977 = vadd.f32 %v1864, %v1976
      %1978 = vmatmul.f32.gmra.mxu0 %v1226
      %v1979 = vpop.f32.mrf.mxu0
      %v1980 = vadd.f32 %v1867, %v1979
      %1981 = vmatmul.f32.gmra.mxu0 %v1235
      %v1982 = vpop.f32.mrf.mxu0
      %v1983 = vadd.f32 %v1870, %v1982
      %1984 = vmatmul.f32.gmra.mxu0 %v1244
      %v1985 = vpop.f32.mrf.mxu0
      %v1986 = vadd.f32 %v1873, %v1985
      %1987 = vmatmul.f32.gmra.mxu0 %v1253
      %v1988 = vpop.f32.mrf.mxu0
      %v1989 = vadd.f32 %v1876, %v1988
      %1990 = vmatmul.f32.gmra.mxu0 %v1262
      %v1991 = vpop.f32.mrf.mxu0
      %v1992 = vadd.f32 %v1879, %v1991
      %1993 = vmatmul.f32.gmra.mxu0 %v1271
      %v1994 = vpop.f32.mrf.mxu0
      %v1995 = vadd.f32 %v1882, %v1994
      %1996 = vmatmul.f32.gmra.mxu0 %v1280
      %v1997 = vpop.f32.mrf.mxu0
      %v1998 = vadd.f32 %v1885, %v1997
      %1999 = vmatmul.f32.gmra.mxu0 %v1289
      %v2000 = vpop.f32.mrf.mxu0
      %v2001 = vadd.f32 %v1888, %v2000
      %2002 = vmatmul.f32.gmra.mxu0 %v1298
      %v2003 = vpop.f32.mrf.mxu0
      %v2004 = vadd.f32 %v1891, %v2003
      %2005 = vmatmul.f32.gmra.mxu0 %v1307
      %v2006 = vpop.f32.mrf.mxu0
      %v2007 = vadd.f32 %v1894, %v2006
      %2008 = vmatmul.f32.gmra.mxu0 %v1316
      %v2009 = vpop.f32.mrf.mxu0
      %v2010 = vadd.f32 %v1897, %v2009
      %2011 = vmatmul.f32.gmra.mxu0 %v1325
      %v2012 = vpop.f32.mrf.mxu0
      %v2013 = vadd.f32 %v1900, %v2012
      %2014 = vmatmul.f32.gmra.mxu0 %v1334
      %v2015 = vpop.f32.mrf.mxu0
      %v2016 = vadd.f32 %v1903, %v2015
      %2017 = vmatmul.f32.gmra.mxu0 %v1343
      %v2018 = vpop.f32.mrf.mxu0
      %v2019 = vadd.f32 %v1906, %v2018
      %2020 = vmatmul.f32.gmra.mxu0 %v1352
      %v2021 = vpop.f32.mrf.mxu0
      %v2022 = vadd.f32 %v1909, %v2021
      %2023 = vmatmul.f32.gmra.mxu0 %v1361
      %v2024 = vpop.f32.mrf.mxu0
      %v2025 = vadd.f32 %v1912, %v2024
      %2026 = vmatmul.f32.gmra.mxu0 %v1370
      %v2027 = vpop.f32.mrf.mxu0
      %v2028 = vadd.f32 %v1915, %v2027
      %2029 = vmatmul.f32.gmra.mxu0 %v1379
      %v2030 = vpop.f32.mrf.mxu0
      %v2031 = vadd.f32 %v1918, %v2030
      %2032 = vmatmul.f32.gmra.mxu0 %v1388
      %v2033 = vpop.f32.mrf.mxu0
      %v2034 = vadd.f32 %v1921, %v2033
      %2035 = vmatmul.f32.gmra.mxu0 %v1397
      %v2036 = vpop.f32.mrf.mxu0
      %v2037 = vadd.f32 %v1924, %v2036
      %2038 = vmatmul.f32.gmra.mxu0 %v1406
      %v2039 = vpop.f32.mrf.mxu0
      %v2040 = vadd.f32 %v1927, %v2039
      %2041 = vmatmul.f32.gmra.mxu0 %v1415
      %v2042 = vpop.f32.mrf.mxu0
      %v2043 = vadd.f32 %v1930, %v2042
      %2044 = vmatmul.f32.gmra.mxu0 %v1424
      %v2045 = vpop.f32.mrf.mxu0
      %v2046 = vadd.f32 %v1933, %v2045
      %2047 = vmatmul.f32.gmra.mxu0 %v1433
      %v2048 = vpop.f32.mrf.mxu0
      %v2049 = vadd.f32 %v1936, %v2048
      %2050 = vmatmul.f32.gmra.mxu0 %v1442
      %v2051 = vpop.f32.mrf.mxu0
      %v2052 = vadd.f32 %v1939, %v2051
      %2053 = vmatmul.f32.gmra.mxu0 %v1451
      %v2054 = vpop.f32.mrf.mxu0
      %v2055 = vadd.f32 %v1942, %v2054
      %2056 = vdwg.mxu0
      %2057 = vmatpush.msra.mxu0 %v1536
      %2058 = vmatpush.msra.mxu0 %v1535
      %2059 = vmatpush.msra.mxu0 %v1534
      %2060 = vmatpush.msra.mxu0 %v1533
      %2061 = vmatpush.msra.mxu0 %v1532
      %2062 = vmatpush.msra.mxu0 %v1531
      %2063 = vmatpush.msra.mxu0 %v1530
      %2064 = vmatpush.msra.mxu0 %v1529
      %2065 = vmatpush.msra.mxu0 %v1528
      %2066 = vmatpush.msra.mxu0 %v1527
      %2067 = vmatpush.msra.mxu0 %v1526
      %2068 = vmatpush.msra.mxu0 %v1525
      %2069 = vmatpush.msra.mxu0 %v1524
      %2070 = vmatpush.msra.mxu0 %v1523
      %2071 = vmatpush.msra.mxu0 %v1522
      %2072 = vmatpush.msra.mxu0 %v1521
      %2073 = vmatmul.f32.gmra.mxu0 %v1173
      %v2074 = vpop.f32.mrf.mxu0
      %v2075 = vadd.f32 %v1962, %v2074
      %2076 = vmatmul.f32.gmra.mxu0 %v1182
      %v2077 = vpop.f32.mrf.mxu0
      %v2078 = vadd.f32 %v1965, %v2077
      %2079 = vmatmul.f32.gmra.mxu0 %v1191
      %v2080 = vpop.f32.mrf.mxu0
      %v2081 = vadd.f32 %v1968, %v2080
      %2082 = vmatmul.f32.gmra.mxu0 %v1200
      %v2083 = vpop.f32.mrf.mxu0
      %v2084 = vadd.f32 %v1971, %v2083
      %2085 = vmatmul.f32.gmra.mxu0 %v1209
      %v2086 = vpop.f32.mrf.mxu0
      %v2087 = vadd.f32 %v1974, %v2086
      %2088 = vmatmul.f32.gmra.mxu0 %v1218
      %v2089 = vpop.f32.mrf.mxu0
      %v2090 = vadd.f32 %v1977, %v2089
      %2091 = vmatmul.f32.gmra.mxu0 %v1227
      %v2092 = vpop.f32.mrf.mxu0
      %v2093 = vadd.f32 %v1980, %v2092
      %2094 = vmatmul.f32.gmra.mxu0 %v1236
      %v2095 = vpop.f32.mrf.mxu0
      %v2096 = vadd.f32 %v1983, %v2095
      %2097 = vmatmul.f32.gmra.mxu0 %v1245
      %v2098 = vpop.f32.mrf.mxu0
      %v2099 = vadd.f32 %v1986, %v2098
      %2100 = vmatmul.f32.gmra.mxu0 %v1254
      %v2101 = vpop.f32.mrf.mxu0
      %v2102 = vadd.f32 %v1989, %v2101
      %2103 = vmatmul.f32.gmra.mxu0 %v1263
      %v2104 = vpop.f32.mrf.mxu0
      %v2105 = vadd.f32 %v1992, %v2104
      %2106 = vmatmul.f32.gmra.mxu0 %v1272
      %v2107 = vpop.f32.mrf.mxu0
      %v2108 = vadd.f32 %v1995, %v2107
      %2109 = vmatmul.f32.gmra.mxu0 %v1281
      %v2110 = vpop.f32.mrf.mxu0
      %v2111 = vadd.f32 %v1998, %v2110
      %2112 = vmatmul.f32.gmra.mxu0 %v1290
      %v2113 = vpop.f32.mrf.mxu0
      %v2114 = vadd.f32 %v2001, %v2113
      %2115 = vmatmul.f32.gmra.mxu0 %v1299
      %v2116 = vpop.f32.mrf.mxu0
      %v2117 = vadd.f32 %v2004, %v2116
      %2118 = vmatmul.f32.gmra.mxu0 %v1308
      %v2119 = vpop.f32.mrf.mxu0
      %v2120 = vadd.f32 %v2007, %v2119
      %2121 = vmatmul.f32.gmra.mxu0 %v1317
      %v2122 = vpop.f32.mrf.mxu0
      %v2123 = vadd.f32 %v2010, %v2122
      %2124 = vmatmul.f32.gmra.mxu0 %v1326
      %v2125 = vpop.f32.mrf.mxu0
      %v2126 = vadd.f32 %v2013, %v2125
      %2127 = vmatmul.f32.gmra.mxu0 %v1335
      %v2128 = vpop.f32.mrf.mxu0
      %v2129 = vadd.f32 %v2016, %v2128
      %2130 = vmatmul.f32.gmra.mxu0 %v1344
      %v2131 = vpop.f32.mrf.mxu0
      %v2132 = vadd.f32 %v2019, %v2131
      %2133 = vmatmul.f32.gmra.mxu0 %v1353
      %v2134 = vpop.f32.mrf.mxu0
      %v2135 = vadd.f32 %v2022, %v2134
      %2136 = vmatmul.f32.gmra.mxu0 %v1362
      %v2137 = vpop.f32.mrf.mxu0
      %v2138 = vadd.f32 %v2025, %v2137
      %2139 = vmatmul.f32.gmra.mxu0 %v1371
      %v2140 = vpop.f32.mrf.mxu0
      %v2141 = vadd.f32 %v2028, %v2140
      %2142 = vmatmul.f32.gmra.mxu0 %v1380
      %v2143 = vpop.f32.mrf.mxu0
      %v2144 = vadd.f32 %v2031, %v2143
      %2145 = vmatmul.f32.gmra.mxu0 %v1389
      %v2146 = vpop.f32.mrf.mxu0
      %v2147 = vadd.f32 %v2034, %v2146
      %2148 = vmatmul.f32.gmra.mxu0 %v1398
      %v2149 = vpop.f32.mrf.mxu0
      %v2150 = vadd.f32 %v2037, %v2149
      %2151 = vmatmul.f32.gmra.mxu0 %v1407
      %v2152 = vpop.f32.mrf.mxu0
      %v2153 = vadd.f32 %v2040, %v2152
      %2154 = vmatmul.f32.gmra.mxu0 %v1416
      %v2155 = vpop.f32.mrf.mxu0
      %v2156 = vadd.f32 %v2043, %v2155
      %2157 = vmatmul.f32.gmra.mxu0 %v1425
      %v2158 = vpop.f32.mrf.mxu0
      %v2159 = vadd.f32 %v2046, %v2158
      %2160 = vmatmul.f32.gmra.mxu0 %v1434
      %v2161 = vpop.f32.mrf.mxu0
      %v2162 = vadd.f32 %v2049, %v2161
      %2163 = vmatmul.f32.gmra.mxu0 %v1443
      %v2164 = vpop.f32.mrf.mxu0
      %v2165 = vadd.f32 %v2052, %v2164
      %2166 = vmatmul.f32.gmra.mxu0 %v1452
      %v2167 = vpop.f32.mrf.mxu0
      %v2168 = vadd.f32 %v2055, %v2167
      %2169 = vdwg.mxu0
      %2170 = vmatpush.msra.mxu0 %v1552
      %2171 = vmatpush.msra.mxu0 %v1551
      %2172 = vmatpush.msra.mxu0 %v1550
      %2173 = vmatpush.msra.mxu0 %v1549
      %2174 = vmatpush.msra.mxu0 %v1548
      %2175 = vmatpush.msra.mxu0 %v1547
      %2176 = vmatpush.msra.mxu0 %v1546
      %2177 = vmatpush.msra.mxu0 %v1545
      %2178 = vmatpush.msra.mxu0 %v1544
      %2179 = vmatpush.msra.mxu0 %v1543
      %2180 = vmatpush.msra.mxu0 %v1542
      %2181 = vmatpush.msra.mxu0 %v1541
      %2182 = vmatpush.msra.mxu0 %v1540
      %2183 = vmatpush.msra.mxu0 %v1539
      %2184 = vmatpush.msra.mxu0 %v1538
      %2185 = vmatpush.msra.mxu0 %v1537
      %2186 = vmatmul.f32.gmra.mxu0 %v1174
      %v2187 = vpop.f32.mrf.mxu0
      %v2188 = vadd.f32 %v2075, %v2187
      %2189 = vmatmul.f32.gmra.mxu0 %v1183
      %v2190 = vpop.f32.mrf.mxu0
      %v2191 = vadd.f32 %v2078, %v2190
      %2192 = vmatmul.f32.gmra.mxu0 %v1192
      %v2193 = vpop.f32.mrf.mxu0
      %v2194 = vadd.f32 %v2081, %v2193
      %2195 = vmatmul.f32.gmra.mxu0 %v1201
      %v2196 = vpop.f32.mrf.mxu0
      %v2197 = vadd.f32 %v2084, %v2196
      %2198 = vmatmul.f32.gmra.mxu0 %v1210
      %v2199 = vpop.f32.mrf.mxu0
      %v2200 = vadd.f32 %v2087, %v2199
      %2201 = vmatmul.f32.gmra.mxu0 %v1219
      %v2202 = vpop.f32.mrf.mxu0
      %v2203 = vadd.f32 %v2090, %v2202
      %2204 = vmatmul.f32.gmra.mxu0 %v1228
      %v2205 = vpop.f32.mrf.mxu0
      %v2206 = vadd.f32 %v2093, %v2205
      %2207 = vmatmul.f32.gmra.mxu0 %v1237
      %v2208 = vpop.f32.mrf.mxu0
      %v2209 = vadd.f32 %v2096, %v2208
      %2210 = vmatmul.f32.gmra.mxu0 %v1246
      %v2211 = vpop.f32.mrf.mxu0
      %v2212 = vadd.f32 %v2099, %v2211
      %2213 = vmatmul.f32.gmra.mxu0 %v1255
      %v2214 = vpop.f32.mrf.mxu0
      %v2215 = vadd.f32 %v2102, %v2214
      %2216 = vmatmul.f32.gmra.mxu0 %v1264
      %v2217 = vpop.f32.mrf.mxu0
      %v2218 = vadd.f32 %v2105, %v2217
      %2219 = vmatmul.f32.gmra.mxu0 %v1273
      %v2220 = vpop.f32.mrf.mxu0
      %v2221 = vadd.f32 %v2108, %v2220
      %2222 = vmatmul.f32.gmra.mxu0 %v1282
      %v2223 = vpop.f32.mrf.mxu0
      %v2224 = vadd.f32 %v2111, %v2223
      %2225 = vmatmul.f32.gmra.mxu0 %v1291
      %v2226 = vpop.f32.mrf.mxu0
      %v2227 = vadd.f32 %v2114, %v2226
      %2228 = vmatmul.f32.gmra.mxu0 %v1300
      %v2229 = vpop.f32.mrf.mxu0
      %v2230 = vadd.f32 %v2117, %v2229
      %2231 = vmatmul.f32.gmra.mxu0 %v1309
      %v2232 = vpop.f32.mrf.mxu0
      %v2233 = vadd.f32 %v2120, %v2232
      %2234 = vmatmul.f32.gmra.mxu0 %v1318
      %v2235 = vpop.f32.mrf.mxu0
      %v2236 = vadd.f32 %v2123, %v2235
      %2237 = vmatmul.f32.gmra.mxu0 %v1327
      %v2238 = vpop.f32.mrf.mxu0
      %v2239 = vadd.f32 %v2126, %v2238
      %2240 = vmatmul.f32.gmra.mxu0 %v1336
      %v2241 = vpop.f32.mrf.mxu0
      %v2242 = vadd.f32 %v2129, %v2241
      %2243 = vmatmul.f32.gmra.mxu0 %v1345
      %v2244 = vpop.f32.mrf.mxu0
      %v2245 = vadd.f32 %v2132, %v2244
      %2246 = vmatmul.f32.gmra.mxu0 %v1354
      %v2247 = vpop.f32.mrf.mxu0
      %v2248 = vadd.f32 %v2135, %v2247
      %2249 = vmatmul.f32.gmra.mxu0 %v1363
      %v2250 = vpop.f32.mrf.mxu0
      %v2251 = vadd.f32 %v2138, %v2250
      %2252 = vmatmul.f32.gmra.mxu0 %v1372
      %v2253 = vpop.f32.mrf.mxu0
      %v2254 = vadd.f32 %v2141, %v2253
      %2255 = vmatmul.f32.gmra.mxu0 %v1381
      %v2256 = vpop.f32.mrf.mxu0
      %v2257 = vadd.f32 %v2144, %v2256
      %2258 = vmatmul.f32.gmra.mxu0 %v1390
      %v2259 = vpop.f32.mrf.mxu0
      %v2260 = vadd.f32 %v2147, %v2259
      %2261 = vmatmul.f32.gmra.mxu0 %v1399
      %v2262 = vpop.f32.mrf.mxu0
      %v2263 = vadd.f32 %v2150, %v2262
      %2264 = vmatmul.f32.gmra.mxu0 %v1408
      %v2265 = vpop.f32.mrf.mxu0
      %v2266 = vadd.f32 %v2153, %v2265
      %2267 = vmatmul.f32.gmra.mxu0 %v1417
      %v2268 = vpop.f32.mrf.mxu0
      %v2269 = vadd.f32 %v2156, %v2268
      %2270 = vmatmul.f32.gmra.mxu0 %v1426
      %v2271 = vpop.f32.mrf.mxu0
      %v2272 = vadd.f32 %v2159, %v2271
      %2273 = vmatmul.f32.gmra.mxu0 %v1435
      %v2274 = vpop.f32.mrf.mxu0
      %v2275 = vadd.f32 %v2162, %v2274
      %2276 = vmatmul.f32.gmra.mxu0 %v1444
      %v2277 = vpop.f32.mrf.mxu0
      %v2278 = vadd.f32 %v2165, %v2277
      %2279 = vmatmul.f32.gmra.mxu0 %v1453
      %v2280 = vpop.f32.mrf.mxu0
      %v2281 = vadd.f32 %v2168, %v2280
      %2282 = vdwg.mxu0
      %2283 = vmatpush.msra.mxu0 %v1568
      %2284 = vmatpush.msra.mxu0 %v1567
      %2285 = vmatpush.msra.mxu0 %v1566
      %2286 = vmatpush.msra.mxu0 %v1565
      %2287 = vmatpush.msra.mxu0 %v1564
      %2288 = vmatpush.msra.mxu0 %v1563
      %2289 = vmatpush.msra.mxu0 %v1562
      %2290 = vmatpush.msra.mxu0 %v1561
      %2291 = vmatpush.msra.mxu0 %v1560
      %2292 = vmatpush.msra.mxu0 %v1559
      %2293 = vmatpush.msra.mxu0 %v1558
      %2294 = vmatpush.msra.mxu0 %v1557
      %2295 = vmatpush.msra.mxu0 %v1556
      %2296 = vmatpush.msra.mxu0 %v1555
      %2297 = vmatpush.msra.mxu0 %v1554
      %2298 = vmatpush.msra.mxu0 %v1553
      %2299 = vmatmul.f32.gmra.mxu0 %v1175
      %v2300 = vpop.f32.mrf.mxu0
      %v2301 = vadd.f32 %v2188, %v2300
      %2302 = vmatmul.f32.gmra.mxu0 %v1184
      %v2303 = vpop.f32.mrf.mxu0
      %v2304 = vadd.f32 %v2191, %v2303
      %2305 = vmatmul.f32.gmra.mxu0 %v1193
      %v2306 = vpop.f32.mrf.mxu0
      %v2307 = vadd.f32 %v2194, %v2306
      %2308 = vmatmul.f32.gmra.mxu0 %v1202
      %v2309 = vpop.f32.mrf.mxu0
      %v2310 = vadd.f32 %v2197, %v2309
      %2311 = vmatmul.f32.gmra.mxu0 %v1211
      %v2312 = vpop.f32.mrf.mxu0
      %v2313 = vadd.f32 %v2200, %v2312
      %2314 = vmatmul.f32.gmra.mxu0 %v1220
      %v2315 = vpop.f32.mrf.mxu0
      %v2316 = vadd.f32 %v2203, %v2315
      %2317 = vmatmul.f32.gmra.mxu0 %v1229
      %v2318 = vpop.f32.mrf.mxu0
      %v2319 = vadd.f32 %v2206, %v2318
      %2320 = vmatmul.f32.gmra.mxu0 %v1238
      %v2321 = vpop.f32.mrf.mxu0
      %v2322 = vadd.f32 %v2209, %v2321
      %2323 = vmatmul.f32.gmra.mxu0 %v1247
      %v2324 = vpop.f32.mrf.mxu0
      %v2325 = vadd.f32 %v2212, %v2324
      %2326 = vmatmul.f32.gmra.mxu0 %v1256
      %v2327 = vpop.f32.mrf.mxu0
      %v2328 = vadd.f32 %v2215, %v2327
      %2329 = vmatmul.f32.gmra.mxu0 %v1265
      %v2330 = vpop.f32.mrf.mxu0
      %v2331 = vadd.f32 %v2218, %v2330
      %2332 = vmatmul.f32.gmra.mxu0 %v1274
      %v2333 = vpop.f32.mrf.mxu0
      %v2334 = vadd.f32 %v2221, %v2333
      %2335 = vmatmul.f32.gmra.mxu0 %v1283
      %v2336 = vpop.f32.mrf.mxu0
      %v2337 = vadd.f32 %v2224, %v2336
      %2338 = vmatmul.f32.gmra.mxu0 %v1292
      %v2339 = vpop.f32.mrf.mxu0
      %v2340 = vadd.f32 %v2227, %v2339
      %2341 = vmatmul.f32.gmra.mxu0 %v1301
      %v2342 = vpop.f32.mrf.mxu0
      %v2343 = vadd.f32 %v2230, %v2342
      %2344 = vmatmul.f32.gmra.mxu0 %v1310
      %v2345 = vpop.f32.mrf.mxu0
      %v2346 = vadd.f32 %v2233, %v2345
      %2347 = vmatmul.f32.gmra.mxu0 %v1319
      %v2348 = vpop.f32.mrf.mxu0
      %v2349 = vadd.f32 %v2236, %v2348
      %2350 = vmatmul.f32.gmra.mxu0 %v1328
      %v2351 = vpop.f32.mrf.mxu0
      %v2352 = vadd.f32 %v2239, %v2351
      %2353 = vmatmul.f32.gmra.mxu0 %v1337
      %v2354 = vpop.f32.mrf.mxu0
      %v2355 = vadd.f32 %v2242, %v2354
      %2356 = vmatmul.f32.gmra.mxu0 %v1346
      %v2357 = vpop.f32.mrf.mxu0
      %v2358 = vadd.f32 %v2245, %v2357
      %2359 = vmatmul.f32.gmra.mxu0 %v1355
      %v2360 = vpop.f32.mrf.mxu0
      %v2361 = vadd.f32 %v2248, %v2360
      %2362 = vmatmul.f32.gmra.mxu0 %v1364
      %v2363 = vpop.f32.mrf.mxu0
      %v2364 = vadd.f32 %v2251, %v2363
      %2365 = vmatmul.f32.gmra.mxu0 %v1373
      %v2366 = vpop.f32.mrf.mxu0
      %v2367 = vadd.f32 %v2254, %v2366
      %2368 = vmatmul.f32.gmra.mxu0 %v1382
      %v2369 = vpop.f32.mrf.mxu0
      %v2370 = vadd.f32 %v2257, %v2369
      %2371 = vmatmul.f32.gmra.mxu0 %v1391
      %v2372 = vpop.f32.mrf.mxu0
      %v2373 = vadd.f32 %v2260, %v2372
      %2374 = vmatmul.f32.gmra.mxu0 %v1400
      %v2375 = vpop.f32.mrf.mxu0
      %v2376 = vadd.f32 %v2263, %v2375
      %2377 = vmatmul.f32.gmra.mxu0 %v1409
      %v2378 = vpop.f32.mrf.mxu0
      %v2379 = vadd.f32 %v2266, %v2378
      %2380 = vmatmul.f32.gmra.mxu0 %v1418
      %v2381 = vpop.f32.mrf.mxu0
      %v2382 = vadd.f32 %v2269, %v2381
      %2383 = vmatmul.f32.gmra.mxu0 %v1427
      %v2384 = vpop.f32.mrf.mxu0
      %v2385 = vadd.f32 %v2272, %v2384
      %2386 = vmatmul.f32.gmra.mxu0 %v1436
      %v2387 = vpop.f32.mrf.mxu0
      %v2388 = vadd.f32 %v2275, %v2387
      %2389 = vmatmul.f32.gmra.mxu0 %v1445
      %v2390 = vpop.f32.mrf.mxu0
      %v2391 = vadd.f32 %v2278, %v2390
      %2392 = vmatmul.f32.gmra.mxu0 %v1454
      %v2393 = vpop.f32.mrf.mxu0
      %v2394 = vadd.f32 %v2281, %v2393
      %2395 = vdwg.mxu0
      %2396 = vmatpush.msra.mxu0 %v1584
      %2397 = vmatpush.msra.mxu0 %v1583
      %2398 = vmatpush.msra.mxu0 %v1582
      %2399 = vmatpush.msra.mxu0 %v1581
      %2400 = vmatpush.msra.mxu0 %v1580
      %2401 = vmatpush.msra.mxu0 %v1579
      %2402 = vmatpush.msra.mxu0 %v1578
      %2403 = vmatpush.msra.mxu0 %v1577
      %2404 = vmatpush.msra.mxu0 %v1576
      %2405 = vmatpush.msra.mxu0 %v1575
      %2406 = vmatpush.msra.mxu0 %v1574
      %2407 = vmatpush.msra.mxu0 %v1573
      %2408 = vmatpush.msra.mxu0 %v1572
      %2409 = vmatpush.msra.mxu0 %v1571
      %2410 = vmatpush.msra.mxu0 %v1570
      %2411 = vmatpush.msra.mxu0 %v1569
      %2412 = vmatmul.f32.gmra.mxu0 %v1176
      %v2413 = vpop.f32.mrf.mxu0
      %v2414 = vadd.f32 %v2301, %v2413
      %2415 = vmatmul.f32.gmra.mxu0 %v1185
      %v2416 = vpop.f32.mrf.mxu0
      %v2417 = vadd.f32 %v2304, %v2416
      %2418 = vmatmul.f32.gmra.mxu0 %v1194
      %v2419 = vpop.f32.mrf.mxu0
      %v2420 = vadd.f32 %v2307, %v2419
      %2421 = vmatmul.f32.gmra.mxu0 %v1203
      %v2422 = vpop.f32.mrf.mxu0
      %v2423 = vadd.f32 %v2310, %v2422
      %2424 = vmatmul.f32.gmra.mxu0 %v1212
      %v2425 = vpop.f32.mrf.mxu0
      %v2426 = vadd.f32 %v2313, %v2425
      %2427 = vmatmul.f32.gmra.mxu0 %v1221
      %v2428 = vpop.f32.mrf.mxu0
      %v2429 = vadd.f32 %v2316, %v2428
      %2430 = vmatmul.f32.gmra.mxu0 %v1230
      %v2431 = vpop.f32.mrf.mxu0
      %v2432 = vadd.f32 %v2319, %v2431
      %2433 = vmatmul.f32.gmra.mxu0 %v1239
      %v2434 = vpop.f32.mrf.mxu0
      %v2435 = vadd.f32 %v2322, %v2434
      %2436 = vmatmul.f32.gmra.mxu0 %v1248
      %v2437 = vpop.f32.mrf.mxu0
      %v2438 = vadd.f32 %v2325, %v2437
      %2439 = vmatmul.f32.gmra.mxu0 %v1257
      %v2440 = vpop.f32.mrf.mxu0
      %v2441 = vadd.f32 %v2328, %v2440
      %2442 = vmatmul.f32.gmra.mxu0 %v1266
      %v2443 = vpop.f32.mrf.mxu0
      %v2444 = vadd.f32 %v2331, %v2443
      %2445 = vmatmul.f32.gmra.mxu0 %v1275
      %v2446 = vpop.f32.mrf.mxu0
      %v2447 = vadd.f32 %v2334, %v2446
      %2448 = vmatmul.f32.gmra.mxu0 %v1284
      %v2449 = vpop.f32.mrf.mxu0
      %v2450 = vadd.f32 %v2337, %v2449
      %2451 = vmatmul.f32.gmra.mxu0 %v1293
      %v2452 = vpop.f32.mrf.mxu0
      %v2453 = vadd.f32 %v2340, %v2452
      %2454 = vmatmul.f32.gmra.mxu0 %v1302
      %v2455 = vpop.f32.mrf.mxu0
      %v2456 = vadd.f32 %v2343, %v2455
      %2457 = vmatmul.f32.gmra.mxu0 %v1311
      %v2458 = vpop.f32.mrf.mxu0
      %v2459 = vadd.f32 %v2346, %v2458
      %2460 = vmatmul.f32.gmra.mxu0 %v1320
      %v2461 = vpop.f32.mrf.mxu0
      %v2462 = vadd.f32 %v2349, %v2461
      %2463 = vmatmul.f32.gmra.mxu0 %v1329
      %v2464 = vpop.f32.mrf.mxu0
      %v2465 = vadd.f32 %v2352, %v2464
      %2466 = vmatmul.f32.gmra.mxu0 %v1338
      %v2467 = vpop.f32.mrf.mxu0
      %v2468 = vadd.f32 %v2355, %v2467
      %2469 = vmatmul.f32.gmra.mxu0 %v1347
      %v2470 = vpop.f32.mrf.mxu0
      %v2471 = vadd.f32 %v2358, %v2470
      %2472 = vmatmul.f32.gmra.mxu0 %v1356
      %v2473 = vpop.f32.mrf.mxu0
      %v2474 = vadd.f32 %v2361, %v2473
      %2475 = vmatmul.f32.gmra.mxu0 %v1365
      %v2476 = vpop.f32.mrf.mxu0
      %v2477 = vadd.f32 %v2364, %v2476
      %2478 = vmatmul.f32.gmra.mxu0 %v1374
      %v2479 = vpop.f32.mrf.mxu0
      %v2480 = vadd.f32 %v2367, %v2479
      %2481 = vmatmul.f32.gmra.mxu0 %v1383
      %v2482 = vpop.f32.mrf.mxu0
      %v2483 = vadd.f32 %v2370, %v2482
      %2484 = vmatmul.f32.gmra.mxu0 %v1392
      %v2485 = vpop.f32.mrf.mxu0
      %v2486 = vadd.f32 %v2373, %v2485
      %2487 = vmatmul.f32.gmra.mxu0 %v1401
      %v2488 = vpop.f32.mrf.mxu0
      %v2489 = vadd.f32 %v2376, %v2488
      %2490 = vmatmul.f32.gmra.mxu0 %v1410
      %v2491 = vpop.f32.mrf.mxu0
      %v2492 = vadd.f32 %v2379, %v2491
      %2493 = vmatmul.f32.gmra.mxu0 %v1419
      %v2494 = vpop.f32.mrf.mxu0
      %v2495 = vadd.f32 %v2382, %v2494
      %2496 = vmatmul.f32.gmra.mxu0 %v1428
      %v2497 = vpop.f32.mrf.mxu0
      %v2498 = vadd.f32 %v2385, %v2497
      %2499 = vmatmul.f32.gmra.mxu0 %v1437
      %v2500 = vpop.f32.mrf.mxu0
      %v2501 = vadd.f32 %v2388, %v2500
      %2502 = vmatmul.f32.gmra.mxu0 %v1446
      %v2503 = vpop.f32.mrf.mxu0
      %v2504 = vadd.f32 %v2391, %v2503
      %2505 = vmatmul.f32.gmra.mxu0 %v1455
      %v2506 = vpop.f32.mrf.mxu0
      %v2507 = vadd.f32 %v2394, %v2506
      %2508 = vdwg.mxu0
      %2509 = vmatpush.msra.mxu0 %v1600
      %2510 = vmatpush.msra.mxu0 %v1599
      %2511 = vmatpush.msra.mxu0 %v1598
      %2512 = vmatpush.msra.mxu0 %v1597
      %2513 = vmatpush.msra.mxu0 %v1596
      %2514 = vmatpush.msra.mxu0 %v1595
      %2515 = vmatpush.msra.mxu0 %v1594
      %2516 = vmatpush.msra.mxu0 %v1593
      %2517 = vmatpush.msra.mxu0 %v1592
      %2518 = vmatpush.msra.mxu0 %v1591
      %2519 = vmatpush.msra.mxu0 %v1590
      %2520 = vmatpush.msra.mxu0 %v1589
      %2521 = vmatpush.msra.mxu0 %v1588
      %2522 = vmatpush.msra.mxu0 %v1587
      %2523 = vmatpush.msra.mxu0 %v1586
      %2524 = vmatpush.msra.mxu0 %v1585
      %2525 = vmatmul.f32.gmra.mxu0 %v1177
      %v2526 = vpop.f32.mrf.mxu0
      %v2527 = vadd.f32 %v2414, %v2526
      %2528 = vmatmul.f32.gmra.mxu0 %v1186
      %v2529 = vpop.f32.mrf.mxu0
      %v2530 = vadd.f32 %v2417, %v2529
      %2531 = vmatmul.f32.gmra.mxu0 %v1195
      %v2532 = vpop.f32.mrf.mxu0
      %v2533 = vadd.f32 %v2420, %v2532
      %2534 = vmatmul.f32.gmra.mxu0 %v1204
      %v2535 = vpop.f32.mrf.mxu0
      %v2536 = vadd.f32 %v2423, %v2535
      %2537 = vmatmul.f32.gmra.mxu0 %v1213
      %v2538 = vpop.f32.mrf.mxu0
      %v2539 = vadd.f32 %v2426, %v2538
      %2540 = vmatmul.f32.gmra.mxu0 %v1222
      %v2541 = vpop.f32.mrf.mxu0
      %v2542 = vadd.f32 %v2429, %v2541
      %2543 = vmatmul.f32.gmra.mxu0 %v1231
      %v2544 = vpop.f32.mrf.mxu0
      %v2545 = vadd.f32 %v2432, %v2544
      %2546 = vmatmul.f32.gmra.mxu0 %v1240
      %v2547 = vpop.f32.mrf.mxu0
      %v2548 = vadd.f32 %v2435, %v2547
      %2549 = vmatmul.f32.gmra.mxu0 %v1249
      %v2550 = vpop.f32.mrf.mxu0
      %v2551 = vadd.f32 %v2438, %v2550
      %2552 = vmatmul.f32.gmra.mxu0 %v1258
      %v2553 = vpop.f32.mrf.mxu0
      %v2554 = vadd.f32 %v2441, %v2553
      %2555 = vmatmul.f32.gmra.mxu0 %v1267
      %v2556 = vpop.f32.mrf.mxu0
      %v2557 = vadd.f32 %v2444, %v2556
      %2558 = vmatmul.f32.gmra.mxu0 %v1276
      %v2559 = vpop.f32.mrf.mxu0
      %v2560 = vadd.f32 %v2447, %v2559
      %2561 = vmatmul.f32.gmra.mxu0 %v1285
      %v2562 = vpop.f32.mrf.mxu0
      %v2563 = vadd.f32 %v2450, %v2562
      %2564 = vmatmul.f32.gmra.mxu0 %v1294
      %v2565 = vpop.f32.mrf.mxu0
      %v2566 = vadd.f32 %v2453, %v2565
      %2567 = vmatmul.f32.gmra.mxu0 %v1303
      %v2568 = vpop.f32.mrf.mxu0
      %v2569 = vadd.f32 %v2456, %v2568
      %2570 = vmatmul.f32.gmra.mxu0 %v1312
      %v2571 = vpop.f32.mrf.mxu0
      %v2572 = vadd.f32 %v2459, %v2571
      %2573 = vmatmul.f32.gmra.mxu0 %v1321
      %v2574 = vpop.f32.mrf.mxu0
      %v2575 = vadd.f32 %v2462, %v2574
      %2576 = vmatmul.f32.gmra.mxu0 %v1330
      %v2577 = vpop.f32.mrf.mxu0
      %v2578 = vadd.f32 %v2465, %v2577
      %2579 = vmatmul.f32.gmra.mxu0 %v1339
      %v2580 = vpop.f32.mrf.mxu0
      %v2581 = vadd.f32 %v2468, %v2580
      %2582 = vmatmul.f32.gmra.mxu0 %v1348
      %v2583 = vpop.f32.mrf.mxu0
      %v2584 = vadd.f32 %v2471, %v2583
      %2585 = vmatmul.f32.gmra.mxu0 %v1357
      %v2586 = vpop.f32.mrf.mxu0
      %v2587 = vadd.f32 %v2474, %v2586
      %2588 = vmatmul.f32.gmra.mxu0 %v1366
      %v2589 = vpop.f32.mrf.mxu0
      %v2590 = vadd.f32 %v2477, %v2589
      %2591 = vmatmul.f32.gmra.mxu0 %v1375
      %v2592 = vpop.f32.mrf.mxu0
      %v2593 = vadd.f32 %v2480, %v2592
      %2594 = vmatmul.f32.gmra.mxu0 %v1384
      %v2595 = vpop.f32.mrf.mxu0
      %v2596 = vadd.f32 %v2483, %v2595
      %2597 = vmatmul.f32.gmra.mxu0 %v1393
      %v2598 = vpop.f32.mrf.mxu0
      %v2599 = vadd.f32 %v2486, %v2598
      %2600 = vmatmul.f32.gmra.mxu0 %v1402
      %v2601 = vpop.f32.mrf.mxu0
      %v2602 = vadd.f32 %v2489, %v2601
      %2603 = vmatmul.f32.gmra.mxu0 %v1411
      %v2604 = vpop.f32.mrf.mxu0
      %v2605 = vadd.f32 %v2492, %v2604
      %2606 = vmatmul.f32.gmra.mxu0 %v1420
      %v2607 = vpop.f32.mrf.mxu0
      %v2608 = vadd.f32 %v2495, %v2607
      %2609 = vmatmul.f32.gmra.mxu0 %v1429
      %v2610 = vpop.f32.mrf.mxu0
      %v2611 = vadd.f32 %v2498, %v2610
      %2612 = vmatmul.f32.gmra.mxu0 %v1438
      %v2613 = vpop.f32.mrf.mxu0
      %v2614 = vadd.f32 %v2501, %v2613
      %2615 = vmatmul.f32.gmra.mxu0 %v1447
      %v2616 = vpop.f32.mrf.mxu0
      %v2617 = vadd.f32 %v2504, %v2616
      %2618 = vmatmul.f32.gmra.mxu0 %v1456
      %v2619 = vpop.f32.mrf.mxu0
      %v2620 = vadd.f32 %v2507, %v2619
      %2621 = vdwg.mxu0
      %v2622 = vadd.f32 %v2527, %v2530
      %v2623 = vadd.f32 %v2622, %v2533
      %v2624 = vadd.f32 %v2623, %v2536
      %v2625 = vadd.f32 %v2624, %v2539
      %v2626 = vadd.f32 %v2625, %v2542
      %v2627 = vadd.f32 %v2626, %v2545
      %v2628 = vadd.f32 %v2627, %v2548
      %v2629 = vadd.f32 %v2628, %v2551
      %v2630 = vadd.f32 %v2629, %v2554
      %v2631 = vadd.f32 %v2630, %v2557
      %v2632 = vadd.f32 %v2631, %v2560
      %v2633 = vadd.f32 %v2632, %v2563
      %v2634 = vadd.f32 %v2633, %v2566
      %v2635 = vadd.f32 %v2634, %v2569
      %v2636 = vadd.f32 %v2635, %v2572
      %v2637 = vadd.f32 %v2636, %v2575
      %v2638 = vadd.f32 %v2637, %v2578
      %v2639 = vadd.f32 %v2638, %v2581
      %v2640 = vadd.f32 %v2639, %v2584
      %v2641 = vadd.f32 %v2640, %v2587
      %v2642 = vadd.f32 %v2641, %v2590
      %v2643 = vadd.f32 %v2642, %v2593
      %v2644 = vadd.f32 %v2643, %v2596
      %v2645 = vadd.f32 %v2644, %v2599
      %v2646 = vadd.f32 %v2645, %v2602
      %v2647 = vadd.f32 %v2646, %v2605
      %v2648 = vadd.f32 %v2647, %v2608
      %v2649 = vadd.f32 %v2648, %v2611
      %v2650 = vadd.f32 %v2649, %v2614
      %v2651 = vadd.f32 %v2650, %v2617
      %v2652 = vadd.f32 %v2651, %v2620
      %v2653 = vrot.slane %v2652, 4
      %v2654 = vadd.f32 %v2652, %v2653
      %v2655 = vrot.slane %v2654, 2
      %v2656 = vadd.f32 %v2654, %v2655
      %v2657 = vrot.slane %v2656, 1
      %v2658 = vadd.f32 %v2656, %v2657
      %2659 = vst [vmem:[%s292] sm:$0x1] %v2658
      %v2660 = vmul.f32 %v2527, %v2527
      %v2661 = vmul.f32 %v2530, %v2530
      %v2662 = vmul.f32 %v2533, %v2533
      %v2663 = vmul.f32 %v2536, %v2536
      %v2664 = vmul.f32 %v2539, %v2539
      %v2665 = vmul.f32 %v2542, %v2542
      %v2666 = vmul.f32 %v2545, %v2545
      %v2667 = vmul.f32 %v2548, %v2548
      %v2668 = vmul.f32 %v2551, %v2551
      %v2669 = vmul.f32 %v2554, %v2554
      %v2670 = vmul.f32 %v2557, %v2557
      %v2671 = vmul.f32 %v2560, %v2560
      %v2672 = vmul.f32 %v2563, %v2563
      %v2673 = vmul.f32 %v2566, %v2566
      %v2674 = vmul.f32 %v2569, %v2569
      %v2675 = vmul.f32 %v2572, %v2572
      %v2676 = vmul.f32 %v2575, %v2575
      %v2677 = vmul.f32 %v2578, %v2578
      %v2678 = vmul.f32 %v2581, %v2581
      %v2679 = vmul.f32 %v2584, %v2584
      %v2680 = vmul.f32 %v2587, %v2587
      %v2681 = vmul.f32 %v2590, %v2590
      %v2682 = vmul.f32 %v2593, %v2593
      %v2683 = vmul.f32 %v2596, %v2596
      %v2684 = vmul.f32 %v2599, %v2599
      %v2685 = vmul.f32 %v2602, %v2602
      %v2686 = vmul.f32 %v2605, %v2605
      %v2687 = vmul.f32 %v2608, %v2608
      %v2688 = vmul.f32 %v2611, %v2611
      %v2689 = vmul.f32 %v2614, %v2614
      %v2690 = vmul.f32 %v2617, %v2617
      %v2691 = vmul.f32 %v2620, %v2620
      %v2692 = vadd.f32 %v2660, %v2661
      %v2693 = vadd.f32 %v2692, %v2662
      %v2694 = vadd.f32 %v2693, %v2663
      %v2695 = vadd.f32 %v2694, %v2664
      %v2696 = vadd.f32 %v2695, %v2665
      %v2697 = vadd.f32 %v2696, %v2666
      %v2698 = vadd.f32 %v2697, %v2667
      %v2699 = vadd.f32 %v2698, %v2668
      %v2700 = vadd.f32 %v2699, %v2669
      %v2701 = vadd.f32 %v2700, %v2670
      %v2702 = vadd.f32 %v2701, %v2671
      %v2703 = vadd.f32 %v2702, %v2672
      %v2704 = vadd.f32 %v2703, %v2673
      %v2705 = vadd.f32 %v2704, %v2674
      %v2706 = vadd.f32 %v2705, %v2675
      %v2707 = vadd.f32 %v2706, %v2676
      %v2708 = vadd.f32 %v2707, %v2677
      %v2709 = vadd.f32 %v2708, %v2678
      %v2710 = vadd.f32 %v2709, %v2679
      %v2711 = vadd.f32 %v2710, %v2680
      %v2712 = vadd.f32 %v2711, %v2681
      %v2713 = vadd.f32 %v2712, %v2682
      %v2714 = vadd.f32 %v2713, %v2683
      %v2715 = vadd.f32 %v2714, %v2684
      %v2716 = vadd.f32 %v2715, %v2685
      %v2717 = vadd.f32 %v2716, %v2686
      %v2718 = vadd.f32 %v2717, %v2687
      %v2719 = vadd.f32 %v2718, %v2688
      %v2720 = vadd.f32 %v2719, %v2689
      %v2721 = vadd.f32 %v2720, %v2690
      %v2722 = vadd.f32 %v2721, %v2691
      %v2723 = vrot.slane %v2722, 4
      %v2724 = vadd.f32 %v2722, %v2723
      %v2725 = vrot.slane %v2724, 2
      %v2726 = vadd.f32 %v2724, %v2725
      %v2727 = vrot.slane %v2726, 1
      %v2728 = vadd.f32 %v2726, %v2727
      %2729 = vst [vmem:[%s295] sm:$0x1] %v2728
      %2730 = vst [vmem:[%s289] sm:$0xff] %v2527
      %2731 = vst [vmem:[%s289 + $0x8] sm:$0xff] %v2530
      %2732 = vst [vmem:[%s289 + $0x10] sm:$0xff] %v2533
      %2733 = vst [vmem:[%s289 + $0x18] sm:$0xff] %v2536
      %2734 = vst [vmem:[%s289 + $0x20] sm:$0xff] %v2539
      %2735 = vst [vmem:[%s289 + $0x28] sm:$0xff] %v2542
      %2736 = vst [vmem:[%s289 + $0x30] sm:$0xff] %v2545
      %2737 = vst [vmem:[%s289 + $0x38] sm:$0xff] %v2548
      %2738 = vst [vmem:[%s289 + $0x40] sm:$0xff] %v2551
      %2739 = vst [vmem:[%s289 + $0x48] sm:$0xff] %v2554
      %2740 = vst [vmem:[%s289 + $0x50] sm:$0xff] %v2557
      %2741 = vst [vmem:[%s289 + $0x58] sm:$0xff] %v2560
      %2742 = vst [vmem:[%s289 + $0x60] sm:$0xff] %v2563
      %2743 = vst [vmem:[%s289 + $0x68] sm:$0xff] %v2566
      %2744 = vst [vmem:[%s289 + $0x70] sm:$0xff] %v2569
      %2745 = vst [vmem:[%s289 + $0x78] sm:$0xff] %v2572
      %2746 = vst [vmem:[%s289 + $0x80] sm:$0xff] %v2575
      %2747 = vst [vmem:[%s289 + $0x88] sm:$0xff] %v2578
      %2748 = vst [vmem:[%s289 + $0x90] sm:$0xff] %v2581
      %2749 = vst [vmem:[%s289 + $0x98] sm:$0xff] %v2584
      %2750 = vst [vmem:[%s289 + $0xa0] sm:$0xff] %v2587
      %2751 = vst [vmem:[%s289 + $0xa8] sm:$0xff] %v2590
      %2752 = vst [vmem:[%s289 + $0xb0] sm:$0xff] %v2593
      %2753 = vst [vmem:[%s289 + $0xb8] sm:$0xff] %v2596
      %2754 = vst [vmem:[%s289 + $0xc0] sm:$0xff] %v2599
      %2755 = vst [vmem:[%s289 + $0xc8] sm:$0xff] %v2602
      %2756 = vst [vmem:[%s289 + $0xd0] sm:$0xff] %v2605
      %2757 = vst [vmem:[%s289 + $0xd8] sm:$0xff] %v2608
      %2758 = vst [vmem:[%s289 + $0xe0] sm:$0xff] %v2611
      %2759 = vst [vmem:[%s289 + $0xe8] sm:$0xff] %v2614
      %2760 = vst [vmem:[%s289 + $0xf0] sm:$0xff] %v2617
      %2761 = vst [vmem:[%s289 + $0xf8] sm:$0xff] %v2620
      %p2762 = scmp.lt.s32.totalorder %s19, 1
      %s2763 = scalar_select %p2762, %s19, 1
      %s2764 = smul.addr %s2763, 32
      %s2765 = smul.addr %s2764, 8
      %s2766 = scalar_lea.vmem %s5, %s2765
      %p2767 = scmp.lt.s32.totalorder %s19, 1
      %s2768 = scalar_select %p2767, %s19, 1
      %s2769 = scalar_lea.vmem %s6, %s2768
      %p2770 = scmp.lt.s32.totalorder %s19, 1
      %s2771 = scalar_select %p2770, %s19, 1
      %s2772 = scalar_lea.vmem %s7, %s2771
      // Predicated region
      $region41: #{preact_block.4} parent=39 // pred_check
        %p2773 = pneg %p147
      $region42: #{preact_block.4} parent=39 // pred_check_branch
        %2775 = sbr.rel (%p2773) target = $region44
      $region43: #{preact_block.4} parent=39 // pred_region
        _
      $region44: #{preact_block.4} parent=39 // pred_fallthru
        _
      // Predicated region
      $region45: #{preact_block.4} parent=39 // pred_check
        %p2776 = pneg %p173
      $region46: #{preact_block.4} parent=39 // pred_check_branch
        %2778 = sbr.rel (%p2776) target = $region48
      $region47: #{preact_block.4} parent=39 // pred_region
        _
      $region48: #{preact_block.4} parent=39 // pred_fallthru
        _
      // Predicated region
      $region49: #{preact_block.4} parent=39 // pred_check
        %p2779 = pneg %p199
      $region50: #{preact_block.4} parent=39 // pred_check_branch
        %2781 = sbr.rel (%p2779) target = $region52
      $region51: #{preact_block.4} parent=39 // pred_region
        _
      $region52: #{preact_block.4} parent=39 // pred_fallthru
        _
    $region40: #{preact_block.4} parent=5 // pred_fallthru
      _
    %p2782 = scmp.le.s32.totalorder 2, %s14
    // Predicated region
    $region53: #{preact_block.4} parent=5 // pred_check
      %p2783 = pneg %p2782
    $region54: #{preact_block.4} parent=5 // pred_check_branch
      %2785 = sbr.rel (%p2783) target = $region56
    $region55: #{preact_block.4} parent=5 // pred_region
      %s2786 = ssub.s32 %s14, 2
      // Predicated region
      $region57: #{preact_block.4} parent=55 // pred_check
        %p2787 = pneg %p153
      $region58: #{preact_block.4} parent=55 // pred_check_branch
        %2789 = sbr.rel (%p2787) target = $region60
      $region59: #{preact_block.4} parent=55 // pred_region
        %p2790 = scmp.lt.s32.totalorder %s20, 1
        %s2791 = scalar_select %p2790, %s20, 1
        %s2792 = smul.addr %s2791, 32
        %s2793 = smul.addr %s2792, 8
        %s2794 = scalar_lea.vmem %s5, %s2793
      $region60: #{preact_block.4} parent=55 // pred_fallthru
        _
      // Predicated region
      $region61: #{preact_block.4} parent=55 // pred_check
        %p2795 = pneg %p179
      $region62: #{preact_block.4} parent=55 // pred_check_branch
        %2797 = sbr.rel (%p2795) target = $region64
      $region63: #{preact_block.4} parent=55 // pred_region
        %p2798 = scmp.lt.s32.totalorder %s20, 1
        %s2799 = scalar_select %p2798, %s20, 1
        %s2800 = scalar_lea.vmem %s6, %s2799
      $region64: #{preact_block.4} parent=55 // pred_fallthru
        _
      // Predicated region
      $region65: #{preact_block.4} parent=55 // pred_check
        %p2801 = pneg %p205
      $region66: #{preact_block.4} parent=55 // pred_check_branch
        %2803 = sbr.rel (%p2801) target = $region68
      $region67: #{preact_block.4} parent=55 // pred_region
        %p2804 = scmp.lt.s32.totalorder %s20, 1
        %s2805 = scalar_select %p2804, %s20, 1
        %s2806 = scalar_lea.vmem %s7, %s2805
      $region68: #{preact_block.4} parent=55 // pred_fallthru
        _
    $region56: #{preact_block.4} parent=5 // pred_fallthru
      _
  $region6: #{preact_block.4} parent=0 // loop_footer
    %s18 = sadd.s32 1, %s14
  $region7: #{preact_block.4} parent=0 // loop_footer_branch
    %13 = sbr.rel target = $region3
  $region8: #{preact_block.4} parent=0 // loop_exit
    _

// kernel: preact_block.5
$region0: #{preact_block.5}
  #allocation0 [shape = 'u32[]', space=smem, size = 0x4, offset = 0x4, fixed_abs, tag = 'smem constant byte address 0x4 - core index']
  #allocation1 [shape = 'u32[72,128]{1,0:T(1,128)}', space=vmem, size = 0x9000, scoped, tag = 'internal scratch']
  #allocation2 [shape = 'f32[1,18,18,128]{3,2,1,0:T(8,128)}', space=vmem, size = 0x36000, scoped, tag = 'scratch operand']
  #allocation3 [shape = 'f32[256,1152]{1,0:T(8,128)}', space=vmem, size = 0x120000, scoped, tag = 'scratch operand']
  %s0 = inlined_call_operand.vmem [shape: f32[2,16,16,128], index: 0, kind: input, shape index: {}]
  %s1 = inlined_call_operand.vmem [shape: f32[1,128], index: 1, kind: input, shape index: {}]
  %s2 = inlined_call_operand.vmem [shape: f32[1,128], index: 2, kind: input, shape index: {}]
  %s3 = inlined_call_operand.vmem [shape: f32[1152,128], index: 3, kind: input, shape index: {}]
  %s4 = inlined_call_operand.vmem [shape: f32[1,128], index: 4, kind: input, shape index: {}]
  %s5 = inlined_call_operand.vmem [shape: f32[2,16,16,128], index: 5, kind: input, shape index: {}]
  %s6 = inlined_call_operand.vmem [shape: f32[128,128], index: 6, kind: input, shape index: {}]
  %s7 = inlined_call_operand.vmem [shape: f32[1,128], index: 7, kind: input, shape index: {}]
  %s8 = inlined_call_operand.vmem [shape: f32[2,16,16,128], index: 8, kind: output, shape index: {}]
  %s9 = sld [smem:[#allocation0]]
  $region65: #{preact_block.5} parent=0
    _
  %s11 = ssub.s32 1, %s9
  %s12 = scalar_select 0, %s11, %s9
  loop: start=0, step=1, limit=4
  $region2: #{preact_block.5} parent=0 // loop_pre_header
    _
  $region3: #{preact_block.5} parent=0 // loop_header
    %s14 = sphi 0, %s18
    %p15 = scmp.ge.s32.totalorder %s14, 4
    %s24 = sphi 0, %s26
    %s27 = sphi 0, %s24
    %s28 = sphi 0, %s27
    %s44 = sphi 0, %s28
    %s48 = sphi 0, %s48
    %s50 = sphi 0, %s48
    %s51 = sphi 0, %s50
    %s65 = sphi 0, %s51
    %s69 = sphi 0, %s69
    %s71 = sphi 0, %s69
    %s72 = sphi 0, %s71
    %s86 = sphi 0, %s72
    %s90 = sphi 0, %s90
    %s92 = sphi 0, %s90
    %s93 = sphi 0, %s92
    %s107 = sphi 0, %s93
    %s111 = sphi 0, %s111
    %s113 = sphi 0, %s111
    %s114 = sphi 0, %s113
    %s128 = sphi 0, %s114
    %s134 = sphi 0, %s136
    %s137 = sphi 0, %s134
    %s138 = sphi 0, %s137
    %s154 = sphi 0, %s138
    %s158 = sphi 0, %s158
    %s160 = sphi 0, %s158
    %s161 = sphi 0, %s160
    %s175 = sphi 0, %s161
    %s179 = sphi 0, %s179
    %s181 = sphi 0, %s179
    %s182 = sphi 0, %s181
    %s196 = sphi 0, %s182
    %s202 = sphi 0, %s204
    %s205 = sphi 0, %s202
    %s206 = sphi 0, %s205
    %s222 = sphi 0, %s206
  $region4: #{preact_block.5} parent=0 // loop_header_branch
    %17 = sbr.rel (%p15) target = $region8
  $region5: #{preact_block.5} parent=0 // loop_body
    %s19 = ssub.s32 %s14, 1
    %s20 = ssub.s32 %s14, 2
    %s21 = sadd.s32 %s14, 1
    %s22 = ssub.s32 %s14, %s21
    %p23 = scmp.eq.s32.totalorder %s22, 0
    %s25 = sadd.s32 %s24, 1
    %s26 = scalar_select %p23, %s24, %s25
    %p29 = pneg %p23
    %p30 = scmp.eq.s32.totalorder %s14, 1
    %p31 = por %p29, %p30
    %p32 = scmp.ne.s32.totalorder %s24, %s27
    %p33 = scmp.eq.s32.totalorder %s14, 0
    %p34 = por %p32, %p33
    %p35 = scmp.ne.s32.totalorder %s24, %s27
    %p36 = scmp.eq.s32.totalorder %s19, 1
    %p37 = por %p35, %p36
    %p38 = scmp.ne.s32.totalorder %s27, %s28
    %p39 = scmp.eq.s32.totalorder %s19, 0
    %p40 = por %p38, %p39
    %p41 = scmp.ne.s32.totalorder %s27, %s28
    %p42 = scmp.eq.s32.totalorder %s20, 1
    %p43 = por %p41, %p42
    %p45 = scmp.ne.s32.totalorder %s28, %s44
    %p46 = scmp.eq.s32.totalorder %s20, 0
    %p47 = por %p45, %p46
    %s49 = sadd.s32 %s48, 1
    %p52 = scmp.eq.s32.totalorder %s14, 1
    %p53 = scmp.ne.s32.totalorder %s48, %s50
    %p54 = scmp.eq.s32.totalorder %s14, 0
    %p55 = por %p53, %p54
    %p56 = scmp.ne.s32.totalorder %s48, %s50
    %p57 = scmp.eq.s32.totalorder %s19, 1
    %p58 = por %p56, %p57
    %p59 = scmp.ne.s32.totalorder %s50, %s51
    %p60 = scmp.eq.s32.totalorder %s19, 0
    %p61 = por %p59, %p60
    %p62 = scmp.ne.s32.totalorder %s50, %s51
    %p63 = scmp.eq.s32.totalorder %s20, 1
    %p64 = por %p62, %p63
    %p66 = scmp.ne.s32.totalorder %s51, %s65
    %p67 = scmp.eq.s32.totalorder %s20, 0
    %p68 = por %p66, %p67
    %s70 = sadd.s32 %s69, 1
    %p73 = scmp.eq.s32.totalorder %s14, 1
    %p74 = scmp.ne.s32.totalorder %s69, %s71
    %p75 = scmp.eq.s32.totalorder %s14, 0
    %p76 = por %p74, %p75
    %p77 = scmp.ne.s32.totalorder %s69, %s71
    %p78 = scmp.eq.s32.totalorder %s19, 1
    %p79 = por %p77, %p78
    %p80 = scmp.ne.s32.totalorder %s71, %s72
    %p81 = scmp.eq.s32.totalorder %s19, 0
    %p82 = por %p80, %p81
    %p83 = scmp.ne.s32.totalorder %s71, %s72
    %p84 = scmp.eq.s32.totalorder %s20, 1
    %p85 = por %p83, %p84
    %p87 = scmp.ne.s32.totalorder %s72, %s86
    %p88 = scmp.eq.s32.totalorder %s20, 0
    %p89 = por %p87, %p88
    %s91 = sadd.s32 %s90, 1
    %p94 = scmp.eq.s32.totalorder %s14, 1
    %p95 = scmp.ne.s32.totalorder %s90, %s92
    %p96 = scmp.eq.s32.totalorder %s14, 0
    %p97 = por %p95, %p96
    %p98 = scmp.ne.s32.totalorder %s90, %s92
    %p99 = scmp.eq.s32.totalorder %s19, 1
    %p100 = por %p98, %p99
    %p101 = scmp.ne.s32.totalorder %s92, %s93
    %p102 = scmp.eq.s32.totalorder %s19, 0
    %p103 = por %p101, %p102
    %p104 = scmp.ne.s32.totalorder %s92, %s93
    %p105 = scmp.eq.s32.totalorder %s20, 1
    %p106 = por %p104, %p105
    %p108 = scmp.ne.s32.totalorder %s93, %s107
    %p109 = scmp.eq.s32.totalorder %s20, 0
    %p110 = por %p108, %p109
    %s112 = sadd.s32 %s111, 1
    %p115 = scmp.eq.s32.totalorder %s14, 1
    %p116 = scmp.ne.s32.totalorder %s111, %s113
    %p117 = scmp.eq.s32.totalorder %s14, 0
    %p118 = por %p116, %p117
    %p119 = scmp.ne.s32.totalorder %s111, %s113
    %p120 = scmp.eq.s32.totalorder %s19, 1
    %p121 = por %p119, %p120
    %p122 = scmp.ne.s32.totalorder %s113, %s114
    %p123 = scmp.eq.s32.totalorder %s19, 0
    %p124 = por %p122, %p123
    %p125 = scmp.ne.s32.totalorder %s113, %s114
    %p126 = scmp.eq.s32.totalorder %s20, 1
    %p127 = por %p125, %p126
    %p129 = scmp.ne.s32.totalorder %s114, %s128
    %p130 = scmp.eq.s32.totalorder %s20, 0
    %p131 = por %p129, %p130
    %s132 = ssub.s32 %s14, %s21
    %p133 = scmp.eq.s32.totalorder %s132, 0
    %s135 = sadd.s32 %s134, 1
    %s136 = scalar_select %p133, %s134, %s135
    %p139 = pneg %p133
    %p140 = scmp.eq.s32.totalorder %s14, 1
    %p141 = por %p139, %p140
    %p142 = scmp.ne.s32.totalorder %s134, %s137
    %p143 = scmp.eq.s32.totalorder %s14, 0
    %p144 = por %p142, %p143
    %p145 = scmp.ne.s32.totalorder %s134, %s137
    %p146 = scmp.eq.s32.totalorder %s19, 1
    %p147 = por %p145, %p146
    %p148 = scmp.ne.s32.totalorder %s137, %s138
    %p149 = scmp.eq.s32.totalorder %s19, 0
    %p150 = por %p148, %p149
    %p151 = scmp.ne.s32.totalorder %s137, %s138
    %p152 = scmp.eq.s32.totalorder %s20, 1
    %p153 = por %p151, %p152
    %p155 = scmp.ne.s32.totalorder %s138, %s154
    %p156 = scmp.eq.s32.totalorder %s20, 0
    %p157 = por %p155, %p156
    %s159 = sadd.s32 %s158, 1
    %p162 = scmp.eq.s32.totalorder %s14, 1
    %p163 = scmp.ne.s32.totalorder %s158, %s160
    %p164 = scmp.eq.s32.totalorder %s14, 0
    %p165 = por %p163, %p164
    %p166 = scmp.ne.s32.totalorder %s158, %s160
    %p167 = scmp.eq.s32.totalorder %s19, 1
    %p168 = por %p166, %p167
    %p169 = scmp.ne.s32.totalorder %s160, %s161
    %p170 = scmp.eq.s32.totalorder %s19, 0
    %p171 = por %p169, %p170
    %p172 = scmp.ne.s32.totalorder %s160, %s161
    %p173 = scmp.eq.s32.totalorder %s20, 1
    %p174 = por %p172, %p173
    %p176 = scmp.ne.s32.totalorder %s161, %s175
    %p177 = scmp.eq.s32.totalorder %s20, 0
    %p178 = por %p176, %p177
    %s180 = sadd.s32 %s179, 1
    %p183 = scmp.eq.s32.totalorder %s14, 1
    %p184 = scmp.ne.s32.totalorder %s179, %s181
    %p185 = scmp.eq.s32.totalorder %s14, 0
    %p186 = por %p184, %p185
    %p187 = scmp.ne.s32.totalorder %s179, %s181
    %p188 = scmp.eq.s32.totalorder %s19, 1
    %p189 = por %p187, %p188
    %p190 = scmp.ne.s32.totalorder %s181, %s182
    %p191 = scmp.eq.s32.totalorder %s19, 0
    %p192 = por %p190, %p191
    %p193 = scmp.ne.s32.totalorder %s181, %s182
    %p194 = scmp.eq.s32.totalorder %s20, 1
    %p195 = por %p193, %p194
    %p197 = scmp.ne.s32.totalorder %s182, %s196
    %p198 = scmp.eq.s32.totalorder %s20, 0
    %p199 = por %p197, %p198
    %s200 = ssub.s32 %s14, %s21
    %p201 = scmp.eq.s32.totalorder %s200, 0
    %s203 = sadd.s32 %s202, 1
    %s204 = scalar_select %p201, %s202, %s203
    %p207 = pneg %p201
    %p208 = scmp.eq.s32.totalorder %s14, 1
    %p209 = por %p207, %p208
    %p210 = scmp.ne.s32.totalorder %s202, %s205
    %p211 = scmp.eq.s32.totalorder %s14, 0
    %p212 = por %p210, %p211
    %p213 = scmp.ne.s32.totalorder %s202, %s205
    %p214 = scmp.eq.s32.totalorder %s19, 1
    %p215 = por %p213, %p214
    %p216 = scmp.ne.s32.totalorder %s205, %s206
    %p217 = scmp.eq.s32.totalorder %s19, 0
    %p218 = por %p216, %p217
    %p219 = scmp.ne.s32.totalorder %s205, %s206
    %p220 = scmp.eq.s32.totalorder %s20, 1
    %p221 = por %p219, %p220
    %p223 = scmp.ne.s32.totalorder %s206, %s222
    %p224 = scmp.eq.s32.totalorder %s20, 0
    %p225 = por %p223, %p224
    %p226 = scmp.le.s32.totalorder 1, %s14
    %p227 = scmp.lt.s32.totalorder %s14, 3
    %p228 = pnand %p226, %p227
    %p229 = pneg %p228
    // Predicated region
    $region9: #{preact_block.5} parent=5 // pred_check
      _
    $region10: #{preact_block.5} parent=5 // pred_check_branch
      %231 = sbr.rel (%p228) target = $region12
    $region11: #{preact_block.5} parent=5 // pred_region
      %s232 = ssub.s32 %s14, 1
      // Predicated region
      $region13: #{preact_block.5} parent=11 // pred_check
        %p233 = pneg %p61
      $region14: #{preact_block.5} parent=11 // pred_check_branch
        %235 = sbr.rel (%p233) target = $region16
      $region15: #{preact_block.5} parent=11 // pred_region
        _
      $region16: #{preact_block.5} parent=11 // pred_fallthru
        _
      // Predicated region
      $region17: #{preact_block.5} parent=11 // pred_check
        %p236 = pneg %p82
      $region18: #{preact_block.5} parent=11 // pred_check_branch
        %238 = sbr.rel (%p236) target = $region20
      $region19: #{preact_block.5} parent=11 // pred_region
        _
      $region20: #{preact_block.5} parent=11 // pred_fallthru
        _
      // Predicated region
      $region21: #{preact_block.5} parent=11 // pred_check
        %p239 = pneg %p103
      $region22: #{preact_block.5} parent=11 // pred_check_branch
        %241 = sbr.rel (%p239) target = $region24
      $region23: #{preact_block.5} parent=11 // pred_region
        _
      $region24: #{preact_block.5} parent=11 // pred_fallthru
        _
      // Predicated region
      $region25: #{preact_block.5} parent=11 // pred_check
        %p242 = pneg %p124
      $region26: #{preact_block.5} parent=11 // pred_check_branch
        %244 = sbr.rel (%p242) target = $region28
      $region27: #{preact_block.5} parent=11 // pred_region
        _
      $region28: #{preact_block.5} parent=11 // pred_fallthru
        _
      // Predicated region
      $region29: #{preact_block.5} parent=11 // pred_check
        %p245 = pneg %p171
      $region30: #{preact_block.5} parent=11 // pred_check_branch
        %247 = sbr.rel (%p245) target = $region32
      $region31: #{preact_block.5} parent=11 // pred_region
        _
      $region32: #{preact_block.5} parent=11 // pred_fallthru
        _
      // Predicated region
      $region33: #{preact_block.5} parent=11 // pred_check
        %p248 = pneg %p192
      $region34: #{preact_block.5} parent=11 // pred_check_branch
        %250 = sbr.rel (%p248) target = $region36
      $region35: #{preact_block.5} parent=11 // pred_region
        _
      $region36: #{preact_block.5} parent=11 // pred_fallthru
        _
    $region12: #{preact_block.5} parent=5 // pred_fallthru
      _
    %p251 = scmp.lt.s32.totalorder %s14, 2
    // Predicated region
    $region37: #{preact_block.5} parent=5 // pred_check
      %p252 = pneg %p251
    $region38: #{preact_block.5} parent=5 // pred_check_branch
      %254 = sbr.rel (%p252) target = $region40
    $region39: #{preact_block.5} parent=5 // pred_region
      // Predicated region
      $region41: #{preact_block.5} parent=39 // pred_check
        %p255 = pneg %p34
      $region42: #{preact_block.5} parent=39 // pred_check_branch
        %257 = sbr.rel (%p255) target = $region44
      $region43: #{preact_block.5} parent=39 // pred_region
        %p258 = scmp.lt.s32.totalorder %s14, 1
        %s259 = scalar_select %p258, %s14, 1
        %s260 = smul.addr %s259, 32
        %s261 = smul.addr %s260, 8
        %s262 = scalar_lea.vmem %s0, %s261
      $region44: #{preact_block.5} parent=39 // pred_fallthru
        _
      // Predicated region
      $region45: #{preact_block.5} parent=39 // pred_check
        %p263 = pneg %p144
      $region46: #{preact_block.5} parent=39 // pred_check_branch
        %265 = sbr.rel (%p263) target = $region48
      $region47: #{preact_block.5} parent=39 // pred_region
        %p266 = scmp.lt.s32.totalorder %s14, 1
        %s267 = scalar_select %p266, %s14, 1
        %s268 = smul.addr %s267, 32
        %s269 = smul.addr %s268, 8
        %s270 = scalar_lea.vmem %s5, %s269
      $region48: #{preact_block.5} parent=39 // pred_fallthru
        _
    $region40: #{preact_block.5} parent=5 // pred_fallthru
      _
    %p271 = scmp.le.s32.totalorder 1, %s14
    %p272 = scmp.lt.s32.totalorder %s14, 3
    %p273 = pnand %p271, %p272
    %p274 = pneg %p273
    // Predicated region
    $region49: #{preact_block.5} parent=5 // pred_check
      _
    $region50: #{preact_block.5} parent=5 // pred_check_branch
      %276 = sbr.rel (%p273) target = $region52
    $region51: #{preact_block.5} parent=5 // pred_region
      %s277 = ssub.s32 %s14, 1
      %p278 = scmp.lt.s32.totalorder %s19, 1
      %s279 = scalar_select %p278, %s19, 1
      %s280 = smul.addr %s279, 32
      %s281 = smul.addr %s280, 8
      %s282 = scalar_lea.vmem %s0, %s281
      %p283 = pneg %p40
      %p284 = pneg %p37
      %p285 = pneg %p61
      %p286 = pneg %p58
      %p287 = pneg %p82
      %p288 = pneg %p79
      %p289 = pneg %p103
      %p290 = pneg %p100
      %p291 = pneg %p124
      %p292 = pneg %p121
      %p293 = scmp.lt.s32.totalorder %s19, 1
      %s294 = scalar_select %p293, %s19, 1
      %s295 = smul.addr %s294, 32
      %s296 = smul.addr %s295, 8
      %s297 = scalar_lea.vmem %s5, %s296
      %p298 = pneg %p150
      %p299 = pneg %p147
      %p300 = pneg %p171
      %p301 = pneg %p168
      %p302 = pneg %p192
      %p303 = pneg %p189
      %p304 = pneg %p218
      %p305 = pneg %p215
      %p306 = scmp.lt.s32.totalorder %s19, 1
      %s307 = scalar_select %p306, %s19, 1
      %s308 = smul.addr %s307, 32
      %s309 = smul.addr %s308, 8
      %s310 = scalar_lea.vmem %s8, %s309
      %p311 = scmp.lt.s32.totalorder %s19, 1
      %s312 = scalar_select %p311, %s19, 1
      %s313 = smul.addr %s312, 32
      %s314 = smul.addr %s313, 8
      %s315 = scalar_lea.vmem %s0, %s314
      %p316 = scmp.lt.s32.totalorder %s19, 1
      %s317 = scalar_select %p316, %s19, 1
      %s318 = smul.addr %s317, 32
      %s319 = smul.addr %s318, 8
      %s320 = scalar_lea.vmem %s5, %s319
      %p321 = scmp.lt.s32.totalorder %s19, 1
      %s322 = scalar_select %p321, %s19, 1
      %s323 = smul.addr %s322, 32
      %s324 = smul.addr %s323, 8
      %s325 = scalar_lea.vmem %s8, %s324
      %v326 = vld [vmem:[%s315] sm:$0xff]
      %v327 = vld [vmem:[%s315 + $0x8] sm:$0xff]
      %v328 = vld [vmem:[%s315 + $0x10] sm:$0xff]
      %v329 = vld [vmem:[%s315 + $0x18] sm:$0xff]
      %v330 = vld [vmem:[%s315 + $0x20] sm:$0xff]
      %v331 = vld [vmem:[%s315 + $0x28] sm:$0xff]
      %v332 = vld [vmem:[%s315 + $0x30] sm:$0xff]
      %v333 = vld [vmem:[%s315 + $0x38] sm:$0xff]
      %v334 = vld [vmem:[%s315 + $0x40] sm:$0xff]
      %v335 = vld [vmem:[%s315 + $0x48] sm:$0xff]
      %v336 = vld [vmem:[%s315 + $0x50] sm:$0xff]
      %v337 = vld [vmem:[%s315 + $0x58] sm:$0xff]
      %v338 = vld [vmem:[%s315 + $0x60] sm:$0xff]
      %v339 = vld [vmem:[%s315 + $0x68] sm:$0xff]
      %v340 = vld [vmem:[%s315 + $0x70] sm:$0xff]
      %v341 = vld [vmem:[%s315 + $0x78] sm:$0xff]
      %v342 = vld [vmem:[%s315 + $0x80] sm:$0xff]
      %v343 = vld [vmem:[%s315 + $0x88] sm:$0xff]
      %v344 = vld [vmem:[%s315 + $0x90] sm:$0xff]
      %v345 = vld [vmem:[%s315 + $0x98] sm:$0xff]
      %v346 = vld [vmem:[%s315 + $0xa0] sm:$0xff]
      %v347 = vld [vmem:[%s315 + $0xa8] sm:$0xff]
      %v348 = vld [vmem:[%s315 + $0xb0] sm:$0xff]
      %v349 = vld [vmem:[%s315 + $0xb8] sm:$0xff]
      %v350 = vld [vmem:[%s315 + $0xc0] sm:$0xff]
      %v351 = vld [vmem:[%s315 + $0xc8] sm:$0xff]
      %v352 = vld [vmem:[%s315 + $0xd0] sm:$0xff]
      %v353 = vld [vmem:[%s315 + $0xd8] sm:$0xff]
      %v354 = vld [vmem:[%s315 + $0xe0] sm:$0xff]
      %v355 = vld [vmem:[%s315 + $0xe8] sm:$0xff]
      %v356 = vld [vmem:[%s315 + $0xf0] sm:$0xff]
      %v357 = vld [vmem:[%s315 + $0xf8] sm:$0xff]
      %v358 = vld [vmem:[%s1] sm:$0x1]
      %v360 = vperm.slane %v358, 0
      %v362 = vmul.f32 %v326, %v360
      %v363 = vmul.f32 %v327, %v360
      %v364 = vmul.f32 %v328, %v360
      %v365 = vmul.f32 %v329, %v360
      %v366 = vmul.f32 %v330, %v360
      %v367 = vmul.f32 %v331, %v360
      %v368 = vmul.f32 %v332, %v360
      %v369 = vmul.f32 %v333, %v360
      %v370 = vmul.f32 %v334, %v360
      %v371 = vmul.f32 %v335, %v360
      %v372 = vmul.f32 %v336, %v360
      %v373 = vmul.f32 %v337, %v360
      %v374 = vmul.f32 %v338, %v360
      %v375 = vmul.f32 %v339, %v360
      %v376 = vmul.f32 %v340, %v360
      %v377 = vmul.f32 %v341, %v360
      %v378 = vmul.f32 %v342, %v360
      %v379 = vmul.f32 %v343, %v360
      %v380 = vmul.f32 %v344, %v360
      %v381 = vmul.f32 %v345, %v360
      %v382 = vmul.f32 %v346, %v360
      %v383 = vmul.f32 %v347, %v360
      %v384 = vmul.f32 %v348, %v360
      %v385 = vmul.f32 %v349, %v360
      %v386 = vmul.f32 %v350, %v360
      %v387 = vmul.f32 %v351, %v360
      %v388 = vmul.f32 %v352, %v360
      %v389 = vmul.f32 %v353, %v360
      %v390 = vmul.f32 %v354, %v360
      %v391 = vmul.f32 %v355, %v360
      %v392 = vmul.f32 %v356, %v360
      %v393 = vmul.f32 %v357, %v360
      %v394 = vld [vmem:[%s2] sm:$0x1]
      %v396 = vperm.slane %v394, 0
      %v398 = vadd.f32 %v362, %v396
      %v399 = vadd.f32 %v363, %v396
      %v400 = vadd.f32 %v364, %v396
      %v401 = vadd.f32 %v365, %v396
      %v402 = vadd.f32 %v366, %v396
      %v403 = vadd.f32 %v367, %v396
      %v404 = vadd.f32 %v368, %v396
      %v405 = vadd.f32 %v369, %v396
      %v406 = vadd.f32 %v370, %v396
      %v407 = vadd.f32 %v371, %v396
      %v408 = vadd.f32 %v372, %v396
      %v409 = vadd.f32 %v373, %v396
      %v410 = vadd.f32 %v374, %v396
      %v411 = vadd.f32 %v375, %v396
      %v412 = vadd.f32 %v376, %v396
      %v413 = vadd.f32 %v377, %v396
      %v414 = vadd.f32 %v378, %v396
      %v415 = vadd.f32 %v379, %v396
      %v416 = vadd.f32 %v380, %v396
      %v417 = vadd.f32 %v381, %v396
      %v418 = vadd.f32 %v382, %v396
      %v419 = vadd.f32 %v383, %v396
      %v420 = vadd.f32 %v384, %v396
      %v421 = vadd.f32 %v385, %v396
      %v422 = vadd.f32 %v386, %v396
      %v423 = vadd.f32 %v387, %v396
      %v424 = vadd.f32 %v388, %v396
      %v425 = vadd.f32 %v389, %v396
      %v426 = vadd.f32 %v390, %v396
      %v427 = vadd.f32 %v391, %v396
      %v428 = vadd.f32 %v392, %v396
      %v429 = vadd.f32 %v393, %v396
      %v430 = vmax.f32 %v398, 0.0
      %v431 = vmax.f32 %v399, 0.0
      %v432 = vmax.f32 %v400, 0.0
      %v433 = vmax.f32 %v401, 0.0
      %v434 = vmax.f32 %v402, 0.0
      %v435 = vmax.f32 %v403, 0.0
      %v436 = vmax.f32 %v404, 0.0
      %v437 = vmax.f32 %v405, 0.0
      %v438 = vmax.f32 %v406, 0.0
      %v439 = vmax.f32 %v407, 0.0
      %v440 = vmax.f32 %v408, 0.0
      %v441 = vmax.f32 %v409, 0.0
      %v442 = vmax.f32 %v410, 0.0
      %v443 = vmax.f32 %v411, 0.0
      %v444 = vmax.f32 %v412, 0.0
      %v445 = vmax.f32 %v413, 0.0
      %v446 = vmax.f32 %v414, 0.0
      %v447 = vmax.f32 %v415, 0.0
      %v448 = vmax.f32 %v416, 0.0
      %v449 = vmax.f32 %v417, 0.0
      %v450 = vmax.f32 %v418, 0.0
      %v451 = vmax.f32 %v419, 0.0
      %v452 = vmax.f32 %v420, 0.0
      %v453 = vmax.f32 %v421, 0.0
      %v454 = vmax.f32 %v422, 0.0
      %v455 = vmax.f32 %v423, 0.0
      %v456 = vmax.f32 %v424, 0.0
      %v457 = vmax.f32 %v425, 0.0
      %v458 = vmax.f32 %v426, 0.0
      %v459 = vmax.f32 %v427, 0.0
      %v460 = vmax.f32 %v428, 0.0
      %v461 = vmax.f32 %v429, 0.0
      %462 = vst [vmem:[#allocation2] sm:$0xff] 0.0
      %463 = vst [vmem:[#allocation2 + $0x8] sm:$0xff] 0.0
      %464 = vst [vmem:[#allocation2 + $0x10] sm:$0x3] 0.0
      %465 = vst [vmem:[#allocation2 + $0x18] sm:$0xff] 0.0
      %466 = vst [vmem:[#allocation2 + $0x20] sm:$0xff] 0.0
      %467 = vst [vmem:[#allocation2 + $0x28] sm:$0x3] 0.0
      %468 = vst [vmem:[#allocation2 + $0x30] sm:$0xff] 0.0
      %469 = vst [vmem:[#allocation2 + $0x38] sm:$0xff] 0.0
      %470 = vst [vmem:[#allocation2 + $0x40] sm:$0x3] 0.0
      %471 = vst [vmem:[#allocation2 + $0x48] sm:$0xff] 0.0
      %472 = vst [vmem:[#allocation2 + $0x50] sm:$0xff] 0.0
      %473 = vst [vmem:[#allocation2 + $0x58] sm:$0x3] 0.0
      %474 = vst [vmem:[#allocation2 + $0x60] sm:$0xff] 0.0
      %475 = vst [vmem:[#allocation2 + $0x68] sm:$0xff] 0.0
      %476 = vst [vmem:[#allocation2 + $0x70] sm:$0x3] 0.0
      %477 = vst [vmem:[#allocation2 + $0x78] sm:$0xff] 0.0
      %478 = vst [vmem:[#allocation2 + $0x80] sm:$0xff] 0.0
      %479 = vst [vmem:[#allocation2 + $0x88] sm:$0x3] 0.0
      %480 = vst [vmem:[#allocation2 + $0x90] sm:$0xff] 0.0
      %481 = vst [vmem:[#allocation2 + $0x98] sm:$0xff] 0.0
      %482 = vst [vmem:[#allocation2 + $0xa0] sm:$0x3] 0.0
      %483 = vst [vmem:[#allocation2 + $0xa8] sm:$0xff] 0.0
      %484 = vst [vmem:[#allocation2 + $0xb0] sm:$0xff] 0.0
      %485 = vst [vmem:[#allocation2 + $0xb8] sm:$0x3] 0.0
      %486 = vst [vmem:[#allocation2 + $0xc0] sm:$0xff] 0.0
      %487 = vst [vmem:[#allocation2 + $0xc8] sm:$0xff] 0.0
      %488 = vst [vmem:[#allocation2 + $0xd0] sm:$0x3] 0.0
      %489 = vst [vmem:[#allocation2 + $0xd8] sm:$0xff] 0.0
      %490 = vst [vmem:[#allocation2 + $0xe0] sm:$0xff] 0.0
      %491 = vst [vmem:[#allocation2 + $0xe8] sm:$0x3] 0.0
      %492 = vst [vmem:[#allocation2 + $0xf0] sm:$0xff] 0.0
      %493 = vst [vmem:[#allocation2 + $0xf8] sm:$0xff] 0.0
      %494 = vst [vmem:[#allocation2 + $0x100] sm:$0x3] 0.0
      %495 = vst [vmem:[#allocation2 + $0x108] sm:$0xff] 0.0
      %496 = vst [vmem:[#allocation2 + $0x110] sm:$0xff] 0.0
      %497 = vst [vmem:[#allocation2 + $0x118] sm:$0x3] 0.0
      %498 = vst [vmem:[#allocation2 + $0x120] sm:$0xff] 0.0
      %499 = vst [vmem:[#allocation2 + $0x128] sm:$0xff] 0.0
      %500 = vst [vmem:[#allocation2 + $0x130] sm:$0x3] 0.0
      %501 = vst [vmem:[#allocation2 + $0x138] sm:$0xff] 0.0
      %502 = vst [vmem:[#allocation2 + $0x140] sm:$0xff] 0.0
      %503 = vst [vmem:[#allocation2 + $0x148] sm:$0x3] 0.0
      %504 = vst [vmem:[#allocation2 + $0x150] sm:$0xff] 0.0
      %505 = vst [vmem:[#allocation2 + $0x158] sm:$0xff] 0.0
      %506 = vst [vmem:[#allocation2 + $0x160] sm:$0x3] 0.0
      %507 = vst [vmem:[#allocation2 + $0x168] sm:$0xff] 0.0
      %508 = vst [vmem:[#allocation2 + $0x170] sm:$0xff] 0.0
      %509 = vst [vmem:[#allocation2 + $0x178] sm:$0x3] 0.0
      %510 = vst [vmem:[#allocation2 + $0x180] sm:$0xff] 0.0
      %511 = vst [vmem:[#allocation2 + $0x188] sm:$0xff] 0.0
      %512 = vst [vmem:[#allocation2 + $0x190] sm:$0x3] 0.0
      %513 = vst [vmem:[#allocation2 + $0x198] sm:$0xff] 0.0
      %514 = vst [vmem:[#allocation2 + $0x1a0] sm:$0xff] 0.0
      %515 = vst [vmem:[#allocation2 + $0x1a8] sm:$0x3] 0.0
      %s516 = scalar_lea.vmem [#allocation2], 24
      %517 = vst [vmem:[%s516 + $0x1] sm:$0xff] %v430
      %518 = vst [vmem:[%s516 + $0x9] sm:$0xff] %v431
      %519 = vst [vmem:[%s516 + $0x19] sm:$0xff] %v432
      %520 = vst [vmem:[%s516 + $0x21] sm:$0xff] %v433
      %521 = vst [vmem:[%s516 + $0x31] sm:$0xff] %v434
      %522 = vst [vmem:[%s516 + $0x39] sm:$0xff] %v435
      %523 = vst [vmem:[%s516 + $0x49] sm:$0xff] %v436
      %524 = vst [vmem:[%s516 + $0x51] sm:$0xff] %v437
      %525 = vst [vmem:[%s516 + $0x61] sm:$0xff] %v438
      %526 = vst [vmem:[%s516 + $0x69] sm:$0xff] %v439
      %527 = vst [vmem:[%s516 + $0x79] sm:$0xff] %v440
      %528 = vst [vmem:[%s516 + $0x81] sm:$0xff] %v441
      %529 = vst [vmem:[%s516 + $0x91] sm:$0xff] %v442
      %530 = vst [vmem:[%s516 + $0x99] sm:$0xff] %v443
      %531 = vst [vmem:[%s516 + $0xa9] sm:$0xff] %v444
      %532 = vst [vmem:[%s516 + $0xb1] sm:$0xff] %v445
      %533 = vst [vmem:[%s516 + $0xc1] sm:$0xff] %v446
      %534 = vst [vmem:[%s516 + $0xc9] sm:$0xff] %v447
      %535 = vst [vmem:[%s516 + $0xd9] sm:$0xff] %v448
      %536 = vst [vmem:[%s516 + $0xe1] sm:$0xff] %v449
      %537 = vst [vmem:[%s516 + $0xf1] sm:$0xff] %v450
      %538 = vst [vmem:[%s516 + $0xf9] sm:$0xff] %v451
      %539 = vst [vmem:[%s516 + $0x109] sm:$0xff] %v452
      %540 = vst [vmem:[%s516 + $0x111] sm:$0xff] %v453
      %541 = vst [vmem:[%s516 + $0x121] sm:$0xff] %v454
      %542 = vst [vmem:[%s516 + $0x129] sm:$0xff] %v455
      %543 = vst [vmem:[%s516 + $0x139] sm:$0xff] %v456
      %544 = vst [vmem:[%s516 + $0x141] sm:$0xff] %v457
      %545 = vst [vmem:[%s516 + $0x151] sm:$0xff] %v458
      %546 = vst [vmem:[%s516 + $0x159] sm:$0xff] %v459
      %547 = vst [vmem:[%s516 + $0x169] sm:$0xff] %v460
      %548 = vst [vmem:[%s516 + $0x171] sm:$0xff] %v461
      %v549 = vld [vmem:[#allocation2] sm:$0xff]
      %v550 = vld [vmem:[#allocation2 + $0x8] sm:$0xff]
      %v551 = vld [vmem:[#allocation2 + $0x10] sm:$0x3]
      %v552 = vld [vmem:[#allocation2 + $0x18] sm:$0xff]
      %v553 = vld [vmem:[#allocation2 + $0x20] sm:$0xff]
      %v554 = vld [vmem:[#allocation2 + $0x28] sm:$0x3]
      %v555 = vld [vmem:[#allocation2 + $0x30] sm:$0xff]
      %v556 = vld [vmem:[#allocation2 + $0x38] sm:$0xff]
      %v557 = vld [vmem:[#allocation2 + $0x40] sm:$0x3]
      %v558 = vld [vmem:[#allocation2 + $0x48] sm:$0xff]
      %v559 = vld [vmem:[#allocation2 + $0x50] sm:$0xff]
      %v560 = vld [vmem:[#allocation2 + $0x58] sm:$0x3]
      %v561 = vld [vmem:[#allocation2 + $0x60] sm:$0xff]
      %v562 = vld [vmem:[#allocation2 + $0x68] sm:$0xff]
      %v563 = vld [vmem:[#allocation2 + $0x70] sm:$0x3]
      %v564 = vld [vmem:[#allocation2 + $0x78] sm:$0xff]
      %v565 = vld [vmem:[#allocation2 + $0x80] sm:$0xff]
      %v566 = vld [vmem:[#allocation2 + $0x88] sm:$0x3]
      %v567 = vld [vmem:[#allocation2 + $0x90] sm:$0xff]
      %v568 = vld [vmem:[#allocation2 + $0x98] sm:$0xff]
      %v569 = vld [vmem:[#allocation2 + $0xa0] sm:$0x3]
      %v570 = vld [vmem:[#allocation2 + $0xa8] sm:$0xff]
      %v571 = vld [vmem:[#allocation2 + $0xb0] sm:$0xff]
      %v572 = vld [vmem:[#allocation2 + $0xb8] sm:$0x3]
      %v573 = vld [vmem:[#allocation2 + $0xc0] sm:$0xff]
      %v574 = vld [vmem:[#allocation2 + $0xc8] sm:$0xff]
      %v575 = vld [vmem:[#allocation2 + $0xd0] sm:$0x3]
      %v576 = vld [vmem:[#allocation2 + $0xd8] sm:$0xff]
      %v577 = vld [vmem:[#allocation2 + $0xe0] sm:$0xff]
      %v578 = vld [vmem:[#allocation2 + $0xe8] sm:$0x3]
      %v579 = vld [vmem:[#allocation2 + $0xf0] sm:$0xff]
      %v580 = vld [vmem:[#allocation2 + $0xf8] sm:$0xff]
      %v581 = vld [vmem:[#allocation2 + $0x100] sm:$0x3]
      %v582 = vld [vmem:[#allocation2 + $0x108] sm:$0xff]
      %v583 = vld [vmem:[#allocation2 + $0x110] sm:$0xff]
      %v584 = vld [vmem:[#allocation2 + $0x118] sm:$0x3]
      %v585 = vld [vmem:[#allocation2 + $0x120] sm:$0xff]
      %v586 = vld [vmem:[#allocation2 + $0x128] sm:$0xff]
      %v587 = vld [vmem:[#allocation2 + $0x130] sm:$0x3]
      %v588 = vld [vmem:[#allocation2 + $0x138] sm:$0xff]
      %v589 = vld [vmem:[#allocation2 + $0x140] sm:$0xff]
      %v590 = vld [vmem:[#allocation2 + $0x148] sm:$0x3]
      %v591 = vld [vmem:[#allocation2 + $0x150] sm:$0xff]
      %v592 = vld [vmem:[#allocation2 + $0x158] sm:$0xff]
      %v593 = vld [vmem:[#allocation2 + $0x160] sm:$0x3]
      %v594 = vld [vmem:[#allocation2 + $0x168] sm:$0xff]
      %v595 = vld [vmem:[#allocation2 + $0x170] sm:$0xff]
      %v596 = vld [vmem:[#allocation2 + $0x178] sm:$0x3]
      %v597 = vld [vmem:[#allocation2 + $0x180] sm:$0xff]
      %v598 = vld [vmem:[#allocation2 + $0x188] sm:$0xff]
      %v599 = vld [vmem:[#allocation2 + $0x190] sm:$0x3]
      %v600 = vld [vmem:[#allocation2 + $0x198] sm:$0xff]
      %v601 = vld [vmem:[#allocation2 + $0x1a0] sm:$0xff]
      %v602 = vld [vmem:[#allocation2 + $0x1a8] sm:$0x3]
      %603 = vst [vmem:[#allocation3] sm:$0xff] %v549
      %604 = vst [vmem:[#allocation3 + $0x48] sm:$0xff] %v550
      %605 = vst [vmem:[#allocation3 + $0x90] sm:$0xff] %v552
      %606 = vst [vmem:[#allocation3 + $0xd8] sm:$0xff] %v553
      %607 = vst [vmem:[#allocation3 + $0x120] sm:$0xff] %v555
      %608 = vst [vmem:[#allocation3 + $0x168] sm:$0xff] %v556
      %609 = vst [vmem:[#allocation3 + $0x1b0] sm:$0xff] %v558
      %610 = vst [vmem:[#allocation3 + $0x1f8] sm:$0xff] %v559
      %611 = vst [vmem:[#allocation3 + $0x240] sm:$0xff] %v561
      %612 = vst [vmem:[#allocation3 + $0x288] sm:$0xff] %v562
      %613 = vst [vmem:[#allocation3 + $0x2d0] sm:$0xff] %v564
      %614 = vst [vmem:[#allocation3 + $0x318] sm:$0xff] %v565
      %615 = vst [vmem:[#allocation3 + $0x360] sm:$0xff] %v567
      %616 = vst [vmem:[#allocation3 + $0x3a8] sm:$0xff] %v568
      %617 = vst [vmem:[#allocation3 + $0x3f0] sm:$0xff] %v570
      %618 = vst [vmem:[#allocation3 + $0x438] sm:$0xff] %v571
      %619 = vst [vmem:[#allocation3 + $0x480] sm:$0xff] %v573
      %620 = vst [vmem:[#allocation3 + $0x4c8] sm:$0xff] %v574
      %621 = vst [vmem:[#allocation3 + $0x510] sm:$0xff] %v576
      %622 = vst [vmem:[#allocation3 + $0x558] sm:$0xff] %v577
      %623 = vst [vmem:[#allocation3 + $0x5a0] sm:$0xff] %v579
      %624 = vst [vmem:[#allocation3 + $0x5e8] sm:$0xff] %v580
      %625 = vst [vmem:[#allocation3 + $0x630] sm:$0xff] %v582
      %626 = vst [vmem:[#allocation3 + $0x678] sm:$0xff] %v583
      %627 = vst [vmem:[#allocation3 + $0x6c0] sm:$0xff] %v585
      %628 = vst [vmem:[#allocation3 + $0x708] sm:$0xff] %v586
      %629 = vst [vmem:[#allocation3 + $0x750] sm:$0xff] %v588
      %630 = vst [vmem:[#allocation3 + $0x798] sm:$0xff] %v589
      %631 = vst [vmem:[#allocation3 + $0x7e0] sm:$0xff] %v591
      %632 = vst [vmem:[#allocation3 + $0x828] sm:$0xff] %v592
      %633 = vst [vmem:[#allocation3 + $0x870] sm:$0xff] %v594
      %634 = vst [vmem:[#allocation3 + $0x8b8] sm:$0xff] %v595
      %vm683 = vcmask 1046528
      %v684 = vrot.slane %v549, 1
      %v685 = vrot.slane %v550, 1
      %v686 = vsel %vm683, %v684, %v685
      %v687 = vrot.slane %v551, 1
      %v688 = vsel %vm683, %v685, %v687
      %v689 = vrot.slane %v552, 1
      %v690 = vrot.slane %v553, 1
      %v691 = vsel %vm683, %v689, %v690
      %v692 = vrot.slane %v554, 1
      %v693 = vsel %vm683, %v690, %v692
      %v694 = vrot.slane %v555, 1
      %v695 = vrot.slane %v556, 1
      %v696 = vsel %vm683, %v694, %v695
      %v697 = vrot.slane %v557, 1
      %v698 = vsel %vm683, %v695, %v697
      %v699 = vrot.slane %v558, 1
      %v700 = vrot.slane %v559, 1
      %v701 = vsel %vm683, %v699, %v700
      %v702 = vrot.slane %v560, 1
      %v703 = vsel %vm683, %v700, %v702
      %v704 = vrot.slane %v561, 1
      %v705 = vrot.slane %v562, 1
      %v706 = vsel %vm683, %v704, %v705
      %v707 = vrot.slane %v563, 1
      %v708 = vsel %vm683, %v705, %v707
      %v709 = vrot.slane %v564, 1
      %v710 = vrot.slane %v565, 1
      %v711 = vsel %vm683, %v709, %v710
      %v712 = vrot.slane %v566, 1
      %v713 = vsel %vm683, %v710, %v712
      %v714 = vrot.slane %v567, 1
      %v715 = vrot.slane %v568, 1
      %v716 = vsel %vm683, %v714, %v715
      %v717 = vrot.slane %v569, 1
      %v718 = vsel %vm683, %v715, %v717
      %v719 = vrot.slane %v570, 1
      %v720 = vrot.slane %v571, 1
      %v721 = vsel %vm683, %v719, %v720
      %v722 = vrot.slane %v572, 1
      %v723 = vsel %vm683, %v720, %v722
      %v724 = vrot.slane %v573, 1
      %v725 = vrot.slane %v574, 1
      %v726 = vsel %vm683, %v724, %v725
      %v727 = vrot.slane %v575, 1
      %v728 = vsel %vm683, %v725, %v727
      %v729 = vrot.slane %v576, 1
      %v730 = vrot.slane %v577, 1
      %v731 = vsel %vm683, %v729, %v730
      %v732 = vrot.slane %v578, 1
      %v733 = vsel %vm683, %v730, %v732
      %v734 = vrot.slane %v579, 1
      %v735 = vrot.slane %v580, 1
      %v736 = vsel %vm683, %v734, %v735
      %v737 = vrot.slane %v581, 1
      %v738 = vsel %vm683, %v735, %v737
      %v739 = vrot.slane %v582, 1
      %v740 = vrot.slane %v583, 1
      %v741 = vsel %vm683, %v739, %v740
      %v742 = vrot.slane %v584, 1
      %v743 = vsel %vm683, %v740, %v742
      %v744 = vrot.slane %v585, 1
      %v745 = vrot.slane %v586, 1
      %v746 = vsel %vm683, %v744, %v745
      %v747 = vrot.slane %v587, 1
      %v748 = vsel %vm683, %v745, %v747
      %v749 = vrot.slane %v588, 1
      %v750 = vrot.slane %v589, 1
      %v751 = vsel %vm683, %v749, %v750
      %v752 = vrot.slane %v590, 1
      %v753 = vsel %vm683, %v750, %v752
      %v754 = vrot.slane %v591, 1
      %v755 = vrot.slane %v592, 1
      %v756 = vsel %vm683, %v754, %v755
      %v757 = vrot.slane %v593, 1
      %v758 = vsel %vm683, %v755, %v757
      %v759 = vrot.slane %v594, 1
      %v760 = vrot.slane %v595, 1
      %v761 = vsel %vm683, %v759, %v760
      %v762 = vrot.slane %v596, 1
      %v763 = vsel %vm683, %v760, %v762
      %796 = vst [vmem:[#allocation3 + $0x8] sm:$0xff] %v686
      %797 = vst [vmem:[#allocation3 + $0x50] sm:$0xff] %v688
      %798 = vst [vmem:[#allocation3 + $0x98] sm:$0xff] %v691
      %799 = vst [vmem:[#allocation3 + $0xe0] sm:$0xff] %v693
      %800 = vst [vmem:[#allocation3 + $0x128] sm:$0xff] %v696
      %801 = vst [vmem:[#allocation3 + $0x170] sm:$0xff] %v698
      %802 = vst [vmem:[#allocation3 + $0x1b8] sm:$0xff] %v701
      %803 = vst [vmem:[#allocation3 + $0x200] sm:$0xff] %v703
      %804 = vst [vmem:[#allocation3 + $0x248] sm:$0xff] %v706
      %805 = vst [vmem:[#allocation3 + $0x290] sm:$0xff] %v708
      %806 = vst [vmem:[#allocation3 + $0x2d8] sm:$0xff] %v711
      %807 = vst [vmem:[#allocation3 + $0x320] sm:$0xff] %v713
      %808 = vst [vmem:[#allocation3 + $0x368] sm:$0xff] %v716
      %809 = vst [vmem:[#allocation3 + $0x3b0] sm:$0xff] %v718
      %810 = vst [vmem:[#allocation3 + $0x3f8] sm:$0xff] %v721
      %811 = vst [vmem:[#allocation3 + $0x440] sm:$0xff] %v723
      %812 = vst [vmem:[#allocation3 + $0x488] sm:$0xff] %v726
      %813 = vst [vmem:[#allocation3 + $0x4d0] sm:$0xff] %v728
      %814 = vst [vmem:[#allocation3 + $0x518] sm:$0xff] %v731
      %815 = vst [vmem:[#allocation3 + $0x560] sm:$0xff] %v733
      %816 = vst [vmem:[#allocation3 + $0x5a8] sm:$0xff] %v736
      %817 = vst [vmem:[#allocation3 + $0x5f0] sm:$0xff] %v738
      %818 = vst [vmem:[#allocation3 + $0x638] sm:$0xff] %v741
      %819 = vst [vmem:[#allocation3 + $0x680] sm:$0xff] %v743
      %820 = vst [vmem:[#allocation3 + $0x6c8] sm:$0xff] %v746
      %821 = vst [vmem:[#allocation3 + $0x710] sm:$0xff] %v748
      %822 = vst [vmem:[#allocation3 + $0x758] sm:$0xff] %v751
      %823 = vst [vmem:[#allocation3 + $0x7a0] sm:$0xff] %v753
      %824 = vst [vmem:[#allocation3 + $0x7e8] sm:$0xff] %v756
      %825 = vst [vmem:[#allocation3 + $0x830] sm:$0xff] %v758
      %826 = vst [vmem:[#allocation3 + $0x878] sm:$0xff] %v761
      %827 = vst [vmem:[#allocation3 + $0x8c0] sm:$0xff] %v763
      %vm828 = vcmask 1045504
      %v829 = vrot.slane %v549, 2
      %v830 = vrot.slane %v550, 2
      %v831 = vsel %vm828, %v829, %v830
      %v832 = vrot.slane %v551, 2
      %v833 = vsel %vm828, %v830, %v832
      %v834 = vrot.slane %v552, 2
      %v835 = vrot.slane %v553, 2
      %v836 = vsel %vm828, %v834, %v835
      %v837 = vrot.slane %v554, 2
      %v838 = vsel %vm828, %v835, %v837
      %v839 = vrot.slane %v555, 2
      %v840 = vrot.slane %v556, 2
      %v841 = vsel %vm828, %v839, %v840
      %v842 = vrot.slane %v557, 2
      %v843 = vsel %vm828, %v840, %v842
      %v844 = vrot.slane %v558, 2
      %v845 = vrot.slane %v559, 2
      %v846 = vsel %vm828, %v844, %v845
      %v847 = vrot.slane %v560, 2
      %v848 = vsel %vm828, %v845, %v847
      %v849 = vrot.slane %v561, 2
      %v850 = vrot.slane %v562, 2
      %v851 = vsel %vm828, %v849, %v850
      %v852 = vrot.slane %v563, 2
      %v853 = vsel %vm828, %v850, %v852
      %v854 = vrot.slane %v564, 2
      %v855 = vrot.slane %v565, 2
      %v856 = vsel %vm828, %v854, %v855
      %v857 = vrot.slane %v566, 2
      %v858 = vsel %vm828, %v855, %v857
      %v859 = vrot.slane %v567, 2
      %v860 = vrot.slane %v568, 2
      %v861 = vsel %vm828, %v859, %v860
      %v862 = vrot.slane %v569, 2
      %v863 = vsel %vm828, %v860, %v862
      %v864 = vrot.slane %v570, 2
      %v865 = vrot.slane %v571, 2
      %v866 = vsel %vm828, %v864, %v865
      %v867 = vrot.slane %v572, 2
      %v868 = vsel %vm828, %v865, %v867
      %v869 = vrot.slane %v573, 2
      %v870 = vrot.slane %v574, 2
      %v871 = vsel %vm828, %v869, %v870
      %v872 = vrot.slane %v575, 2
      %v873 = vsel %vm828, %v870, %v872
      %v874 = vrot.slane %v576, 2
      %v875 = vrot.slane %v577, 2
      %v876 = vsel %vm828, %v874, %v875
      %v877 = vrot.slane %v578, 2
      %v878 = vsel %vm828, %v875, %v877
      %v879 = vrot.slane %v579, 2
      %v880 = vrot.slane %v580, 2
      %v881 = vsel %vm828, %v879, %v880
      %v882 = vrot.slane %v581, 2
      %v883 = vsel %vm828, %v880, %v882
      %v884 = vrot.slane %v582, 2
      %v885 = vrot.slane %v583, 2
      %v886 = vsel %vm828, %v884, %v885
      %v887 = vrot.slane %v584, 2
      %v888 = vsel %vm828, %v885, %v887
      %v889 = vrot.slane %v585, 2
      %v890 = vrot.slane %v586, 2
      %v891 = vsel %vm828, %v889, %v890
      %v892 = vrot.slane %v587, 2
      %v893 = vsel %vm828, %v890, %v892
      %v894 = vrot.slane %v588, 2
      %v895 = vrot.slane %v589, 2
      %v896 = vsel %vm828, %v894, %v895
      %v897 = vrot.slane %v590, 2
      %v898 = vsel %vm828, %v895, %v897
      %v899 = vrot.slane %v591, 2
      %v900 = vrot.slane %v592, 2
      %v901 = vsel %vm828, %v899, %v900
      %v902 = vrot.slane %v593, 2
      %v903 = vsel %vm828, %v900, %v902
      %v904 = vrot.slane %v594, 2
      %v905 = vrot.slane %v595, 2
      %v906 = vsel %vm828, %v904, %v905
      %v907 = vrot.slane %v596, 2
      %v908 = vsel %vm828, %v905, %v907
      %941 = vst [vmem:[#allocation3 + $0x10] sm:$0xff] %v831
      %942 = vst [vmem:[#allocation3 + $0x58] sm:$0xff] %v833
      %943 = vst [vmem:[#allocation3 + $0xa0] sm:$0xff] %v836
      %944 = vst [vmem:[#allocation3 + $0xe8] sm:$0xff] %v838
      %945 = vst [vmem:[#allocation3 + $0x130] sm:$0xff] %v841
      %946 = vst [vmem:[#allocation3 + $0x178] sm:$0xff] %v843
      %947 = vst [vmem:[#allocation3 + $0x1c0] sm:$0xff] %v846
      %948 = vst [vmem:[#allocation3 + $0x208] sm:$0xff] %v848
      %949 = vst [vmem:[#allocation3 + $0x250] sm:$0xff] %v851
      %950 = vst [vmem:[#allocation3 + $0x298] sm:$0xff] %v853
      %951 = vst [vmem:[#allocation3 + $0x2e0] sm:$0xff] %v856
      %952 = vst [vmem:[#allocation3 + $0x328] sm:$0xff] %v858
      %953 = vst [vmem:[#allocation3 + $0x370] sm:$0xff] %v861
      %954 = vst [vmem:[#allocation3 + $0x3b8] sm:$0xff] %v863
      %955 = vst [vmem:[#allocation3 + $0x400] sm:$0xff] %v866
      %956 = vst [vmem:[#allocation3 + $0x448] sm:$0xff] %v868
      %957 = vst [vmem:[#allocation3 + $0x490] sm:$0xff] %v871
      %958 = vst [vmem:[#allocation3 + $0x4d8] sm:$0xff] %v873
      %959 = vst [vmem:[#allocation3 + $0x520] sm:$0xff] %v876
      %960 = vst [vmem:[#allocation3 + $0x568] sm:$0xff] %v878
      %961 = vst [vmem:[#allocation3 + $0x5b0] sm:$0xff] %v881
      %962 = vst [vmem:[#allocation3 + $0x5f8] sm:$0xff] %v883
      %963 = vst [vmem:[#allocation3 + $0x640] sm:$0xff] %v886
      %964 = vst [vmem:[#allocation3 + $0x688] sm:$0xff] %v888
      %965 = vst [vmem:[#allocation3 + $0x6d0] sm:$0xff] %v891
      %966 = vst [vmem:[#allocation3 + $0x718] sm:$0xff] %v893
      %967 = vst [vmem:[#allocation3 + $0x760] sm:$0xff] %v896
      %968 = vst [vmem:[#allocation3 + $0x7a8] sm:$0xff] %v898
      %969 = vst [vmem:[#allocation3 + $0x7f0] sm:$0xff] %v901
      %970 = vst [vmem:[#allocation3 + $0x838] sm:$0xff] %v903
      %971 = vst [vmem:[#allocation3 + $0x880] sm:$0xff] %v906
      %972 = vst [vmem:[#allocation3 + $0x8c8] sm:$0xff] %v908
      %973 = vst [vmem:[#allocation3 + $0x18] sm:$0xff] %v552
      %974 = vst [vmem:[#allocation3 + $0x60] sm:$0xff] %v553
      %975 = vst [vmem:[#allocation3 + $0xa8] sm:$0xff] %v555
      %976 = vst [vmem:[#allocation3 + $0xf0] sm:$0xff] %v556
      %977 = vst [vmem:[#allocation3 + $0x138] sm:$0xff] %v558
      %978 = vst [vmem:[#allocation3 + $0x180] sm:$0xff] %v559
      %979 = vst [vmem:[#allocation3 + $0x1c8] sm:$0xff] %v561
      %980 = vst [vmem:[#allocation3 + $0x210] sm:$0xff] %v562
      %981 = vst [vmem:[#allocation3 + $0x258] sm:$0xff] %v564
      %982 = vst [vmem:[#allocation3 + $0x2a0] sm:$0xff] %v565
      %983 = vst [vmem:[#allocation3 + $0x2e8] sm:$0xff] %v567
      %984 = vst [vmem:[#allocation3 + $0x330] sm:$0xff] %v568
      %985 = vst [vmem:[#allocation3 + $0x378] sm:$0xff] %v570
      %986 = vst [vmem:[#allocation3 + $0x3c0] sm:$0xff] %v571
      %987 = vst [vmem:[#allocation3 + $0x408] sm:$0xff] %v573
      %988 = vst [vmem:[#allocation3 + $0x450] sm:$0xff] %v574
      %989 = vst [vmem:[#allocation3 + $0x498] sm:$0xff] %v576
      %990 = vst [vmem:[#allocation3 + $0x4e0] sm:$0xff] %v577
      %991 = vst [vmem:[#allocation3 + $0x528] sm:$0xff] %v579
      %992 = vst [vmem:[#allocation3 + $0x570] sm:$0xff] %v580
      %993 = vst [vmem:[#allocation3 + $0x5b8] sm:$0xff] %v582
      %994 = vst [vmem:[#allocation3 + $0x600] sm:$0xff] %v583
      %995 = vst [vmem:[#allocation3 + $0x648] sm:$0xff] %v585
      %996 = vst [vmem:[#allocation3 + $0x690] sm:$0xff] %v586
      %997 = vst [vmem:[#allocation3 + $0x6d8] sm:$0xff] %v588
      %998 = vst [vmem:[#allocation3 + $0x720] sm:$0xff] %v589
      %999 = vst [vmem:[#allocation3 + $0x768] sm:$0xff] %v591
      %1000 = vst [vmem:[#allocation3 + $0x7b0] sm:$0xff] %v592
      %1001 = vst [vmem:[#allocation3 + $0x7f8] sm:$0xff] %v594
      %1002 = vst [vmem:[#allocation3 + $0x840] sm:$0xff] %v595
      %1003 = vst [vmem:[#allocation3 + $0x888] sm:$0xff] %v597
      %1004 = vst [vmem:[#allocation3 + $0x8d0] sm:$0xff] %v598
      %v1008 = vrot.slane %v597, 1
      %v1009 = vrot.slane %v598, 1
      %v1010 = vsel %vm683, %v1008, %v1009
      %v1011 = vrot.slane %v599, 1
      %v1012 = vsel %vm683, %v1009, %v1011
      %1015 = vst [vmem:[#allocation3 + $0x20] sm:$0xff] %v691
      %1016 = vst [vmem:[#allocation3 + $0x68] sm:$0xff] %v693
      %1017 = vst [vmem:[#allocation3 + $0xb0] sm:$0xff] %v696
      %1018 = vst [vmem:[#allocation3 + $0xf8] sm:$0xff] %v698
      %1019 = vst [vmem:[#allocation3 + $0x140] sm:$0xff] %v701
      %1020 = vst [vmem:[#allocation3 + $0x188] sm:$0xff] %v703
      %1021 = vst [vmem:[#allocation3 + $0x1d0] sm:$0xff] %v706
      %1022 = vst [vmem:[#allocation3 + $0x218] sm:$0xff] %v708
      %1023 = vst [vmem:[#allocation3 + $0x260] sm:$0xff] %v711
      %1024 = vst [vmem:[#allocation3 + $0x2a8] sm:$0xff] %v713
      %1025 = vst [vmem:[#allocation3 + $0x2f0] sm:$0xff] %v716
      %1026 = vst [vmem:[#allocation3 + $0x338] sm:$0xff] %v718
      %1027 = vst [vmem:[#allocation3 + $0x380] sm:$0xff] %v721
      %1028 = vst [vmem:[#allocation3 + $0x3c8] sm:$0xff] %v723
      %1029 = vst [vmem:[#allocation3 + $0x410] sm:$0xff] %v726
      %1030 = vst [vmem:[#allocation3 + $0x458] sm:$0xff] %v728
      %1031 = vst [vmem:[#allocation3 + $0x4a0] sm:$0xff] %v731
      %1032 = vst [vmem:[#allocation3 + $0x4e8] sm:$0xff] %v733
      %1033 = vst [vmem:[#allocation3 + $0x530] sm:$0xff] %v736
      %1034 = vst [vmem:[#allocation3 + $0x578] sm:$0xff] %v738
      %1035 = vst [vmem:[#allocation3 + $0x5c0] sm:$0xff] %v741
      %1036 = vst [vmem:[#allocation3 + $0x608] sm:$0xff] %v743
      %1037 = vst [vmem:[#allocation3 + $0x650] sm:$0xff] %v746
      %1038 = vst [vmem:[#allocation3 + $0x698] sm:$0xff] %v748
      %1039 = vst [vmem:[#allocation3 + $0x6e0] sm:$0xff] %v751
      %1040 = vst [vmem:[#allocation3 + $0x728] sm:$0xff] %v753
      %1041 = vst [vmem:[#allocation3 + $0x770] sm:$0xff] %v756
      %1042 = vst [vmem:[#allocation3 + $0x7b8] sm:$0xff] %v758
      %1043 = vst [vmem:[#allocation3 + $0x800] sm:$0xff] %v761
      %1044 = vst [vmem:[#allocation3 + $0x848] sm:$0xff] %v763
      %1045 = vst [vmem:[#allocation3 + $0x890] sm:$0xff] %v1010
      %1046 = vst [vmem:[#allocation3 + $0x8d8] sm:$0xff] %v1012
      %v1047 = vrot.slane %v597, 2
      %v1048 = vrot.slane %v598, 2
      %v1049 = vsel %vm828, %v1047, %v1048
      %v1050 = vrot.slane %v599, 2
      %v1051 = vsel %vm828, %v1048, %v1050
      %1054 = vst [vmem:[#allocation3 + $0x28] sm:$0xff] %v836
      %1055 = vst [vmem:[#allocation3 + $0x70] sm:$0xff] %v838
      %1056 = vst [vmem:[#allocation3 + $0xb8] sm:$0xff] %v841
      %1057 = vst [vmem:[#allocation3 + $0x100] sm:$0xff] %v843
      %1058 = vst [vmem:[#allocation3 + $0x148] sm:$0xff] %v846
      %1059 = vst [vmem:[#allocation3 + $0x190] sm:$0xff] %v848
      %1060 = vst [vmem:[#allocation3 + $0x1d8] sm:$0xff] %v851
      %1061 = vst [vmem:[#allocation3 + $0x220] sm:$0xff] %v853
      %1062 = vst [vmem:[#allocation3 + $0x268] sm:$0xff] %v856
      %1063 = vst [vmem:[#allocation3 + $0x2b0] sm:$0xff] %v858
      %1064 = vst [vmem:[#allocation3 + $0x2f8] sm:$0xff] %v861
      %1065 = vst [vmem:[#allocation3 + $0x340] sm:$0xff] %v863
      %1066 = vst [vmem:[#allocation3 + $0x388] sm:$0xff] %v866
      %1067 = vst [vmem:[#allocation3 + $0x3d0] sm:$0xff] %v868
      %1068 = vst [vmem:[#allocation3 + $0x418] sm:$0xff] %v871
      %1069 = vst [vmem:[#allocation3 + $0x460] sm:$0xff] %v873
      %1070 = vst [vmem:[#allocation3 + $0x4a8] sm:$0xff] %v876
      %1071 = vst [vmem:[#allocation3 + $0x4f0] sm:$0xff] %v878
      %1072 = vst [vmem:[#allocation3 + $0x538] sm:$0xff] %v881
      %1073 = vst [vmem:[#allocation3 + $0x580] sm:$0xff] %v883
      %1074 = vst [vmem:[#allocation3 + $0x5c8] sm:$0xff] %v886
      %1075 = vst [vmem:[#allocation3 + $0x610] sm:$0xff] %v888
      %1076 = vst [vmem:[#allocation3 + $0x658] sm:$0xff] %v891
      %1077 = vst [vmem:[#allocation3 + $0x6a0] sm:$0xff] %v893
      %1078 = vst [vmem:[#allocation3 + $0x6e8] sm:$0xff] %v896
      %1079 = vst [vmem:[#allocation3 + $0x730] sm:$0xff] %v898
      %1080 = vst [vmem:[#allocation3 + $0x778] sm:$0xff] %v901
      %1081 = vst [vmem:[#allocation3 + $0x7c0] sm:$0xff] %v903
      %1082 = vst [vmem:[#allocation3 + $0x808] sm:$0xff] %v906
      %1083 = vst [vmem:[#allocation3 + $0x850] sm:$0xff] %v908
      %1084 = vst [vmem:[#allocation3 + $0x898] sm:$0xff] %v1049
      %1085 = vst [vmem:[#allocation3 + $0x8e0] sm:$0xff] %v1051
      %1086 = vst [vmem:[#allocation3 + $0x30] sm:$0xff] %v555
      %1087 = vst [vmem:[#allocation3 + $0x78] sm:$0xff] %v556
      %1088 = vst [vmem:[#allocation3 + $0xc0] sm:$0xff] %v558
      %1089 = vst [vmem:[#allocation3 + $0x108] sm:$0xff] %v559
      %1090 = vst [vmem:[#allocation3 + $0x150] sm:$0xff] %v561
      %1091 = vst [vmem:[#allocation3 + $0x198] sm:$0xff] %v562
      %1092 = vst [vmem:[#allocation3 + $0x1e0] sm:$0xff] %v564
      %1093 = vst [vmem:[#allocation3 + $0x228] sm:$0xff] %v565
      %1094 = vst [vmem:[#allocation3 + $0x270] sm:$0xff] %v567
      %1095 = vst [vmem:[#allocation3 + $0x2b8] sm:$0xff] %v568
      %1096 = vst [vmem:[#allocation3 + $0x300] sm:$0xff] %v570
      %1097 = vst [vmem:[#allocation3 + $0x348] sm:$0xff] %v571
      %1098 = vst [vmem:[#allocation3 + $0x390] sm:$0xff] %v573
      %1099 = vst [vmem:[#allocation3 + $0x3d8] sm:$0xff] %v574
      %1100 = vst [vmem:[#allocation3 + $0x420] sm:$0xff] %v576
      %1101 = vst [vmem:[#allocation3 + $0x468] sm:$0xff] %v577
      %1102 = vst [vmem:[#allocation3 + $0x4b0] sm:$0xff] %v579
      %1103 = vst [vmem:[#allocation3 + $0x4f8] sm:$0xff] %v580
      %1104 = vst [vmem:[#allocation3 + $0x540] sm:$0xff] %v582
      %1105 = vst [vmem:[#allocation3 + $0x588] sm:$0xff] %v583
      %1106 = vst [vmem:[#allocation3 + $0x5d0] sm:$0xff] %v585
      %1107 = vst [vmem:[#allocation3 + $0x618] sm:$0xff] %v586
      %1108 = vst [vmem:[#allocation3 + $0x660] sm:$0xff] %v588
      %1109 = vst [vmem:[#allocation3 + $0x6a8] sm:$0xff] %v589
      %1110 = vst [vmem:[#allocation3 + $0x6f0] sm:$0xff] %v591
      %1111 = vst [vmem:[#allocation3 + $0x738] sm:$0xff] %v592
      %1112 = vst [vmem:[#allocation3 + $0x780] sm:$0xff] %v594
      %1113 = vst [vmem:[#allocation3 + $0x7c8] sm:$0xff] %v595
      %1114 = vst [vmem:[#allocation3 + $0x810] sm:$0xff] %v597
      %1115 = vst [vmem:[#allocation3 + $0x858] sm:$0xff] %v598
      %1116 = vst [vmem:[#allocation3 + $0x8a0] sm:$0xff] %v600
      %1117 = vst [vmem:[#allocation3 + $0x8e8] sm:$0xff] %v601
      %v1121 = vrot.slane %v600, 1
      %v1122 = vrot.slane %v601, 1
      %v1123 = vsel %vm683, %v1121, %v1122
      %v1124 = vrot.slane %v602, 1
      %v1125 = vsel %vm683, %v1122, %v1124
      %1128 = vst [vmem:[#allocation3 + $0x38] sm:$0xff] %v696
      %1129 = vst [vmem:[#allocation3 + $0x80] sm:$0xff] %v698
      %1130 = vst [vmem:[#allocation3 + $0xc8] sm:$0xff] %v701
      %1131 = vst [vmem:[#allocation3 + $0x110] sm:$0xff] %v703
      %1132 = vst [vmem:[#allocation3 + $0x158] sm:$0xff] %v706
      %1133 = vst [vmem:[#allocation3 + $0x1a0] sm:$0xff] %v708
      %1134 = vst [vmem:[#allocation3 + $0x1e8] sm:$0xff] %v711
      %1135 = vst [vmem:[#allocation3 + $0x230] sm:$0xff] %v713
      %1136 = vst [vmem:[#allocation3 + $0x278] sm:$0xff] %v716
      %1137 = vst [vmem:[#allocation3 + $0x2c0] sm:$0xff] %v718
      %1138 = vst [vmem:[#allocation3 + $0x308] sm:$0xff] %v721
      %1139 = vst [vmem:[#allocation3 + $0x350] sm:$0xff] %v723
      %1140 = vst [vmem:[#allocation3 + $0x398] sm:$0xff] %v726
      %1141 = vst [vmem:[#allocation3 + $0x3e0] sm:$0xff] %v728
      %1142 = vst [vmem:[#allocation3 + $0x428] sm:$0xff] %v731
      %1143 = vst [vmem:[#allocation3 + $0x470] sm:$0xff] %v733
      %1144 = vst [vmem:[#allocation3 + $0x4b8] sm:$0xff] %v736
      %1145 = vst [vmem:[#allocation3 + $0x500] sm:$0xff] %v738
      %1146 = vst [vmem:[#allocation3 + $0x548] sm:$0xff] %v741
      %1147 = vst [vmem:[#allocation3 + $0x590] sm:$0xff] %v743
      %1148 = vst [vmem:[#allocation3 + $0x5d8] sm:$0xff] %v746
      %1149 = vst [vmem:[#allocation3 + $0x620] sm:$0xff] %v748
      %1150 = vst [vmem:[#allocation3 + $0x668] sm:$0xff] %v751
      %1151 = vst [vmem:[#allocation3 + $0x6b0] sm:$0xff] %v753
      %1152 = vst [vmem:[#allocation3 + $0x6f8] sm:$0xff] %v756
      %1153 = vst [vmem:[#allocation3 + $0x740] sm:$0xff] %v758
      %1154 = vst [vmem:[#allocation3 + $0x788] sm:$0xff] %v761
      %1155 = vst [vmem:[#allocation3 + $0x7d0] sm:$0xff] %v763
      %1156 = vst [vmem:[#allocation3 + $0x818] sm:$0xff] %v1010
      %1157 = vst [vmem:[#allocation3 + $0x860] sm:$0xff] %v1012
      %1158 = vst [vmem:[#allocation3 + $0x8a8] sm:$0xff] %v1123
      %1159 = vst [vmem:[#allocation3 + $0x8f0] sm:$0xff] %v1125
      %v1160 = vrot.slane %v600, 2
      %v1161 = vrot.slane %v601, 2
      %v1162 = vsel %vm828, %v1160, %v1161
      %v1163 = vrot.slane %v602, 2
      %v1164 = vsel %vm828, %v1161, %v1163
      %1167 = vst [vmem:[#allocation3 + $0x40] sm:$0xff] %v841
      %1168 = vst [vmem:[#allocation3 + $0x88] sm:$0xff] %v843
      %1169 = vst [vmem:[#allocation3 + $0xd0] sm:$0xff] %v846
      %1170 = vst [vmem:[#allocation3 + $0x118] sm:$0xff] %v848
      %1171 = vst [vmem:[#allocation3 + $0x160] sm:$0xff] %v851
      %1172 = vst [vmem:[#allocation3 + $0x1a8] sm:$0xff] %v853
      %1173 = vst [vmem:[#allocation3 + $0x1f0] sm:$0xff] %v856
      %1174 = vst [vmem:[#allocation3 + $0x238] sm:$0xff] %v858
      %1175 = vst [vmem:[#allocation3 + $0x280] sm:$0xff] %v861
      %1176 = vst [vmem:[#allocation3 + $0x2c8] sm:$0xff] %v863
      %1177 = vst [vmem:[#allocation3 + $0x310] sm:$0xff] %v866
      %1178 = vst [vmem:[#allocation3 + $0x358] sm:$0xff] %v868
      %1179 = vst [vmem:[#allocation3 + $0x3a0] sm:$0xff] %v871
      %1180 = vst [vmem:[#allocation3 + $0x3e8] sm:$0xff] %v873
      %1181 = vst [vmem:[#allocation3 + $0x430] sm:$0xff] %v876
      %1182 = vst [vmem:[#allocation3 + $0x478] sm:$0xff] %v878
      %1183 = vst [vmem:[#allocation3 + $0x4c0] sm:$0xff] %v881
      %1184 = vst [vmem:[#allocation3 + $0x508] sm:$0xff] %v883
      %1185 = vst [vmem:[#allocation3 + $0x550] sm:$0xff] %v886
      %1186 = vst [vmem:[#allocation3 + $0x598] sm:$0xff] %v888
      %1187 = vst [vmem:[#allocation3 + $0x5e0] sm:$0xff] %v891
      %1188 = vst [vmem:[#allocation3 + $0x628] sm:$0xff] %v893
      %1189 = vst [vmem:[#allocation3 + $0x670] sm:$0xff] %v896
      %1190 = vst [vmem:[#allocation3 + $0x6b8] sm:$0xff] %v898
      %1191 = vst [vmem:[#allocation3 + $0x700] sm:$0xff] %v901
      %1192 = vst [vmem:[#allocation3 + $0x748] sm:$0xff] %v903
      %1193 = vst [vmem:[#allocation3 + $0x790] sm:$0xff] %v906
      %1194 = vst [vmem:[#allocation3 + $0x7d8] sm:$0xff] %v908
      %1195 = vst [vmem:[#allocation3 + $0x820] sm:$0xff] %v1049
      %1196 = vst [vmem:[#allocation3 + $0x868] sm:$0xff] %v1051
      %1197 = vst [vmem:[#allocation3 + $0x8b0] sm:$0xff] %v1162
      %1198 = vst [vmem:[#allocation3 + $0x8f8] sm:$0xff] %v1164
      %v1199 = vld [vmem:[#allocation3] sm:$0xff]
      %v1200 = vld [vmem:[#allocation3 + $0x8] sm:$0xff]
      %v1201 = vld [vmem:[#allocation3 + $0x10] sm:$0xff]
      %v1202 = vld [vmem:[#allocation3 + $0x18] sm:$0xff]
      %v1203 = vld [vmem:[#allocation3 + $0x20] sm:$0xff]
      %v1204 = vld [vmem:[#allocation3 + $0x28] sm:$0xff]
      %v1205 = vld [vmem:[#allocation3 + $0x30] sm:$0xff]
      %v1206 = vld [vmem:[#allocation3 + $0x38] sm:$0xff]
      %v1207 = vld [vmem:[#allocation3 + $0x40] sm:$0xff]
      %v1208 = vld [vmem:[#allocation3 + $0x48] sm:$0xff]
      %v1209 = vld [vmem:[#allocation3 + $0x50] sm:$0xff]
      %v1210 = vld [vmem:[#allocation3 + $0x58] sm:$0xff]
      %v1211 = vld [vmem:[#allocation3 + $0x60] sm:$0xff]
      %v1212 = vld [vmem:[#allocation3 + $0x68] sm:$0xff]
      %v1213 = vld [vmem:[#allocation3 + $0x70] sm:$0xff]
      %v1214 = vld [vmem:[#allocation3 + $0x78] sm:$0xff]
      %v1215 = vld [vmem:[#allocation3 + $0x80] sm:$0xff]
      %v1216 = vld [vmem:[#allocation3 + $0x88] sm:$0xff]
      %v1217 = vld [vmem:[#allocation3 + $0x90] sm:$0xff]
      %v1218 = vld [vmem:[#allocation3 + $0x98] sm:$0xff]
      %v1219 = vld [vmem:[#allocation3 + $0xa0] sm:$0xff]
      %v1220 = vld [vmem:[#allocation3 + $0xa8] sm:$0xff]
      %v1221 = vld [vmem:[#allocation3 + $0xb0] sm:$0xff]
      %v1222 = vld [vmem:[#allocation3 + $0xb8] sm:$0xff]
      %v1223 = vld [vmem:[#allocation3 + $0xc0] sm:$0xff]
      %v1224 = vld [vmem:[#allocation3 + $0xc8] sm:$0xff]
      %v1225 = vld [vmem:[#allocation3 + $0xd0] sm:$0xff]
      %v1226 = vld [vmem:[#allocation3 + $0xd8] sm:$0xff]
      %v1227 = vld [vmem:[#allocation3 + $0xe0] sm:$0xff]
      %v1228 = vld [vmem:[#allocation3 + $0xe8] sm:$0xff]
      %v1229 = vld [vmem:[#allocation3 + $0xf0] sm:$0xff]
      %v1230 = vld [vmem:[#allocation3 + $0xf8] sm:$0xff]
      %v1231 = vld [vmem:[#allocation3 + $0x100] sm:$0xff]
      %v1232 = vld [vmem:[#allocation3 + $0x108] sm:$0xff]
      %v1233 = vld [vmem:[#allocation3 + $0x110] sm:$0xff]
      %v1234 = vld [vmem:[#allocation3 + $0x118] sm:$0xff]
      %v1235 = vld [vmem:[#allocation3 + $0x120] sm:$0xff]
      %v1236 = vld [vmem:[#allocation3 + $0x128] sm:$0xff]
      %v1237 = vld [vmem:[#allocation3 + $0x130] sm:$0xff]
      %v1238 = vld [vmem:[#allocation3 + $0x138] sm:$0xff]
      %v1239 = vld [vmem:[#allocation3 + $0x140] sm:$0xff]
      %v1240 = vld [vmem:[#allocation3 + $0x148] sm:$0xff]
      %v1241 = vld [vmem:[#allocation3 + $0x150] sm:$0xff]
      %v1242 = vld [vmem:[#allocation3 + $0x158] sm:$0xff]
      %v1243 = vld [vmem:[#allocation3 + $0x160] sm:$0xff]
      %v1244 = vld [vmem:[#allocation3 + $0x168] sm:$0xff]
      %v1245 = vld [vmem:[#allocation3 + $0x170] sm:$0xff]
      %v1246 = vld [vmem:[#allocation3 + $0x178] sm:$0xff]
      %v1247 = vld [vmem:[#allocation3 + $0x180] sm:$0xff]
      %v1248 = vld [vmem:[#allocation3 + $0x188] sm:$0xff]
      %v1249 = vld [vmem:[#allocation3 + $0x190] sm:$0xff]
      %v1250 = vld [vmem:[#allocation3 + $0x198] sm:$0xff]
      %v1251 = vld [vmem:[#allocation3 + $0x1a0] sm:$0xff]
      %v1252 = vld [vmem:[#allocation3 + $0x1a8] sm:$0xff]
      %v1253 = vld [vmem:[#allocation3 + $0x1b0] sm:$0xff]
      %v1254 = vld [vmem:[#allocation3 + $0x1b8] sm:$0xff]
      %v1255 = vld [vmem:[#allocation3 + $0x1c0] sm:$0xff]
      %v1256 = vld [vmem:[#allocation3 + $0x1c8] sm:$0xff]
      %v1257 = vld [vmem:[#allocation3 + $0x1d0] sm:$0xff]
      %v1258 = vld [vmem:[#allocation3 + $0x1d8] sm:$0xff]
      %v1259 = vld [vmem:[#allocation3 + $0x1e0] sm:$0xff]
      %v1260 = vld [vmem:[#allocation3 + $0x1e8] sm:$0xff]
      %v1261 = vld [vmem:[#allocation3 + $0x1f0] sm:$0xff]
      %v1262 = vld [vmem:[#allocation3 + $0x1f8] sm:$0xff]
      %v1263 = vld [vmem:[#allocation3 + $0x200] sm:$0xff]
      %v1264 = vld [vmem:[#allocation3 + $0x208] sm:$0xff]
      %v1265 = vld [vmem:[#allocation3 + $0x210] sm:$0xff]
      %v1266 = vld [vmem:[#allocation3 + $0x218] sm:$0xff]
      %v1267 = vld [vmem:[#allocation3 + $0x220] sm:$0xff]
      %v1268 = vld [vmem:[#allocation3 + $0x228] sm:$0xff]
      %v1269 = vld [vmem:[#allocation3 + $0x230] sm:$0xff]
      %v1270 = vld [vmem:[#allocation3 + $0x238] sm:$0xff]
      %v1271 = vld [vmem:[#allocation3 + $0x240] sm:$0xff]
      %v1272 = vld [vmem:[#allocation3 + $0x248] sm:$0xff]
      %v1273 = vld [vmem:[#allocation3 + $0x250] sm:$0xff]
      %v1274 = vld [vmem:[#allocation3 + $0x258] sm:$0xff]
      %v1275 = vld [vmem:[#allocation3 + $0x260] sm:$0xff]
      %v1276 = vld [vmem:[#allocation3 + $0x268] sm:$0xff]
      %v1277 = vld [vmem:[#allocation3 + $0x270] sm:$0xff]
      %v1278 = vld [vmem:[#allocation3 + $0x278] sm:$0xff]
      %v1279 = vld [vmem:[#allocation3 + $0x280] sm:$0xff]
      %v1280 = vld [vmem:[#allocation3 + $0x288] sm:$0xff]
      %v1281 = vld [vmem:[#allocation3 + $0x290] sm:$0xff]
      %v1282 = vld [vmem:[#allocation3 + $0x298] sm:$0xff]
      %v1283 = vld [vmem:[#allocation3 + $0x2a0] sm:$0xff]
      %v1284 = vld [vmem:[#allocation3 + $0x2a8] sm:$0xff]
      %v1285 = vld [vmem:[#allocation3 + $0x2b0] sm:$0xff]
      %v1286 = vld [vmem:[#allocation3 + $0x2b8] sm:$0xff]
      %v1287 = vld [vmem:[#allocation3 + $0x2c0] sm:$0xff]
      %v1288 = vld [vmem:[#allocation3 + $0x2c8] sm:$0xff]
      %v1289 = vld [vmem:[#allocation3 + $0x2d0] sm:$0xff]
      %v1290 = vld [vmem:[#allocation3 + $0x2d8] sm:$0xff]
      %v1291 = vld [vmem:[#allocation3 + $0x2e0] sm:$0xff]
      %v1292 = vld [vmem:[#allocation3 + $0x2e8] sm:$0xff]
      %v1293 = vld [vmem:[#allocation3 + $0x2f0] sm:$0xff]
      %v1294 = vld [vmem:[#allocation3 + $0x2f8] sm:$0xff]
      %v1295 = vld [vmem:[#allocation3 + $0x300] sm:$0xff]
      %v1296 = vld [vmem:[#allocation3 + $0x308] sm:$0xff]
      %v1297 = vld [vmem:[#allocation3 + $0x310] sm:$0xff]
      %v1298 = vld [vmem:[#allocation3 + $0x318] sm:$0xff]
      %v1299 = vld [vmem:[#allocation3 + $0x320] sm:$0xff]
      %v1300 = vld [vmem:[#allocation3 + $0x328] sm:$0xff]
      %v1301 = vld [vmem:[#allocation3 + $0x330] sm:$0xff]
      %v1302 = vld [vmem:[#allocation3 + $0x338] sm:$0xff]
      %v1303 = vld [vmem:[#allocation3 + $0x340] sm:$0xff]
      %v1304 = vld [vmem:[#allocation3 + $0x348] sm:$0xff]
      %v1305 = vld [vmem:[#allocation3 + $0x350] sm:$0xff]
      %v1306 = vld [vmem:[#allocation3 + $0x358] sm:$0xff]
      %v1307 = vld [vmem:[#allocation3 + $0x360] sm:$0xff]
      %v1308 = vld [vmem:[#allocation3 + $0x368] sm:$0xff]
      %v1309 = vld [vmem:[#allocation3 + $0x370] sm:$0xff]
      %v1310 = vld [vmem:[#allocation3 + $0x378] sm:$0xff]
      %v1311 = vld [vmem:[#allocation3 + $0x380] sm:$0xff]
      %v1312 = vld [vmem:[#allocation3 + $0x388] sm:$0xff]
      %v1313 = vld [vmem:[#allocation3 + $0x390] sm:$0xff]
      %v1314 = vld [vmem:[#allocation3 + $0x398] sm:$0xff]
      %v1315 = vld [vmem:[#allocation3 + $0x3a0] sm:$0xff]
      %v1316 = vld [vmem:[#allocation3 + $0x3a8] sm:$0xff]
      %v1317 = vld [vmem:[#allocation3 + $0x3b0] sm:$0xff]
      %v1318 = vld [vmem:[#allocation3 + $0x3b8] sm:$0xff]
      %v1319 = vld [vmem:[#allocation3 + $0x3c0] sm:$0xff]
      %v1320 = vld [vmem:[#allocation3 + $0x3c8] sm:$0xff]
      %v1321 = vld [vmem:[#allocation3 + $0x3d0] sm:$0xff]
      %v1322 = vld [vmem:[#allocation3 + $0x3d8] sm:$0xff]
      %v1323 = vld [vmem:[#allocation3 + $0x3e0] sm:$0xff]
      %v1324 = vld [vmem:[#allocation3 + $0x3e8] sm:$0xff]
      %v1325 = vld [vmem:[#allocation3 + $0x3f0] sm:$0xff]
      %v1326 = vld [vmem:[#allocation3 + $0x3f8] sm:$0xff]
      %v1327 = vld [vmem:[#allocation3 + $0x400] sm:$0xff]
      %v1328 = vld [vmem:[#allocation3 + $0x408] sm:$0xff]
      %v1329 = vld [vmem:[#allocation3 + $0x410] sm:$0xff]
      %v1330 = vld [vmem:[#allocation3 + $0x418] sm:$0xff]
      %v1331 = vld [vmem:[#allocation3 + $0x420] sm:$0xff]
      %v1332 = vld [vmem:[#allocation3 + $0x428] sm:$0xff]
      %v1333 = vld [vmem:[#allocation3 + $0x430] sm:$0xff]
      %v1334 = vld [vmem:[#allocation3 + $0x438] sm:$0xff]
      %v1335 = vld [vmem:[#allocation3 + $0x440] sm:$0xff]
      %v1336 = vld [vmem:[#allocation3 + $0x448] sm:$0xff]
      %v1337 = vld [vmem:[#allocation3 + $0x450] sm:$0xff]
      %v1338 = vld [vmem:[#allocation3 + $0x458] sm:$0xff]
      %v1339 = vld [vmem:[#allocation3 + $0x460] sm:$0xff]
      %v1340 = vld [vmem:[#allocation3 + $0x468] sm:$0xff]
      %v1341 = vld [vmem:[#allocation3 + $0x470] sm:$0xff]
      %v1342 = vld [vmem:[#allocation3 + $0x478] sm:$0xff]
      %v1343 = vld [vmem:[#allocation3 + $0x480] sm:$0xff]
      %v1344 = vld [vmem:[#allocation3 + $0x488] sm:$0xff]
      %v1345 = vld [vmem:[#allocation3 + $0x490] sm:$0xff]
      %v1346 = vld [vmem:[#allocation3 + $0x498] sm:$0xff]
      %v1347 = vld [vmem:[#allocation3 + $0x4a0] sm:$0xff]
      %v1348 = vld [vmem:[#allocation3 + $0x4a8] sm:$0xff]
      %v1349 = vld [vmem:[#allocation3 + $0x4b0] sm:$0xff]
      %v1350 = vld [vmem:[#allocation3 + $0x4b8] sm:$0xff]
      %v1351 = vld [vmem:[#allocation3 + $0x4c0] sm:$0xff]
      %v1352 = vld [vmem:[#allocation3 + $0x4c8] sm:$0xff]
      %v1353 = vld [vmem:[#allocation3 + $0x4d0] sm:$0xff]
      %v1354 = vld [vmem:[#allocation3 + $0x4d8] sm:$0xff]
      %v1355 = vld [vmem:[#allocation3 + $0x4e0] sm:$0xff]
      %v1356 = vld [vmem:[#allocation3 + $0x4e8] sm:$0xff]
      %v1357 = vld [vmem:[#allocation3 + $0x4f0] sm:$0xff]
      %v1358 = vld [vmem:[#allocation3 + $0x4f8] sm:$0xff]
      %v1359 = vld [vmem:[#allocation3 + $0x500] sm:$0xff]
      %v1360 = vld [vmem:[#allocation3 + $0x508] sm:$0xff]
      %v1361 = vld [vmem:[#allocation3 + $0x510] sm:$0xff]
      %v1362 = vld [vmem:[#allocation3 + $0x518] sm:$0xff]
      %v1363 = vld [vmem:[#allocation3 + $0x520] sm:$0xff]
      %v1364 = vld [vmem:[#allocation3 + $0x528] sm:$0xff]
      %v1365 = vld [vmem:[#allocation3 + $0x530] sm:$0xff]
      %v1366 = vld [vmem:[#allocation3 + $0x538] sm:$0xff]
      %v1367 = vld [vmem:[#allocation3 + $0x540] sm:$0xff]
      %v1368 = vld [vmem:[#allocation3 + $0x548] sm:$0xff]
      %v1369 = vld [vmem:[#allocation3 + $0x550] sm:$0xff]
      %v1370 = vld [vmem:[#allocation3 + $0x558] sm:$0xff]
      %v1371 = vld [vmem:[#allocation3 + $0x560] sm:$0xff]
      %v1372 = vld [vmem:[#allocation3 + $0x568] sm:$0xff]
      %v1373 = vld [vmem:[#allocation3 + $0x570] sm:$0xff]
      %v1374 = vld [vmem:[#allocation3 + $0x578] sm:$0xff]
      %v1375 = vld [vmem:[#allocation3 + $0x580] sm:$0xff]
      %v1376 = vld [vmem:[#allocation3 + $0x588] sm:$0xff]
      %v1377 = vld [vmem:[#allocation3 + $0x590] sm:$0xff]
      %v1378 = vld [vmem:[#allocation3 + $0x598] sm:$0xff]
      %v1379 = vld [vmem:[#allocation3 + $0x5a0] sm:$0xff]
      %v1380 = vld [vmem:[#allocation3 + $0x5a8] sm:$0xff]
      %v1381 = vld [vmem:[#allocation3 + $0x5b0] sm:$0xff]
      %v1382 = vld [vmem:[#allocation3 + $0x5b8] sm:$0xff]
      %v1383 = vld [vmem:[#allocation3 + $0x5c0] sm:$0xff]
      %v1384 = vld [vmem:[#allocation3 + $0x5c8] sm:$0xff]
      %v1385 = vld [vmem:[#allocation3 + $0x5d0] sm:$0xff]
      %v1386 = vld [vmem:[#allocation3 + $0x5d8] sm:$0xff]
      %v1387 = vld [vmem:[#allocation3 + $0x5e0] sm:$0xff]
      %v1388 = vld [vmem:[#allocation3 + $0x5e8] sm:$0xff]
      %v1389 = vld [vmem:[#allocation3 + $0x5f0] sm:$0xff]
      %v1390 = vld [vmem:[#allocation3 + $0x5f8] sm:$0xff]
      %v1391 = vld [vmem:[#allocation3 + $0x600] sm:$0xff]
      %v1392 = vld [vmem:[#allocation3 + $0x608] sm:$0xff]
      %v1393 = vld [vmem:[#allocation3 + $0x610] sm:$0xff]
      %v1394 = vld [vmem:[#allocation3 + $0x618] sm:$0xff]
      %v1395 = vld [vmem:[#allocation3 + $0x620] sm:$0xff]
      %v1396 = vld [vmem:[#allocation3 + $0x628] sm:$0xff]
      %v1397 = vld [vmem:[#allocation3 + $0x630] sm:$0xff]
      %v1398 = vld [vmem:[#allocation3 + $0x638] sm:$0xff]
      %v1399 = vld [vmem:[#allocation3 + $0x640] sm:$0xff]
      %v1400 = vld [vmem:[#allocation3 + $0x648] sm:$0xff]
      %v1401 = vld [vmem:[#allocation3 + $0x650] sm:$0xff]
      %v1402 = vld [vmem:[#allocation3 + $0x658] sm:$0xff]
      %v1403 = vld [vmem:[#allocation3 + $0x660] sm:$0xff]
      %v1404 = vld [vmem:[#allocation3 + $0x668] sm:$0xff]
      %v1405 = vld [vmem:[#allocation3 + $0x670] sm:$0xff]
      %v1406 = vld [vmem:[#allocation3 + $0x678] sm:$0xff]
      %v1407 = vld [vmem:[#allocation3 + $0x680] sm:$0xff]
      %v1408 = vld [vmem:[#allocation3 + $0x688] sm:$0xff]
      %v1409 = vld [vmem:[#allocation3 + $0x690] sm:$0xff]
      %v1410 = vld [vmem:[#allocation3 + $0x698] sm:$0xff]
      %v1411 = vld [vmem:[#allocation3 + $0x6a0] sm:$0xff]
      %v1412 = vld [vmem:[#allocation3 + $0x6a8] sm:$0xff]
      %v1413 = vld [vmem:[#allocation3 + $0x6b0] sm:$0xff]
      %v1414 = vld [vmem:[#allocation3 + $0x6b8] sm:$0xff]
      %v1415 = vld [vmem:[#allocation3 + $0x6c0] sm:$0xff]
      %v1416 = vld [vmem:[#allocation3 + $0x6c8] sm:$0xff]
      %v1417 = vld [vmem:[#allocation3 + $0x6d0] sm:$0xff]
      %v1418 = vld [vmem:[#allocation3 + $0x6d8] sm:$0xff]
      %v1419 = vld [vmem:[#allocation3 + $0x6e0] sm:$0xff]
      %v1420 = vld [vmem:[#allocation3 + $0x6e8] sm:$0xff]
      %v1421 = vld [vmem:[#allocation3 + $0x6f0] sm:$0xff]
      %v1422 = vld [vmem:[#allocation3 + $0x6f8] sm:$0xff]
      %v1423 = vld [vmem:[#allocation3 + $0x700] sm:$0xff]
      %v1424 = vld [vmem:[#allocation3 + $0x708] sm:$0xff]
      %v1425 = vld [vmem:[#allocation3 + $0x710] sm:$0xff]
      %v1426 = vld [vmem:[#allocation3 + $0x718] sm:$0xff]
      %v1427 = vld [vmem:[#allocation3 + $0x720] sm:$0xff]
      %v1428 = vld [vmem:[#allocation3 + $0x728] sm:$0xff]
      %v1429 = vld [vmem:[#allocation3 + $0x730] sm:$0xff]
      %v1430 = vld [vmem:[#allocation3 + $0x738] sm:$0xff]
      %v1431 = vld [vmem:[#allocation3 + $0x740] sm:$0xff]
      %v1432 = vld [vmem:[#allocation3 + $0x748] sm:$0xff]
      %v1433 = vld [vmem:[#allocation3 + $0x750] sm:$0xff]
      %v1434 = vld [vmem:[#allocation3 + $0x758] sm:$0xff]
      %v1435 = vld [vmem:[#allocation3 + $0x760] sm:$0xff]
      %v1436 = vld [vmem:[#allocation3 + $0x768] sm:$0xff]
      %v1437 = vld [vmem:[#allocation3 + $0x770] sm:$0xff]
      %v1438 = vld [vmem:[#allocation3 + $0x778] sm:$0xff]
      %v1439 = vld [vmem:[#allocation3 + $0x780] sm:$0xff]
      %v1440 = vld [vmem:[#allocation3 + $0x788] sm:$0xff]
      %v1441 = vld [vmem:[#allocation3 + $0x790] sm:$0xff]
      %v1442 = vld [vmem:[#allocation3 + $0x798] sm:$0xff]
      %v1443 = vld [vmem:[#allocation3 + $0x7a0] sm:$0xff]
      %v1444 = vld [vmem:[#allocation3 + $0x7a8] sm:$0xff]
      %v1445 = vld [vmem:[#allocation3 + $0x7b0] sm:$0xff]
      %v1446 = vld [vmem:[#allocation3 + $0x7b8] sm:$0xff]
      %v1447 = vld [vmem:[#allocation3 + $0x7c0] sm:$0xff]
      %v1448 = vld [vmem:[#allocation3 + $0x7c8] sm:$0xff]
      %v1449 = vld [vmem:[#allocation3 + $0x7d0] sm:$0xff]
      %v1450 = vld [vmem:[#allocation3 + $0x7d8] sm:$0xff]
      %v1451 = vld [vmem:[#allocation3 + $0x7e0] sm:$0xff]
      %v1452 = vld [vmem:[#allocation3 + $0x7e8] sm:$0xff]
      %v1453 = vld [vmem:[#allocation3 + $0x7f0] sm:$0xff]
      %v1454 = vld [vmem:[#allocation3 + $0x7f8] sm:$0xff]
      %v1455 = vld [vmem:[#allocation3 + $0x800] sm:$0xff]
      %v1456 = vld [vmem:[#allocation3 + $0x808] sm:$0xff]
      %v1457 = vld [vmem:[#allocation3 + $0x810] sm:$0xff]
      %v1458 = vld [vmem:[#allocation3 + $0x818] sm:$0xff]
      %v1459 = vld [vmem:[#allocation3 + $0x820] sm:$0xff]
      %v1460 = vld [vmem:[#allocation3 + $0x828] sm:$0xff]
      %v1461 = vld [vmem:[#allocation3 + $0x830] sm:$0xff]
      %v1462 = vld [vmem:[#allocation3 + $0x838] sm:$0xff]
      %v1463 = vld [vmem:[#allocation3 + $0x840] sm:$0xff]
      %v1464 = vld [vmem:[#allocation3 + $0x848] sm:$0xff]
      %v1465 = vld [vmem:[#allocation3 + $0x850] sm:$0xff]
      %v1466 = vld [vmem:[#allocation3 + $0x858] sm:$0xff]
      %v1467 = vld [vmem:[#allocation3 + $0x860] sm:$0xff]
      %v1468 = vld [vmem:[#allocation3 + $0x868] sm:$0xff]
      %v1469 = vld [vmem:[#allocation3 + $0x870] sm:$0xff]
      %v1470 = vld [vmem:[#allocation3 + $0x878] sm:$0xff]
      %v1471 = vld [vmem:[#allocation3 + $0x880] sm:$0xff]
      %v1472 = vld [vmem:[#allocation3 + $0x888] sm:$0xff]
      %v1473 = vld [vmem:[#allocation3 + $0x890] sm:$0xff]
      %v1474 = vld [vmem:[#allocation3 + $0x898] sm:$0xff]
      %v1475 = vld [vmem:[#allocation3 + $0x8a0] sm:$0xff]
      %v1476 = vld [vmem:[#allocation3 + $0x8a8] sm:$0xff]
      %v1477 = vld [vmem:[#allocation3 + $0x8b0] sm:$0xff]
      %v1478 = vld [vmem:[#allocation3 + $0x8b8] sm:$0xff]
      %v1479 = vld [vmem:[#allocation3 + $0x8c0] sm:$0xff]
      %v1480 = vld [vmem:[#allocation3 + $0x8c8] sm:$0xff]
      %v1481 = vld [vmem:[#allocation3 + $0x8d0] sm:$0xff]
      %v1482 = vld [vmem:[#allocation3 + $0x8d8] sm:$0xff]
      %v1483 = vld [vmem:[#allocation3 + $0x8e0] sm:$0xff]
      %v1484 = vld [vmem:[#allocation3 + $0x8e8] sm:$0xff]
      %v1485 = vld [vmem:[#allocation3 + $0x8f0] sm:$0xff]
      %v1486 = vld [vmem:[#allocation3 + $0x8f8] sm:$0xff]
      %v1487 = vld [vmem:[%s3] sm:$0xff]
      %v1488 = vld [vmem:[%s3 + $0x8] sm:$0xff]
      %v1489 = vld [vmem:[%s3 + $0x10] sm:$0xff]
      %v1490 = vld [vmem:[%s3 + $0x18] sm:$0xff]
      %v1491 = vld [vmem:[%s3 + $0x20] sm:$0xff]
      %v1492 = vld [vmem:[%s3 + $0x28] sm:$0xff]
      %v1493 = vld [vmem:[%s3 + $0x30] sm:$0xff]
      %v1494 = vld [vmem:[%s3 + $0x38] sm:$0xff]
      %v1495 = vld [vmem:[%s3 + $0x40] sm:$0xff]
      %v1496 = vld [vmem:[%s3 + $0x48] sm:$0xff]
      %v1497 = vld [vmem:[%s3 + $0x50] sm:$0xff]
      %v1498 = vld [vmem:[%s3 + $0x58] sm:$0xff]
      %v1499 = vld [vmem:[%s3 + $0x60] sm:$0xff]
      %v1500 = vld [vmem:[%s3 + $0x68] sm:$0xff]
      %v1501 = vld [vmem:[%s3 + $0x70] sm:$0xff]
      %v1502 = vld [vmem:[%s3 + $0x78] sm:$0xff]
      %v1503 = vld [vmem:[%s3 + $0x80] sm:$0xff]
      %v1504 = vld [vmem:[%s3 + $0x88] sm:$0xff]
      %v1505 = vld [vmem:[%s3 + $0x90] sm:$0xff]
      %v1506 = vld [vmem:[%s3 + $0x98] sm:$0xff]
      %v1507 = vld [vmem:[%s3 + $0xa0] sm:$0xff]
      %v1508 = vld [vmem:[%s3 + $0xa8] sm:$0xff]
      %v1509 = vld [vmem:[%s3 + $0xb0] sm:$0xff]
      %v1510 = vld [vmem:[%s3 + $0xb8] sm:$0xff]
      %v1511 = vld [vmem:[%s3 + $0xc0] sm:$0xff]
      %v1512 = vld [vmem:[%s3 + $0xc8] sm:$0xff]
      %v1513 = vld [vmem:[%s3 + $0xd0] sm:$0xff]
      %v1514 = vld [vmem:[%s3 + $0xd8] sm:$0xff]
      %v1515 = vld [vmem:[%s3 + $0xe0] sm:$0xff]
      %v1516 = vld [vmem:[%s3 + $0xe8] sm:$0xff]
      %v1517 = vld [vmem:[%s3 + $0xf0] sm:$0xff]
      %v1518 = vld [vmem:[%s3 + $0xf8] sm:$0xff]
      %v1519 = vld [vmem:[%s3 + $0x100] sm:$0xff]
      %v1520 = vld [vmem:[%s3 + $0x108] sm:$0xff]
      %v1521 = vld [vmem:[%s3 + $0x110] sm:$0xff]
      %v1522 = vld [vmem:[%s3 + $0x118] sm:$0xff]
      %v1523 = vld [vmem:[%s3 + $0x120] sm:$0xff]
      %v1524 = vld [vmem:[%s3 + $0x128] sm:$0xff]
      %v1525 = vld [vmem:[%s3 + $0x130] sm:$0xff]
      %v1526 = vld [vmem:[%s3 + $0x138] sm:$0xff]
      %v1527 = vld [vmem:[%s3 + $0x140] sm:$0xff]
      %v1528 = vld [vmem:[%s3 + $0x148] sm:$0xff]
      %v1529 = vld [vmem:[%s3 + $0x150] sm:$0xff]
      %v1530 = vld [vmem:[%s3 + $0x158] sm:$0xff]
      %v1531 = vld [vmem:[%s3 + $0x160] sm:$0xff]
      %v1532 = vld [vmem:[%s3 + $0x168] sm:$0xff]
      %v1533 = vld [vmem:[%s3 + $0x170] sm:$0xff]
      %v1534 = vld [vmem:[%s3 + $0x178] sm:$0xff]
      %v1535 = vld [vmem:[%s3 + $0x180] sm:$0xff]
      %v1536 = vld [vmem:[%s3 + $0x188] sm:$0xff]
      %v1537 = vld [vmem:[%s3 + $0x190] sm:$0xff]
      %v1538 = vld [vmem:[%s3 + $0x198] sm:$0xff]
      %v1539 = vld [vmem:[%s3 + $0x1a0] sm:$0xff]
      %v1540 = vld [vmem:[%s3 + $0x1a8] sm:$0xff]
      %v1541 = vld [vmem:[%s3 + $0x1b0] sm:$0xff]
      %v1542 = vld [vmem:[%s3 + $0x1b8] sm:$0xff]
      %v1543 = vld [vmem:[%s3 + $0x1c0] sm:$0xff]
      %v1544 = vld [vmem:[%s3 + $0x1c8] sm:$0xff]
      %v1545 = vld [vmem:[%s3 + $0x1d0] sm:$0xff]
      %v1546 = vld [vmem:[%s3 + $0x1d8] sm:$0xff]
      %v1547 = vld [vmem:[%s3 + $0x1e0] sm:$0xff]
      %v1548 = vld [vmem:[%s3 + $0x1e8] sm:$0xff]
      %v1549 = vld [vmem:[%s3 + $0x1f0] sm:$0xff]
      %v1550 = vld [vmem:[%s3 + $0x1f8] sm:$0xff]
      %v1551 = vld [vmem:[%s3 + $0x200] sm:$0xff]
      %v1552 = vld [vmem:[%s3 + $0x208] sm:$0xff]
      %v1553 = vld [vmem:[%s3 + $0x210] sm:$0xff]
      %v1554 = vld [vmem:[%s3 + $0x218] sm:$0xff]
      %v1555 = vld [vmem:[%s3 + $0x220] sm:$0xff]
      %v1556 = vld [vmem:[%s3 + $0x228] sm:$0xff]
      %v1557 = vld [vmem:[%s3 + $0x230] sm:$0xff]
      %v1558 = vld [vmem:[%s3 + $0x238] sm:$0xff]
      %v1559 = vld [vmem:[%s3 + $0x240] sm:$0xff]
      %v1560 = vld [vmem:[%s3 + $0x248] sm:$0xff]
      %v1561 = vld [vmem:[%s3 + $0x250] sm:$0xff]
      %v1562 = vld [vmem:[%s3 + $0x258] sm:$0xff]
      %v1563 = vld [vmem:[%s3 + $0x260] sm:$0xff]
      %v1564 = vld [vmem:[%s3 + $0x268] sm:$0xff]
      %v1565 = vld [vmem:[%s3 + $0x270] sm:$0xff]
      %v1566 = vld [vmem:[%s3 + $0x278] sm:$0xff]
      %v1567 = vld [vmem:[%s3 + $0x280] sm:$0xff]
      %v1568 = vld [vmem:[%s3 + $0x288] sm:$0xff]
      %v1569 = vld [vmem:[%s3 + $0x290] sm:$0xff]
      %v1570 = vld [vmem:[%s3 + $0x298] sm:$0xff]
      %v1571 = vld [vmem:[%s3 + $0x2a0] sm:$0xff]
      %v1572 = vld [vmem:[%s3 + $0x2a8] sm:$0xff]
      %v1573 = vld [vmem:[%s3 + $0x2b0] sm:$0xff]
      %v1574 = vld [vmem:[%s3 + $0x2b8] sm:$0xff]
      %v1575 = vld [vmem:[%s3 + $0x2c0] sm:$0xff]
      %v1576 = vld [vmem:[%s3 + $0x2c8] sm:$0xff]
      %v1577 = vld [vmem:[%s3 + $0x2d0] sm:$0xff]
      %v1578 = vld [vmem:[%s3 + $0x2d8] sm:$0xff]
      %v1579 = vld [vmem:[%s3 + $0x2e0] sm:$0xff]
      %v1580 = vld [vmem:[%s3 + $0x2e8] sm:$0xff]
      %v1581 = vld [vmem:[%s3 + $0x2f0] sm:$0xff]
      %v1582 = vld [vmem:[%s3 + $0x2f8] sm:$0xff]
      %v1583 = vld [vmem:[%s3 + $0x300] sm:$0xff]
      %v1584 = vld [vmem:[%s3 + $0x308] sm:$0xff]
      %v1585 = vld [vmem:[%s3 + $0x310] sm:$0xff]
      %v1586 = vld [vmem:[%s3 + $0x318] sm:$0xff]
      %v1587 = vld [vmem:[%s3 + $0x320] sm:$0xff]
      %v1588 = vld [vmem:[%s3 + $0x328] sm:$0xff]
      %v1589 = vld [vmem:[%s3 + $0x330] sm:$0xff]
      %v1590 = vld [vmem:[%s3 + $0x338] sm:$0xff]
      %v1591 = vld [vmem:[%s3 + $0x340] sm:$0xff]
      %v1592 = vld [vmem:[%s3 + $0x348] sm:$0xff]
      %v1593 = vld [vmem:[%s3 + $0x350] sm:$0xff]
      %v1594 = vld [vmem:[%s3 + $0x358] sm:$0xff]
      %v1595 = vld [vmem:[%s3 + $0x360] sm:$0xff]
      %v1596 = vld [vmem:[%s3 + $0x368] sm:$0xff]
      %v1597 = vld [vmem:[%s3 + $0x370] sm:$0xff]
      %v1598 = vld [vmem:[%s3 + $0x378] sm:$0xff]
      %v1599 = vld [vmem:[%s3 + $0x380] sm:$0xff]
      %v1600 = vld [vmem:[%s3 + $0x388] sm:$0xff]
      %v1601 = vld [vmem:[%s3 + $0x390] sm:$0xff]
      %v1602 = vld [vmem:[%s3 + $0x398] sm:$0xff]
      %v1603 = vld [vmem:[%s3 + $0x3a0] sm:$0xff]
      %v1604 = vld [vmem:[%s3 + $0x3a8] sm:$0xff]
      %v1605 = vld [vmem:[%s3 + $0x3b0] sm:$0xff]
      %v1606 = vld [vmem:[%s3 + $0x3b8] sm:$0xff]
      %v1607 = vld [vmem:[%s3 + $0x3c0] sm:$0xff]
      %v1608 = vld [vmem:[%s3 + $0x3c8] sm:$0xff]
      %v1609 = vld [vmem:[%s3 + $0x3d0] sm:$0xff]
      %v1610 = vld [vmem:[%s3 + $0x3d8] sm:$0xff]
      %v1611 = vld [vmem:[%s3 + $0x3e0] sm:$0xff]
      %v1612 = vld [vmem:[%s3 + $0x3e8] sm:$0xff]
      %v1613 = vld [vmem:[%s3 + $0x3f0] sm:$0xff]
      %v1614 = vld [vmem:[%s3 + $0x3f8] sm:$0xff]
      %v1615 = vld [vmem:[%s3 + $0x400] sm:$0xff]
      %v1616 = vld [vmem:[%s3 + $0x408] sm:$0xff]
      %v1617 = vld [vmem:[%s3 + $0x410] sm:$0xff]
      %v1618 = vld [vmem:[%s3 + $0x418] sm:$0xff]
      %v1619 = vld [vmem:[%s3 + $0x420] sm:$0xff]
      %v1620 = vld [vmem:[%s3 + $0x428] sm:$0xff]
      %v1621 = vld [vmem:[%s3 + $0x430] sm:$0xff]
      %v1622 = vld [vmem:[%s3 + $0x438] sm:$0xff]
      %v1623 = vld [vmem:[%s3 + $0x440] sm:$0xff]
      %v1624 = vld [vmem:[%s3 + $0x448] sm:$0xff]
      %v1625 = vld [vmem:[%s3 + $0x450] sm:$0xff]
      %v1626 = vld [vmem:[%s3 + $0x458] sm:$0xff]
      %v1627 = vld [vmem:[%s3 + $0x460] sm:$0xff]
      %v1628 = vld [vmem:[%s3 + $0x468] sm:$0xff]
      %v1629 = vld [vmem:[%s3 + $0x470] sm:$0xff]
      %v1630 = vld [vmem:[%s3 + $0x478] sm:$0xff]
      %v1631 = vld [vmem:[%s4] sm:$0x1]
      %v1633 = vperm.slane %v1631, 0
      %1635 = vmatpush.msra.mxu0 %v1502
      %1636 = vmatpush.msra.mxu0 %v1501
      %1637 = vmatpush.msra.mxu0 %v1500
      %1638 = vmatpush.msra.mxu0 %v1499
      %1639 = vmatpush.msra.mxu0 %v1498
      %1640 = vmatpush.msra.mxu0 %v1497
      %1641 = vmatpush.msra.mxu0 %v1496
      %1642 = vmatpush.msra.mxu0 %v1495
      %1643 = vmatpush.msra.mxu0 %v1494
      %1644 = vmatpush.msra.mxu0 %v1493
      %1645 = vmatpush.msra.mxu0 %v1492
      %1646 = vmatpush.msra.mxu0 %v1491
      %1647 = vmatpush.msra.mxu0 %v1490
      %1648 = vmatpush.msra.mxu0 %v1489
      %1649 = vmatpush.msra.mxu0 %v1488
      %1650 = vmatpush.msra.mxu0 %v1487
      %1651 = vmatmul.f32.gmra.mxu0 %v1199
      %v1652 = vpop.f32.mrf.mxu0
      %v1653 = vadd.f32 %v1633, %v1652
      %1654 = vmatmul.f32.gmra.mxu0 %v1208
      %v1655 = vpop.f32.mrf.mxu0
      %v1656 = vadd.f32 %v1633, %v1655
      %1657 = vmatmul.f32.gmra.mxu0 %v1217
      %v1658 = vpop.f32.mrf.mxu0
      %v1659 = vadd.f32 %v1633, %v1658
      %1660 = vmatmul.f32.gmra.mxu0 %v1226
      %v1661 = vpop.f32.mrf.mxu0
      %v1662 = vadd.f32 %v1633, %v1661
      %1663 = vmatmul.f32.gmra.mxu0 %v1235
      %v1664 = vpop.f32.mrf.mxu0
      %v1665 = vadd.f32 %v1633, %v1664
      %1666 = vmatmul.f32.gmra.mxu0 %v1244
      %v1667 = vpop.f32.mrf.mxu0
      %v1668 = vadd.f32 %v1633, %v1667
      %1669 = vmatmul.f32.gmra.mxu0 %v1253
      %v1670 = vpop.f32.mrf.mxu0
      %v1671 = vadd.f32 %v1633, %v1670
      %1672 = vmatmul.f32.gmra.mxu0 %v1262
      %v1673 = vpop.f32.mrf.mxu0
      %v1674 = vadd.f32 %v1633, %v1673
      %1675 = vmatmul.f32.gmra.mxu0 %v1271
      %v1676 = vpop.f32.mrf.mxu0
      %v1677 = vadd.f32 %v1633, %v1676
      %1678 = vmatmul.f32.gmra.mxu0 %v1280
      %v1679 = vpop.f32.mrf.mxu0
      %v1680 = vadd.f32 %v1633, %v1679
      %1681 = vmatmul.f32.gmra.mxu0 %v1289
      %v1682 = vpop.f32.mrf.mxu0
      %v1683 = vadd.f32 %v1633, %v1682
      %1684 = vmatmul.f32.gmra.mxu0 %v1298
      %v1685 = vpop.f32.mrf.mxu0
      %v1686 = vadd.f32 %v1633, %v1685
      %1687 = vmatmul.f32.gmra.mxu0 %v1307
      %v1688 = vpop.f32.mrf.mxu0
      %v1689 = vadd.f32 %v1633, %v1688
      %1690 = vmatmul.f32.gmra.mxu0 %v1316
      %v1691 = vpop.f32.mrf.mxu0
      %v1692 = vadd.f32 %v1633, %v1691
      %1693 = vmatmul.f32.gmra.mxu0 %v1325
      %v1694 = vpop.f32.mrf.mxu0
      %v1695 = vadd.f32 %v1633, %v1694
      %1696 = vmatmul.f32.gmra.mxu0 %v1334
      %v1697 = vpop.f32.mrf.mxu0
      %v1698 = vadd.f32 %v1633, %v1697
      %1699 = vmatmul.f32.gmra.mxu0 %v1343
      %v1700 = vpop.f32.mrf.mxu0
      %v1701 = vadd.f32 %v1633, %v1700
      %1702 = vmatmul.f32.gmra.mxu0 %v1352
      %v1703 = vpop.f32.mrf.mxu0
      %v1704 = vadd.f32 %v1633, %v1703
      %1705 = vmatmul.f32.gmra.mxu0 %v1361
      %v1706 = vpop.f32.mrf.mxu0
      %v1707 = vadd.f32 %v1633, %v1706
      %1708 = vmatmul.f32.gmra.mxu0 %v1370
      %v1709 = vpop.f32.mrf.mxu0
      %v1710 = vadd.f32 %v1633, %v1709
      %1711 = vmatmul.f32.gmra.mxu0 %v1379
      %v1712 = vpop.f32.mrf.mxu0
      %v1713 = vadd.f32 %v1633, %v1712
      %1714 = vmatmul.f32.gmra.mxu0 %v1388
      %v1715 = vpop.f32.mrf.mxu0
      %v1716 = vadd.f32 %v1633, %v1715
      %1717 = vmatmul.f32.gmra.mxu0 %v1397
      %v1718 = vpop.f32.mrf.mxu0
      %v1719 = vadd.f32 %v1633, %v1718
      %1720 = vmatmul.f32.gmra.mxu0 %v1406
      %v1721 = vpop.f32.mrf.mxu0
      %v1722 = vadd.f32 %v1633, %v1721
      %1723 = vmatmul.f32.gmra.mxu0 %v1415
      %v1724 = vpop.f32.mrf.mxu0
      %v1725 = vadd.f32 %v1633, %v1724
      %1726 = vmatmul.f32.gmra.mxu0 %v1424
      %v1727 = vpop.f32.mrf.mxu0
      %v1728 = vadd.f32 %v1633, %v1727
      %1729 = vmatmul.f32.gmra.mxu0 %v1433
      %v1730 = vpop.f32.mrf.mxu0
      %v1731 = vadd.f32 %v1633, %v1730
      %1732 = vmatmul.f32.gmra.mxu0 %v1442
      %v1733 = vpop.f32.mrf.mxu0
      %v1734 = vadd.f32 %v1633, %v1733
      %1735 = vmatmul.f32.gmra.mxu0 %v1451
      %v1736 = vpop.f32.mrf.mxu0
      %v1737 = vadd.f32 %v1633, %v1736
      %1738 = vmatmul.f32.gmra.mxu0 %v1460
      %v1739 = vpop.f32.mrf.mxu0
      %v1740 = vadd.f32 %v1633, %v1739
      %1741 = vmatmul.f32.gmra.mxu0 %v1469
      %v1742 = vpop.f32.mrf.mxu0
      %v1743 = vadd.f32 %v1633, %v1742
      %1744 = vmatmul.f32.gmra.mxu0 %v1478
      %v1745 = vpop.f32.mrf.mxu0
      %v1746 = vadd.f32 %v1633, %v1745
      %1747 = vdwg.mxu0
      %1748 = vmatpush.msra.mxu0 %v1518
      %1749 = vmatpush.msra.mxu0 %v1517
      %1750 = vmatpush.msra.mxu0 %v1516
      %1751 = vmatpush.msra.mxu0 %v1515
      %1752 = vmatpush.msra.mxu0 %v1514
      %1753 = vmatpush.msra.mxu0 %v1513
      %1754 = vmatpush.msra.mxu0 %v1512
      %1755 = vmatpush.msra.mxu0 %v1511
      %1756 = vmatpush.msra.mxu0 %v1510
      %1757 = vmatpush.msra.mxu0 %v1509
      %1758 = vmatpush.msra.mxu0 %v1508
      %1759 = vmatpush.msra.mxu0 %v1507
      %1760 = vmatpush.msra.mxu0 %v1506
      %1761 = vmatpush.msra.mxu0 %v1505
      %1762 = vmatpush.msra.mxu0 %v1504
      %1763 = vmatpush.msra.mxu0 %v1503
      %1764 = vmatmul.f32.gmra.mxu0 %v1200
      %v1765 = vpop.f32.mrf.mxu0
      %v1766 = vadd.f32 %v1653, %v1765
      %1767 = vmatmul.f32.gmra.mxu0 %v1209
      %v1768 = vpop.f32.mrf.mxu0
      %v1769 = vadd.f32 %v1656, %v1768
      %1770 = vmatmul.f32.gmra.mxu0 %v1218
      %v1771 = vpop.f32.mrf.mxu0
      %v1772 = vadd.f32 %v1659, %v1771
      %1773 = vmatmul.f32.gmra.mxu0 %v1227
      %v1774 = vpop.f32.mrf.mxu0
      %v1775 = vadd.f32 %v1662, %v1774
      %1776 = vmatmul.f32.gmra.mxu0 %v1236
      %v1777 = vpop.f32.mrf.mxu0
      %v1778 = vadd.f32 %v1665, %v1777
      %1779 = vmatmul.f32.gmra.mxu0 %v1245
      %v1780 = vpop.f32.mrf.mxu0
      %v1781 = vadd.f32 %v1668, %v1780
      %1782 = vmatmul.f32.gmra.mxu0 %v1254
      %v1783 = vpop.f32.mrf.mxu0
      %v1784 = vadd.f32 %v1671, %v1783
      %1785 = vmatmul.f32.gmra.mxu0 %v1263
      %v1786 = vpop.f32.mrf.mxu0
      %v1787 = vadd.f32 %v1674, %v1786
      %1788 = vmatmul.f32.gmra.mxu0 %v1272
      %v1789 = vpop.f32.mrf.mxu0
      %v1790 = vadd.f32 %v1677, %v1789
      %1791 = vmatmul.f32.gmra.mxu0 %v1281
      %v1792 = vpop.f32.mrf.mxu0
      %v1793 = vadd.f32 %v1680, %v1792
      %1794 = vmatmul.f32.gmra.mxu0 %v1290
      %v1795 = vpop.f32.mrf.mxu0
      %v1796 = vadd.f32 %v1683, %v1795
      %1797 = vmatmul.f32.gmra.mxu0 %v1299
      %v1798 = vpop.f32.mrf.mxu0
      %v1799 = vadd.f32 %v1686, %v1798
      %1800 = vmatmul.f32.gmra.mxu0 %v1308
      %v1801 = vpop.f32.mrf.mxu0
      %v1802 = vadd.f32 %v1689, %v1801
      %1803 = vmatmul.f32.gmra.mxu0 %v1317
      %v1804 = vpop.f32.mrf.mxu0
      %v1805 = vadd.f32 %v1692, %v1804
      %1806 = vmatmul.f32.gmra.mxu0 %v1326
      %v1807 = vpop.f32.mrf.mxu0
      %v1808 = vadd.f32 %v1695, %v1807
      %1809 = vmatmul.f32.gmra.mxu0 %v1335
      %v1810 = vpop.f32.mrf.mxu0
      %v1811 = vadd.f32 %v1698, %v1810
      %1812 = vmatmul.f32.gmra.mxu0 %v1344
      %v1813 = vpop.f32.mrf.mxu0
      %v1814 = vadd.f32 %v1701, %v1813
      %1815 = vmatmul.f32.gmra.mxu0 %v1353
      %v1816 = vpop.f32.mrf.mxu0
      %v1817 = vadd.f32 %v1704, %v1816
      %1818 = vmatmul.f32.gmra.mxu0 %v1362
      %v1819 = vpop.f32.mrf.mxu0
      %v1820 = vadd.f32 %v1707, %v1819
      %1821 = vmatmul.f32.gmra.mxu0 %v1371
      %v1822 = vpop.f32.mrf.mxu0
      %v1823 = vadd.f32 %v1710, %v1822
      %1824 = vmatmul.f32.gmra.mxu0 %v1380
      %v1825 = vpop.f32.mrf.mxu0
      %v1826 = vadd.f32 %v1713, %v1825
      %1827 = vmatmul.f32.gmra.mxu0 %v1389
      %v1828 = vpop.f32.mrf.mxu0
      %v1829 = vadd.f32 %v1716, %v1828
      %1830 = vmatmul.f32.gmra.mxu0 %v1398
      %v1831 = vpop.f32.mrf.mxu0
      %v1832 = vadd.f32 %v1719, %v1831
      %1833 = vmatmul.f32.gmra.mxu0 %v1407
      %v1834 = vpop.f32.mrf.mxu0
      %v1835 = vadd.f32 %v1722, %v1834
      %1836 = vmatmul.f32.gmra.mxu0 %v1416
      %v1837 = vpop.f32.mrf.mxu0
      %v1838 = vadd.f32 %v1725, %v1837
      %1839 = vmatmul.f32.gmra.mxu0 %v1425
      %v1840 = vpop.f32.mrf.mxu0
      %v1841 = vadd.f32 %v1728, %v1840
      %1842 = vmatmul.f32.gmra.mxu0 %v1434
      %v1843 = vpop.f32.mrf.mxu0
      %v1844 = vadd.f32 %v1731, %v1843
      %1845 = vmatmul.f32.gmra.mxu0 %v1443
      %v1846 = vpop.f32.mrf.mxu0
      %v1847 = vadd.f32 %v1734, %v1846
      %1848 = vmatmul.f32.gmra.mxu0 %v1452
      %v1849 = vpop.f32.mrf.mxu0
      %v1850 = vadd.f32 %v1737, %v1849
      %1851 = vmatmul.f32.gmra.mxu0 %v1461
      %v1852 = vpop.f32.mrf.mxu0
      %v1853 = vadd.f32 %v1740, %v1852
      %1854 = vmatmul.f32.gmra.mxu0 %v1470
      %v1855 = vpop.f32.mrf.mxu0
      %v1856 = vadd.f32 %v1743, %v1855
      %1857 = vmatmul.f32.gmra.mxu0 %v1479
      %v1858 = vpop.f32.mrf.mxu0
      %v1859 = vadd.f32 %v1746, %v1858
      %1860 = vdwg.mxu0
      %1861 = vmatpush.msra.mxu0 %v1534
      %1862 = vmatpush.msra.mxu0 %v1533
      %1863 = vmatpush.msra.mxu0 %v1532
      %1864 = vmatpush.msra.mxu0 %v1531
      %1865 = vmatpush.msra.mxu0 %v1530
      %1866 = vmatpush.msra.mxu0 %v1529
      %1867 = vmatpush.msra.mxu0 %v1528
      %1868 = vmatpush.msra.mxu0 %v1527
      %1869 = vmatpush.msra.mxu0 %v1526
      %1870 = vmatpush.msra.mxu0 %v1525
      %1871 = vmatpush.msra.mxu0 %v1524
      %1872 = vmatpush.msra.mxu0 %v1523
      %1873 = vmatpush.msra.mxu0 %v1522
      %1874 = vmatpush.msra.mxu0 %v1521
      %1875 = vmatpush.msra.mxu0 %v1520
      %1876 = vmatpush.msra.mxu0 %v1519
      %1877 = vmatmul.f32.gmra.mxu0 %v1201
      %v1878 = vpop.f32.mrf.mxu0
      %v1879 = vadd.f32 %v1766, %v1878
      %1880 = vmatmul.f32.gmra.mxu0 %v1210
      %v1881 = vpop.f32.mrf.mxu0
      %v1882 = vadd.f32 %v1769, %v1881
      %1883 = vmatmul.f32.gmra.mxu0 %v1219
      %v1884 = vpop.f32.mrf.mxu0
      %v1885 = vadd.f32 %v1772, %v1884
      %1886 = vmatmul.f32.gmra.mxu0 %v1228
      %v1887 = vpop.f32.mrf.mxu0
      %v1888 = vadd.f32 %v1775, %v1887
      %1889 = vmatmul.f32.gmra.mxu0 %v1237
      %v1890 = vpop.f32.mrf.mxu0
      %v1891 = vadd.f32 %v1778, %v1890
      %1892 = vmatmul.f32.gmra.mxu0 %v1246
      %v1893 = vpop.f32.mrf.mxu0
      %v1894 = vadd.f32 %v1781, %v1893
      %1895 = vmatmul.f32.gmra.mxu0 %v1255
      %v1896 = vpop.f32.mrf.mxu0
      %v1897 = vadd.f32 %v1784, %v1896
      %1898 = vmatmul.f32.gmra.mxu0 %v1264
      %v1899 = vpop.f32.mrf.mxu0
      %v1900 = vadd.f32 %v1787, %v1899
      %1901 = vmatmul.f32.gmra.mxu0 %v1273
      %v1902 = vpop.f32.mrf.mxu0
      %v1903 = vadd.f32 %v1790, %v1902
      %1904 = vmatmul.f32.gmra.mxu0 %v1282
      %v1905 = vpop.f32.mrf.mxu0
      %v1906 = vadd.f32 %v1793, %v1905
      %1907 = vmatmul.f32.gmra.mxu0 %v1291
      %v1908 = vpop.f32.mrf.mxu0
      %v1909 = vadd.f32 %v1796, %v1908
      %1910 = vmatmul.f32.gmra.mxu0 %v1300
      %v1911 = vpop.f32.mrf.mxu0
      %v1912 = vadd.f32 %v1799, %v1911
      %1913 = vmatmul.f32.gmra.mxu0 %v1309
      %v1914 = vpop.f32.mrf.mxu0
      %v1915 = vadd.f32 %v1802, %v1914
      %1916 = vmatmul.f32.gmra.mxu0 %v1318
      %v1917 = vpop.f32.mrf.mxu0
      %v1918 = vadd.f32 %v1805, %v1917
      %1919 = vmatmul.f32.gmra.mxu0 %v1327
      %v1920 = vpop.f32.mrf.mxu0
      %v1921 = vadd.f32 %v1808, %v1920
      %1922 = vmatmul.f32.gmra.mxu0 %v1336
      %v1923 = vpop.f32.mrf.mxu0
      %v1924 = vadd.f32 %v1811, %v1923
      %1925 = vmatmul.f32.gmra.mxu0 %v1345
      %v1926 = vpop.f32.mrf.mxu0
      %v1927 = vadd.f32 %v1814, %v1926
      %1928 = vmatmul.f32.gmra.mxu0 %v1354
      %v1929 = vpop.f32.mrf.mxu0
      %v1930 = vadd.f32 %v1817, %v1929
      %1931 = vmatmul.f32.gmra.mxu0 %v1363
      %v1932 = vpop.f32.mrf.mxu0
      %v1933 = vadd.f32 %v1820, %v1932
      %1934 = vmatmul.f32.gmra.mxu0 %v1372
      %v1935 = vpop.f32.mrf.mxu0
      %v1936 = vadd.f32 %v1823, %v1935
      %1937 = vmatmul.f32.gmra.mxu0 %v1381
      %v1938 = vpop.f32.mrf.mxu0
      %v1939 = vadd.f32 %v1826, %v1938
      %1940 = vmatmul.f32.gmra.mxu0 %v1390
      %v1941 = vpop.f32.mrf.mxu0
      %v1942 = vadd.f32 %v1829, %v1941
      %1943 = vmatmul.f32.gmra.mxu0 %v1399
      %v1944 = vpop.f32.mrf.mxu0
      %v1945 = vadd.f32 %v1832, %v1944
      %1946 = vmatmul.f32.gmra.mxu0 %v1408
      %v1947 = vpop.f32.mrf.mxu0
      %v1948 = vadd.f32 %v1835, %v1947
      %1949 = vmatmul.f32.gmra.mxu0 %v1417
      %v1950 = vpop.f32.mrf.mxu0
      %v1951 = vadd.f32 %v1838, %v1950
      %1952 = vmatmul.f32.gmra.mxu0 %v1426
      %v1953 = vpop.f32.mrf.mxu0
      %v1954 = vadd.f32 %v1841, %v1953
      %1955 = vmatmul.f32.gmra.mxu0 %v1435
      %v1956 = vpop.f32.mrf.mxu0
      %v1957 = vadd.f32 %v1844, %v1956
      %1958 = vmatmul.f32.gmra.mxu0 %v1444
      %v1959 = vpop.f32.mrf.mxu0
      %v1960 = vadd.f32 %v1847, %v1959
      %1961 = vmatmul.f32.gmra.mxu0 %v1453
      %v1962 = vpop.f32.mrf.mxu0
      %v1963 = vadd.f32 %v1850, %v1962
      %1964 = vmatmul.f32.gmra.mxu0 %v1462
      %v1965 = vpop.f32.mrf.mxu0
      %v1966 = vadd.f32 %v1853, %v1965
      %1967 = vmatmul.f32.gmra.mxu0 %v1471
      %v1968 = vpop.f32.mrf.mxu0
      %v1969 = vadd.f32 %v1856, %v1968
      %1970 = vmatmul.f32.gmra.mxu0 %v1480
      %v1971 = vpop.f32.mrf.mxu0
      %v1972 = vadd.f32 %v1859, %v1971
      %1973 = vdwg.mxu0
      %1974 = vmatpush.msra.mxu0 %v1550
      %1975 = vmatpush.msra.mxu0 %v1549
      %1976 = vmatpush.msra.mxu0 %v1548
      %1977 = vmatpush.msra.mxu0 %v1547
      %1978 = vmatpush.msra.mxu0 %v1546
      %1979 = vmatpush.msra.mxu0 %v1545
      %1980 = vmatpush.msra.mxu0 %v1544
      %1981 = vmatpush.msra.mxu0 %v1543
      %1982 = vmatpush.msra.mxu0 %v1542
      %1983 = vmatpush.msra.mxu0 %v1541
      %1984 = vmatpush.msra.mxu0 %v1540
      %1985 = vmatpush.msra.mxu0 %v1539
      %1986 = vmatpush.msra.mxu0 %v1538
      %1987 = vmatpush.msra.mxu0 %v1537
      %1988 = vmatpush.msra.mxu0 %v1536
      %1989 = vmatpush.msra.mxu0 %v1535
      %1990 = vmatmul.f32.gmra.mxu0 %v1202
      %v1991 = vpop.f32.mrf.mxu0
      %v1992 = vadd.f32 %v1879, %v1991
      %1993 = vmatmul.f32.gmra.mxu0 %v1211
      %v1994 = vpop.f32.mrf.mxu0
      %v1995 = vadd.f32 %v1882, %v1994
      %1996 = vmatmul.f32.gmra.mxu0 %v1220
      %v1997 = vpop.f32.mrf.mxu0
      %v1998 = vadd.f32 %v1885, %v1997
      %1999 = vmatmul.f32.gmra.mxu0 %v1229
      %v2000 = vpop.f32.mrf.mxu0
      %v2001 = vadd.f32 %v1888, %v2000
      %2002 = vmatmul.f32.gmra.mxu0 %v1238
      %v2003 = vpop.f32.mrf.mxu0
      %v2004 = vadd.f32 %v1891, %v2003
      %2005 = vmatmul.f32.gmra.mxu0 %v1247
      %v2006 = vpop.f32.mrf.mxu0
      %v2007 = vadd.f32 %v1894, %v2006
      %2008 = vmatmul.f32.gmra.mxu0 %v1256
      %v2009 = vpop.f32.mrf.mxu0
      %v2010 = vadd.f32 %v1897, %v2009
      %2011 = vmatmul.f32.gmra.mxu0 %v1265
      %v2012 = vpop.f32.mrf.mxu0
      %v2013 = vadd.f32 %v1900, %v2012
      %2014 = vmatmul.f32.gmra.mxu0 %v1274
      %v2015 = vpop.f32.mrf.mxu0
      %v2016 = vadd.f32 %v1903, %v2015
      %2017 = vmatmul.f32.gmra.mxu0 %v1283
      %v2018 = vpop.f32.mrf.mxu0
      %v2019 = vadd.f32 %v1906, %v2018
      %2020 = vmatmul.f32.gmra.mxu0 %v1292
      %v2021 = vpop.f32.mrf.mxu0
      %v2022 = vadd.f32 %v1909, %v2021
      %2023 = vmatmul.f32.gmra.mxu0 %v1301
      %v2024 = vpop.f32.mrf.mxu0
      %v2025 = vadd.f32 %v1912, %v2024
      %2026 = vmatmul.f32.gmra.mxu0 %v1310
      %v2027 = vpop.f32.mrf.mxu0
      %v2028 = vadd.f32 %v1915, %v2027
      %2029 = vmatmul.f32.gmra.mxu0 %v1319
      %v2030 = vpop.f32.mrf.mxu0
      %v2031 = vadd.f32 %v1918, %v2030
      %2032 = vmatmul.f32.gmra.mxu0 %v1328
      %v2033 = vpop.f32.mrf.mxu0
      %v2034 = vadd.f32 %v1921, %v2033
      %2035 = vmatmul.f32.gmra.mxu0 %v1337
      %v2036 = vpop.f32.mrf.mxu0
      %v2037 = vadd.f32 %v1924, %v2036
      %2038 = vmatmul.f32.gmra.mxu0 %v1346
      %v2039 = vpop.f32.mrf.mxu0
      %v2040 = vadd.f32 %v1927, %v2039
      %2041 = vmatmul.f32.gmra.mxu0 %v1355
      %v2042 = vpop.f32.mrf.mxu0
      %v2043 = vadd.f32 %v1930, %v2042
      %2044 = vmatmul.f32.gmra.mxu0 %v1364
      %v2045 = vpop.f32.mrf.mxu0
      %v2046 = vadd.f32 %v1933, %v2045
      %2047 = vmatmul.f32.gmra.mxu0 %v1373
      %v2048 = vpop.f32.mrf.mxu0
      %v2049 = vadd.f32 %v1936, %v2048
      %2050 = vmatmul.f32.gmra.mxu0 %v1382
      %v2051 = vpop.f32.mrf.mxu0
      %v2052 = vadd.f32 %v1939, %v2051
      %2053 = vmatmul.f32.gmra.mxu0 %v1391
      %v2054 = vpop.f32.mrf.mxu0
      %v2055 = vadd.f32 %v1942, %v2054
      %2056 = vmatmul.f32.gmra.mxu0 %v1400
      %v2057 = vpop.f32.mrf.mxu0
      %v2058 = vadd.f32 %v1945, %v2057
      %2059 = vmatmul.f32.gmra.mxu0 %v1409
      %v2060 = vpop.f32.mrf.mxu0
      %v2061 = vadd.f32 %v1948, %v2060
      %2062 = vmatmul.f32.gmra.mxu0 %v1418
      %v2063 = vpop.f32.mrf.mxu0
      %v2064 = vadd.f32 %v1951, %v2063
      %2065 = vmatmul.f32.gmra.mxu0 %v1427
      %v2066 = vpop.f32.mrf.mxu0
      %v2067 = vadd.f32 %v1954, %v2066
      %2068 = vmatmul.f32.gmra.mxu0 %v1436
      %v2069 = vpop.f32.mrf.mxu0
      %v2070 = vadd.f32 %v1957, %v2069
      %2071 = vmatmul.f32.gmra.mxu0 %v1445
      %v2072 = vpop.f32.mrf.mxu0
      %v2073 = vadd.f32 %v1960, %v2072
      %2074 = vmatmul.f32.gmra.mxu0 %v1454
      %v2075 = vpop.f32.mrf.mxu0
      %v2076 = vadd.f32 %v1963, %v2075
      %2077 = vmatmul.f32.gmra.mxu0 %v1463
      %v2078 = vpop.f32.mrf.mxu0
      %v2079 = vadd.f32 %v1966, %v2078
      %2080 = vmatmul.f32.gmra.mxu0 %v1472
      %v2081 = vpop.f32.mrf.mxu0
      %v2082 = vadd.f32 %v1969, %v2081
      %2083 = vmatmul.f32.gmra.mxu0 %v1481
      %v2084 = vpop.f32.mrf.mxu0
      %v2085 = vadd.f32 %v1972, %v2084
      %2086 = vdwg.mxu0
      %2087 = vmatpush.msra.mxu0 %v1566
      %2088 = vmatpush.msra.mxu0 %v1565
      %2089 = vmatpush.msra.mxu0 %v1564
      %2090 = vmatpush.msra.mxu0 %v1563
      %2091 = vmatpush.msra.mxu0 %v1562
      %2092 = vmatpush.msra.mxu0 %v1561
      %2093 = vmatpush.msra.mxu0 %v1560
      %2094 = vmatpush.msra.mxu0 %v1559
      %2095 = vmatpush.msra.mxu0 %v1558
      %2096 = vmatpush.msra.mxu0 %v1557
      %2097 = vmatpush.msra.mxu0 %v1556
      %2098 = vmatpush.msra.mxu0 %v1555
      %2099 = vmatpush.msra.mxu0 %v1554
      %2100 = vmatpush.msra.mxu0 %v1553
      %2101 = vmatpush.msra.mxu0 %v1552
      %2102 = vmatpush.msra.mxu0 %v1551
      %2103 = vmatmul.f32.gmra.mxu0 %v1203
      %v2104 = vpop.f32.mrf.mxu0
      %v2105 = vadd.f32 %v1992, %v2104
      %2106 = vmatmul.f32.gmra.mxu0 %v1212
      %v2107 = vpop.f32.mrf.mxu0
      %v2108 = vadd.f32 %v1995, %v2107
      %2109 = vmatmul.f32.gmra.mxu0 %v1221
      %v2110 = vpop.f32.mrf.mxu0
      %v2111 = vadd.f32 %v1998, %v2110
      %2112 = vmatmul.f32.gmra.mxu0 %v1230
      %v2113 = vpop.f32.mrf.mxu0
      %v2114 = vadd.f32 %v2001, %v2113
      %2115 = vmatmul.f32.gmra.mxu0 %v1239
      %v2116 = vpop.f32.mrf.mxu0
      %v2117 = vadd.f32 %v2004, %v2116
      %2118 = vmatmul.f32.gmra.mxu0 %v1248
      %v2119 = vpop.f32.mrf.mxu0
      %v2120 = vadd.f32 %v2007, %v2119
      %2121 = vmatmul.f32.gmra.mxu0 %v1257
      %v2122 = vpop.f32.mrf.mxu0
      %v2123 = vadd.f32 %v2010, %v2122
      %2124 = vmatmul.f32.gmra.mxu0 %v1266
      %v2125 = vpop.f32.mrf.mxu0
      %v2126 = vadd.f32 %v2013, %v2125
      %2127 = vmatmul.f32.gmra.mxu0 %v1275
      %v2128 = vpop.f32.mrf.mxu0
      %v2129 = vadd.f32 %v2016, %v2128
      %2130 = vmatmul.f32.gmra.mxu0 %v1284
      %v2131 = vpop.f32.mrf.mxu0
      %v2132 = vadd.f32 %v2019, %v2131
      %2133 = vmatmul.f32.gmra.mxu0 %v1293
      %v2134 = vpop.f32.mrf.mxu0
      %v2135 = vadd.f32 %v2022, %v2134
      %2136 = vmatmul.f32.gmra.mxu0 %v1302
      %v2137 = vpop.f32.mrf.mxu0
      %v2138 = vadd.f32 %v2025, %v2137
      %2139 = vmatmul.f32.gmra.mxu0 %v1311
      %v2140 = vpop.f32.mrf.mxu0
      %v2141 = vadd.f32 %v2028, %v2140
      %2142 = vmatmul.f32.gmra.mxu0 %v1320
      %v2143 = vpop.f32.mrf.mxu0
      %v2144 = vadd.f32 %v2031, %v2143
      %2145 = vmatmul.f32.gmra.mxu0 %v1329
      %v2146 = vpop.f32.mrf.mxu0
      %v2147 = vadd.f32 %v2034, %v2146
      %2148 = vmatmul.f32.gmra.mxu0 %v1338
      %v2149 = vpop.f32.mrf.mxu0
      %v2150 = vadd.f32 %v2037, %v2149
      %2151 = vmatmul.f32.gmra.mxu0 %v1347
      %v2152 = vpop.f32.mrf.mxu0
      %v2153 = vadd.f32 %v2040, %v2152
      %2154 = vmatmul.f32.gmra.mxu0 %v1356
      %v2155 = vpop.f32.mrf.mxu0
      %v2156 = vadd.f32 %v2043, %v2155
      %2157 = vmatmul.f32.gmra.mxu0 %v1365
      %v2158 = vpop.f32.mrf.mxu0
      %v2159 = vadd.f32 %v2046, %v2158
      %2160 = vmatmul.f32.gmra.mxu0 %v1374
      %v2161 = vpop.f32.mrf.mxu0
      %v2162 = vadd.f32 %v2049, %v2161
      %2163 = vmatmul.f32.gmra.mxu0 %v1383
      %v2164 = vpop.f32.mrf.mxu0
      %v2165 = vadd.f32 %v2052, %v2164
      %2166 = vmatmul.f32.gmra.mxu0 %v1392
      %v2167 = vpop.f32.mrf.mxu0
      %v2168 = vadd.f32 %v2055, %v2167
      %2169 = vmatmul.f32.gmra.mxu0 %v1401
      %v2170 = vpop.f32.mrf.mxu0
      %v2171 = vadd.f32 %v2058, %v2170
      %2172 = vmatmul.f32.gmra.mxu0 %v1410
      %v2173 = vpop.f32.mrf.mxu0
      %v2174 = vadd.f32 %v2061, %v2173
      %2175 = vmatmul.f32.gmra.mxu0 %v1419
      %v2176 = vpop.f32.mrf.mxu0
      %v2177 = vadd.f32 %v2064, %v2176
      %2178 = vmatmul.f32.gmra.mxu0 %v1428
      %v2179 = vpop.f32.mrf.mxu0
      %v2180 = vadd.f32 %v2067, %v2179
      %2181 = vmatmul.f32.gmra.mxu0 %v1437
      %v2182 = vpop.f32.mrf.mxu0
      %v2183 = vadd.f32 %v2070, %v2182
      %2184 = vmatmul.f32.gmra.mxu0 %v1446
      %v2185 = vpop.f32.mrf.mxu0
      %v2186 = vadd.f32 %v2073, %v2185
      %2187 = vmatmul.f32.gmra.mxu0 %v1455
      %v2188 = vpop.f32.mrf.mxu0
      %v2189 = vadd.f32 %v2076, %v2188
      %2190 = vmatmul.f32.gmra.mxu0 %v1464
      %v2191 = vpop.f32.mrf.mxu0
      %v2192 = vadd.f32 %v2079, %v2191
      %2193 = vmatmul.f32.gmra.mxu0 %v1473
      %v2194 = vpop.f32.mrf.mxu0
      %v2195 = vadd.f32 %v2082, %v2194
      %2196 = vmatmul.f32.gmra.mxu0 %v1482
      %v2197 = vpop.f32.mrf.mxu0
      %v2198 = vadd.f32 %v2085, %v2197
      %2199 = vdwg.mxu0
      %2200 = vmatpush.msra.mxu0 %v1582
      %2201 = vmatpush.msra.mxu0 %v1581
      %2202 = vmatpush.msra.mxu0 %v1580
      %2203 = vmatpush.msra.mxu0 %v1579
      %2204 = vmatpush.msra.mxu0 %v1578
      %2205 = vmatpush.msra.mxu0 %v1577
      %2206 = vmatpush.msra.mxu0 %v1576
      %2207 = vmatpush.msra.mxu0 %v1575
      %2208 = vmatpush.msra.mxu0 %v1574
      %2209 = vmatpush.msra.mxu0 %v1573
      %2210 = vmatpush.msra.mxu0 %v1572
      %2211 = vmatpush.msra.mxu0 %v1571
      %2212 = vmatpush.msra.mxu0 %v1570
      %2213 = vmatpush.msra.mxu0 %v1569
      %2214 = vmatpush.msra.mxu0 %v1568
      %2215 = vmatpush.msra.mxu0 %v1567
      %2216 = vmatmul.f32.gmra.mxu0 %v1204
      %v2217 = vpop.f32.mrf.mxu0
      %v2218 = vadd.f32 %v2105, %v2217
      %2219 = vmatmul.f32.gmra.mxu0 %v1213
      %v2220 = vpop.f32.mrf.mxu0
      %v2221 = vadd.f32 %v2108, %v2220
      %2222 = vmatmul.f32.gmra.mxu0 %v1222
      %v2223 = vpop.f32.mrf.mxu0
      %v2224 = vadd.f32 %v2111, %v2223
      %2225 = vmatmul.f32.gmra.mxu0 %v1231
      %v2226 = vpop.f32.mrf.mxu0
      %v2227 = vadd.f32 %v2114, %v2226
      %2228 = vmatmul.f32.gmra.mxu0 %v1240
      %v2229 = vpop.f32.mrf.mxu0
      %v2230 = vadd.f32 %v2117, %v2229
      %2231 = vmatmul.f32.gmra.mxu0 %v1249
      %v2232 = vpop.f32.mrf.mxu0
      %v2233 = vadd.f32 %v2120, %v2232
      %2234 = vmatmul.f32.gmra.mxu0 %v1258
      %v2235 = vpop.f32.mrf.mxu0
      %v2236 = vadd.f32 %v2123, %v2235
      %2237 = vmatmul.f32.gmra.mxu0 %v1267
      %v2238 = vpop.f32.mrf.mxu0
      %v2239 = vadd.f32 %v2126, %v2238
      %2240 = vmatmul.f32.gmra.mxu0 %v1276
      %v2241 = vpop.f32.mrf.mxu0
      %v2242 = vadd.f32 %v2129, %v2241
      %2243 = vmatmul.f32.gmra.mxu0 %v1285
      %v2244 = vpop.f32.mrf.mxu0
      %v2245 = vadd.f32 %v2132, %v2244
      %2246 = vmatmul.f32.gmra.mxu0 %v1294
      %v2247 = vpop.f32.mrf.mxu0
      %v2248 = vadd.f32 %v2135, %v2247
      %2249 = vmatmul.f32.gmra.mxu0 %v1303
      %v2250 = vpop.f32.mrf.mxu0
      %v2251 = vadd.f32 %v2138, %v2250
      %2252 = vmatmul.f32.gmra.mxu0 %v1312
      %v2253 = vpop.f32.mrf.mxu0
      %v2254 = vadd.f32 %v2141, %v2253
      %2255 = vmatmul.f32.gmra.mxu0 %v1321
      %v2256 = vpop.f32.mrf.mxu0
      %v2257 = vadd.f32 %v2144, %v2256
      %2258 = vmatmul.f32.gmra.mxu0 %v1330
      %v2259 = vpop.f32.mrf.mxu0
      %v2260 = vadd.f32 %v2147, %v2259
      %2261 = vmatmul.f32.gmra.mxu0 %v1339
      %v2262 = vpop.f32.mrf.mxu0
      %v2263 = vadd.f32 %v2150, %v2262
      %2264 = vmatmul.f32.gmra.mxu0 %v1348
      %v2265 = vpop.f32.mrf.mxu0
      %v2266 = vadd.f32 %v2153, %v2265
      %2267 = vmatmul.f32.gmra.mxu0 %v1357
      %v2268 = vpop.f32.mrf.mxu0
      %v2269 = vadd.f32 %v2156, %v2268
      %2270 = vmatmul.f32.gmra.mxu0 %v1366
      %v2271 = vpop.f32.mrf.mxu0
      %v2272 = vadd.f32 %v2159, %v2271
      %2273 = vmatmul.f32.gmra.mxu0 %v1375
      %v2274 = vpop.f32.mrf.mxu0
      %v2275 = vadd.f32 %v2162, %v2274
      %2276 = vmatmul.f32.gmra.mxu0 %v1384
      %v2277 = vpop.f32.mrf.mxu0
      %v2278 = vadd.f32 %v2165, %v2277
      %2279 = vmatmul.f32.gmra.mxu0 %v1393
      %v2280 = vpop.f32.mrf.mxu0
      %v2281 = vadd.f32 %v2168, %v2280
      %2282 = vmatmul.f32.gmra.mxu0 %v1402
      %v2283 = vpop.f32.mrf.mxu0
      %v2284 = vadd.f32 %v2171, %v2283
      %2285 = vmatmul.f32.gmra.mxu0 %v1411
      %v2286 = vpop.f32.mrf.mxu0
      %v2287 = vadd.f32 %v2174, %v2286
      %2288 = vmatmul.f32.gmra.mxu0 %v1420
      %v2289 = vpop.f32.mrf.mxu0
      %v2290 = vadd.f32 %v2177, %v2289
      %2291 = vmatmul.f32.gmra.mxu0 %v1429
      %v2292 = vpop.f32.mrf.mxu0
      %v2293 = vadd.f32 %v2180, %v2292
      %2294 = vmatmul.f32.gmra.mxu0 %v1438
      %v2295 = vpop.f32.mrf.mxu0
      %v2296 = vadd.f32 %v2183, %v2295
      %2297 = vmatmul.f32.gmra.mxu0 %v1447
      %v2298 = vpop.f32.mrf.mxu0
      %v2299 = vadd.f32 %v2186, %v2298
      %2300 = vmatmul.f32.gmra.mxu0 %v1456
      %v2301 = vpop.f32.mrf.mxu0
      %v2302 = vadd.f32 %v2189, %v2301
      %2303 = vmatmul.f32.gmra.mxu0 %v1465
      %v2304 = vpop.f32.mrf.mxu0
      %v2305 = vadd.f32 %v2192, %v2304
      %2306 = vmatmul.f32.gmra.mxu0 %v1474
      %v2307 = vpop.f32.mrf.mxu0
      %v2308 = vadd.f32 %v2195, %v2307
      %2309 = vmatmul.f32.gmra.mxu0 %v1483
      %v2310 = vpop.f32.mrf.mxu0
      %v2311 = vadd.f32 %v2198, %v2310
      %2312 = vdwg.mxu0
      %2313 = vmatpush.msra.mxu0 %v1598
      %2314 = vmatpush.msra.mxu0 %v1597
      %2315 = vmatpush.msra.mxu0 %v1596
      %2316 = vmatpush.msra.mxu0 %v1595
      %2317 = vmatpush.msra.mxu0 %v1594
      %2318 = vmatpush.msra.mxu0 %v1593
      %2319 = vmatpush.msra.mxu0 %v1592
      %2320 = vmatpush.msra.mxu0 %v1591
      %2321 = vmatpush.msra.mxu0 %v1590
      %2322 = vmatpush.msra.mxu0 %v1589
      %2323 = vmatpush.msra.mxu0 %v1588
      %2324 = vmatpush.msra.mxu0 %v1587
      %2325 = vmatpush.msra.mxu0 %v1586
      %2326 = vmatpush.msra.mxu0 %v1585
      %2327 = vmatpush.msra.mxu0 %v1584
      %2328 = vmatpush.msra.mxu0 %v1583
      %2329 = vmatmul.f32.gmra.mxu0 %v1205
      %v2330 = vpop.f32.mrf.mxu0
      %v2331 = vadd.f32 %v2218, %v2330
      %2332 = vmatmul.f32.gmra.mxu0 %v1214
      %v2333 = vpop.f32.mrf.mxu0
      %v2334 = vadd.f32 %v2221, %v2333
      %2335 = vmatmul.f32.gmra.mxu0 %v1223
      %v2336 = vpop.f32.mrf.mxu0
      %v2337 = vadd.f32 %v2224, %v2336
      %2338 = vmatmul.f32.gmra.mxu0 %v1232
      %v2339 = vpop.f32.mrf.mxu0
      %v2340 = vadd.f32 %v2227, %v2339
      %2341 = vmatmul.f32.gmra.mxu0 %v1241
      %v2342 = vpop.f32.mrf.mxu0
      %v2343 = vadd.f32 %v2230, %v2342
      %2344 = vmatmul.f32.gmra.mxu0 %v1250
      %v2345 = vpop.f32.mrf.mxu0
      %v2346 = vadd.f32 %v2233, %v2345
      %2347 = vmatmul.f32.gmra.mxu0 %v1259
      %v2348 = vpop.f32.mrf.mxu0
      %v2349 = vadd.f32 %v2236, %v2348
      %2350 = vmatmul.f32.gmra.mxu0 %v1268
      %v2351 = vpop.f32.mrf.mxu0
      %v2352 = vadd.f32 %v2239, %v2351
      %2353 = vmatmul.f32.gmra.mxu0 %v1277
      %v2354 = vpop.f32.mrf.mxu0
      %v2355 = vadd.f32 %v2242, %v2354
      %2356 = vmatmul.f32.gmra.mxu0 %v1286
      %v2357 = vpop.f32.mrf.mxu0
      %v2358 = vadd.f32 %v2245, %v2357
      %2359 = vmatmul.f32.gmra.mxu0 %v1295
      %v2360 = vpop.f32.mrf.mxu0
      %v2361 = vadd.f32 %v2248, %v2360
      %2362 = vmatmul.f32.gmra.mxu0 %v1304
      %v2363 = vpop.f32.mrf.mxu0
      %v2364 = vadd.f32 %v2251, %v2363
      %2365 = vmatmul.f32.gmra.mxu0 %v1313
      %v2366 = vpop.f32.mrf.mxu0
      %v2367 = vadd.f32 %v2254, %v2366
      %2368 = vmatmul.f32.gmra.mxu0 %v1322
      %v2369 = vpop.f32.mrf.mxu0
      %v2370 = vadd.f32 %v2257, %v2369
      %2371 = vmatmul.f32.gmra.mxu0 %v1331
      %v2372 = vpop.f32.mrf.mxu0
      %v2373 = vadd.f32 %v2260, %v2372
      %2374 = vmatmul.f32.gmra.mxu0 %v1340
      %v2375 = vpop.f32.mrf.mxu0
      %v2376 = vadd.f32 %v2263, %v2375
      %2377 = vmatmul.f32.gmra.mxu0 %v1349
      %v2378 = vpop.f32.mrf.mxu0
      %v2379 = vadd.f32 %v2266, %v2378
      %2380 = vmatmul.f32.gmra.mxu0 %v1358
      %v2381 = vpop.f32.mrf.mxu0
      %v2382 = vadd.f32 %v2269, %v2381
      %2383 = vmatmul.f32.gmra.mxu0 %v1367
      %v2384 = vpop.f32.mrf.mxu0
      %v2385 = vadd.f32 %v2272, %v2384
      %2386 = vmatmul.f32.gmra.mxu0 %v1376
      %v2387 = vpop.f32.mrf.mxu0
      %v2388 = vadd.f32 %v2275, %v2387
      %2389 = vmatmul.f32.gmra.mxu0 %v1385
      %v2390 = vpop.f32.mrf.mxu0
      %v2391 = vadd.f32 %v2278, %v2390
      %2392 = vmatmul.f32.gmra.mxu0 %v1394
      %v2393 = vpop.f32.mrf.mxu0
      %v2394 = vadd.f32 %v2281, %v2393
      %2395 = vmatmul.f32.gmra.mxu0 %v1403
      %v2396 = vpop.f32.mrf.mxu0
      %v2397 = vadd.f32 %v2284, %v2396
      %2398 = vmatmul.f32.gmra.mxu0 %v1412
      %v2399 = vpop.f32.mrf.mxu0
      %v2400 = vadd.f32 %v2287, %v2399
      %2401 = vmatmul.f32.gmra.mxu0 %v1421
      %v2402 = vpop.f32.mrf.mxu0
      %v2403 = vadd.f32 %v2290, %v2402
      %2404 = vmatmul.f32.gmra.mxu0 %v1430
      %v2405 = vpop.f32.mrf.mxu0
      %v2406 = vadd.f32 %v2293, %v2405
      %2407 = vmatmul.f32.gmra.mxu0 %v1439
      %v2408 = vpop.f32.mrf.mxu0
      %v2409 = vadd.f32 %v2296, %v2408
      %2410 = vmatmul.f32.gmra.mxu0 %v1448
      %v2411 = vpop.f32.mrf.mxu0
      %v2412 = vadd.f32 %v2299, %v2411
      %2413 = vmatmul.f32.gmra.mxu0 %v1457
      %v2414 = vpop.f32.mrf.mxu0
      %v2415 = vadd.f32 %v2302, %v2414
      %2416 = vmatmul.f32.gmra.mxu0 %v1466
      %v2417 = vpop.f32.mrf.mxu0
      %v2418 = vadd.f32 %v2305, %v2417
      %2419 = vmatmul.f32.gmra.mxu0 %v1475
      %v2420 = vpop.f32.mrf.mxu0
      %v2421 = vadd.f32 %v2308, %v2420
      %2422 = vmatmul.f32.gmra.mxu0 %v1484
      %v2423 = vpop.f32.mrf.mxu0
      %v2424 = vadd.f32 %v2311, %v2423
      %2425 = vdwg.mxu0
      %2426 = vmatpush.msra.mxu0 %v1614
      %2427 = vmatpush.msra.mxu0 %v1613
      %2428 = vmatpush.msra.mxu0 %v1612
      %2429 = vmatpush.msra.mxu0 %v1611
      %2430 = vmatpush.msra.mxu0 %v1610
      %2431 = vmatpush.msra.mxu0 %v1609
      %2432 = vmatpush.msra.mxu0 %v1608
      %2433 = vmatpush.msra.mxu0 %v1607
      %2434 = vmatpush.msra.mxu0 %v1606
      %2435 = vmatpush.msra.mxu0 %v1605
      %2436 = vmatpush.msra.mxu0 %v1604
      %2437 = vmatpush.msra.mxu0 %v1603
      %2438 = vmatpush.msra.mxu0 %v1602
      %2439 = vmatpush.msra.mxu0 %v1601
      %2440 = vmatpush.msra.mxu0 %v1600
      %2441 = vmatpush.msra.mxu0 %v1599
      %2442 = vmatmul.f32.gmra.mxu0 %v1206
      %v2443 = vpop.f32.mrf.mxu0
      %v2444 = vadd.f32 %v2331, %v2443
      %2445 = vmatmul.f32.gmra.mxu0 %v1215
      %v2446 = vpop.f32.mrf.mxu0
      %v2447 = vadd.f32 %v2334, %v2446
      %2448 = vmatmul.f32.gmra.mxu0 %v1224
      %v2449 = vpop.f32.mrf.mxu0
      %v2450 = vadd.f32 %v2337, %v2449
      %2451 = vmatmul.f32.gmra.mxu0 %v1233
      %v2452 = vpop.f32.mrf.mxu0
      %v2453 = vadd.f32 %v2340, %v2452
      %2454 = vmatmul.f32.gmra.mxu0 %v1242
      %v2455 = vpop.f32.mrf.mxu0
      %v2456 = vadd.f32 %v2343, %v2455
      %2457 = vmatmul.f32.gmra.mxu0 %v1251
      %v2458 = vpop.f32.mrf.mxu0
      %v2459 = vadd.f32 %v2346, %v2458
      %2460 = vmatmul.f32.gmra.mxu0 %v1260
      %v2461 = vpop.f32.mrf.mxu0
      %v2462 = vadd.f32 %v2349, %v2461
      %2463 = vmatmul.f32.gmra.mxu0 %v1269
      %v2464 = vpop.f32.mrf.mxu0
      %v2465 = vadd.f32 %v2352, %v2464
      %2466 = vmatmul.f32.gmra.mxu0 %v1278
      %v2467 = vpop.f32.mrf.mxu0
      %v2468 = vadd.f32 %v2355, %v2467
      %2469 = vmatmul.f32.gmra.mxu0 %v1287
      %v2470 = vpop.f32.mrf.mxu0
      %v2471 = vadd.f32 %v2358, %v2470
      %2472 = vmatmul.f32.gmra.mxu0 %v1296
      %v2473 = vpop.f32.mrf.mxu0
      %v2474 = vadd.f32 %v2361, %v2473
      %2475 = vmatmul.f32.gmra.mxu0 %v1305
      %v2476 = vpop.f32.mrf.mxu0
      %v2477 = vadd.f32 %v2364, %v2476
      %2478 = vmatmul.f32.gmra.mxu0 %v1314
      %v2479 = vpop.f32.mrf.mxu0
      %v2480 = vadd.f32 %v2367, %v2479
      %2481 = vmatmul.f32.gmra.mxu0 %v1323
      %v2482 = vpop.f32.mrf.mxu0
      %v2483 = vadd.f32 %v2370, %v2482
      %2484 = vmatmul.f32.gmra.mxu0 %v1332
      %v2485 = vpop.f32.mrf.mxu0
      %v2486 = vadd.f32 %v2373, %v2485
      %2487 = vmatmul.f32.gmra.mxu0 %v1341
      %v2488 = vpop.f32.mrf.mxu0
      %v2489 = vadd.f32 %v2376, %v2488
      %2490 = vmatmul.f32.gmra.mxu0 %v1350
      %v2491 = vpop.f32.mrf.mxu0
      %v2492 = vadd.f32 %v2379, %v2491
      %2493 = vmatmul.f32.gmra.mxu0 %v1359
      %v2494 = vpop.f32.mrf.mxu0
      %v2495 = vadd.f32 %v2382, %v2494
      %2496 = vmatmul.f32.gmra.mxu0 %v1368
      %v2497 = vpop.f32.mrf.mxu0
      %v2498 = vadd.f32 %v2385, %v2497
      %2499 = vmatmul.f32.gmra.mxu0 %v1377
      %v2500 = vpop.f32.mrf.mxu0
      %v2501 = vadd.f32 %v2388, %v2500
      %2502 = vmatmul.f32.gmra.mxu0 %v1386
      %v2503 = vpop.f32.mrf.mxu0
      %v2504 = vadd.f32 %v2391, %v2503
      %2505 = vmatmul.f32.gmra.mxu0 %v1395
      %v2506 = vpop.f32.mrf.mxu0
      %v2507 = vadd.f32 %v2394, %v2506
      %2508 = vmatmul.f32.gmra.mxu0 %v1404
      %v2509 = vpop.f32.mrf.mxu0
      %v2510 = vadd.f32 %v2397, %v2509
      %2511 = vmatmul.f32.gmra.mxu0 %v1413
      %v2512 = vpop.f32.mrf.mxu0
      %v2513 = vadd.f32 %v2400, %v2512
      %2514 = vmatmul.f32.gmra.mxu0 %v1422
      %v2515 = vpop.f32.mrf.mxu0
      %v2516 = vadd.f32 %v2403, %v2515
      %2517 = vmatmul.f32.gmra.mxu0 %v1431
      %v2518 = vpop.f32.mrf.mxu0
      %v2519 = vadd.f32 %v2406, %v2518
      %2520 = vmatmul.f32.gmra.mxu0 %v1440
      %v2521 = vpop.f32.mrf.mxu0
      %v2522 = vadd.f32 %v2409, %v2521
      %2523 = vmatmul.f32.gmra.mxu0 %v1449
      %v2524 = vpop.f32.mrf.mxu0
      %v2525 = vadd.f32 %v2412, %v2524
      %2526 = vmatmul.f32.gmra.mxu0 %v1458
      %v2527 = vpop.f32.mrf.mxu0
      %v2528 = vadd.f32 %v2415, %v2527
      %2529 = vmatmul.f32.gmra.mxu0 %v1467
      %v2530 = vpop.f32.mrf.mxu0
      %v2531 = vadd.f32 %v2418, %v2530
      %2532 = vmatmul.f32.gmra.mxu0 %v1476
      %v2533 = vpop.f32.mrf.mxu0
      %v2534 = vadd.f32 %v2421, %v2533
      %2535 = vmatmul.f32.gmra.mxu0 %v1485
      %v2536 = vpop.f32.mrf.mxu0
      %v2537 = vadd.f32 %v2424, %v2536
      %2538 = vdwg.mxu0
      %2539 = vmatpush.msra.mxu0 %v1630
      %2540 = vmatpush.msra.mxu0 %v1629
      %2541 = vmatpush.msra.mxu0 %v1628
      %2542 = vmatpush.msra.mxu0 %v1627
      %2543 = vmatpush.msra.mxu0 %v1626
      %2544 = vmatpush.msra.mxu0 %v1625
      %2545 = vmatpush.msra.mxu0 %v1624
      %2546 = vmatpush.msra.mxu0 %v1623
      %2547 = vmatpush.msra.mxu0 %v1622
      %2548 = vmatpush.msra.mxu0 %v1621
      %2549 = vmatpush.msra.mxu0 %v1620
      %2550 = vmatpush.msra.mxu0 %v1619
      %2551 = vmatpush.msra.mxu0 %v1618
      %2552 = vmatpush.msra.mxu0 %v1617
      %2553 = vmatpush.msra.mxu0 %v1616
      %2554 = vmatpush.msra.mxu0 %v1615
      %2555 = vmatmul.f32.gmra.mxu0 %v1207
      %v2556 = vpop.f32.mrf.mxu0
      %v2557 = vadd.f32 %v2444, %v2556
      %2558 = vmatmul.f32.gmra.mxu0 %v1216
      %v2559 = vpop.f32.mrf.mxu0
      %v2560 = vadd.f32 %v2447, %v2559
      %2561 = vmatmul.f32.gmra.mxu0 %v1225
      %v2562 = vpop.f32.mrf.mxu0
      %v2563 = vadd.f32 %v2450, %v2562
      %2564 = vmatmul.f32.gmra.mxu0 %v1234
      %v2565 = vpop.f32.mrf.mxu0
      %v2566 = vadd.f32 %v2453, %v2565
      %2567 = vmatmul.f32.gmra.mxu0 %v1243
      %v2568 = vpop.f32.mrf.mxu0
      %v2569 = vadd.f32 %v2456, %v2568
      %2570 = vmatmul.f32.gmra.mxu0 %v1252
      %v2571 = vpop.f32.mrf.mxu0
      %v2572 = vadd.f32 %v2459, %v2571
      %2573 = vmatmul.f32.gmra.mxu0 %v1261
      %v2574 = vpop.f32.mrf.mxu0
      %v2575 = vadd.f32 %v2462, %v2574
      %2576 = vmatmul.f32.gmra.mxu0 %v1270
      %v2577 = vpop.f32.mrf.mxu0
      %v2578 = vadd.f32 %v2465, %v2577
      %2579 = vmatmul.f32.gmra.mxu0 %v1279
      %v2580 = vpop.f32.mrf.mxu0
      %v2581 = vadd.f32 %v2468, %v2580
      %2582 = vmatmul.f32.gmra.mxu0 %v1288
      %v2583 = vpop.f32.mrf.mxu0
      %v2584 = vadd.f32 %v2471, %v2583
      %2585 = vmatmul.f32.gmra.mxu0 %v1297
      %v2586 = vpop.f32.mrf.mxu0
      %v2587 = vadd.f32 %v2474, %v2586
      %2588 = vmatmul.f32.gmra.mxu0 %v1306
      %v2589 = vpop.f32.mrf.mxu0
      %v2590 = vadd.f32 %v2477, %v2589
      %2591 = vmatmul.f32.gmra.mxu0 %v1315
      %v2592 = vpop.f32.mrf.mxu0
      %v2593 = vadd.f32 %v2480, %v2592
      %2594 = vmatmul.f32.gmra.mxu0 %v1324
      %v2595 = vpop.f32.mrf.mxu0
      %v2596 = vadd.f32 %v2483, %v2595
      %2597 = vmatmul.f32.gmra.mxu0 %v1333
      %v2598 = vpop.f32.mrf.mxu0
      %v2599 = vadd.f32 %v2486, %v2598
      %2600 = vmatmul.f32.gmra.mxu0 %v1342
      %v2601 = vpop.f32.mrf.mxu0
      %v2602 = vadd.f32 %v2489, %v2601
      %2603 = vmatmul.f32.gmra.mxu0 %v1351
      %v2604 = vpop.f32.mrf.mxu0
      %v2605 = vadd.f32 %v2492, %v2604
      %2606 = vmatmul.f32.gmra.mxu0 %v1360
      %v2607 = vpop.f32.mrf.mxu0
      %v2608 = vadd.f32 %v2495, %v2607
      %2609 = vmatmul.f32.gmra.mxu0 %v1369
      %v2610 = vpop.f32.mrf.mxu0
      %v2611 = vadd.f32 %v2498, %v2610
      %2612 = vmatmul.f32.gmra.mxu0 %v1378
      %v2613 = vpop.f32.mrf.mxu0
      %v2614 = vadd.f32 %v2501, %v2613
      %2615 = vmatmul.f32.gmra.mxu0 %v1387
      %v2616 = vpop.f32.mrf.mxu0
      %v2617 = vadd.f32 %v2504, %v2616
      %2618 = vmatmul.f32.gmra.mxu0 %v1396
      %v2619 = vpop.f32.mrf.mxu0
      %v2620 = vadd.f32 %v2507, %v2619
      %2621 = vmatmul.f32.gmra.mxu0 %v1405
      %v2622 = vpop.f32.mrf.mxu0
      %v2623 = vadd.f32 %v2510, %v2622
      %2624 = vmatmul.f32.gmra.mxu0 %v1414
      %v2625 = vpop.f32.mrf.mxu0
      %v2626 = vadd.f32 %v2513, %v2625
      %2627 = vmatmul.f32.gmra.mxu0 %v1423
      %v2628 = vpop.f32.mrf.mxu0
      %v2629 = vadd.f32 %v2516, %v2628
      %2630 = vmatmul.f32.gmra.mxu0 %v1432
      %v2631 = vpop.f32.mrf.mxu0
      %v2632 = vadd.f32 %v2519, %v2631
      %2633 = vmatmul.f32.gmra.mxu0 %v1441
      %v2634 = vpop.f32.mrf.mxu0
      %v2635 = vadd.f32 %v2522, %v2634
      %2636 = vmatmul.f32.gmra.mxu0 %v1450
      %v2637 = vpop.f32.mrf.mxu0
      %v2638 = vadd.f32 %v2525, %v2637
      %2639 = vmatmul.f32.gmra.mxu0 %v1459
      %v2640 = vpop.f32.mrf.mxu0
      %v2641 = vadd.f32 %v2528, %v2640
      %2642 = vmatmul.f32.gmra.mxu0 %v1468
      %v2643 = vpop.f32.mrf.mxu0
      %v2644 = vadd.f32 %v2531, %v2643
      %2645 = vmatmul.f32.gmra.mxu0 %v1477
      %v2646 = vpop.f32.mrf.mxu0
      %v2647 = vadd.f32 %v2534, %v2646
      %2648 = vmatmul.f32.gmra.mxu0 %v1486
      %v2649 = vpop.f32.mrf.mxu0
      %v2650 = vadd.f32 %v2537, %v2649
      %2651 = vdwg.mxu0
      %v2652 = vld [vmem:[%s320] sm:$0xff]
      %v2653 = vld [vmem:[%s320 + $0x8] sm:$0xff]
      %v2654 = vld [vmem:[%s320 + $0x10] sm:$0xff]
      %v2655 = vld [vmem:[%s320 + $0x18] sm:$0xff]
      %v2656 = vld [vmem:[%s320 + $0x20] sm:$0xff]
      %v2657 = vld [vmem:[%s320 + $0x28] sm:$0xff]
      %v2658 = vld [vmem:[%s320 + $0x30] sm:$0xff]
      %v2659 = vld [vmem:[%s320 + $0x38] sm:$0xff]
      %v2660 = vld [vmem:[%s320 + $0x40] sm:$0xff]
      %v2661 = vld [vmem:[%s320 + $0x48] sm:$0xff]
      %v2662 = vld [vmem:[%s320 + $0x50] sm:$0xff]
      %v2663 = vld [vmem:[%s320 + $0x58] sm:$0xff]
      %v2664 = vld [vmem:[%s320 + $0x60] sm:$0xff]
      %v2665 = vld [vmem:[%s320 + $0x68] sm:$0xff]
      %v2666 = vld [vmem:[%s320 + $0x70] sm:$0xff]
      %v2667 = vld [vmem:[%s320 + $0x78] sm:$0xff]
      %v2668 = vld [vmem:[%s320 + $0x80] sm:$0xff]
      %v2669 = vld [vmem:[%s320 + $0x88] sm:$0xff]
      %v2670 = vld [vmem:[%s320 + $0x90] sm:$0xff]
      %v2671 = vld [vmem:[%s320 + $0x98] sm:$0xff]
      %v2672 = vld [vmem:[%s320 + $0xa0] sm:$0xff]
      %v2673 = vld [vmem:[%s320 + $0xa8] sm:$0xff]
      %v2674 = vld [vmem:[%s320 + $0xb0] sm:$0xff]
      %v2675 = vld [vmem:[%s320 + $0xb8] sm:$0xff]
      %v2676 = vld [vmem:[%s320 + $0xc0] sm:$0xff]
      %v2677 = vld [vmem:[%s320 + $0xc8] sm:$0xff]
      %v2678 = vld [vmem:[%s320 + $0xd0] sm:$0xff]
      %v2679 = vld [vmem:[%s320 + $0xd8] sm:$0xff]
      %v2680 = vld [vmem:[%s320 + $0xe0] sm:$0xff]
      %v2681 = vld [vmem:[%s320 + $0xe8] sm:$0xff]
      %v2682 = vld [vmem:[%s320 + $0xf0] sm:$0xff]
      %v2683 = vld [vmem:[%s320 + $0xf8] sm:$0xff]
      %v2684 = vld [vmem:[%s6] sm:$0xff]
      %v2685 = vld [vmem:[%s6 + $0x8] sm:$0xff]
      %v2686 = vld [vmem:[%s6 + $0x10] sm:$0xff]
      %v2687 = vld [vmem:[%s6 + $0x18] sm:$0xff]
      %v2688 = vld [vmem:[%s6 + $0x20] sm:$0xff]
      %v2689 = vld [vmem:[%s6 + $0x28] sm:$0xff]
      %v2690 = vld [vmem:[%s6 + $0x30] sm:$0xff]
      %v2691 = vld [vmem:[%s6 + $0x38] sm:$0xff]
      %v2692 = vld [vmem:[%s6 + $0x40] sm:$0xff]
      %v2693 = vld [vmem:[%s6 + $0x48] sm:$0xff]
      %v2694 = vld [vmem:[%s6 + $0x50] sm:$0xff]
      %v2695 = vld [vmem:[%s6 + $0x58] sm:$0xff]
      %v2696 = vld [vmem:[%s6 + $0x60] sm:$0xff]
      %v2697 = vld [vmem:[%s6 + $0x68] sm:$0xff]
      %v2698 = vld [vmem:[%s6 + $0x70] sm:$0xff]
      %v2699 = vld [vmem:[%s6 + $0x78] sm:$0xff]
      %2700 = vmatpush.msra.mxu0 %v2699
      %2701 = vmatpush.msra.mxu0 %v2698
      %2702 = vmatpush.msra.mxu0 %v2697
      %2703 = vmatpush.msra.mxu0 %v2696
      %2704 = vmatpush.msra.mxu0 %v2695
      %2705 = vmatpush.msra.mxu0 %v2694
      %2706 = vmatpush.msra.mxu0 %v2693
      %2707 = vmatpush.msra.mxu0 %v2692
      %2708 = vmatpush.msra.mxu0 %v2691
      %2709 = vmatpush.msra.mxu0 %v2690
      %2710 = vmatpush.msra.mxu0 %v2689
      %2711 = vmatpush.msra.mxu0 %v2688
      %2712 = vmatpush.msra.mxu0 %v2687
      %2713 = vmatpush.msra.mxu0 %v2686
      %2714 = vmatpush.msra.mxu0 %v2685
      %2715 = vmatpush.msra.mxu0 %v2684
      %2716 = vmatmul.f32.gmra.mxu0 %v2652
      %v2717 = vpop.f32.mrf.mxu0
      %v2718 = vadd.f32 0.0, %v2717
      %2719 = vmatmul.f32.gmra.mxu0 %v2653
      %v2720 = vpop.f32.mrf.mxu0
      %v2721 = vadd.f32 0.0, %v2720
      %2722 = vmatmul.f32.gmra.mxu0 %v2654
      %v2723 = vpop.f32.mrf.mxu0
      %v2724 = vadd.f32 0.0, %v2723
      %2725 = vmatmul.f32.gmra.mxu0 %v2655
      %v2726 = vpop.f32.mrf.mxu0
      %v2727 = vadd.f32 0.0, %v2726
      %2728 = vmatmul.f32.gmra.mxu0 %v2656
      %v2729 = vpop.f32.mrf.mxu0
      %v2730 = vadd.f32 0.0, %v2729
      %2731 = vmatmul.f32.gmra.mxu0 %v2657
      %v2732 = vpop.f32.mrf.mxu0
      %v2733 = vadd.f32 0.0, %v2732
      %2734 = vmatmul.f32.gmra.mxu0 %v2658
      %v2735 = vpop.f32.mrf.mxu0
      %v2736 = vadd.f32 0.0, %v2735
      %2737 = vmatmul.f32.gmra.mxu0 %v2659
      %v2738 = vpop.f32.mrf.mxu0
      %v2739 = vadd.f32 0.0, %v2738
      %2740 = vmatmul.f32.gmra.mxu0 %v2660
      %v2741 = vpop.f32.mrf.mxu0
      %v2742 = vadd.f32 0.0, %v2741
      %2743 = vmatmul.f32.gmra.mxu0 %v2661
      %v2744 = vpop.f32.mrf.mxu0
      %v2745 = vadd.f32 0.0, %v2744
      %2746 = vmatmul.f32.gmra.mxu0 %v2662
      %v2747 = vpop.f32.mrf.mxu0
      %v2748 = vadd.f32 0.0, %v2747
      %2749 = vmatmul.f32.gmra.mxu0 %v2663
      %v2750 = vpop.f32.mrf.mxu0
      %v2751 = vadd.f32 0.0, %v2750
      %2752 = vmatmul.f32.gmra.mxu0 %v2664
      %v2753 = vpop.f32.mrf.mxu0
      %v2754 = vadd.f32 0.0, %v2753
      %2755 = vmatmul.f32.gmra.mxu0 %v2665
      %v2756 = vpop.f32.mrf.mxu0
      %v2757 = vadd.f32 0.0, %v2756
      %2758 = vmatmul.f32.gmra.mxu0 %v2666
      %v2759 = vpop.f32.mrf.mxu0
      %v2760 = vadd.f32 0.0, %v2759
      %2761 = vmatmul.f32.gmra.mxu0 %v2667
      %v2762 = vpop.f32.mrf.mxu0
      %v2763 = vadd.f32 0.0, %v2762
      %2764 = vmatmul.f32.gmra.mxu0 %v2668
      %v2765 = vpop.f32.mrf.mxu0
      %v2766 = vadd.f32 0.0, %v2765
      %2767 = vmatmul.f32.gmra.mxu0 %v2669
      %v2768 = vpop.f32.mrf.mxu0
      %v2769 = vadd.f32 0.0, %v2768
      %2770 = vmatmul.f32.gmra.mxu0 %v2670
      %v2771 = vpop.f32.mrf.mxu0
      %v2772 = vadd.f32 0.0, %v2771
      %2773 = vmatmul.f32.gmra.mxu0 %v2671
      %v2774 = vpop.f32.mrf.mxu0
      %v2775 = vadd.f32 0.0, %v2774
      %2776 = vmatmul.f32.gmra.mxu0 %v2672
      %v2777 = vpop.f32.mrf.mxu0
      %v2778 = vadd.f32 0.0, %v2777
      %2779 = vmatmul.f32.gmra.mxu0 %v2673
      %v2780 = vpop.f32.mrf.mxu0
      %v2781 = vadd.f32 0.0, %v2780
      %2782 = vmatmul.f32.gmra.mxu0 %v2674
      %v2783 = vpop.f32.mrf.mxu0
      %v2784 = vadd.f32 0.0, %v2783
      %2785 = vmatmul.f32.gmra.mxu0 %v2675
      %v2786 = vpop.f32.mrf.mxu0
      %v2787 = vadd.f32 0.0, %v2786
      %2788 = vmatmul.f32.gmra.mxu0 %v2676
      %v2789 = vpop.f32.mrf.mxu0
      %v2790 = vadd.f32 0.0, %v2789
      %2791 = vmatmul.f32.gmra.mxu0 %v2677
      %v2792 = vpop.f32.mrf.mxu0
      %v2793 = vadd.f32 0.0, %v2792
      %2794 = vmatmul.f32.gmra.mxu0 %v2678
      %v2795 = vpop.f32.mrf.mxu0
      %v2796 = vadd.f32 0.0, %v2795
      %2797 = vmatmul.f32.gmra.mxu0 %v2679
      %v2798 = vpop.f32.mrf.mxu0
      %v2799 = vadd.f32 0.0, %v2798
      %2800 = vmatmul.f32.gmra.mxu0 %v2680
      %v2801 = vpop.f32.mrf.mxu0
      %v2802 = vadd.f32 0.0, %v2801
      %2803 = vmatmul.f32.gmra.mxu0 %v2681
      %v2804 = vpop.f32.mrf.mxu0
      %v2805 = vadd.f32 0.0, %v2804
      %2806 = vmatmul.f32.gmra.mxu0 %v2682
      %v2807 = vpop.f32.mrf.mxu0
      %v2808 = vadd.f32 0.0, %v2807
      %2809 = vmatmul.f32.gmra.mxu0 %v2683
      %v2810 = vpop.f32.mrf.mxu0
      %v2811 = vadd.f32 0.0, %v2810
      %2812 = vdwg.mxu0
      %v2813 = vadd.f32 %v2557, %v2718
      %v2814 = vadd.f32 %v2560, %v2721
      %v2815 = vadd.f32 %v2563, %v2724
      %v2816 = vadd.f32 %v2566, %v2727
      %v2817 = vadd.f32 %v2569, %v2730
      %v2818 = vadd.f32 %v2572, %v2733
      %v2819 = vadd.f32 %v2575, %v2736
      %v2820 = vadd.f32 %v2578, %v2739
      %v2821 = vadd.f32 %v2581, %v2742
      %v2822 = vadd.f32 %v2584, %v2745
      %v2823 = vadd.f32 %v2587, %v2748
      %v2824 = vadd.f32 %v2590, %v2751
      %v2825 = vadd.f32 %v2593, %v2754
      %v2826 = vadd.f32 %v2596, %v2757
      %v2827 = vadd.f32 %v2599, %v2760
      %v2828 = vadd.f32 %v2602, %v2763
      %v2829 = vadd.f32 %v2605, %v2766
      %v2830 = vadd.f32 %v2608, %v2769
      %v2831 = vadd.f32 %v2611, %v2772
      %v2832 = vadd.f32 %v2614, %v2775
      %v2833 = vadd.f32 %v2617, %v2778
      %v2834 = vadd.f32 %v2620, %v2781
      %v2835 = vadd.f32 %v2623, %v2784
      %v2836 = vadd.f32 %v2626, %v2787
      %v2837 = vadd.f32 %v2629, %v2790
      %v2838 = vadd.f32 %v2632, %v2793
      %v2839 = vadd.f32 %v2635, %v2796
      %v2840 = vadd.f32 %v2638, %v2799
      %v2841 = vadd.f32 %v2641, %v2802
      %v2842 = vadd.f32 %v2644, %v2805
      %v2843 = vadd.f32 %v2647, %v2808
      %v2844 = vadd.f32 %v2650, %v2811
      %v2845 = vld [vmem:[%s7] sm:$0x1]
      %v2847 = vperm.slane %v2845, 0
      %v2849 = vadd.f32 %v2813, %v2847
      %v2850 = vadd.f32 %v2814, %v2847
      %v2851 = vadd.f32 %v2815, %v2847
      %v2852 = vadd.f32 %v2816, %v2847
      %v2853 = vadd.f32 %v2817, %v2847
      %v2854 = vadd.f32 %v2818, %v2847
      %v2855 = vadd.f32 %v2819, %v2847
      %v2856 = vadd.f32 %v2820, %v2847
      %v2857 = vadd.f32 %v2821, %v2847
      %v2858 = vadd.f32 %v2822, %v2847
      %v2859 = vadd.f32 %v2823, %v2847
      %v2860 = vadd.f32 %v2824, %v2847
      %v2861 = vadd.f32 %v2825, %v2847
      %v2862 = vadd.f32 %v2826, %v2847
      %v2863 = vadd.f32 %v2827, %v2847
      %v2864 = vadd.f32 %v2828, %v2847
      %v2865 = vadd.f32 %v2829, %v2847
      %v2866 = vadd.f32 %v2830, %v2847
      %v2867 = vadd.f32 %v2831, %v2847
      %v2868 = vadd.f32 %v2832, %v2847
      %v2869 = vadd.f32 %v2833, %v2847
      %v2870 = vadd.f32 %v2834, %v2847
      %v2871 = vadd.f32 %v2835, %v2847
      %v2872 = vadd.f32 %v2836, %v2847
      %v2873 = vadd.f32 %v2837, %v2847
      %v2874 = vadd.f32 %v2838, %v2847
      %v2875 = vadd.f32 %v2839, %v2847
      %v2876 = vadd.f32 %v2840, %v2847
      %v2877 = vadd.f32 %v2841, %v2847
      %v2878 = vadd.f32 %v2842, %v2847
      %v2879 = vadd.f32 %v2843, %v2847
      %v2880 = vadd.f32 %v2844, %v2847
      %2881 = vst [vmem:[%s325] sm:$0xff] %v2849
      %2882 = vst [vmem:[%s325 + $0x8] sm:$0xff] %v2850
      %2883 = vst [vmem:[%s325 + $0x10] sm:$0xff] %v2851
      %2884 = vst [vmem:[%s325 + $0x18] sm:$0xff] %v2852
      %2885 = vst [vmem:[%s325 + $0x20] sm:$0xff] %v2853
      %2886 = vst [vmem:[%s325 + $0x28] sm:$0xff] %v2854
      %2887 = vst [vmem:[%s325 + $0x30] sm:$0xff] %v2855
      %2888 = vst [vmem:[%s325 + $0x38] sm:$0xff] %v2856
      %2889 = vst [vmem:[%s325 + $0x40] sm:$0xff] %v2857
      %2890 = vst [vmem:[%s325 + $0x48] sm:$0xff] %v2858
      %2891 = vst [vmem:[%s325 + $0x50] sm:$0xff] %v2859
      %2892 = vst [vmem:[%s325 + $0x58] sm:$0xff] %v2860
      %2893 = vst [vmem:[%s325 + $0x60] sm:$0xff] %v2861
      %2894 = vst [vmem:[%s325 + $0x68] sm:$0xff] %v2862
      %2895 = vst [vmem:[%s325 + $0x70] sm:$0xff] %v2863
      %2896 = vst [vmem:[%s325 + $0x78] sm:$0xff] %v2864
      %2897 = vst [vmem:[%s325 + $0x80] sm:$0xff] %v2865
      %2898 = vst [vmem:[%s325 + $0x88] sm:$0xff] %v2866
      %2899 = vst [vmem:[%s325 + $0x90] sm:$0xff] %v2867
      %2900 = vst [vmem:[%s325 + $0x98] sm:$0xff] %v2868
      %2901 = vst [vmem:[%s325 + $0xa0] sm:$0xff] %v2869
      %2902 = vst [vmem:[%s325 + $0xa8] sm:$0xff] %v2870
      %2903 = vst [vmem:[%s325 + $0xb0] sm:$0xff] %v2871
      %2904 = vst [vmem:[%s325 + $0xb8] sm:$0xff] %v2872
      %2905 = vst [vmem:[%s325 + $0xc0] sm:$0xff] %v2873
      %2906 = vst [vmem:[%s325 + $0xc8] sm:$0xff] %v2874
      %2907 = vst [vmem:[%s325 + $0xd0] sm:$0xff] %v2875
      %2908 = vst [vmem:[%s325 + $0xd8] sm:$0xff] %v2876
      %2909 = vst [vmem:[%s325 + $0xe0] sm:$0xff] %v2877
      %2910 = vst [vmem:[%s325 + $0xe8] sm:$0xff] %v2878
      %2911 = vst [vmem:[%s325 + $0xf0] sm:$0xff] %v2879
      %2912 = vst [vmem:[%s325 + $0xf8] sm:$0xff] %v2880
      %p2913 = scmp.lt.s32.totalorder %s19, 1
      %s2914 = scalar_select %p2913, %s19, 1
      %s2915 = smul.addr %s2914, 32
      %s2916 = smul.addr %s2915, 8
      %s2917 = scalar_lea.vmem %s8, %s2916
      // Predicated region
      $region53: #{preact_block.5} parent=51 // pred_check
        %p2918 = pneg %p215
      $region54: #{preact_block.5} parent=51 // pred_check_branch
        %2920 = sbr.rel (%p2918) target = $region56
      $region55: #{preact_block.5} parent=51 // pred_region
        _
      $region56: #{preact_block.5} parent=51 // pred_fallthru
        _
    $region52: #{preact_block.5} parent=5 // pred_fallthru
      _
    %p2921 = scmp.le.s32.totalorder 2, %s14
    // Predicated region
    $region57: #{preact_block.5} parent=5 // pred_check
      %p2922 = pneg %p2921
    $region58: #{preact_block.5} parent=5 // pred_check_branch
      %2924 = sbr.rel (%p2922) target = $region60
    $region59: #{preact_block.5} parent=5 // pred_region
      %s2925 = ssub.s32 %s14, 2
      // Predicated region
      $region61: #{preact_block.5} parent=59 // pred_check
        %p2926 = pneg %p221
      $region62: #{preact_block.5} parent=59 // pred_check_branch
        %2928 = sbr.rel (%p2926) target = $region64
      $region63: #{preact_block.5} parent=59 // pred_region
        %p2929 = scmp.lt.s32.totalorder %s20, 1
        %s2930 = scalar_select %p2929, %s20, 1
        %s2931 = smul.addr %s2930, 32
        %s2932 = smul.addr %s2931, 8
        %s2933 = scalar_lea.vmem %s8, %s2932
      $region64: #{preact_block.5} parent=59 // pred_fallthru
        _
    $region60: #{preact_block.5} parent=5 // pred_fallthru
      _
  $region6: #{preact_block.5} parent=0 // loop_footer
    %s18 = sadd.s32 1, %s14
  $region7: #{preact_block.5} parent=0 // loop_footer_branch
    %13 = sbr.rel target = $region3
  $region8: #{preact_block.5} parent=0 // loop_exit
    _

</llo_original>
